<compile_context>
chip_gen: v7x
topology: tpu7x:2x2x1
jax: 0.10.0
libtpu: 0.0.40
codegen_flags: <defaults>
</compile_context>

<pallas_src>
import jax
import jax.numpy as jnp
from jax.experimental import pallas as pl
from jax.experimental.pallas import tpu as pltpu


def _round_up(x, m):
    return ((x + m - 1) // m) * m


def _cdiv(a, b):
    return (a + b - 1) // b


def _vmem_limit(est_bytes):
    """Derived per-call VMEM limit: est * 1.5, clamped to [16 MiB, 48 MiB]."""
    return int(min(48 * 2**20, max(16 * 2**20, est_bytes * 3 // 2)))


# ----------------------------------------------------------------------------
# Pallas kernels
# ----------------------------------------------------------------------------
def _sa_layer1_xyz(xyz_ref, w1x_ref):
    """xyz contribution of SA layer 1 as 3 broadcast-FMAs on the VPU.

    xyz_ref : (1, S, tm, 3) bf16, w1x_ref : (3, C1) f32
    returns (S*tm, C1) f32
    """
    S, tm = xyz_ref.shape[1], xyz_ref.shape[2]
    xf = xyz_ref[...].astype(jnp.float32)            # (1, S, tm, 3)
    w1x = w1x_ref[...]                               # (3, C1) f32
    h = xf[..., 0:1] * w1x[0:1, :]
    h = h + xf[..., 1:2] * w1x[1:2, :]
    h = h + xf[..., 2:3] * w1x[2:3, :]
    return h.reshape(S * tm, h.shape[-1])


def _sa_tail(h, S, tm, b1, w2, b2, w3, b3, o_ref):
    """Layers 2-3 + max over the S samples + bias/ReLU epilogue.

    bias + monotone ReLU commute with the per-point max, so the layer-3
    epilogue runs on tm rows instead of tm*S rows.
    """
    h = jnp.maximum(h + b1[...], 0.0).astype(jnp.bfloat16)
    h = jnp.dot(h, w2[...], preferred_element_type=jnp.float32)
    h = jnp.maximum(h + b2[...], 0.0).astype(jnp.bfloat16)
    h = jnp.dot(h, w3[...], preferred_element_type=jnp.float32)
    # Running max over S contiguous tm-row slices (VPU, no reshape/XLU).
    m = h[0:tm, :]
    for s in range(1, S):
        m = jnp.maximum(m, h[s * tm:(s + 1) * tm, :])
    out = jnp.maximum(m + b3[...], 0.0).astype(o_ref.dtype)
    o_ref[...] = out.reshape(o_ref.shape)


def _sa_kernel_nofeat(xyz_ref, w1x, b1, w2, b2, w3, b3, o_ref):
    """SA1 (xyz only): fused 3-layer shared MLP + max over nsample."""
    S, tm = xyz_ref.shape[1], xyz_ref.shape[2]
    h = _sa_layer1_xyz(xyz_ref, w1x)
    _sa_tail(h, S, tm, b1, w2, b2, w3, b3, o_ref)


def _sa_kernel_feat(xyz_ref, feat_ref, w1f, w1x, b1, w2, b2, w3, b3, o_ref):
    """SA2-4 (xyz + features): feature part on the MXU with exact K,
    xyz part as VPU FMAs; then layers 2-3 + max over nsample."""
    S, tm, cf = feat_ref.shape[1], feat_ref.shape[2], feat_ref.shape[3]
    f = feat_ref[...].reshape(S * tm, cf)
    h = jnp.dot(f, w1f[...], preferred_element_type=jnp.float32)
    h = h + _sa_layer1_xyz(xyz_ref, w1x)
    _sa_tail(h, S, tm, b1, w2, b2, w3, b3, o_ref)


def _fp_mlp_kernel(a_ref, b_ref, w1a, w1b, b1, w2, b2, o_ref):
    """Fused FP SharedMLP (2x [1x1 conv(+folded BN) + ReLU]).

    First layer's weight is split in K: h = a @ w1a + b @ w1b + b1, so the
    concat([interp, skip]) tensor is never materialized in HBM.
    """
    h = jnp.dot(a_ref[...], w1a[...], preferred_element_type=jnp.float32)
    h = h + jnp.dot(b_ref[...], w1b[...], preferred_element_type=jnp.float32)
    h = jnp.maximum(h + b1[...], 0.0).astype(jnp.bfloat16)
    h = jnp.dot(h, w2[...], preferred_element_type=jnp.float32)
    o_ref[...] = jnp.maximum(h + b2[...], 0.0).astype(o_ref.dtype)


# ----------------------------------------------------------------------------
# Pallas wrappers
# ----------------------------------------------------------------------------
def sa_shared_mlp_max(xyz_slab, feat_slab, layers):
    """xyz_slab: (B, S, P, 3) bf16, feat_slab: (B, S, P, Cf) bf16 or None.

    Returns (B, P, cout) bf16: fused 3-layer shared MLP + max over S.
    """
    B, S, P, _ = xyz_slab.shape
    w1x, b1 = layers["w1x"], layers["b1"]
    w2, b2 = layers["w2"], layers["b2"]
    w3, b3 = layers["w3"], layers["b3"]
    c1p, c2p, c3p = b1.shape[1], b2.shape[1], b3.shape[1]
    cout, cf, cfp = layers["cout"], layers["cf"], layers["cfp"]
    has_feat = feat_slab is not None

    # Row tile: target ~4096 matmul rows per grid step, multiple of 16
    # (bf16 packed (16,128) tile).  Keep grid length >= 2 for v7x megacore.
    tm = max(16, (4096 // S) // 16 * 16)
    tm = min(tm, _round_up(P, 16))
    if B * _cdiv(P, tm) < 2 and tm > 16:
        tm = max(16, _round_up((P + 1) // 2, 16))
    p_pad = _round_up(P, tm)

    xyz_slab = jnp.pad(xyz_slab, ((0, 0), (0, 0), (0, p_pad - P), (0, 0)))
    in_arrays = [xyz_slab]
    in_specs = [pl.BlockSpec((1, S, tm, 3), lambda b, i: (b, 0, i, 0))]
    if has_feat:
        feat_slab = jnp.pad(
            feat_slab, ((0, 0), (0, 0), (0, p_pad - P), (0, cfp - cf)))
        in_arrays.append(feat_slab)
        in_specs.append(
            pl.BlockSpec((1, S, tm, cfp), lambda b, i: (b, 0, i, 0)))
        weights = [layers["w1f"], w1x, b1, w2, b2, w3, b3]
        kernel = _sa_kernel_feat
    else:
        weights = [w1x, b1, w2, b2, w3, b3]
        kernel = _sa_kernel_nofeat
    in_arrays += weights
    in_specs += [pl.BlockSpec(w.shape, lambda b, i: (0, 0)) for w in weights]

    grid = (B, p_pad // tm)
    rows = S * tm

    # VMEM budget (per grid step, double-buffered blocks + f32 temporaries).
    in_bytes = S * tm * 128 * 2                        # xyz block, lane-padded
    if has_feat:
        in_bytes += S * tm * cfp * 2
    w_bytes = ((cfp * c1p + c1p * c2p + c2p * c3p) * 2
               + 3 * c1p * 4 + (c1p + c2p + c3p) * 4)
    out_blk = tm * c3p * 2
    temp_bytes = rows * (6 * c1p + 6 * c2p + 4 * c3p)
    vmem = _vmem_limit(2 * in_bytes + 2 * out_blk + w_bytes + temp_bytes)

    mm_flops = 2 * B * p_pad * S * (cfp * c1p + c1p * c2p + c2p * c3p)
    vpu_flops = 2 * B * p_pad * S * 3 * c1p
    bytes_accessed = (B * S * p_pad * (3 + (cfp if has_feat else 0)) * 2
                      + w_bytes + B * p_pad * c3p * 2)

    out = pl.pallas_call(
        kernel,
        out_shape=jax.ShapeDtypeStruct((B, p_pad, c3p), jnp.bfloat16),
        grid_spec=pltpu.PrefetchScalarGridSpec(
            num_scalar_prefetch=0,
            grid=grid,
            in_specs=in_specs,
            out_specs=pl.BlockSpec((1, tm, c3p), lambda b, i: (b, i, 0)),
        ),
        compiler_params=pltpu.CompilerParams(
            dimension_semantics=("parallel", "parallel"),
            vmem_limit_bytes=vmem,
        ),
        cost_estimate=pl.CostEstimate(
            flops=mm_flops + vpu_flops, transcendentals=0,
            bytes_accessed=bytes_accessed),
    )(*in_arrays)
    return out[:, :P, :cout]


def fp_shared_mlp(interp, skip, layers, out_dtype=jnp.bfloat16):
    """interp: (M, Ca), skip: (M, Cb) -> (M, Cout) via 2-layer fused MLP."""
    M = interp.shape[0]
    w1a, w1b, b1 = layers["w1a"], layers["w1b"], layers["b1"]
    w2, b2 = layers["w2"], layers["b2"]
    cap, cbp = w1a.shape[0], w1b.shape[0]
    c1p, c2p = w2.shape[0], w2.shape[1]
    cout = layers["cout"]

    tm = min(1024, _round_up(M, 16))
    m_pad = _round_up(M, tm)
    if m_pad // tm < 2 and M > 16:          # keep grid >= 2 for v7x megacore
        tm = _round_up((M + 1) // 2, 16)
        m_pad = _round_up(M, tm)

    a = jnp.pad(interp, ((0, m_pad - M), (0, cap - interp.shape[1])))
    a = a.astype(jnp.bfloat16)
    b = jnp.pad(skip, ((0, m_pad - M), (0, cbp - skip.shape[1])))
    b = b.astype(jnp.bfloat16)

    grid = (m_pad // tm,)
    weight_elems = cap * c1p + cbp * c1p + c1p * c2p
    out_itemsize = jnp.dtype(out_dtype).itemsize
    in_bytes = tm * (cap + cbp) * 2
    w_bytes = weight_elems * 2 + (c1p + c2p) * 4
    out_blk = tm * c2p * out_itemsize
    temp_bytes = tm * (6 * c1p + 4 * c2p)
    vmem = _vmem_limit(2 * in_bytes + 2 * out_blk + w_bytes + temp_bytes)

    flops = 2 * m_pad * weight_elems
    bytes_accessed = (m_pad * (cap + cbp) * 2 + w_bytes
                      + m_pad * c2p * out_itemsize)

    out = pl.pallas_call(
        _fp_mlp_kernel,
        out_shape=jax.ShapeDtypeStruct((m_pad, c2p), out_dtype),
        grid_spec=pltpu.PrefetchScalarGridSpec(
            num_scalar_prefetch=0,
            grid=grid,
            in_specs=[
                pl.BlockSpec((tm, cap), lambda i: (i, 0)),
                pl.BlockSpec((tm, cbp), lambda i: (i, 0)),
                pl.BlockSpec((cap, c1p), lambda i: (0, 0)),
                pl.BlockSpec((cbp, c1p), lambda i: (0, 0)),
                pl.BlockSpec((1, c1p), lambda i: (0, 0)),
                pl.BlockSpec((c1p, c2p), lambda i: (0, 0)),
                pl.BlockSpec((1, c2p), lambda i: (0, 0)),
            ],
            out_specs=pl.BlockSpec((tm, c2p), lambda i: (i, 0)),
        ),
        compiler_params=pltpu.CompilerParams(
            dimension_semantics=("parallel",),
            vmem_limit_bytes=vmem,
        ),
        cost_estimate=pl.CostEstimate(
            flops=flops, transcendentals=0, bytes_accessed=bytes_accessed),
    )(a, b, w1a, w1b, b1, w2, b2)
    return out[:M, :cout]


# ----------------------------------------------------------------------------
# Plain-JAX glue: FPS, ball query, three-NN (data-dependent gathers)
# ----------------------------------------------------------------------------
# TODO(synk): FPS / ball-query / three-NN are data-dependent gathers; kept in
# plain JAX rather than Pallas (no clean dense-tile formulation).
def batched_index(data, idx):
    """data: (B, N, ...) , idx: (B, ...) int -> gathered (B, idx.shape[1:], ...)."""
    return jax.vmap(lambda d, i: d[i])(data, idx)


def furthest_point_sample(xyz, npoint):
    B, N, _ = xyz.shape

    def body(i, state):
        inds, mind, far = state
        inds = inds.at[:, i].set(far)
        centroid = batched_index(xyz, far[:, None])          # (B, 1, 3)
        d = jnp.sum((xyz - centroid) ** 2, axis=-1)          # (B, N)
        mind = jnp.minimum(mind, d)
        far = jnp.argmax(mind, axis=-1).astype(jnp.int32)
        return inds, mind, far

    inds0 = jnp.zeros((B, npoint), jnp.int32)
    mind0 = jnp.full((B, N), 1e10, jnp.float32)
    far0 = jnp.zeros((B,), jnp.int32)
    inds, _, _ = jax.lax.fori_loop(0, npoint, body, (inds0, mind0, far0))
    return inds


def ball_query(radius, nsample, xyz, new_xyz):
    # new_xyz are FPS-selected members of xyz, so every query has at least one
    # in-radius point (itself); PyTorch replicates the first in-radius index
    # for the remaining slots, which is what happens here.
    B, N, _ = xyz.shape
    d2 = jnp.sum((new_xyz[:, :, None, :] - xyz[:, None, :, :]) ** 2, axis=-1)
    mask = d2 < (radius * radius)
    cand = jnp.where(mask, jnp.arange(N, dtype=jnp.int32)[None, None, :], N)
    cand = jnp.sort(cand, axis=-1)[:, :, :nsample]
    first = cand[:, :, :1]
    idx = jnp.where(cand == N, first, cand)
    idx = jnp.where(idx == N, 0, idx)  # unreachable in practice (see note)
    return idx.astype(jnp.int32)


# ----------------------------------------------------------------------------
# Module-level forward pieces
# ----------------------------------------------------------------------------
def sa_module(xyz, features, cfg, layers):
    """PointnetSAModuleVotes (use_xyz=True, normalize_xyz=True, max pooling)."""
    npoint, radius, nsample = cfg["npoint"], cfg["radius"], cfg["nsample"]
    inds = furthest_point_sample(xyz, npoint)                 # (B, npoint)
    new_xyz = batched_index(xyz, inds)                        # (B, npoint, 3)
    idx = ball_query(radius, nsample, xyz, new_xyz)           # (B, npoint, S)
    idx_sm = jnp.swapaxes(idx, 1, 2)                          # (B, S, npoint)

    # Gather DIRECTLY into the kernel's sample-major layout, in bf16: no
    # big-slab transpose / f32 round trip / channel padding afterwards.
    g_xyz = batched_index(xyz, idx_sm)                        # (B, S, npoint, 3)
    g_xyz = ((g_xyz - new_xyz[:, None, :, :]) / radius).astype(jnp.bfloat16)
    if features is not None:
        g_feat = batched_index(features.astype(jnp.bfloat16), idx_sm)
    else:
        g_feat = None
    # TODO(synk): fuse this gather into the SA Pallas kernel via a
    # scalar-prefetched idx + per-row DMA from a pl.ANY ref so the grouped
    # (B, S, npoint, C) slab is never materialized in HBM.
    new_feat = sa_shared_mlp_max(g_xyz, g_feat, layers)       # (B, npoint, cout) bf16
    return new_xyz, new_feat, inds


def fp_module(xyz1, xyz2, feat1, feat2, layers, out_dtype=jnp.bfloat16):
    """PointnetFPModule: three-NN inverse-distance interpolation + MLP."""
    d2 = jnp.sum((xyz1[:, :, None, :] - xyz2[:, None, :, :]) ** 2, axis=-1)
    neg_d, idx = jax.lax.top_k(-d2, 3)
    dist = -neg_d                                             # squared distances
    w = 1.0 / (dist + 1e-8)
    w = w / jnp.sum(w, axis=-1, keepdims=True)
    # TODO(synk): fuse three-NN gather + weighting into the FP kernel via
    # scalar-prefetched idx/weights (lower priority; small tensors).
    gathered = batched_index(feat2, idx)                      # (B, n, 3, C2)
    interp = jnp.einsum('bnkc,bnk->bnc', gathered.astype(jnp.float32), w)
    B, n, Ca = interp.shape
    out = fp_shared_mlp(interp.reshape(B * n, Ca),
                        feat1.reshape(B * n, -1), layers, out_dtype=out_dtype)
    return out.reshape(B, n, -1)


def backbone_forward(pointcloud, params):
    """pointcloud: (B, N, 3 + input_feature_dim), input_feature_dim = 0 here."""
    xyz = pointcloud[..., 0:3]
    features = pointcloud[..., 3:] if pointcloud.shape[-1] > 3 else None

    end_points = {}
    sa_cfgs, sa_layers = params["sa_cfgs"], params["sa_layers"]

    xyz, features, fps_inds = sa_module(xyz, features, sa_cfgs[0], sa_layers[0])
    end_points["sa1_inds"] = fps_inds
    end_points["sa1_xyz"] = xyz
    end_points["sa1_features"] = features

    xyz, features, fps_inds = sa_module(xyz, features, sa_cfgs[1], sa_layers[1])
    end_points["sa2_inds"] = fps_inds
    end_points["sa2_xyz"] = xyz
    end_points["sa2_features"] = features

    xyz, features, _ = sa_module(xyz, features, sa_cfgs[2], sa_layers[2])
    end_points["sa3_xyz"] = xyz
    end_points["sa3_features"] = features

    xyz, features, _ = sa_module(xyz, features, sa_cfgs[3], sa_layers[3])
    end_points["sa4_xyz"] = xyz
    end_points["sa4_features"] = features

    feats = fp_module(end_points["sa3_xyz"], end_points["sa4_xyz"],
                      end_points["sa3_features"], end_points["sa4_features"],
                      params["fp_layers"][0], out_dtype=jnp.bfloat16)
    feats = fp_module(end_points["sa2_xyz"], end_points["sa3_xyz"],
                      end_points["sa2_features"], feats,
                      params["fp_layers"][1], out_dtype=jnp.float32)
    end_points["fp2_features"] = feats
    end_points["fp2_xyz"] = end_points["sa2_xyz"]
    num_seed = end_points["fp2_xyz"].shape[1]
    end_points["fp2_inds"] = end_points["sa1_inds"][:, 0:num_seed]
    return end_points


# ----------------------------------------------------------------------------
# Deterministic parameter init (BN folded into weights, padded, bf16)
# ----------------------------------------------------------------------------
_BN_SCALE = (1.0 + 1e-5) ** -0.5   # gamma=1, running_var=1, eps=1e-5


def _init_conv_bn(key, cin, cout):
    key, wk = jax.random.split(key)
    w = 0.05 * jax.random.normal(wk, (cin, cout), jnp.float32)
    # Fold eval-mode BN (default running stats) into the weight; folded bias = 0.
    w = w * _BN_SCALE
    b = jnp.zeros((cout,), jnp.float32)
    return key, w, b


def _pad2(w, rpad, cpad):
    return jnp.pad(w, ((0, rpad - w.shape[0]), (0, cpad - w.shape[1])))


def make_sa_layers(key, dims):
    cin, c1, c2, c3 = dims                       # cin includes the 3 xyz dims
    cf = cin - 3
    cfp = _round_up(cf, 128) if cf > 0 else 0
    c1p, c2p, c3p = _round_up(c1, 128), _round_up(c2, 128), _round_up(c3, 128)
    key, w1, b1 = _init_conv_bn(key, cin, c1)
    key, w2, b2 = _init_conv_bn(key, c1, c2)
    key, w3, b3 = _init_conv_bn(key, c2, c3)
    layers = dict(
        # xyz rows of layer-1 weight stay f32 (used by VPU FMAs, not the MXU)
        w1x=jnp.pad(w1[:3], ((0, 0), (0, c1p - c1))),
        b1=jnp.pad(b1, (0, c1p - c1)).reshape(1, c1p),
        w2=_pad2(w2, c1p, c2p).astype(jnp.bfloat16),
        b2=jnp.pad(b2, (0, c2p - c2)).reshape(1, c2p),
        w3=_pad2(w3, c2p, c3p).astype(jnp.bfloat16),
        b3=jnp.pad(b3, (0, c3p - c3)).reshape(1, c3p),
        cout=c3, cf=cf, cfp=cfp,
    )
    if cf > 0:
        layers["w1f"] = _pad2(w1[3:], cfp, c1p).astype(jnp.bfloat16)
    return key, layers


def make_fp_layers(key, dims, c_interp, c_skip):
    _, c1, c2 = dims
    cap, cbp = _round_up(c_interp, 128), _round_up(c_skip, 128)
    c1p, c2p = _round_up(c1, 128), _round_up(c2, 128)
    key, w1, b1 = _init_conv_bn(key, c_interp + c_skip, c1)
    key, w2, b2 = _init_conv_bn(key, c1, c2)
    w1a, w1b = w1[:c_interp], w1[c_interp:]
    layers = dict(
        w1a=_pad2(w1a, cap, c1p).astype(jnp.bfloat16),
        w1b=_pad2(w1b, cbp, c1p).astype(jnp.bfloat16),
        b1=jnp.pad(b1, (0, c1p - c1)).reshape(1, c1p),
        w2=_pad2(w2, c1p, c2p).astype(jnp.bfloat16),
        b2=jnp.pad(b2, (0, c2p - c2)).reshape(1, c2p),
        cout=c2,
    )
    return key, layers


def make_params(key, input_feature_dim=0):
    # Small-shape analogue of the original (npoint 2048/1024/512/256, nsample 64/32/16/16).
    sa_cfgs = [
        dict(npoint=32, radius=0.2, nsample=8, mlp=[input_feature_dim + 3, 64, 64, 128]),
        dict(npoint=16, radius=0.4, nsample=8, mlp=[128 + 3, 128, 128, 256]),
        dict(npoint=8,  radius=0.8, nsample=8, mlp=[256 + 3, 128, 128, 256]),
        dict(npoint=4,  radius=1.2, nsample=8, mlp=[256 + 3, 128, 128, 256]),
    ]
    sa_layers = []
    for cfg in sa_cfgs:
        key, layers = make_sa_layers(key, cfg["mlp"])
        sa_layers.append(layers)
    fp_layers = []
    for _ in range(2):
        key, layers = make_fp_layers(key, [256 + 256, 256, 256],
                                     c_interp=256, c_skip=256)
        fp_layers.append(layers)
    return dict(sa_cfgs=sa_cfgs, sa_layers=sa_layers, fp_layers=fp_layers)


# ----------------------------------------------------------------------------
if __name__ == "__main__":
    key = jax.random.PRNGKey(0)
    pkey, dkey = jax.random.split(key)
    params = make_params(pkey, input_feature_dim=0)

    B, N = 2, 64
    pointcloud = jax.random.uniform(dkey, (B, N, 3), jnp.float32)

    fwd = jax.jit(lambda pc: backbone_forward(pc, params))
    end_points = fwd(pointcloud)
    jax.block_until_ready(end_points)

    # light sanity checks on shapes / dtypes
    assert end_points["fp2_features"].shape == (B, 16, 256)
    assert end_points["fp2_features"].dtype == jnp.float32
    assert end_points["fp2_xyz"].shape == (B, 16, 3)
    assert end_points["fp2_inds"].shape == (B, 16)
    assert end_points["sa1_features"].shape == (B, 32, 128)
    assert bool(jnp.all(jnp.isfinite(end_points["fp2_features"])))
    print("KERNEL_OK")
</pallas_src>

<mosaic_0001>
module attributes {stable_mosaic.version = 11 : i64} {
  func.func @_sa_kernel_nofeat(%arg0: i32, %arg1: i32, %arg2: memref<1x8x32x3xbf16, #tpu.memory_space<vmem>>, %arg3: memref<3x128xf32, #tpu.memory_space<vmem>>, %arg4: memref<1x128xf32, #tpu.memory_space<vmem>>, %arg5: memref<128x128xbf16, #tpu.memory_space<vmem>>, %arg6: memref<1x128xf32, #tpu.memory_space<vmem>>, %arg7: memref<128x128xbf16, #tpu.memory_space<vmem>>, %arg8: memref<1x128xf32, #tpu.memory_space<vmem>>, %arg9: memref<1x32x128xbf16, #tpu.memory_space<vmem>>) attributes {dimension_semantics = [#tpu.dimension_semantics<parallel>, #tpu.dimension_semantics<parallel>], iteration_bounds = array<i64: 2, 1>, scalar_prefetch = 0 : i64, scratch_operands = 0 : i64, tpu.core_type = #tpu.core_type<tc>, window_params = [{transform_indices = @transform_0, window_bounds = array<i64: 1, 8, 32, 3>}, {pipeline_mode = #tpu.pipeline_mode<synchronous>, transform_indices = @transform_1, window_bounds = array<i64: 3, 128>}, {pipeline_mode = #tpu.pipeline_mode<synchronous>, transform_indices = @transform_2, window_bounds = array<i64: 1, 128>}, {pipeline_mode = #tpu.pipeline_mode<synchronous>, transform_indices = @transform_3, window_bounds = array<i64: 128, 128>}, {pipeline_mode = #tpu.pipeline_mode<synchronous>, transform_indices = @transform_4, window_bounds = array<i64: 1, 128>}, {pipeline_mode = #tpu.pipeline_mode<synchronous>, transform_indices = @transform_5, window_bounds = array<i64: 128, 128>}, {pipeline_mode = #tpu.pipeline_mode<synchronous>, transform_indices = @transform_6, window_bounds = array<i64: 1, 128>}, {transform_indices = @transform_7, window_bounds = array<i64: 1, 32, 128>}]} {
    %c0 = arith.constant 0 : index
    %c0_0 = arith.constant 0 : index
    %c0_1 = arith.constant 0 : index
    %c0_2 = arith.constant 0 : index
    %0 = vector.load %arg2[%c0, %c0_0, %c0_1, %c0_2] : memref<1x8x32x3xbf16, #tpu.memory_space<vmem>>, vector<1x8x32x3xbf16>
    %1 = arith.extf %0 : vector<1x8x32x3xbf16> to vector<1x8x32x3xf32>
    %c0_3 = arith.constant 0 : index
    %c0_4 = arith.constant 0 : index
    %2 = vector.load %arg3[%c0_3, %c0_4] : memref<3x128xf32, #tpu.memory_space<vmem>>, vector<3x128xf32>
    %3 = vector.extract_strided_slice %1 {offsets = [0, 0, 0, 0], sizes = [1, 8, 32, 1], strides = [1, 1, 1, 1]} : vector<1x8x32x3xf32> to vector<1x8x32x1xf32>
    %4 = vector.extract_strided_slice %2 {offsets = [0, 0], sizes = [1, 128], strides = [1, 1]} : vector<3x128xf32> to vector<1x128xf32>
    %5 = vector.shape_cast %4 : vector<1x128xf32> to vector<1x1x1x128xf32>
    %6 = vector.broadcast %3 : vector<1x8x32x1xf32> to vector<1x8x32x128xf32>
    %7 = vector.broadcast %5 : vector<1x1x1x128xf32> to vector<1x8x32x128xf32>
    %8 = arith.mulf %6, %7 : vector<1x8x32x128xf32>
    %9 = vector.extract_strided_slice %1 {offsets = [0, 0, 0, 1], sizes = [1, 8, 32, 1], strides = [1, 1, 1, 1]} : vector<1x8x32x3xf32> to vector<1x8x32x1xf32>
    %10 = vector.extract_strided_slice %2 {offsets = [1, 0], sizes = [1, 128], strides = [1, 1]} : vector<3x128xf32> to vector<1x128xf32>
    %11 = vector.shape_cast %10 : vector<1x128xf32> to vector<1x1x1x128xf32>
    %12 = vector.broadcast %9 : vector<1x8x32x1xf32> to vector<1x8x32x128xf32>
    %13 = vector.broadcast %11 : vector<1x1x1x128xf32> to vector<1x8x32x128xf32>
    %14 = arith.mulf %12, %13 : vector<1x8x32x128xf32>
    %15 = arith.addf %8, %14 : vector<1x8x32x128xf32>
    %16 = vector.extract_strided_slice %1 {offsets = [0, 0, 0, 2], sizes = [1, 8, 32, 1], strides = [1, 1, 1, 1]} : vector<1x8x32x3xf32> to vector<1x8x32x1xf32>
    %17 = vector.extract_strided_slice %2 {offsets = [2, 0], sizes = [1, 128], strides = [1, 1]} : vector<3x128xf32> to vector<1x128xf32>
    %18 = vector.shape_cast %17 : vector<1x128xf32> to vector<1x1x1x128xf32>
    %19 = vector.broadcast %16 : vector<1x8x32x1xf32> to vector<1x8x32x128xf32>
    %20 = vector.broadcast %18 : vector<1x1x1x128xf32> to vector<1x8x32x128xf32>
    %21 = arith.mulf %19, %20 : vector<1x8x32x128xf32>
    %22 = arith.addf %15, %21 : vector<1x8x32x128xf32>
    %23 = vector.shape_cast %22 : vector<1x8x32x128xf32> to vector<256x128xf32>
    %c0_5 = arith.constant 0 : index
    %c0_6 = arith.constant 0 : index
    %24 = vector.load %arg4[%c0_5, %c0_6] : memref<1x128xf32, #tpu.memory_space<vmem>>, vector<1x128xf32>
    %25 = vector.broadcast %24 : vector<1x128xf32> to vector<256x128xf32>
    %26 = arith.addf %23, %25 : vector<256x128xf32>
    %cst = arith.constant 0.000000e+00 : f32
    %27 = vector.broadcast %cst : f32 to vector<256x128xf32>
    %28 = arith.maximumf %26, %27 : vector<256x128xf32>
    %29 = arith.truncf %28 : vector<256x128xf32> to vector<256x128xbf16>
    %c0_7 = arith.constant 0 : index
    %c0_8 = arith.constant 0 : index
    %30 = vector.load %arg5[%c0_7, %c0_8] : memref<128x128xbf16, #tpu.memory_space<vmem>>, vector<128x128xbf16>
    %cst_9 = arith.constant dense<0.000000e+00> : vector<256x128xf32>
    %31 = tpu.matmul %29, %30, %cst_9 {dimension_numbers = #tpu.dot_dimension_numbers<[1], [0], [0], [1], [0, 0, 1, 1], [], []>} : vector<256x128xbf16>, vector<128x128xbf16>, vector<256x128xf32> -> vector<256x128xf32>
    %c0_10 = arith.constant 0 : index
    %c0_11 = arith.constant 0 : index
    %32 = vector.load %arg6[%c0_10, %c0_11] : memref<1x128xf32, #tpu.memory_space<vmem>>, vector<1x128xf32>
    %33 = vector.broadcast %32 : vector<1x128xf32> to vector<256x128xf32>
    %34 = arith.addf %31, %33 : vector<256x128xf32>
    %cst_12 = arith.constant 0.000000e+00 : f32
    %35 = vector.broadcast %cst_12 : f32 to vector<256x128xf32>
    %36 = arith.maximumf %34, %35 : vector<256x128xf32>
    %37 = arith.truncf %36 : vector<256x128xf32> to vector<256x128xbf16>
    %c0_13 = arith.constant 0 : index
    %c0_14 = arith.constant 0 : index
    %38 = vector.load %arg7[%c0_13, %c0_14] : memref<128x128xbf16, #tpu.memory_space<vmem>>, vector<128x128xbf16>
    %cst_15 = arith.constant dense<0.000000e+00> : vector<256x128xf32>
    %39 = tpu.matmul %37, %38, %cst_15 {dimension_numbers = #tpu.dot_dimension_numbers<[1], [0], [0], [1], [0, 0, 1, 1], [], []>} : vector<256x128xbf16>, vector<128x128xbf16>, vector<256x128xf32> -> vector<256x128xf32>
    %40 = vector.extract_strided_slice %39 {offsets = [0, 0], sizes = [32, 128], strides = [1, 1]} : vector<256x128xf32> to vector<32x128xf32>
    %41 = vector.extract_strided_slice %39 {offsets = [32, 0], sizes = [32, 128], strides = [1, 1]} : vector<256x128xf32> to vector<32x128xf32>
    %42 = arith.maximumf %40, %41 : vector<32x128xf32>
    %43 = vector.extract_strided_slice %39 {offsets = [64, 0], sizes = [32, 128], strides = [1, 1]} : vector<256x128xf32> to vector<32x128xf32>
    %44 = arith.maximumf %42, %43 : vector<32x128xf32>
    %45 = vector.extract_strided_slice %39 {offsets = [96, 0], sizes = [32, 128], strides = [1, 1]} : vector<256x128xf32> to vector<32x128xf32>
    %46 = arith.maximumf %44, %45 : vector<32x128xf32>
    %47 = vector.extract_strided_slice %39 {offsets = [128, 0], sizes = [32, 128], strides = [1, 1]} : vector<256x128xf32> to vector<32x128xf32>
    %48 = arith.maximumf %46, %47 : vector<32x128xf32>
    %49 = vector.extract_strided_slice %39 {offsets = [160, 0], sizes = [32, 128], strides = [1, 1]} : vector<256x128xf32> to vector<32x128xf32>
    %50 = arith.maximumf %48, %49 : vector<32x128xf32>
    %51 = vector.extract_strided_slice %39 {offsets = [192, 0], sizes = [32, 128], strides = [1, 1]} : vector<256x128xf32> to vector<32x128xf32>
    %52 = arith.maximumf %50, %51 : vector<32x128xf32>
    %53 = vector.extract_strided_slice %39 {offsets = [224, 0], sizes = [32, 128], strides = [1, 1]} : vector<256x128xf32> to vector<32x128xf32>
    %54 = arith.maximumf %52, %53 : vector<32x128xf32>
    %c0_16 = arith.constant 0 : index
    %c0_17 = arith.constant 0 : index
    %55 = vector.load %arg8[%c0_16, %c0_17] : memref<1x128xf32, #tpu.memory_space<vmem>>, vector<1x128xf32>
    %56 = vector.broadcast %55 : vector<1x128xf32> to vector<32x128xf32>
    %57 = arith.addf %54, %56 : vector<32x128xf32>
    %cst_18 = arith.constant 0.000000e+00 : f32
    %58 = vector.broadcast %cst_18 : f32 to vector<32x128xf32>
    %59 = arith.maximumf %57, %58 : vector<32x128xf32>
    %60 = arith.truncf %59 : vector<32x128xf32> to vector<32x128xbf16>
    %61 = vector.shape_cast %60 : vector<32x128xbf16> to vector<1x32x128xbf16>
    %c0_19 = arith.constant 0 : index
    %c0_20 = arith.constant 0 : index
    %c0_21 = arith.constant 0 : index
    %62 = vector.load %arg9[%c0_19, %c0_20, %c0_21] : memref<1x32x128xbf16, #tpu.memory_space<vmem>>, vector<1x32x128xbf16>
    tpu.vector_store %arg9[%c0_19, %c0_20, %c0_21], %61 {strides = array<i32>} : memref<1x32x128xbf16, #tpu.memory_space<vmem>>, vector<1x32x128xbf16>,
    return
  }
  func.func @transform_0(%arg0: i32, %arg1: i32) -> (i32, i32, i32, i32) {
    %c0_i32 = arith.constant 0 : i32
    %c0_i32_0 = arith.constant 0 : i32
    %c0_i32_1 = arith.constant 0 : i32
    return %arg0, %c0_i32, %arg1, %c0_i32_0 : i32, i32, i32, i32
  }
  func.func @transform_1(%arg0: i32, %arg1: i32) -> (i32, i32) {
    %c0_i32 = arith.constant 0 : i32
    %c0_i32_0 = arith.constant 0 : i32
    %c0_i32_1 = arith.constant 0 : i32
    return %c0_i32, %c0_i32_0 : i32, i32
  }
  func.func @transform_2(%arg0: i32, %arg1: i32) -> (i32, i32) {
    %c0_i32 = arith.constant 0 : i32
    %c0_i32_0 = arith.constant 0 : i32
    %c0_i32_1 = arith.constant 0 : i32
    return %c0_i32, %c0_i32_0 : i32, i32
  }
  func.func @transform_3(%arg0: i32, %arg1: i32) -> (i32, i32) {
    %c0_i32 = arith.constant 0 : i32
    %c0_i32_0 = arith.constant 0 : i32
    %c0_i32_1 = arith.constant 0 : i32
    return %c0_i32, %c0_i32_0 : i32, i32
  }
  func.func @transform_4(%arg0: i32, %arg1: i32) -> (i32, i32) {
    %c0_i32 = arith.constant 0 : i32
    %c0_i32_0 = arith.constant 0 : i32
    %c0_i32_1 = arith.constant 0 : i32
    return %c0_i32, %c0_i32_0 : i32, i32
  }
  func.func @transform_5(%arg0: i32, %arg1: i32) -> (i32, i32) {
    %c0_i32 = arith.constant 0 : i32
    %c0_i32_0 = arith.constant 0 : i32
    %c0_i32_1 = arith.constant 0 : i32
    return %c0_i32, %c0_i32_0 : i32, i32
  }
  func.func @transform_6(%arg0: i32, %arg1: i32) -> (i32, i32) {
    %c0_i32 = arith.constant 0 : i32
    %c0_i32_0 = arith.constant 0 : i32
    %c0_i32_1 = arith.constant 0 : i32
    return %c0_i32, %c0_i32_0 : i32, i32
  }
  func.func @transform_7(%arg0: i32, %arg1: i32) -> (i32, i32, i32) {
    %c0_i32 = arith.constant 0 : i32
    %c0_i32_0 = arith.constant 0 : i32
    return %arg0, %arg1, %c0_i32 : i32, i32, i32
  }
}

module attributes {stable_mosaic.version = 11 : i64} {
  func.func @_sa_kernel_feat(%arg0: i32, %arg1: i32, %arg2: memref<1x8x16x3xbf16, #tpu.memory_space<vmem>>, %arg3: memref<1x8x16x128xbf16, #tpu.memory_space<vmem>>, %arg4: memref<128x128xbf16, #tpu.memory_space<vmem>>, %arg5: memref<3x128xf32, #tpu.memory_space<vmem>>, %arg6: memref<1x128xf32, #tpu.memory_space<vmem>>, %arg7: memref<128x128xbf16, #tpu.memory_space<vmem>>, %arg8: memref<1x128xf32, #tpu.memory_space<vmem>>, %arg9: memref<128x256xbf16, #tpu.memory_space<vmem>>, %arg10: memref<1x256xf32, #tpu.memory_space<vmem>>, %arg11: memref<1x16x256xbf16, #tpu.memory_space<vmem>>) attributes {dimension_semantics = [#tpu.dimension_semantics<parallel>, #tpu.dimension_semantics<parallel>], iteration_bounds = array<i64: 2, 1>, scalar_prefetch = 0 : i64, scratch_operands = 0 : i64, tpu.core_type = #tpu.core_type<tc>, window_params = [{transform_indices = @transform_0, window_bounds = array<i64: 1, 8, 16, 3>}, {transform_indices = @transform_1, window_bounds = array<i64: 1, 8, 16, 128>}, {pipeline_mode = #tpu.pipeline_mode<synchronous>, transform_indices = @transform_2, window_bounds = array<i64: 128, 128>}, {pipeline_mode = #tpu.pipeline_mode<synchronous>, transform_indices = @transform_3, window_bounds = array<i64: 3, 128>}, {pipeline_mode = #tpu.pipeline_mode<synchronous>, transform_indices = @transform_4, window_bounds = array<i64: 1, 128>}, {pipeline_mode = #tpu.pipeline_mode<synchronous>, transform_indices = @transform_5, window_bounds = array<i64: 128, 128>}, {pipeline_mode = #tpu.pipeline_mode<synchronous>, transform_indices = @transform_6, window_bounds = array<i64: 1, 128>}, {pipeline_mode = #tpu.pipeline_mode<synchronous>, transform_indices = @transform_7, window_bounds = array<i64: 128, 256>}, {pipeline_mode = #tpu.pipeline_mode<synchronous>, transform_indices = @transform_8, window_bounds = array<i64: 1, 256>}, {transform_indices = @transform_9, window_bounds = array<i64: 1, 16, 256>}]} {
    %c0 = arith.constant 0 : index
    %c0_0 = arith.constant 0 : index
    %c0_1 = arith.constant 0 : index
    %c0_2 = arith.constant 0 : index
    %0 = vector.load %arg3[%c0, %c0_0, %c0_1, %c0_2] : memref<1x8x16x128xbf16, #tpu.memory_space<vmem>>, vector<1x8x16x128xbf16>
    %1 = vector.shape_cast %0 : vector<1x8x16x128xbf16> to vector<128x128xbf16>
    %c0_3 = arith.constant 0 : index
    %c0_4 = arith.constant 0 : index
    %2 = vector.load %arg4[%c0_3, %c0_4] : memref<128x128xbf16, #tpu.memory_space<vmem>>, vector<128x128xbf16>
    %cst = arith.constant dense<0.000000e+00> : vector<128x128xf32>
    %3 = tpu.matmul %1, %2, %cst {dimension_numbers = #tpu.dot_dimension_numbers<[1], [0], [0], [1], [0, 0, 1, 1], [], []>} : vector<128x128xbf16>, vector<128x128xbf16>, vector<128x128xf32> -> vector<128x128xf32>
    %c0_5 = arith.constant 0 : index
    %c0_6 = arith.constant 0 : index
    %c0_7 = arith.constant 0 : index
    %c0_8 = arith.constant 0 : index
    %4 = vector.load %arg2[%c0_5, %c0_6, %c0_7, %c0_8] : memref<1x8x16x3xbf16, #tpu.memory_space<vmem>>, vector<1x8x16x3xbf16>
    %5 = arith.extf %4 : vector<1x8x16x3xbf16> to vector<1x8x16x3xf32>
    %c0_9 = arith.constant 0 : index
    %c0_10 = arith.constant 0 : index
    %6 = vector.load %arg5[%c0_9, %c0_10] : memref<3x128xf32, #tpu.memory_space<vmem>>, vector<3x128xf32>
    %7 = vector.extract_strided_slice %5 {offsets = [0, 0, 0, 0], sizes = [1, 8, 16, 1], strides = [1, 1, 1, 1]} : vector<1x8x16x3xf32> to vector<1x8x16x1xf32>
    %8 = vector.extract_strided_slice %6 {offsets = [0, 0], sizes = [1, 128], strides = [1, 1]} : vector<3x128xf32> to vector<1x128xf32>
    %9 = vector.shape_cast %8 : vector<1x128xf32> to vector<1x1x1x128xf32>
    %10 = vector.broadcast %7 : vector<1x8x16x1xf32> to vector<1x8x16x128xf32>
    %11 = vector.broadcast %9 : vector<1x1x1x128xf32> to vector<1x8x16x128xf32>
    %12 = arith.mulf %10, %11 : vector<1x8x16x128xf32>
    %13 = vector.extract_strided_slice %5 {offsets = [0, 0, 0, 1], sizes = [1, 8, 16, 1], strides = [1, 1, 1, 1]} : vector<1x8x16x3xf32> to vector<1x8x16x1xf32>
    %14 = vector.extract_strided_slice %6 {offsets = [1, 0], sizes = [1, 128], strides = [1, 1]} : vector<3x128xf32> to vector<1x128xf32>
    %15 = vector.shape_cast %14 : vector<1x128xf32> to vector<1x1x1x128xf32>
    %16 = vector.broadcast %13 : vector<1x8x16x1xf32> to vector<1x8x16x128xf32>
    %17 = vector.broadcast %15 : vector<1x1x1x128xf32> to vector<1x8x16x128xf32>
    %18 = arith.mulf %16, %17 : vector<1x8x16x128xf32>
    %19 = arith.addf %12, %18 : vector<1x8x16x128xf32>
    %20 = vector.extract_strided_slice %5 {offsets = [0, 0, 0, 2], sizes = [1, 8, 16, 1], strides = [1, 1, 1, 1]} : vector<1x8x16x3xf32> to vector<1x8x16x1xf32>
    %21 = vector.extract_strided_slice %6 {offsets = [2, 0], sizes = [1, 128], strides = [1, 1]} : vector<3x128xf32> to vector<1x128xf32>
    %22 = vector.shape_cast %21 : vector<1x128xf32> to vector<1x1x1x128xf32>
    %23 = vector.broadcast %20 : vector<1x8x16x1xf32> to vector<1x8x16x128xf32>
    %24 = vector.broadcast %22 : vector<1x1x1x128xf32> to vector<1x8x16x128xf32>
    %25 = arith.mulf %23, %24 : vector<1x8x16x128xf32>
    %26 = arith.addf %19, %25 : vector<1x8x16x128xf32>
    %27 = vector.shape_cast %26 : vector<1x8x16x128xf32> to vector<128x128xf32>
    %28 = arith.addf %3, %27 : vector<128x128xf32>
    %c0_11 = arith.constant 0 : index
    %c0_12 = arith.constant 0 : index
    %29 = vector.load %arg6[%c0_11, %c0_12] : memref<1x128xf32, #tpu.memory_space<vmem>>, vector<1x128xf32>
    %30 = vector.broadcast %29 : vector<1x128xf32> to vector<128x128xf32>
    %31 = arith.addf %28, %30 : vector<128x128xf32>
    %cst_13 = arith.constant 0.000000e+00 : f32
    %32 = vector.broadcast %cst_13 : f32 to vector<128x128xf32>
    %33 = arith.maximumf %31, %32 : vector<128x128xf32>
    %34 = arith.truncf %33 : vector<128x128xf32> to vector<128x128xbf16>
    %c0_14 = arith.constant 0 : index
    %c0_15 = arith.constant 0 : index
    %35 = vector.load %arg7[%c0_14, %c0_15] : memref<128x128xbf16, #tpu.memory_space<vmem>>, vector<128x128xbf16>
    %cst_16 = arith.constant dense<0.000000e+00> : vector<128x128xf32>
    %36 = tpu.matmul %34, %35, %cst_16 {dimension_numbers = #tpu.dot_dimension_numbers<[1], [0], [0], [1], [0, 0, 1, 1], [], []>} : vector<128x128xbf16>, vector<128x128xbf16>, vector<128x128xf32> -> vector<128x128xf32>
    %c0_17 = arith.constant 0 : index
    %c0_18 = arith.constant 0 : index
    %37 = vector.load %arg8[%c0_17, %c0_18] : memref<1x128xf32, #tpu.memory_space<vmem>>, vector<1x128xf32>
    %38 = vector.broadcast %37 : vector<1x128xf32> to vector<128x128xf32>
    %39 = arith.addf %36, %38 : vector<128x128xf32>
    %cst_19 = arith.constant 0.000000e+00 : f32
    %40 = vector.broadcast %cst_19 : f32 to vector<128x128xf32>
    %41 = arith.maximumf %39, %40 : vector<128x128xf32>
    %42 = arith.truncf %41 : vector<128x128xf32> to vector<128x128xbf16>
    %c0_20 = arith.constant 0 : index
    %c0_21 = arith.constant 0 : index
    %43 = vector.load %arg9[%c0_20, %c0_21] : memref<128x256xbf16, #tpu.memory_space<vmem>>, vector<128x256xbf16>
    %cst_22 = arith.constant dense<0.000000e+00> : vector<128x256xf32>
    %44 = tpu.matmul %42, %43, %cst_22 {dimension_numbers = #tpu.dot_dimension_numbers<[1], [0], [0], [1], [0, 0, 1, 1], [], []>} : vector<128x128xbf16>, vector<128x256xbf16>, vector<128x256xf32> -> vector<128x256xf32>
    %45 = vector.extract_strided_slice %44 {offsets = [0, 0], sizes = [16, 256], strides = [1, 1]} : vector<128x256xf32> to vector<16x256xf32>
    %46 = vector.extract_strided_slice %44 {offsets = [16, 0], sizes = [16, 256], strides = [1, 1]} : vector<128x256xf32> to vector<16x256xf32>
    %47 = arith.maximumf %45, %46 : vector<16x256xf32>
    %48 = vector.extract_strided_slice %44 {offsets = [32, 0], sizes = [16, 256], strides = [1, 1]} : vector<128x256xf32> to vector<16x256xf32>
    %49 = arith.maximumf %47, %48 : vector<16x256xf32>
    %50 = vector.extract_strided_slice %44 {offsets = [48, 0], sizes = [16, 256], strides = [1, 1]} : vector<128x256xf32> to vector<16x256xf32>
    %51 = arith.maximumf %49, %50 : vector<16x256xf32>
    %52 = vector.extract_strided_slice %44 {offsets = [64, 0], sizes = [16, 256], strides = [1, 1]} : vector<128x256xf32> to vector<16x256xf32>
    %53 = arith.maximumf %51, %52 : vector<16x256xf32>
    %54 = vector.extract_strided_slice %44 {offsets = [80, 0], sizes = [16, 256], strides = [1, 1]} : vector<128x256xf32> to vector<16x256xf32>
    %55 = arith.maximumf %53, %54 : vector<16x256xf32>
    %56 = vector.extract_strided_slice %44 {offsets = [96, 0], sizes = [16, 256], strides = [1, 1]} : vector<128x256xf32> to vector<16x256xf32>
    %57 = arith.maximumf %55, %56 : vector<16x256xf32>
    %58 = vector.extract_strided_slice %44 {offsets = [112, 0], sizes = [16, 256], strides = [1, 1]} : vector<128x256xf32> to vector<16x256xf32>
    %59 = arith.maximumf %57, %58 : vector<16x256xf32>
    %c0_23 = arith.constant 0 : index
    %c0_24 = arith.constant 0 : index
    %60 = vector.load %arg10[%c0_23, %c0_24] : memref<1x256xf32, #tpu.memory_space<vmem>>, vector<1x256xf32>
    %61 = vector.broadcast %60 : vector<1x256xf32> to vector<16x256xf32>
    %62 = arith.addf %59, %61 : vector<16x256xf32>
    %cst_25 = arith.constant 0.000000e+00 : f32
    %63 = vector.broadcast %cst_25 : f32 to vector<16x256xf32>
    %64 = arith.maximumf %62, %63 : vector<16x256xf32>
    %65 = arith.truncf %64 : vector<16x256xf32> to vector<16x256xbf16>
    %66 = vector.shape_cast %65 : vector<16x256xbf16> to vector<1x16x256xbf16>
    %c0_26 = arith.constant 0 : index
    %c0_27 = arith.constant 0 : index
    %c0_28 = arith.constant 0 : index
    %67 = vector.load %arg11[%c0_26, %c0_27, %c0_28] : memref<1x16x256xbf16, #tpu.memory_space<vmem>>, vector<1x16x256xbf16>
    tpu.vector_store %arg11[%c0_26, %c0_27, %c0_28], %66 {strides = array<i32>} : memref<1x16x256xbf16, #tpu.memory_space<vmem>>, vector<1x16x256xbf16>,
    return
  }
  func.func @transform_0(%arg0: i32, %arg1: i32) -> (i32, i32, i32, i32) {
    %c0_i32 = arith.constant 0 : i32
    %c0_i32_0 = arith.constant 0 : i32
    %c0_i32_1 = arith.constant 0 : i32
    return %arg0, %c0_i32, %arg1, %c0_i32_0 : i32, i32, i32, i32
  }
  func.func @transform_1(%arg0: i32, %arg1: i32) -> (i32, i32, i32, i32) {
    %c0_i32 = arith.constant 0 : i32
    %c0_i32_0 = arith.constant 0 : i32
    %c0_i32_1 = arith.constant 0 : i32
    return %arg0, %c0_i32, %arg1, %c0_i32_0 : i32, i32, i32, i32
  }
  func.func @transform_2(%arg0: i32, %arg1: i32) -> (i32, i32) {
    %c0_i32 = arith.constant 0 : i32
    %c0_i32_0 = arith.constant 0 : i32
    %c0_i32_1 = arith.constant 0 : i32
    return %c0_i32, %c0_i32_0 : i32, i32
  }
  func.func @transform_3(%arg0: i32, %arg1: i32) -> (i32, i32) {
    %c0_i32 = arith.constant 0 : i32
    %c0_i32_0 = arith.constant 0 : i32
    %c0_i32_1 = arith.constant 0 : i32
    return %c0_i32, %c0_i32_0 : i32, i32
  }
  func.func @transform_4(%arg0: i32, %arg1: i32) -> (i32, i32) {
    %c0_i32 = arith.constant 0 : i32
    %c0_i32_0 = arith.constant 0 : i32
    %c0_i32_1 = arith.constant 0 : i32
    return %c0_i32, %c0_i32_0 : i32, i32
  }
  func.func @transform_5(%arg0: i32, %arg1: i32) -> (i32, i32) {
    %c0_i32 = arith.constant 0 : i32
    %c0_i32_0 = arith.constant 0 : i32
    %c0_i32_1 = arith.constant 0 : i32
    return %c0_i32, %c0_i32_0 : i32, i32
  }
  func.func @transform_6(%arg0: i32, %arg1: i32) -> (i32, i32) {
    %c0_i32 = arith.constant 0 : i32
    %c0_i32_0 = arith.constant 0 : i32
    %c0_i32_1 = arith.constant 0 : i32
    return %c0_i32, %c0_i32_0 : i32, i32
  }
  func.func @transform_7(%arg0: i32, %arg1: i32) -> (i32, i32) {
    %c0_i32 = arith.constant 0 : i32
    %c0_i32_0 = arith.constant 0 : i32
    %c0_i32_1 = arith.constant 0 : i32
    return %c0_i32, %c0_i32_0 : i32, i32
  }
  func.func @transform_8(%arg0: i32, %arg1: i32) -> (i32, i32) {
    %c0_i32 = arith.constant 0 : i32
    %c0_i32_0 = arith.constant 0 : i32
    %c0_i32_1 = arith.constant 0 : i32
    return %c0_i32, %c0_i32_0 : i32, i32
  }
  func.func @transform_9(%arg0: i32, %arg1: i32) -> (i32, i32, i32) {
    %c0_i32 = arith.constant 0 : i32
    %c0_i32_0 = arith.constant 0 : i32
    return %arg0, %arg1, %c0_i32 : i32, i32, i32
  }
}

module attributes {stable_mosaic.version = 11 : i64} {
  func.func @_sa_kernel_feat(%arg0: i32, %arg1: i32, %arg2: memref<1x8x16x3xbf16, #tpu.memory_space<vmem>>, %arg3: memref<1x8x16x256xbf16, #tpu.memory_space<vmem>>, %arg4: memref<256x128xbf16, #tpu.memory_space<vmem>>, %arg5: memref<3x128xf32, #tpu.memory_space<vmem>>, %arg6: memref<1x128xf32, #tpu.memory_space<vmem>>, %arg7: memref<128x128xbf16, #tpu.memory_space<vmem>>, %arg8: memref<1x128xf32, #tpu.memory_space<vmem>>, %arg9: memref<128x256xbf16, #tpu.memory_space<vmem>>, %arg10: memref<1x256xf32, #tpu.memory_space<vmem>>, %arg11: memref<1x16x256xbf16, #tpu.memory_space<vmem>>) attributes {dimension_semantics = [#tpu.dimension_semantics<parallel>, #tpu.dimension_semantics<parallel>], iteration_bounds = array<i64: 2, 1>, scalar_prefetch = 0 : i64, scratch_operands = 0 : i64, tpu.core_type = #tpu.core_type<tc>, window_params = [{transform_indices = @transform_0, window_bounds = array<i64: 1, 8, 16, 3>}, {transform_indices = @transform_1, window_bounds = array<i64: 1, 8, 16, 256>}, {pipeline_mode = #tpu.pipeline_mode<synchronous>, transform_indices = @transform_2, window_bounds = array<i64: 256, 128>}, {pipeline_mode = #tpu.pipeline_mode<synchronous>, transform_indices = @transform_3, window_bounds = array<i64: 3, 128>}, {pipeline_mode = #tpu.pipeline_mode<synchronous>, transform_indices = @transform_4, window_bounds = array<i64: 1, 128>}, {pipeline_mode = #tpu.pipeline_mode<synchronous>, transform_indices = @transform_5, window_bounds = array<i64: 128, 128>}, {pipeline_mode = #tpu.pipeline_mode<synchronous>, transform_indices = @transform_6, window_bounds = array<i64: 1, 128>}, {pipeline_mode = #tpu.pipeline_mode<synchronous>, transform_indices = @transform_7, window_bounds = array<i64: 128, 256>}, {pipeline_mode = #tpu.pipeline_mode<synchronous>, transform_indices = @transform_8, window_bounds = array<i64: 1, 256>}, {transform_indices = @transform_9, window_bounds = array<i64: 1, 16, 256>}]} {
    %c0 = arith.constant 0 : index
    %c0_0 = arith.constant 0 : index
    %c0_1 = arith.constant 0 : index
    %c0_2 = arith.constant 0 : index
    %0 = vector.load %arg3[%c0, %c0_0, %c0_1, %c0_2] : memref<1x8x16x256xbf16, #tpu.memory_space<vmem>>, vector<1x8x16x256xbf16>
    %1 = vector.shape_cast %0 : vector<1x8x16x256xbf16> to vector<128x256xbf16>
    %c0_3 = arith.constant 0 : index
    %c0_4 = arith.constant 0 : index
    %2 = vector.load %arg4[%c0_3, %c0_4] : memref<256x128xbf16, #tpu.memory_space<vmem>>, vector<256x128xbf16>
    %cst = arith.constant dense<0.000000e+00> : vector<128x128xf32>
    %3 = tpu.matmul %1, %2, %cst {dimension_numbers = #tpu.dot_dimension_numbers<[1], [0], [0], [1], [0, 0, 1, 1], [], []>} : vector<128x256xbf16>, vector<256x128xbf16>, vector<128x128xf32> -> vector<128x128xf32>
    %c0_5 = arith.constant 0 : index
    %c0_6 = arith.constant 0 : index
    %c0_7 = arith.constant 0 : index
    %c0_8 = arith.constant 0 : index
    %4 = vector.load %arg2[%c0_5, %c0_6, %c0_7, %c0_8] : memref<1x8x16x3xbf16, #tpu.memory_space<vmem>>, vector<1x8x16x3xbf16>
    %5 = arith.extf %4 : vector<1x8x16x3xbf16> to vector<1x8x16x3xf32>
    %c0_9 = arith.constant 0 : index
    %c0_10 = arith.constant 0 : index
    %6 = vector.load %arg5[%c0_9, %c0_10] : memref<3x128xf32, #tpu.memory_space<vmem>>, vector<3x128xf32>
    %7 = vector.extract_strided_slice %5 {offsets = [0, 0, 0, 0], sizes = [1, 8, 16, 1], strides = [1, 1, 1, 1]} : vector<1x8x16x3xf32> to vector<1x8x16x1xf32>
    %8 = vector.extract_strided_slice %6 {offsets = [0, 0], sizes = [1, 128], strides = [1, 1]} : vector<3x128xf32> to vector<1x128xf32>
    %9 = vector.shape_cast %8 : vector<1x128xf32> to vector<1x1x1x128xf32>
    %10 = vector.broadcast %7 : vector<1x8x16x1xf32> to vector<1x8x16x128xf32>
    %11 = vector.broadcast %9 : vector<1x1x1x128xf32> to vector<1x8x16x128xf32>
    %12 = arith.mulf %10, %11 : vector<1x8x16x128xf32>
    %13 = vector.extract_strided_slice %5 {offsets = [0, 0, 0, 1], sizes = [1, 8, 16, 1], strides = [1, 1, 1, 1]} : vector<1x8x16x3xf32> to vector<1x8x16x1xf32>
    %14 = vector.extract_strided_slice %6 {offsets = [1, 0], sizes = [1, 128], strides = [1, 1]} : vector<3x128xf32> to vector<1x128xf32>
    %15 = vector.shape_cast %14 : vector<1x128xf32> to vector<1x1x1x128xf32>
    %16 = vector.broadcast %13 : vector<1x8x16x1xf32> to vector<1x8x16x128xf32>
    %17 = vector.broadcast %15 : vector<1x1x1x128xf32> to vector<1x8x16x128xf32>
    %18 = arith.mulf %16, %17 : vector<1x8x16x128xf32>
    %19 = arith.addf %12, %18 : vector<1x8x16x128xf32>
    %20 = vector.extract_strided_slice %5 {offsets = [0, 0, 0, 2], sizes = [1, 8, 16, 1], strides = [1, 1, 1, 1]} : vector<1x8x16x3xf32> to vector<1x8x16x1xf32>
    %21 = vector.extract_strided_slice %6 {offsets = [2, 0], sizes = [1, 128], strides = [1, 1]} : vector<3x128xf32> to vector<1x128xf32>
    %22 = vector.shape_cast %21 : vector<1x128xf32> to vector<1x1x1x128xf32>
    %23 = vector.broadcast %20 : vector<1x8x16x1xf32> to vector<1x8x16x128xf32>
    %24 = vector.broadcast %22 : vector<1x1x1x128xf32> to vector<1x8x16x128xf32>
    %25 = arith.mulf %23, %24 : vector<1x8x16x128xf32>
    %26 = arith.addf %19, %25 : vector<1x8x16x128xf32>
    %27 = vector.shape_cast %26 : vector<1x8x16x128xf32> to vector<128x128xf32>
    %28 = arith.addf %3, %27 : vector<128x128xf32>
    %c0_11 = arith.constant 0 : index
    %c0_12 = arith.constant 0 : index
    %29 = vector.load %arg6[%c0_11, %c0_12] : memref<1x128xf32, #tpu.memory_space<vmem>>, vector<1x128xf32>
    %30 = vector.broadcast %29 : vector<1x128xf32> to vector<128x128xf32>
    %31 = arith.addf %28, %30 : vector<128x128xf32>
    %cst_13 = arith.constant 0.000000e+00 : f32
    %32 = vector.broadcast %cst_13 : f32 to vector<128x128xf32>
    %33 = arith.maximumf %31, %32 : vector<128x128xf32>
    %34 = arith.truncf %33 : vector<128x128xf32> to vector<128x128xbf16>
    %c0_14 = arith.constant 0 : index
    %c0_15 = arith.constant 0 : index
    %35 = vector.load %arg7[%c0_14, %c0_15] : memref<128x128xbf16, #tpu.memory_space<vmem>>, vector<128x128xbf16>
    %cst_16 = arith.constant dense<0.000000e+00> : vector<128x128xf32>
    %36 = tpu.matmul %34, %35, %cst_16 {dimension_numbers = #tpu.dot_dimension_numbers<[1], [0], [0], [1], [0, 0, 1, 1], [], []>} : vector<128x128xbf16>, vector<128x128xbf16>, vector<128x128xf32> -> vector<128x128xf32>
    %c0_17 = arith.constant 0 : index
    %c0_18 = arith.constant 0 : index
    %37 = vector.load %arg8[%c0_17, %c0_18] : memref<1x128xf32, #tpu.memory_space<vmem>>, vector<1x128xf32>
    %38 = vector.broadcast %37 : vector<1x128xf32> to vector<128x128xf32>
    %39 = arith.addf %36, %38 : vector<128x128xf32>
    %cst_19 = arith.constant 0.000000e+00 : f32
    %40 = vector.broadcast %cst_19 : f32 to vector<128x128xf32>
    %41 = arith.maximumf %39, %40 : vector<128x128xf32>
    %42 = arith.truncf %41 : vector<128x128xf32> to vector<128x128xbf16>
    %c0_20 = arith.constant 0 : index
    %c0_21 = arith.constant 0 : index
    %43 = vector.load %arg9[%c0_20, %c0_21] : memref<128x256xbf16, #tpu.memory_space<vmem>>, vector<128x256xbf16>
    %cst_22 = arith.constant dense<0.000000e+00> : vector<128x256xf32>
    %44 = tpu.matmul %42, %43, %cst_22 {dimension_numbers = #tpu.dot_dimension_numbers<[1], [0], [0], [1], [0, 0, 1, 1], [], []>} : vector<128x128xbf16>, vector<128x256xbf16>, vector<128x256xf32> -> vector<128x256xf32>
    %45 = vector.extract_strided_slice %44 {offsets = [0, 0], sizes = [16, 256], strides = [1, 1]} : vector<128x256xf32> to vector<16x256xf32>
    %46 = vector.extract_strided_slice %44 {offsets = [16, 0], sizes = [16, 256], strides = [1, 1]} : vector<128x256xf32> to vector<16x256xf32>
    %47 = arith.maximumf %45, %46 : vector<16x256xf32>
    %48 = vector.extract_strided_slice %44 {offsets = [32, 0], sizes = [16, 256], strides = [1, 1]} : vector<128x256xf32> to vector<16x256xf32>
    %49 = arith.maximumf %47, %48 : vector<16x256xf32>
    %50 = vector.extract_strided_slice %44 {offsets = [48, 0], sizes = [16, 256], strides = [1, 1]} : vector<128x256xf32> to vector<16x256xf32>
    %51 = arith.maximumf %49, %50 : vector<16x256xf32>
    %52 = vector.extract_strided_slice %44 {offsets = [64, 0], sizes = [16, 256], strides = [1, 1]} : vector<128x256xf32> to vector<16x256xf32>
    %53 = arith.maximumf %51, %52 : vector<16x256xf32>
    %54 = vector.extract_strided_slice %44 {offsets = [80, 0], sizes = [16, 256], strides = [1, 1]} : vector<128x256xf32> to vector<16x256xf32>
    %55 = arith.maximumf %53, %54 : vector<16x256xf32>
    %56 = vector.extract_strided_slice %44 {offsets = [96, 0], sizes = [16, 256], strides = [1, 1]} : vector<128x256xf32> to vector<16x256xf32>
    %57 = arith.maximumf %55, %56 : vector<16x256xf32>
    %58 = vector.extract_strided_slice %44 {offsets = [112, 0], sizes = [16, 256], strides = [1, 1]} : vector<128x256xf32> to vector<16x256xf32>
    %59 = arith.maximumf %57, %58 : vector<16x256xf32>
    %c0_23 = arith.constant 0 : index
    %c0_24 = arith.constant 0 : index
    %60 = vector.load %arg10[%c0_23, %c0_24] : memref<1x256xf32, #tpu.memory_space<vmem>>, vector<1x256xf32>
    %61 = vector.broadcast %60 : vector<1x256xf32> to vector<16x256xf32>
    %62 = arith.addf %59, %61 : vector<16x256xf32>
    %cst_25 = arith.constant 0.000000e+00 : f32
    %63 = vector.broadcast %cst_25 : f32 to vector<16x256xf32>
    %64 = arith.maximumf %62, %63 : vector<16x256xf32>
    %65 = arith.truncf %64 : vector<16x256xf32> to vector<16x256xbf16>
    %66 = vector.shape_cast %65 : vector<16x256xbf16> to vector<1x16x256xbf16>
    %c0_26 = arith.constant 0 : index
    %c0_27 = arith.constant 0 : index
    %c0_28 = arith.constant 0 : index
    %67 = vector.load %arg11[%c0_26, %c0_27, %c0_28] : memref<1x16x256xbf16, #tpu.memory_space<vmem>>, vector<1x16x256xbf16>
    tpu.vector_store %arg11[%c0_26, %c0_27, %c0_28], %66 {strides = array<i32>} : memref<1x16x256xbf16, #tpu.memory_space<vmem>>, vector<1x16x256xbf16>,
    return
  }
  func.func @transform_0(%arg0: i32, %arg1: i32) -> (i32, i32, i32, i32) {
    %c0_i32 = arith.constant 0 : i32
    %c0_i32_0 = arith.constant 0 : i32
    %c0_i32_1 = arith.constant 0 : i32
    return %arg0, %c0_i32, %arg1, %c0_i32_0 : i32, i32, i32, i32
  }
  func.func @transform_1(%arg0: i32, %arg1: i32) -> (i32, i32, i32, i32) {
    %c0_i32 = arith.constant 0 : i32
    %c0_i32_0 = arith.constant 0 : i32
    %c0_i32_1 = arith.constant 0 : i32
    return %arg0, %c0_i32, %arg1, %c0_i32_0 : i32, i32, i32, i32
  }
  func.func @transform_2(%arg0: i32, %arg1: i32) -> (i32, i32) {
    %c0_i32 = arith.constant 0 : i32
    %c0_i32_0 = arith.constant 0 : i32
    %c0_i32_1 = arith.constant 0 : i32
    return %c0_i32, %c0_i32_0 : i32, i32
  }
  func.func @transform_3(%arg0: i32, %arg1: i32) -> (i32, i32) {
    %c0_i32 = arith.constant 0 : i32
    %c0_i32_0 = arith.constant 0 : i32
    %c0_i32_1 = arith.constant 0 : i32
    return %c0_i32, %c0_i32_0 : i32, i32
  }
  func.func @transform_4(%arg0: i32, %arg1: i32) -> (i32, i32) {
    %c0_i32 = arith.constant 0 : i32
    %c0_i32_0 = arith.constant 0 : i32
    %c0_i32_1 = arith.constant 0 : i32
    return %c0_i32, %c0_i32_0 : i32, i32
  }
  func.func @transform_5(%arg0: i32, %arg1: i32) -> (i32, i32) {
    %c0_i32 = arith.constant 0 : i32
    %c0_i32_0 = arith.constant 0 : i32
    %c0_i32_1 = arith.constant 0 : i32
    return %c0_i32, %c0_i32_0 : i32, i32
  }
  func.func @transform_6(%arg0: i32, %arg1: i32) -> (i32, i32) {
    %c0_i32 = arith.constant 0 : i32
    %c0_i32_0 = arith.constant 0 : i32
    %c0_i32_1 = arith.constant 0 : i32
    return %c0_i32, %c0_i32_0 : i32, i32
  }
  func.func @transform_7(%arg0: i32, %arg1: i32) -> (i32, i32) {
    %c0_i32 = arith.constant 0 : i32
    %c0_i32_0 = arith.constant 0 : i32
    %c0_i32_1 = arith.constant 0 : i32
    return %c0_i32, %c0_i32_0 : i32, i32
  }
  func.func @transform_8(%arg0: i32, %arg1: i32) -> (i32, i32) {
    %c0_i32 = arith.constant 0 : i32
    %c0_i32_0 = arith.constant 0 : i32
    %c0_i32_1 = arith.constant 0 : i32
    return %c0_i32, %c0_i32_0 : i32, i32
  }
  func.func @transform_9(%arg0: i32, %arg1: i32) -> (i32, i32, i32) {
    %c0_i32 = arith.constant 0 : i32
    %c0_i32_0 = arith.constant 0 : i32
    return %arg0, %arg1, %c0_i32 : i32, i32, i32
  }
}

module attributes {stable_mosaic.version = 11 : i64} {
  func.func @_fp_mlp_kernel(%arg0: i32, %arg1: memref<16x256xbf16, #tpu.memory_space<vmem>>, %arg2: memref<16x256xbf16, #tpu.memory_space<vmem>>, %arg3: memref<256x256xbf16, #tpu.memory_space<vmem>>, %arg4: memref<256x256xbf16, #tpu.memory_space<vmem>>, %arg5: memref<1x256xf32, #tpu.memory_space<vmem>>, %arg6: memref<256x256xbf16, #tpu.memory_space<vmem>>, %arg7: memref<1x256xf32, #tpu.memory_space<vmem>>, %arg8: memref<16x256xbf16, #tpu.memory_space<vmem>>) attributes {dimension_semantics = [#tpu.dimension_semantics<parallel>], iteration_bounds = array<i64: 1>, scalar_prefetch = 0 : i64, scratch_operands = 0 : i64, tpu.core_type = #tpu.core_type<tc>, window_params = [{transform_indices = @transform_0, window_bounds = array<i64: 16, 256>}, {transform_indices = @transform_1, window_bounds = array<i64: 16, 256>}, {pipeline_mode = #tpu.pipeline_mode<synchronous>, transform_indices = @transform_2, window_bounds = array<i64: 256, 256>}, {pipeline_mode = #tpu.pipeline_mode<synchronous>, transform_indices = @transform_3, window_bounds = array<i64: 256, 256>}, {pipeline_mode = #tpu.pipeline_mode<synchronous>, transform_indices = @transform_4, window_bounds = array<i64: 1, 256>}, {pipeline_mode = #tpu.pipeline_mode<synchronous>, transform_indices = @transform_5, window_bounds = array<i64: 256, 256>}, {pipeline_mode = #tpu.pipeline_mode<synchronous>, transform_indices = @transform_6, window_bounds = array<i64: 1, 256>}, {transform_indices = @transform_7, window_bounds = array<i64: 16, 256>}]} {
    %c0 = arith.constant 0 : index
    %c0_0 = arith.constant 0 : index
    %0 = vector.load %arg1[%c0, %c0_0] : memref<16x256xbf16, #tpu.memory_space<vmem>>, vector<16x256xbf16>
    %c0_1 = arith.constant 0 : index
    %c0_2 = arith.constant 0 : index
    %1 = vector.load %arg3[%c0_1, %c0_2] : memref<256x256xbf16, #tpu.memory_space<vmem>>, vector<256x256xbf16>
    %cst = arith.constant dense<0.000000e+00> : vector<16x256xf32>
    %2 = tpu.matmul %0, %1, %cst {dimension_numbers = #tpu.dot_dimension_numbers<[1], [0], [0], [1], [0, 0, 1, 1], [], []>} : vector<16x256xbf16>, vector<256x256xbf16>, vector<16x256xf32> -> vector<16x256xf32>
    %c0_3 = arith.constant 0 : index
    %c0_4 = arith.constant 0 : index
    %3 = vector.load %arg2[%c0_3, %c0_4] : memref<16x256xbf16, #tpu.memory_space<vmem>>, vector<16x256xbf16>
    %c0_5 = arith.constant 0 : index
    %c0_6 = arith.constant 0 : index
    %4 = vector.load %arg4[%c0_5, %c0_6] : memref<256x256xbf16, #tpu.memory_space<vmem>>, vector<256x256xbf16>
    %cst_7 = arith.constant dense<0.000000e+00> : vector<16x256xf32>
    %5 = tpu.matmul %3, %4, %cst_7 {dimension_numbers = #tpu.dot_dimension_numbers<[1], [0], [0], [1], [0, 0, 1, 1], [], []>} : vector<16x256xbf16>, vector<256x256xbf16>, vector<16x256xf32> -> vector<16x256xf32>
    %6 = arith.addf %2, %5 : vector<16x256xf32>
    %c0_8 = arith.constant 0 : index
    %c0_9 = arith.constant 0 : index
    %7 = vector.load %arg5[%c0_8, %c0_9] : memref<1x256xf32, #tpu.memory_space<vmem>>, vector<1x256xf32>
    %8 = vector.broadcast %7 : vector<1x256xf32> to vector<16x256xf32>
    %9 = arith.addf %6, %8 : vector<16x256xf32>
    %cst_10 = arith.constant 0.000000e+00 : f32
    %10 = vector.broadcast %cst_10 : f32 to vector<16x256xf32>
    %11 = arith.maximumf %9, %10 : vector<16x256xf32>
    %12 = arith.truncf %11 : vector<16x256xf32> to vector<16x256xbf16>
    %c0_11 = arith.constant 0 : index
    %c0_12 = arith.constant 0 : index
    %13 = vector.load %arg6[%c0_11, %c0_12] : memref<256x256xbf16, #tpu.memory_space<vmem>>, vector<256x256xbf16>
    %cst_13 = arith.constant dense<0.000000e+00> : vector<16x256xf32>
    %14 = tpu.matmul %12, %13, %cst_13 {dimension_numbers = #tpu.dot_dimension_numbers<[1], [0], [0], [1], [0, 0, 1, 1], [], []>} : vector<16x256xbf16>, vector<256x256xbf16>, vector<16x256xf32> -> vector<16x256xf32>
    %c0_14 = arith.constant 0 : index
    %c0_15 = arith.constant 0 : index
    %15 = vector.load %arg7[%c0_14, %c0_15] : memref<1x256xf32, #tpu.memory_space<vmem>>, vector<1x256xf32>
    %16 = vector.broadcast %15 : vector<1x256xf32> to vector<16x256xf32>
    %17 = arith.addf %14, %16 : vector<16x256xf32>
    %cst_16 = arith.constant 0.000000e+00 : f32
    %18 = vector.broadcast %cst_16 : f32 to vector<16x256xf32>
    %19 = arith.maximumf %17, %18 : vector<16x256xf32>
    %20 = arith.truncf %19 : vector<16x256xf32> to vector<16x256xbf16>
    %c0_17 = arith.constant 0 : index
    %c0_18 = arith.constant 0 : index
    %21 = vector.load %arg8[%c0_17, %c0_18] : memref<16x256xbf16, #tpu.memory_space<vmem>>, vector<16x256xbf16>
    tpu.vector_store %arg8[%c0_17, %c0_18], %20 {strides = array<i32>} : memref<16x256xbf16, #tpu.memory_space<vmem>>, vector<16x256xbf16>,
    return
  }
  func.func @transform_0(%arg0: i32) -> (i32, i32) {
    %c0_i32 = arith.constant 0 : i32
    %c0_i32_0 = arith.constant 0 : i32
    return %arg0, %c0_i32 : i32, i32
  }
  func.func @transform_1(%arg0: i32) -> (i32, i32) {
    %c0_i32 = arith.constant 0 : i32
    %c0_i32_0 = arith.constant 0 : i32
    return %arg0, %c0_i32 : i32, i32
  }
  func.func @transform_2(%arg0: i32) -> (i32, i32) {
    %c0_i32 = arith.constant 0 : i32
    %c0_i32_0 = arith.constant 0 : i32
    %c0_i32_1 = arith.constant 0 : i32
    return %c0_i32, %c0_i32_0 : i32, i32
  }
  func.func @transform_3(%arg0: i32) -> (i32, i32) {
    %c0_i32 = arith.constant 0 : i32
    %c0_i32_0 = arith.constant 0 : i32
    %c0_i32_1 = arith.constant 0 : i32
    return %c0_i32, %c0_i32_0 : i32, i32
  }
  func.func @transform_4(%arg0: i32) -> (i32, i32) {
    %c0_i32 = arith.constant 0 : i32
    %c0_i32_0 = arith.constant 0 : i32
    %c0_i32_1 = arith.constant 0 : i32
    return %c0_i32, %c0_i32_0 : i32, i32
  }
  func.func @transform_5(%arg0: i32) -> (i32, i32) {
    %c0_i32 = arith.constant 0 : i32
    %c0_i32_0 = arith.constant 0 : i32
    %c0_i32_1 = arith.constant 0 : i32
    return %c0_i32, %c0_i32_0 : i32, i32
  }
  func.func @transform_6(%arg0: i32) -> (i32, i32) {
    %c0_i32 = arith.constant 0 : i32
    %c0_i32_0 = arith.constant 0 : i32
    %c0_i32_1 = arith.constant 0 : i32
    return %c0_i32, %c0_i32_0 : i32, i32
  }
  func.func @transform_7(%arg0: i32) -> (i32, i32) {
    %c0_i32 = arith.constant 0 : i32
    %c0_i32_0 = arith.constant 0 : i32
    return %arg0, %c0_i32 : i32, i32
  }
}

module attributes {stable_mosaic.version = 11 : i64} {
  func.func @_fp_mlp_kernel(%arg0: i32, %arg1: memref<16x256xbf16, #tpu.memory_space<vmem>>, %arg2: memref<16x256xbf16, #tpu.memory_space<vmem>>, %arg3: memref<256x256xbf16, #tpu.memory_space<vmem>>, %arg4: memref<256x256xbf16, #tpu.memory_space<vmem>>, %arg5: memref<1x256xf32, #tpu.memory_space<vmem>>, %arg6: memref<256x256xbf16, #tpu.memory_space<vmem>>, %arg7: memref<1x256xf32, #tpu.memory_space<vmem>>, %arg8: memref<16x256xf32, #tpu.memory_space<vmem>>) attributes {dimension_semantics = [#tpu.dimension_semantics<parallel>], iteration_bounds = array<i64: 2>, scalar_prefetch = 0 : i64, scratch_operands = 0 : i64, tpu.core_type = #tpu.core_type<tc>, window_params = [{transform_indices = @transform_0, window_bounds = array<i64: 16, 256>}, {transform_indices = @transform_1, window_bounds = array<i64: 16, 256>}, {pipeline_mode = #tpu.pipeline_mode<synchronous>, transform_indices = @transform_2, window_bounds = array<i64: 256, 256>}, {pipeline_mode = #tpu.pipeline_mode<synchronous>, transform_indices = @transform_3, window_bounds = array<i64: 256, 256>}, {pipeline_mode = #tpu.pipeline_mode<synchronous>, transform_indices = @transform_4, window_bounds = array<i64: 1, 256>}, {pipeline_mode = #tpu.pipeline_mode<synchronous>, transform_indices = @transform_5, window_bounds = array<i64: 256, 256>}, {pipeline_mode = #tpu.pipeline_mode<synchronous>, transform_indices = @transform_6, window_bounds = array<i64: 1, 256>}, {transform_indices = @transform_7, window_bounds = array<i64: 16, 256>}]} {
    %c0 = arith.constant 0 : index
    %c0_0 = arith.constant 0 : index
    %0 = vector.load %arg1[%c0, %c0_0] : memref<16x256xbf16, #tpu.memory_space<vmem>>, vector<16x256xbf16>
    %c0_1 = arith.constant 0 : index
    %c0_2 = arith.constant 0 : index
    %1 = vector.load %arg3[%c0_1, %c0_2] : memref<256x256xbf16, #tpu.memory_space<vmem>>, vector<256x256xbf16>
    %cst = arith.constant dense<0.000000e+00> : vector<16x256xf32>
    %2 = tpu.matmul %0, %1, %cst {dimension_numbers = #tpu.dot_dimension_numbers<[1], [0], [0], [1], [0, 0, 1, 1], [], []>} : vector<16x256xbf16>, vector<256x256xbf16>, vector<16x256xf32> -> vector<16x256xf32>
    %c0_3 = arith.constant 0 : index
    %c0_4 = arith.constant 0 : index
    %3 = vector.load %arg2[%c0_3, %c0_4] : memref<16x256xbf16, #tpu.memory_space<vmem>>, vector<16x256xbf16>
    %c0_5 = arith.constant 0 : index
    %c0_6 = arith.constant 0 : index
    %4 = vector.load %arg4[%c0_5, %c0_6] : memref<256x256xbf16, #tpu.memory_space<vmem>>, vector<256x256xbf16>
    %cst_7 = arith.constant dense<0.000000e+00> : vector<16x256xf32>
    %5 = tpu.matmul %3, %4, %cst_7 {dimension_numbers = #tpu.dot_dimension_numbers<[1], [0], [0], [1], [0, 0, 1, 1], [], []>} : vector<16x256xbf16>, vector<256x256xbf16>, vector<16x256xf32> -> vector<16x256xf32>
    %6 = arith.addf %2, %5 : vector<16x256xf32>
    %c0_8 = arith.constant 0 : index
    %c0_9 = arith.constant 0 : index
    %7 = vector.load %arg5[%c0_8, %c0_9] : memref<1x256xf32, #tpu.memory_space<vmem>>, vector<1x256xf32>
    %8 = vector.broadcast %7 : vector<1x256xf32> to vector<16x256xf32>
    %9 = arith.addf %6, %8 : vector<16x256xf32>
    %cst_10 = arith.constant 0.000000e+00 : f32
    %10 = vector.broadcast %cst_10 : f32 to vector<16x256xf32>
    %11 = arith.maximumf %9, %10 : vector<16x256xf32>
    %12 = arith.truncf %11 : vector<16x256xf32> to vector<16x256xbf16>
    %c0_11 = arith.constant 0 : index
    %c0_12 = arith.constant 0 : index
    %13 = vector.load %arg6[%c0_11, %c0_12] : memref<256x256xbf16, #tpu.memory_space<vmem>>, vector<256x256xbf16>
    %cst_13 = arith.constant dense<0.000000e+00> : vector<16x256xf32>
    %14 = tpu.matmul %12, %13, %cst_13 {dimension_numbers = #tpu.dot_dimension_numbers<[1], [0], [0], [1], [0, 0, 1, 1], [], []>} : vector<16x256xbf16>, vector<256x256xbf16>, vector<16x256xf32> -> vector<16x256xf32>
    %c0_14 = arith.constant 0 : index
    %c0_15 = arith.constant 0 : index
    %15 = vector.load %arg7[%c0_14, %c0_15] : memref<1x256xf32, #tpu.memory_space<vmem>>, vector<1x256xf32>
    %16 = vector.broadcast %15 : vector<1x256xf32> to vector<16x256xf32>
    %17 = arith.addf %14, %16 : vector<16x256xf32>
    %cst_16 = arith.constant 0.000000e+00 : f32
    %18 = vector.broadcast %cst_16 : f32 to vector<16x256xf32>
    %19 = arith.maximumf %17, %18 : vector<16x256xf32>
    %c0_17 = arith.constant 0 : index
    %c0_18 = arith.constant 0 : index
    %20 = vector.load %arg8[%c0_17, %c0_18] : memref<16x256xf32, #tpu.memory_space<vmem>>, vector<16x256xf32>
    tpu.vector_store %arg8[%c0_17, %c0_18], %19 {strides = array<i32>} : memref<16x256xf32, #tpu.memory_space<vmem>>, vector<16x256xf32>,
    return
  }
  func.func @transform_0(%arg0: i32) -> (i32, i32) {
    %c0_i32 = arith.constant 0 : i32
    %c0_i32_0 = arith.constant 0 : i32
    return %arg0, %c0_i32 : i32, i32
  }
  func.func @transform_1(%arg0: i32) -> (i32, i32) {
    %c0_i32 = arith.constant 0 : i32
    %c0_i32_0 = arith.constant 0 : i32
    return %arg0, %c0_i32 : i32, i32
  }
  func.func @transform_2(%arg0: i32) -> (i32, i32) {
    %c0_i32 = arith.constant 0 : i32
    %c0_i32_0 = arith.constant 0 : i32
    %c0_i32_1 = arith.constant 0 : i32
    return %c0_i32, %c0_i32_0 : i32, i32
  }
  func.func @transform_3(%arg0: i32) -> (i32, i32) {
    %c0_i32 = arith.constant 0 : i32
    %c0_i32_0 = arith.constant 0 : i32
    %c0_i32_1 = arith.constant 0 : i32
    return %c0_i32, %c0_i32_0 : i32, i32
  }
  func.func @transform_4(%arg0: i32) -> (i32, i32) {
    %c0_i32 = arith.constant 0 : i32
    %c0_i32_0 = arith.constant 0 : i32
    %c0_i32_1 = arith.constant 0 : i32
    return %c0_i32, %c0_i32_0 : i32, i32
  }
  func.func @transform_5(%arg0: i32) -> (i32, i32) {
    %c0_i32 = arith.constant 0 : i32
    %c0_i32_0 = arith.constant 0 : i32
    %c0_i32_1 = arith.constant 0 : i32
    return %c0_i32, %c0_i32_0 : i32, i32
  }
  func.func @transform_6(%arg0: i32) -> (i32, i32) {
    %c0_i32 = arith.constant 0 : i32
    %c0_i32_0 = arith.constant 0 : i32
    %c0_i32_1 = arith.constant 0 : i32
    return %c0_i32, %c0_i32_0 : i32, i32
  }
  func.func @transform_7(%arg0: i32) -> (i32, i32) {
    %c0_i32 = arith.constant 0 : i32
    %c0_i32_0 = arith.constant 0 : i32
    return %arg0, %c0_i32 : i32, i32
  }
}

</mosaic_0001>

<llo_original>
// kernel: custom-call.34
$region0: #{custom-call.34}
  %s0 = inlined_call_operand.vmem [shape: f32[2,64], index: 0, kind: output, shape index: {}]

// kernel: custom-call.35
$region0: #{custom-call.35}
  %s0 = inlined_call_operand.vmem [shape: f32[2,32], index: 0, kind: output, shape index: {}]

// kernel: custom-call.36
$region0: #{custom-call.36}
  %s0 = inlined_call_operand.vmem [shape: f32[2,16], index: 0, kind: output, shape index: {}]

// kernel: _lambda_.6
$region0: #{_lambda_.6}
  #allocation0 [shape = 'u32[]', space=smem, size = 0x4, offset = 0x4, fixed_abs, tag = 'smem constant byte address 0x4 - core index']
  #allocation1 [shape = 'u32[144,128]{1,0:T(1,128)}', space=vmem, size = 0x12000, scoped, tag = 'internal scratch']
  %s0 = inlined_call_operand.vmem [shape: bf16[2,8,32,3], index: 0, kind: input, shape index: {}]
  %s1 = inlined_call_operand.vmem [shape: f32[3,128], index: 1, kind: input, shape index: {}]
  %s2 = inlined_call_operand.vmem [shape: f32[1,128], index: 2, kind: input, shape index: {}, may-alias: {2,4,6}]
  %s3 = inlined_call_operand.vmem [shape: bf16[128,128], index: 3, kind: input, shape index: {}]
  %s4 = inlined_call_operand.vmem [shape: f32[1,128], index: 4, kind: input, shape index: {}, may-alias: {2,4,6}]
  %s5 = inlined_call_operand.vmem [shape: bf16[128,128], index: 5, kind: input, shape index: {}]
  %s6 = inlined_call_operand.vmem [shape: f32[1,128], index: 6, kind: input, shape index: {}, may-alias: {2,4,6}]
  %s7 = inlined_call_operand.vmem [shape: bf16[2,32,128], index: 7, kind: output, shape index: {}]
  %s8 = sld [smem:[#allocation0]]
  $region61: #{_lambda_.6} parent=0
    _
  %s10 = ssub.s32 1, %s8
  %s11 = scalar_select 0, %s10, %s8
  loop: start=0, step=1, limit=4
  $region2: #{_lambda_.6} parent=0 // loop_pre_header
    _
  $region3: #{_lambda_.6} parent=0 // loop_header
    %s13 = sphi 0, %s17
    %p14 = scmp.ge.s32.totalorder %s13, 4
    %s20 = sphi 0, %s32
    %s21 = sphi 0, %s28
    %s22 = sphi 0, %s20
    %s23 = sphi 0, %s21
    %s24 = sphi 0, %s22
    %s25 = sphi 0, %s23
    %s37 = sphi 0, %s39
    %s40 = sphi 0, %s37
    %s41 = sphi 0, %s40
    %s57 = sphi 0, %s41
    %s61 = sphi 0, %s61
    %s63 = sphi 0, %s61
    %s64 = sphi 0, %s63
    %s78 = sphi 0, %s64
    %s82 = sphi 0, %s82
    %s84 = sphi 0, %s82
    %s85 = sphi 0, %s84
    %s99 = sphi 0, %s85
    %s103 = sphi 0, %s103
    %s105 = sphi 0, %s103
    %s106 = sphi 0, %s105
    %s120 = sphi 0, %s106
    %s124 = sphi 0, %s124
    %s126 = sphi 0, %s124
    %s127 = sphi 0, %s126
    %s141 = sphi 0, %s127
    %s145 = sphi 0, %s145
    %s147 = sphi 0, %s145
    %s148 = sphi 0, %s147
    %s162 = sphi 0, %s148
    %s166 = sphi 0, %s166
    %s168 = sphi 0, %s166
    %s169 = sphi 0, %s168
    %s183 = sphi 0, %s169
    %s191 = sphi 0, %s193
    %s194 = sphi 0, %s191
    %s195 = sphi 0, %s194
    %s211 = sphi 0, %s195
  $region4: #{_lambda_.6} parent=0 // loop_header_branch
    %16 = sbr.rel (%p14) target = $region8
  $region5: #{_lambda_.6} parent=0 // loop_body
    %s18 = ssub.s32 %s13, 1
    %s19 = ssub.s32 %s13, 2
    %s26 = sadd.s32 1, %s21
    %p27 = scmp.ge.s32.totalorder %s26, 1
    %s28 = scalar_select %p27, 0, %s26
    %s29 = sadd.s32 1, %s20
    %s30 = scalar_select %p27, %s29, %s20
    %p31 = scmp.ge.s32.totalorder %s30, 2
    %s32 = scalar_select %p31, 0, %s30
    %s33 = ssub.s32 %s20, %s32
    %s34 = ssub.s32 %s21, %s28
    %s35 = sor.u32 %s33, %s34
    %p36 = scmp.eq.s32.totalorder %s35, 0
    %s38 = sadd.s32 %s37, 1
    %s39 = scalar_select %p36, %s37, %s38
    %p42 = pneg %p36
    %p43 = scmp.eq.s32.totalorder %s13, 1
    %p44 = por %p42, %p43
    %p45 = scmp.ne.s32.totalorder %s37, %s40
    %p46 = scmp.eq.s32.totalorder %s13, 0
    %p47 = por %p45, %p46
    %p48 = scmp.ne.s32.totalorder %s37, %s40
    %p49 = scmp.eq.s32.totalorder %s18, 1
    %p50 = por %p48, %p49
    %p51 = scmp.ne.s32.totalorder %s40, %s41
    %p52 = scmp.eq.s32.totalorder %s18, 0
    %p53 = por %p51, %p52
    %p54 = scmp.ne.s32.totalorder %s40, %s41
    %p55 = scmp.eq.s32.totalorder %s19, 1
    %p56 = por %p54, %p55
    %p58 = scmp.ne.s32.totalorder %s41, %s57
    %p59 = scmp.eq.s32.totalorder %s19, 0
    %p60 = por %p58, %p59
    %s62 = sadd.s32 %s61, 1
    %p65 = scmp.eq.s32.totalorder %s13, 1
    %p66 = scmp.ne.s32.totalorder %s61, %s63
    %p67 = scmp.eq.s32.totalorder %s13, 0
    %p68 = por %p66, %p67
    %p69 = scmp.ne.s32.totalorder %s61, %s63
    %p70 = scmp.eq.s32.totalorder %s18, 1
    %p71 = por %p69, %p70
    %p72 = scmp.ne.s32.totalorder %s63, %s64
    %p73 = scmp.eq.s32.totalorder %s18, 0
    %p74 = por %p72, %p73
    %p75 = scmp.ne.s32.totalorder %s63, %s64
    %p76 = scmp.eq.s32.totalorder %s19, 1
    %p77 = por %p75, %p76
    %p79 = scmp.ne.s32.totalorder %s64, %s78
    %p80 = scmp.eq.s32.totalorder %s19, 0
    %p81 = por %p79, %p80
    %s83 = sadd.s32 %s82, 1
    %p86 = scmp.eq.s32.totalorder %s13, 1
    %p87 = scmp.ne.s32.totalorder %s82, %s84
    %p88 = scmp.eq.s32.totalorder %s13, 0
    %p89 = por %p87, %p88
    %p90 = scmp.ne.s32.totalorder %s82, %s84
    %p91 = scmp.eq.s32.totalorder %s18, 1
    %p92 = por %p90, %p91
    %p93 = scmp.ne.s32.totalorder %s84, %s85
    %p94 = scmp.eq.s32.totalorder %s18, 0
    %p95 = por %p93, %p94
    %p96 = scmp.ne.s32.totalorder %s84, %s85
    %p97 = scmp.eq.s32.totalorder %s19, 1
    %p98 = por %p96, %p97
    %p100 = scmp.ne.s32.totalorder %s85, %s99
    %p101 = scmp.eq.s32.totalorder %s19, 0
    %p102 = por %p100, %p101
    %s104 = sadd.s32 %s103, 1
    %p107 = scmp.eq.s32.totalorder %s13, 1
    %p108 = scmp.ne.s32.totalorder %s103, %s105
    %p109 = scmp.eq.s32.totalorder %s13, 0
    %p110 = por %p108, %p109
    %p111 = scmp.ne.s32.totalorder %s103, %s105
    %p112 = scmp.eq.s32.totalorder %s18, 1
    %p113 = por %p111, %p112
    %p114 = scmp.ne.s32.totalorder %s105, %s106
    %p115 = scmp.eq.s32.totalorder %s18, 0
    %p116 = por %p114, %p115
    %p117 = scmp.ne.s32.totalorder %s105, %s106
    %p118 = scmp.eq.s32.totalorder %s19, 1
    %p119 = por %p117, %p118
    %p121 = scmp.ne.s32.totalorder %s106, %s120
    %p122 = scmp.eq.s32.totalorder %s19, 0
    %p123 = por %p121, %p122
    %s125 = sadd.s32 %s124, 1
    %p128 = scmp.eq.s32.totalorder %s13, 1
    %p129 = scmp.ne.s32.totalorder %s124, %s126
    %p130 = scmp.eq.s32.totalorder %s13, 0
    %p131 = por %p129, %p130
    %p132 = scmp.ne.s32.totalorder %s124, %s126
    %p133 = scmp.eq.s32.totalorder %s18, 1
    %p134 = por %p132, %p133
    %p135 = scmp.ne.s32.totalorder %s126, %s127
    %p136 = scmp.eq.s32.totalorder %s18, 0
    %p137 = por %p135, %p136
    %p138 = scmp.ne.s32.totalorder %s126, %s127
    %p139 = scmp.eq.s32.totalorder %s19, 1
    %p140 = por %p138, %p139
    %p142 = scmp.ne.s32.totalorder %s127, %s141
    %p143 = scmp.eq.s32.totalorder %s19, 0
    %p144 = por %p142, %p143
    %s146 = sadd.s32 %s145, 1
    %p149 = scmp.eq.s32.totalorder %s13, 1
    %p150 = scmp.ne.s32.totalorder %s145, %s147
    %p151 = scmp.eq.s32.totalorder %s13, 0
    %p152 = por %p150, %p151
    %p153 = scmp.ne.s32.totalorder %s145, %s147
    %p154 = scmp.eq.s32.totalorder %s18, 1
    %p155 = por %p153, %p154
    %p156 = scmp.ne.s32.totalorder %s147, %s148
    %p157 = scmp.eq.s32.totalorder %s18, 0
    %p158 = por %p156, %p157
    %p159 = scmp.ne.s32.totalorder %s147, %s148
    %p160 = scmp.eq.s32.totalorder %s19, 1
    %p161 = por %p159, %p160
    %p163 = scmp.ne.s32.totalorder %s148, %s162
    %p164 = scmp.eq.s32.totalorder %s19, 0
    %p165 = por %p163, %p164
    %s167 = sadd.s32 %s166, 1
    %p170 = scmp.eq.s32.totalorder %s13, 1
    %p171 = scmp.ne.s32.totalorder %s166, %s168
    %p172 = scmp.eq.s32.totalorder %s13, 0
    %p173 = por %p171, %p172
    %p174 = scmp.ne.s32.totalorder %s166, %s168
    %p175 = scmp.eq.s32.totalorder %s18, 1
    %p176 = por %p174, %p175
    %p177 = scmp.ne.s32.totalorder %s168, %s169
    %p178 = scmp.eq.s32.totalorder %s18, 0
    %p179 = por %p177, %p178
    %p180 = scmp.ne.s32.totalorder %s168, %s169
    %p181 = scmp.eq.s32.totalorder %s19, 1
    %p182 = por %p180, %p181
    %p184 = scmp.ne.s32.totalorder %s169, %s183
    %p185 = scmp.eq.s32.totalorder %s19, 0
    %p186 = por %p184, %p185
    %s187 = ssub.s32 %s20, %s32
    %s188 = ssub.s32 %s21, %s28
    %s189 = sor.u32 %s187, %s188
    %p190 = scmp.eq.s32.totalorder %s189, 0
    %s192 = sadd.s32 %s191, 1
    %s193 = scalar_select %p190, %s191, %s192
    %p196 = pneg %p190
    %p197 = scmp.eq.s32.totalorder %s13, 1
    %p198 = por %p196, %p197
    %p199 = scmp.ne.s32.totalorder %s191, %s194
    %p200 = scmp.eq.s32.totalorder %s13, 0
    %p201 = por %p199, %p200
    %p202 = scmp.ne.s32.totalorder %s191, %s194
    %p203 = scmp.eq.s32.totalorder %s18, 1
    %p204 = por %p202, %p203
    %p205 = scmp.ne.s32.totalorder %s194, %s195
    %p206 = scmp.eq.s32.totalorder %s18, 0
    %p207 = por %p205, %p206
    %p208 = scmp.ne.s32.totalorder %s194, %s195
    %p209 = scmp.eq.s32.totalorder %s19, 1
    %p210 = por %p208, %p209
    %p212 = scmp.ne.s32.totalorder %s195, %s211
    %p213 = scmp.eq.s32.totalorder %s19, 0
    %p214 = por %p212, %p213
    %p215 = scmp.le.s32.totalorder 1, %s13
    %p216 = scmp.lt.s32.totalorder %s13, 3
    %p217 = pnand %p215, %p216
    %p218 = pneg %p217
    // Predicated region
    $region9: #{_lambda_.6} parent=5 // pred_check
      _
    $region10: #{_lambda_.6} parent=5 // pred_check_branch
      %220 = sbr.rel (%p217) target = $region12
    $region11: #{_lambda_.6} parent=5 // pred_region
      %s221 = ssub.s32 %s13, 1
      // Predicated region
      $region13: #{_lambda_.6} parent=11 // pred_check
        %p222 = pneg %p74
      $region14: #{_lambda_.6} parent=11 // pred_check_branch
        %224 = sbr.rel (%p222) target = $region16
      $region15: #{_lambda_.6} parent=11 // pred_region
        _
      $region16: #{_lambda_.6} parent=11 // pred_fallthru
        _
      // Predicated region
      $region17: #{_lambda_.6} parent=11 // pred_check
        %p225 = pneg %p95
      $region18: #{_lambda_.6} parent=11 // pred_check_branch
        %227 = sbr.rel (%p225) target = $region20
      $region19: #{_lambda_.6} parent=11 // pred_region
        _
      $region20: #{_lambda_.6} parent=11 // pred_fallthru
        _
      // Predicated region
      $region21: #{_lambda_.6} parent=11 // pred_check
        %p228 = pneg %p116
      $region22: #{_lambda_.6} parent=11 // pred_check_branch
        %230 = sbr.rel (%p228) target = $region24
      $region23: #{_lambda_.6} parent=11 // pred_region
        _
      $region24: #{_lambda_.6} parent=11 // pred_fallthru
        _
      // Predicated region
      $region25: #{_lambda_.6} parent=11 // pred_check
        %p231 = pneg %p137
      $region26: #{_lambda_.6} parent=11 // pred_check_branch
        %233 = sbr.rel (%p231) target = $region28
      $region27: #{_lambda_.6} parent=11 // pred_region
        _
      $region28: #{_lambda_.6} parent=11 // pred_fallthru
        _
      // Predicated region
      $region29: #{_lambda_.6} parent=11 // pred_check
        %p234 = pneg %p158
      $region30: #{_lambda_.6} parent=11 // pred_check_branch
        %236 = sbr.rel (%p234) target = $region32
      $region31: #{_lambda_.6} parent=11 // pred_region
        _
      $region32: #{_lambda_.6} parent=11 // pred_fallthru
        _
      // Predicated region
      $region33: #{_lambda_.6} parent=11 // pred_check
        %p237 = pneg %p179
      $region34: #{_lambda_.6} parent=11 // pred_check_branch
        %239 = sbr.rel (%p237) target = $region36
      $region35: #{_lambda_.6} parent=11 // pred_region
        _
      $region36: #{_lambda_.6} parent=11 // pred_fallthru
        _
    $region12: #{_lambda_.6} parent=5 // pred_fallthru
      _
    %p240 = scmp.lt.s32.totalorder %s13, 2
    // Predicated region
    $region37: #{_lambda_.6} parent=5 // pred_check
      %p241 = pneg %p240
    $region38: #{_lambda_.6} parent=5 // pred_check_branch
      %243 = sbr.rel (%p241) target = $region40
    $region39: #{_lambda_.6} parent=5 // pred_region
      // Predicated region
      $region41: #{_lambda_.6} parent=39 // pred_check
        %p244 = pneg %p47
      $region42: #{_lambda_.6} parent=39 // pred_check_branch
        %246 = sbr.rel (%p244) target = $region44
      $region43: #{_lambda_.6} parent=39 // pred_region
        %s247 = smul.u32 4, %s21
        %p248 = scmp.lt.s32.totalorder %s20, 1
        %s249 = scalar_select %p248, %s20, 1
        %p250 = scmp.lt.s32.totalorder %s247, 3
        %s251 = scalar_select %p250, %s247, 3
        %s252 = smul.addr %s249, 32
        %s253 = sadd.s32 %s251, %s252
        %s254 = smul.addr %s253, 4
        %s255 = scalar_lea.vmem %s0, %s254
        %s256 = smul.u32 4, %s21
      $region44: #{_lambda_.6} parent=39 // pred_fallthru
        _
    $region40: #{_lambda_.6} parent=5 // pred_fallthru
      _
    %p257 = scmp.le.s32.totalorder 1, %s13
    %p258 = scmp.lt.s32.totalorder %s13, 3
    %p259 = pnand %p257, %p258
    %p260 = pneg %p259
    // Predicated region
    $region45: #{_lambda_.6} parent=5 // pred_check
      _
    $region46: #{_lambda_.6} parent=5 // pred_check_branch
      %262 = sbr.rel (%p259) target = $region48
    $region47: #{_lambda_.6} parent=5 // pred_region
      %s263 = ssub.s32 %s13, 1
      %s264 = smul.u32 4, %s23
      %p265 = scmp.lt.s32.totalorder %s22, 1
      %s266 = scalar_select %p265, %s22, 1
      %p267 = scmp.lt.s32.totalorder %s264, 3
      %s268 = scalar_select %p267, %s264, 3
      %s269 = smul.addr %s266, 32
      %s270 = sadd.s32 %s268, %s269
      %s271 = smul.addr %s270, 4
      %s272 = scalar_lea.vmem %s0, %s271
      %p273 = pneg %p53
      %p274 = pneg %p50
      %p275 = pneg %p74
      %p276 = pneg %p71
      %p277 = pneg %p95
      %p278 = pneg %p92
      %p279 = pneg %p116
      %p280 = pneg %p113
      %p281 = pneg %p137
      %p282 = pneg %p134
      %p283 = pneg %p158
      %p284 = pneg %p155
      %p285 = pneg %p179
      %p286 = pneg %p176
      %p287 = pneg %p207
      %p288 = pneg %p204
      %s289 = smul.u32 4, %s23
      %p290 = scmp.lt.s32.totalorder %s22, 1
      %s291 = scalar_select %p290, %s22, 1
      %p292 = scmp.lt.s32.totalorder %s289, 3
      %s293 = scalar_select %p292, %s289, 3
      %s294 = smul.addr %s291, 4
      %s295 = sadd.s32 %s293, %s294
      %s296 = smul.addr %s295, 4
      %s297 = scalar_lea.vmem %s7, %s296
      %s298 = smul.u32 4, %s23
      %p299 = scmp.lt.s32.totalorder %s22, 1
      %s300 = scalar_select %p299, %s22, 1
      %p301 = scmp.lt.s32.totalorder %s298, 3
      %s302 = scalar_select %p301, %s298, 3
      %s303 = smul.addr %s300, 32
      %s304 = sadd.s32 %s302, %s303
      %s305 = smul.addr %s304, 4
      %s306 = scalar_lea.vmem %s0, %s305
      %s307 = smul.u32 4, %s23
      %s308 = smul.u32 4, %s23
      %p309 = scmp.lt.s32.totalorder %s22, 1
      %s310 = scalar_select %p309, %s22, 1
      %p311 = scmp.lt.s32.totalorder %s308, 3
      %s312 = scalar_select %p311, %s308, 3
      %s313 = smul.addr %s310, 4
      %s314 = sadd.s32 %s312, %s313
      %s315 = smul.addr %s314, 4
      %s316 = scalar_lea.vmem %s7, %s315
      %s317 = smul.u32 4, %s23
      %v319 = vld [vmem:[%s306] sm:$0xf]
      %v320 = vld [vmem:[%s306 + $0x4] sm:$0xf]
      %v321 = vld [vmem:[%s306 + $0x8] sm:$0xf]
      %v322 = vld [vmem:[%s306 + $0xc] sm:$0xf]
      %v323 = vld [vmem:[%s306 + $0x10] sm:$0xf]
      %v324 = vld [vmem:[%s306 + $0x14] sm:$0xf]
      %v325 = vld [vmem:[%s306 + $0x18] sm:$0xf]
      %v326 = vld [vmem:[%s306 + $0x1c] sm:$0xf]
      %v327 = vld [vmem:[%s306 + $0x20] sm:$0xf]
      %v328 = vld [vmem:[%s306 + $0x24] sm:$0xf]
      %v329 = vld [vmem:[%s306 + $0x28] sm:$0xf]
      %v330 = vld [vmem:[%s306 + $0x2c] sm:$0xf]
      %v331 = vld [vmem:[%s306 + $0x30] sm:$0xf]
      %v332 = vld [vmem:[%s306 + $0x34] sm:$0xf]
      %v333 = vld [vmem:[%s306 + $0x38] sm:$0xf]
      %v334 = vld [vmem:[%s306 + $0x3c] sm:$0xf]
      %v335 = vld [vmem:[%s306 + $0x40] sm:$0xf]
      %v336 = vld [vmem:[%s306 + $0x44] sm:$0xf]
      %v337 = vld [vmem:[%s306 + $0x48] sm:$0xf]
      %v338 = vld [vmem:[%s306 + $0x4c] sm:$0xf]
      %v339 = vld [vmem:[%s306 + $0x50] sm:$0xf]
      %v340 = vld [vmem:[%s306 + $0x54] sm:$0xf]
      %v341 = vld [vmem:[%s306 + $0x58] sm:$0xf]
      %v342 = vld [vmem:[%s306 + $0x5c] sm:$0xf]
      %v343 = vld [vmem:[%s306 + $0x60] sm:$0xf]
      %v344 = vld [vmem:[%s306 + $0x64] sm:$0xf]
      %v345 = vld [vmem:[%s306 + $0x68] sm:$0xf]
      %v346 = vld [vmem:[%s306 + $0x6c] sm:$0xf]
      %v347 = vld [vmem:[%s306 + $0x70] sm:$0xf]
      %v348 = vld [vmem:[%s306 + $0x74] sm:$0xf]
      %v349 = vld [vmem:[%s306 + $0x78] sm:$0xf]
      %v350 = vld [vmem:[%s306 + $0x7c] sm:$0xf]
      %v351 = vunpack.c.l.bf16 %v319
      %v352 = vunpack.c.l.bf16 %v320
      %v353 = vunpack.c.l.bf16 %v321
      %v354 = vunpack.c.l.bf16 %v322
      %v355 = vunpack.c.l.bf16 %v323
      %v356 = vunpack.c.l.bf16 %v324
      %v357 = vunpack.c.l.bf16 %v325
      %v358 = vunpack.c.l.bf16 %v326
      %v359 = vunpack.c.l.bf16 %v327
      %v360 = vunpack.c.l.bf16 %v328
      %v361 = vunpack.c.l.bf16 %v329
      %v362 = vunpack.c.l.bf16 %v330
      %v363 = vunpack.c.l.bf16 %v331
      %v364 = vunpack.c.l.bf16 %v332
      %v365 = vunpack.c.l.bf16 %v333
      %v366 = vunpack.c.l.bf16 %v334
      %v367 = vunpack.c.l.bf16 %v335
      %v368 = vunpack.c.l.bf16 %v336
      %v369 = vunpack.c.l.bf16 %v337
      %v370 = vunpack.c.l.bf16 %v338
      %v371 = vunpack.c.l.bf16 %v339
      %v372 = vunpack.c.l.bf16 %v340
      %v373 = vunpack.c.l.bf16 %v341
      %v374 = vunpack.c.l.bf16 %v342
      %v375 = vunpack.c.l.bf16 %v343
      %v376 = vunpack.c.l.bf16 %v344
      %v377 = vunpack.c.l.bf16 %v345
      %v378 = vunpack.c.l.bf16 %v346
      %v379 = vunpack.c.l.bf16 %v347
      %v380 = vunpack.c.l.bf16 %v348
      %v381 = vunpack.c.l.bf16 %v349
      %v382 = vunpack.c.l.bf16 %v350
      %v383 = vld [vmem:[%s1] sm:$0x7]
      %385 = vset.pattern.permute.xlu0 0
      %386 = vperm.xlu0 %385, %v351
      %v387 = vpop.permute.xlu0 %386
      %390 = vset.pattern.permute.xlu0 0
      %391 = vperm.xlu0 %390, %v352
      %v392 = vpop.permute.xlu0 %391
      %395 = vset.pattern.permute.xlu0 0
      %396 = vperm.xlu0 %395, %v353
      %v397 = vpop.permute.xlu0 %396
      %400 = vset.pattern.permute.xlu0 0
      %401 = vperm.xlu0 %400, %v354
      %v402 = vpop.permute.xlu0 %401
      %405 = vset.pattern.permute.xlu0 0
      %406 = vperm.xlu0 %405, %v355
      %v407 = vpop.permute.xlu0 %406
      %410 = vset.pattern.permute.xlu0 0
      %411 = vperm.xlu0 %410, %v356
      %v412 = vpop.permute.xlu0 %411
      %415 = vset.pattern.permute.xlu0 0
      %416 = vperm.xlu0 %415, %v357
      %v417 = vpop.permute.xlu0 %416
      %420 = vset.pattern.permute.xlu0 0
      %421 = vperm.xlu0 %420, %v358
      %v422 = vpop.permute.xlu0 %421
      %425 = vset.pattern.permute.xlu0 0
      %426 = vperm.xlu0 %425, %v359
      %v427 = vpop.permute.xlu0 %426
      %430 = vset.pattern.permute.xlu0 0
      %431 = vperm.xlu0 %430, %v360
      %v432 = vpop.permute.xlu0 %431
      %435 = vset.pattern.permute.xlu0 0
      %436 = vperm.xlu0 %435, %v361
      %v437 = vpop.permute.xlu0 %436
      %440 = vset.pattern.permute.xlu0 0
      %441 = vperm.xlu0 %440, %v362
      %v442 = vpop.permute.xlu0 %441
      %445 = vset.pattern.permute.xlu0 0
      %446 = vperm.xlu0 %445, %v363
      %v447 = vpop.permute.xlu0 %446
      %450 = vset.pattern.permute.xlu0 0
      %451 = vperm.xlu0 %450, %v364
      %v452 = vpop.permute.xlu0 %451
      %455 = vset.pattern.permute.xlu0 0
      %456 = vperm.xlu0 %455, %v365
      %v457 = vpop.permute.xlu0 %456
      %460 = vset.pattern.permute.xlu0 0
      %461 = vperm.xlu0 %460, %v366
      %v462 = vpop.permute.xlu0 %461
      %465 = vset.pattern.permute.xlu0 0
      %466 = vperm.xlu0 %465, %v367
      %v467 = vpop.permute.xlu0 %466
      %470 = vset.pattern.permute.xlu0 0
      %471 = vperm.xlu0 %470, %v368
      %v472 = vpop.permute.xlu0 %471
      %475 = vset.pattern.permute.xlu0 0
      %476 = vperm.xlu0 %475, %v369
      %v477 = vpop.permute.xlu0 %476
      %480 = vset.pattern.permute.xlu0 0
      %481 = vperm.xlu0 %480, %v370
      %v482 = vpop.permute.xlu0 %481
      %485 = vset.pattern.permute.xlu0 0
      %486 = vperm.xlu0 %485, %v371
      %v487 = vpop.permute.xlu0 %486
      %490 = vset.pattern.permute.xlu0 0
      %491 = vperm.xlu0 %490, %v372
      %v492 = vpop.permute.xlu0 %491
      %495 = vset.pattern.permute.xlu0 0
      %496 = vperm.xlu0 %495, %v373
      %v497 = vpop.permute.xlu0 %496
      %500 = vset.pattern.permute.xlu0 0
      %501 = vperm.xlu0 %500, %v374
      %v502 = vpop.permute.xlu0 %501
      %505 = vset.pattern.permute.xlu0 0
      %506 = vperm.xlu0 %505, %v375
      %v507 = vpop.permute.xlu0 %506
      %510 = vset.pattern.permute.xlu0 0
      %511 = vperm.xlu0 %510, %v376
      %v512 = vpop.permute.xlu0 %511
      %515 = vset.pattern.permute.xlu0 0
      %516 = vperm.xlu0 %515, %v377
      %v517 = vpop.permute.xlu0 %516
      %520 = vset.pattern.permute.xlu0 0
      %521 = vperm.xlu0 %520, %v378
      %v522 = vpop.permute.xlu0 %521
      %525 = vset.pattern.permute.xlu0 0
      %526 = vperm.xlu0 %525, %v379
      %v527 = vpop.permute.xlu0 %526
      %530 = vset.pattern.permute.xlu0 0
      %531 = vperm.xlu0 %530, %v380
      %v532 = vpop.permute.xlu0 %531
      %535 = vset.pattern.permute.xlu0 0
      %536 = vperm.xlu0 %535, %v381
      %v537 = vpop.permute.xlu0 %536
      %540 = vset.pattern.permute.xlu0 0
      %541 = vperm.xlu0 %540, %v382
      %v542 = vpop.permute.xlu0 %541
      %v544 = vlaneseq
      %v545 = vshrl.u32 %v544, 7
      %v546 = vsub.s32 0, %v545
      %v547 = vrot.slane %v383, %v546
      %v548 = vmul.f32 %v387, %v547
      %v549 = vmul.f32 %v392, %v547
      %v550 = vmul.f32 %v397, %v547
      %v551 = vmul.f32 %v402, %v547
      %v552 = vmul.f32 %v407, %v547
      %v553 = vmul.f32 %v412, %v547
      %v554 = vmul.f32 %v417, %v547
      %v555 = vmul.f32 %v422, %v547
      %v556 = vmul.f32 %v427, %v547
      %v557 = vmul.f32 %v432, %v547
      %v558 = vmul.f32 %v437, %v547
      %v559 = vmul.f32 %v442, %v547
      %v560 = vmul.f32 %v447, %v547
      %v561 = vmul.f32 %v452, %v547
      %v562 = vmul.f32 %v457, %v547
      %v563 = vmul.f32 %v462, %v547
      %v564 = vmul.f32 %v467, %v547
      %v565 = vmul.f32 %v472, %v547
      %v566 = vmul.f32 %v477, %v547
      %v567 = vmul.f32 %v482, %v547
      %v568 = vmul.f32 %v487, %v547
      %v569 = vmul.f32 %v492, %v547
      %v570 = vmul.f32 %v497, %v547
      %v571 = vmul.f32 %v502, %v547
      %v572 = vmul.f32 %v507, %v547
      %v573 = vmul.f32 %v512, %v547
      %v574 = vmul.f32 %v517, %v547
      %v575 = vmul.f32 %v522, %v547
      %v576 = vmul.f32 %v527, %v547
      %v577 = vmul.f32 %v532, %v547
      %v578 = vmul.f32 %v537, %v547
      %v579 = vmul.f32 %v542, %v547
      %580 = vset.pattern.permute.xlu0 1
      %581 = vperm.xlu0 %580, %v351
      %v582 = vpop.permute.xlu0 %581
      %584 = vset.pattern.permute.xlu0 1
      %585 = vperm.xlu0 %584, %v352
      %v586 = vpop.permute.xlu0 %585
      %588 = vset.pattern.permute.xlu0 1
      %589 = vperm.xlu0 %588, %v353
      %v590 = vpop.permute.xlu0 %589
      %592 = vset.pattern.permute.xlu0 1
      %593 = vperm.xlu0 %592, %v354
      %v594 = vpop.permute.xlu0 %593
      %596 = vset.pattern.permute.xlu0 1
      %597 = vperm.xlu0 %596, %v355
      %v598 = vpop.permute.xlu0 %597
      %600 = vset.pattern.permute.xlu0 1
      %601 = vperm.xlu0 %600, %v356
      %v602 = vpop.permute.xlu0 %601
      %604 = vset.pattern.permute.xlu0 1
      %605 = vperm.xlu0 %604, %v357
      %v606 = vpop.permute.xlu0 %605
      %608 = vset.pattern.permute.xlu0 1
      %609 = vperm.xlu0 %608, %v358
      %v610 = vpop.permute.xlu0 %609
      %612 = vset.pattern.permute.xlu0 1
      %613 = vperm.xlu0 %612, %v359
      %v614 = vpop.permute.xlu0 %613
      %616 = vset.pattern.permute.xlu0 1
      %617 = vperm.xlu0 %616, %v360
      %v618 = vpop.permute.xlu0 %617
      %620 = vset.pattern.permute.xlu0 1
      %621 = vperm.xlu0 %620, %v361
      %v622 = vpop.permute.xlu0 %621
      %624 = vset.pattern.permute.xlu0 1
      %625 = vperm.xlu0 %624, %v362
      %v626 = vpop.permute.xlu0 %625
      %628 = vset.pattern.permute.xlu0 1
      %629 = vperm.xlu0 %628, %v363
      %v630 = vpop.permute.xlu0 %629
      %632 = vset.pattern.permute.xlu0 1
      %633 = vperm.xlu0 %632, %v364
      %v634 = vpop.permute.xlu0 %633
      %636 = vset.pattern.permute.xlu0 1
      %637 = vperm.xlu0 %636, %v365
      %v638 = vpop.permute.xlu0 %637
      %640 = vset.pattern.permute.xlu0 1
      %641 = vperm.xlu0 %640, %v366
      %v642 = vpop.permute.xlu0 %641
      %644 = vset.pattern.permute.xlu0 1
      %645 = vperm.xlu0 %644, %v367
      %v646 = vpop.permute.xlu0 %645
      %648 = vset.pattern.permute.xlu0 1
      %649 = vperm.xlu0 %648, %v368
      %v650 = vpop.permute.xlu0 %649
      %652 = vset.pattern.permute.xlu0 1
      %653 = vperm.xlu0 %652, %v369
      %v654 = vpop.permute.xlu0 %653
      %656 = vset.pattern.permute.xlu0 1
      %657 = vperm.xlu0 %656, %v370
      %v658 = vpop.permute.xlu0 %657
      %660 = vset.pattern.permute.xlu0 1
      %661 = vperm.xlu0 %660, %v371
      %v662 = vpop.permute.xlu0 %661
      %664 = vset.pattern.permute.xlu0 1
      %665 = vperm.xlu0 %664, %v372
      %v666 = vpop.permute.xlu0 %665
      %668 = vset.pattern.permute.xlu0 1
      %669 = vperm.xlu0 %668, %v373
      %v670 = vpop.permute.xlu0 %669
      %672 = vset.pattern.permute.xlu0 1
      %673 = vperm.xlu0 %672, %v374
      %v674 = vpop.permute.xlu0 %673
      %676 = vset.pattern.permute.xlu0 1
      %677 = vperm.xlu0 %676, %v375
      %v678 = vpop.permute.xlu0 %677
      %680 = vset.pattern.permute.xlu0 1
      %681 = vperm.xlu0 %680, %v376
      %v682 = vpop.permute.xlu0 %681
      %684 = vset.pattern.permute.xlu0 1
      %685 = vperm.xlu0 %684, %v377
      %v686 = vpop.permute.xlu0 %685
      %688 = vset.pattern.permute.xlu0 1
      %689 = vperm.xlu0 %688, %v378
      %v690 = vpop.permute.xlu0 %689
      %692 = vset.pattern.permute.xlu0 1
      %693 = vperm.xlu0 %692, %v379
      %v694 = vpop.permute.xlu0 %693
      %696 = vset.pattern.permute.xlu0 1
      %697 = vperm.xlu0 %696, %v380
      %v698 = vpop.permute.xlu0 %697
      %700 = vset.pattern.permute.xlu0 1
      %701 = vperm.xlu0 %700, %v381
      %v702 = vpop.permute.xlu0 %701
      %704 = vset.pattern.permute.xlu0 1
      %705 = vperm.xlu0 %704, %v382
      %v706 = vpop.permute.xlu0 %705
      %v708 = vlaneseq
      %v709 = vshrl.u32 %v708, 7
      %v710 = vsub.s32 1, %v709
      %v711 = vrot.slane %v383, %v710
      %v712 = vmul.f32 %v582, %v711
      %v713 = vmul.f32 %v586, %v711
      %v714 = vmul.f32 %v590, %v711
      %v715 = vmul.f32 %v594, %v711
      %v716 = vmul.f32 %v598, %v711
      %v717 = vmul.f32 %v602, %v711
      %v718 = vmul.f32 %v606, %v711
      %v719 = vmul.f32 %v610, %v711
      %v720 = vmul.f32 %v614, %v711
      %v721 = vmul.f32 %v618, %v711
      %v722 = vmul.f32 %v622, %v711
      %v723 = vmul.f32 %v626, %v711
      %v724 = vmul.f32 %v630, %v711
      %v725 = vmul.f32 %v634, %v711
      %v726 = vmul.f32 %v638, %v711
      %v727 = vmul.f32 %v642, %v711
      %v728 = vmul.f32 %v646, %v711
      %v729 = vmul.f32 %v650, %v711
      %v730 = vmul.f32 %v654, %v711
      %v731 = vmul.f32 %v658, %v711
      %v732 = vmul.f32 %v662, %v711
      %v733 = vmul.f32 %v666, %v711
      %v734 = vmul.f32 %v670, %v711
      %v735 = vmul.f32 %v674, %v711
      %v736 = vmul.f32 %v678, %v711
      %v737 = vmul.f32 %v682, %v711
      %v738 = vmul.f32 %v686, %v711
      %v739 = vmul.f32 %v690, %v711
      %v740 = vmul.f32 %v694, %v711
      %v741 = vmul.f32 %v698, %v711
      %v742 = vmul.f32 %v702, %v711
      %v743 = vmul.f32 %v706, %v711
      %v744 = vadd.f32 %v548, %v712
      %v745 = vadd.f32 %v549, %v713
      %v746 = vadd.f32 %v550, %v714
      %v747 = vadd.f32 %v551, %v715
      %v748 = vadd.f32 %v552, %v716
      %v749 = vadd.f32 %v553, %v717
      %v750 = vadd.f32 %v554, %v718
      %v751 = vadd.f32 %v555, %v719
      %v752 = vadd.f32 %v556, %v720
      %v753 = vadd.f32 %v557, %v721
      %v754 = vadd.f32 %v558, %v722
      %v755 = vadd.f32 %v559, %v723
      %v756 = vadd.f32 %v560, %v724
      %v757 = vadd.f32 %v561, %v725
      %v758 = vadd.f32 %v562, %v726
      %v759 = vadd.f32 %v563, %v727
      %v760 = vadd.f32 %v564, %v728
      %v761 = vadd.f32 %v565, %v729
      %v762 = vadd.f32 %v566, %v730
      %v763 = vadd.f32 %v567, %v731
      %v764 = vadd.f32 %v568, %v732
      %v765 = vadd.f32 %v569, %v733
      %v766 = vadd.f32 %v570, %v734
      %v767 = vadd.f32 %v571, %v735
      %v768 = vadd.f32 %v572, %v736
      %v769 = vadd.f32 %v573, %v737
      %v770 = vadd.f32 %v574, %v738
      %v771 = vadd.f32 %v575, %v739
      %v772 = vadd.f32 %v576, %v740
      %v773 = vadd.f32 %v577, %v741
      %v774 = vadd.f32 %v578, %v742
      %v775 = vadd.f32 %v579, %v743
      %776 = vset.pattern.permute.xlu0 2
      %777 = vperm.xlu0 %776, %v351
      %v778 = vpop.permute.xlu0 %777
      %780 = vset.pattern.permute.xlu0 2
      %781 = vperm.xlu0 %780, %v352
      %v782 = vpop.permute.xlu0 %781
      %784 = vset.pattern.permute.xlu0 2
      %785 = vperm.xlu0 %784, %v353
      %v786 = vpop.permute.xlu0 %785
      %788 = vset.pattern.permute.xlu0 2
      %789 = vperm.xlu0 %788, %v354
      %v790 = vpop.permute.xlu0 %789
      %792 = vset.pattern.permute.xlu0 2
      %793 = vperm.xlu0 %792, %v355
      %v794 = vpop.permute.xlu0 %793
      %796 = vset.pattern.permute.xlu0 2
      %797 = vperm.xlu0 %796, %v356
      %v798 = vpop.permute.xlu0 %797
      %800 = vset.pattern.permute.xlu0 2
      %801 = vperm.xlu0 %800, %v357
      %v802 = vpop.permute.xlu0 %801
      %804 = vset.pattern.permute.xlu0 2
      %805 = vperm.xlu0 %804, %v358
      %v806 = vpop.permute.xlu0 %805
      %808 = vset.pattern.permute.xlu0 2
      %809 = vperm.xlu0 %808, %v359
      %v810 = vpop.permute.xlu0 %809
      %812 = vset.pattern.permute.xlu0 2
      %813 = vperm.xlu0 %812, %v360
      %v814 = vpop.permute.xlu0 %813
      %816 = vset.pattern.permute.xlu0 2
      %817 = vperm.xlu0 %816, %v361
      %v818 = vpop.permute.xlu0 %817
      %820 = vset.pattern.permute.xlu0 2
      %821 = vperm.xlu0 %820, %v362
      %v822 = vpop.permute.xlu0 %821
      %824 = vset.pattern.permute.xlu0 2
      %825 = vperm.xlu0 %824, %v363
      %v826 = vpop.permute.xlu0 %825
      %828 = vset.pattern.permute.xlu0 2
      %829 = vperm.xlu0 %828, %v364
      %v830 = vpop.permute.xlu0 %829
      %832 = vset.pattern.permute.xlu0 2
      %833 = vperm.xlu0 %832, %v365
      %v834 = vpop.permute.xlu0 %833
      %836 = vset.pattern.permute.xlu0 2
      %837 = vperm.xlu0 %836, %v366
      %v838 = vpop.permute.xlu0 %837
      %840 = vset.pattern.permute.xlu0 2
      %841 = vperm.xlu0 %840, %v367
      %v842 = vpop.permute.xlu0 %841
      %844 = vset.pattern.permute.xlu0 2
      %845 = vperm.xlu0 %844, %v368
      %v846 = vpop.permute.xlu0 %845
      %848 = vset.pattern.permute.xlu0 2
      %849 = vperm.xlu0 %848, %v369
      %v850 = vpop.permute.xlu0 %849
      %852 = vset.pattern.permute.xlu0 2
      %853 = vperm.xlu0 %852, %v370
      %v854 = vpop.permute.xlu0 %853
      %856 = vset.pattern.permute.xlu0 2
      %857 = vperm.xlu0 %856, %v371
      %v858 = vpop.permute.xlu0 %857
      %860 = vset.pattern.permute.xlu0 2
      %861 = vperm.xlu0 %860, %v372
      %v862 = vpop.permute.xlu0 %861
      %864 = vset.pattern.permute.xlu0 2
      %865 = vperm.xlu0 %864, %v373
      %v866 = vpop.permute.xlu0 %865
      %868 = vset.pattern.permute.xlu0 2
      %869 = vperm.xlu0 %868, %v374
      %v870 = vpop.permute.xlu0 %869
      %872 = vset.pattern.permute.xlu0 2
      %873 = vperm.xlu0 %872, %v375
      %v874 = vpop.permute.xlu0 %873
      %876 = vset.pattern.permute.xlu0 2
      %877 = vperm.xlu0 %876, %v376
      %v878 = vpop.permute.xlu0 %877
      %880 = vset.pattern.permute.xlu0 2
      %881 = vperm.xlu0 %880, %v377
      %v882 = vpop.permute.xlu0 %881
      %884 = vset.pattern.permute.xlu0 2
      %885 = vperm.xlu0 %884, %v378
      %v886 = vpop.permute.xlu0 %885
      %888 = vset.pattern.permute.xlu0 2
      %889 = vperm.xlu0 %888, %v379
      %v890 = vpop.permute.xlu0 %889
      %892 = vset.pattern.permute.xlu0 2
      %893 = vperm.xlu0 %892, %v380
      %v894 = vpop.permute.xlu0 %893
      %896 = vset.pattern.permute.xlu0 2
      %897 = vperm.xlu0 %896, %v381
      %v898 = vpop.permute.xlu0 %897
      %900 = vset.pattern.permute.xlu0 2
      %901 = vperm.xlu0 %900, %v382
      %v902 = vpop.permute.xlu0 %901
      %v904 = vlaneseq
      %v905 = vshrl.u32 %v904, 7
      %v906 = vsub.s32 2, %v905
      %v907 = vrot.slane %v383, %v906
      %v908 = vmul.f32 %v778, %v907
      %v909 = vmul.f32 %v782, %v907
      %v910 = vmul.f32 %v786, %v907
      %v911 = vmul.f32 %v790, %v907
      %v912 = vmul.f32 %v794, %v907
      %v913 = vmul.f32 %v798, %v907
      %v914 = vmul.f32 %v802, %v907
      %v915 = vmul.f32 %v806, %v907
      %v916 = vmul.f32 %v810, %v907
      %v917 = vmul.f32 %v814, %v907
      %v918 = vmul.f32 %v818, %v907
      %v919 = vmul.f32 %v822, %v907
      %v920 = vmul.f32 %v826, %v907
      %v921 = vmul.f32 %v830, %v907
      %v922 = vmul.f32 %v834, %v907
      %v923 = vmul.f32 %v838, %v907
      %v924 = vmul.f32 %v842, %v907
      %v925 = vmul.f32 %v846, %v907
      %v926 = vmul.f32 %v850, %v907
      %v927 = vmul.f32 %v854, %v907
      %v928 = vmul.f32 %v858, %v907
      %v929 = vmul.f32 %v862, %v907
      %v930 = vmul.f32 %v866, %v907
      %v931 = vmul.f32 %v870, %v907
      %v932 = vmul.f32 %v874, %v907
      %v933 = vmul.f32 %v878, %v907
      %v934 = vmul.f32 %v882, %v907
      %v935 = vmul.f32 %v886, %v907
      %v936 = vmul.f32 %v890, %v907
      %v937 = vmul.f32 %v894, %v907
      %v938 = vmul.f32 %v898, %v907
      %v939 = vmul.f32 %v902, %v907
      %v940 = vadd.f32 %v744, %v908
      %v941 = vadd.f32 %v745, %v909
      %v942 = vadd.f32 %v746, %v910
      %v943 = vadd.f32 %v747, %v911
      %v944 = vadd.f32 %v748, %v912
      %v945 = vadd.f32 %v749, %v913
      %v946 = vadd.f32 %v750, %v914
      %v947 = vadd.f32 %v751, %v915
      %v948 = vadd.f32 %v752, %v916
      %v949 = vadd.f32 %v753, %v917
      %v950 = vadd.f32 %v754, %v918
      %v951 = vadd.f32 %v755, %v919
      %v952 = vadd.f32 %v756, %v920
      %v953 = vadd.f32 %v757, %v921
      %v954 = vadd.f32 %v758, %v922
      %v955 = vadd.f32 %v759, %v923
      %v956 = vadd.f32 %v760, %v924
      %v957 = vadd.f32 %v761, %v925
      %v958 = vadd.f32 %v762, %v926
      %v959 = vadd.f32 %v763, %v927
      %v960 = vadd.f32 %v764, %v928
      %v961 = vadd.f32 %v765, %v929
      %v962 = vadd.f32 %v766, %v930
      %v963 = vadd.f32 %v767, %v931
      %v964 = vadd.f32 %v768, %v932
      %v965 = vadd.f32 %v769, %v933
      %v966 = vadd.f32 %v770, %v934
      %v967 = vadd.f32 %v771, %v935
      %v968 = vadd.f32 %v772, %v936
      %v969 = vadd.f32 %v773, %v937
      %v970 = vadd.f32 %v774, %v938
      %v971 = vadd.f32 %v775, %v939
      %v972 = vld [vmem:[%s2] sm:$0x1]
      %v974 = vlaneseq
      %v975 = vshrl.u32 %v974, 7
      %v976 = vsub.s32 0, %v975
      %v977 = vrot.slane %v972, %v976
      %v979 = vadd.f32 %v940, %v977
      %v980 = vadd.f32 %v941, %v977
      %v981 = vadd.f32 %v942, %v977
      %v982 = vadd.f32 %v943, %v977
      %v983 = vadd.f32 %v944, %v977
      %v984 = vadd.f32 %v945, %v977
      %v985 = vadd.f32 %v946, %v977
      %v986 = vadd.f32 %v947, %v977
      %v987 = vadd.f32 %v948, %v977
      %v988 = vadd.f32 %v949, %v977
      %v989 = vadd.f32 %v950, %v977
      %v990 = vadd.f32 %v951, %v977
      %v991 = vadd.f32 %v952, %v977
      %v992 = vadd.f32 %v953, %v977
      %v993 = vadd.f32 %v954, %v977
      %v994 = vadd.f32 %v955, %v977
      %v995 = vadd.f32 %v956, %v977
      %v996 = vadd.f32 %v957, %v977
      %v997 = vadd.f32 %v958, %v977
      %v998 = vadd.f32 %v959, %v977
      %v999 = vadd.f32 %v960, %v977
      %v1000 = vadd.f32 %v961, %v977
      %v1001 = vadd.f32 %v962, %v977
      %v1002 = vadd.f32 %v963, %v977
      %v1003 = vadd.f32 %v964, %v977
      %v1004 = vadd.f32 %v965, %v977
      %v1005 = vadd.f32 %v966, %v977
      %v1006 = vadd.f32 %v967, %v977
      %v1007 = vadd.f32 %v968, %v977
      %v1008 = vadd.f32 %v969, %v977
      %v1009 = vadd.f32 %v970, %v977
      %v1010 = vadd.f32 %v971, %v977
      %v1011 = vmax.f32 %v979, 0.0
      %v1012 = vmax.f32 %v980, 0.0
      %v1013 = vmax.f32 %v981, 0.0
      %v1014 = vmax.f32 %v982, 0.0
      %v1015 = vmax.f32 %v983, 0.0
      %v1016 = vmax.f32 %v984, 0.0
      %v1017 = vmax.f32 %v985, 0.0
      %v1018 = vmax.f32 %v986, 0.0
      %v1019 = vmax.f32 %v987, 0.0
      %v1020 = vmax.f32 %v988, 0.0
      %v1021 = vmax.f32 %v989, 0.0
      %v1022 = vmax.f32 %v990, 0.0
      %v1023 = vmax.f32 %v991, 0.0
      %v1024 = vmax.f32 %v992, 0.0
      %v1025 = vmax.f32 %v993, 0.0
      %v1026 = vmax.f32 %v994, 0.0
      %v1027 = vmax.f32 %v995, 0.0
      %v1028 = vmax.f32 %v996, 0.0
      %v1029 = vmax.f32 %v997, 0.0
      %v1030 = vmax.f32 %v998, 0.0
      %v1031 = vmax.f32 %v999, 0.0
      %v1032 = vmax.f32 %v1000, 0.0
      %v1033 = vmax.f32 %v1001, 0.0
      %v1034 = vmax.f32 %v1002, 0.0
      %v1035 = vmax.f32 %v1003, 0.0
      %v1036 = vmax.f32 %v1004, 0.0
      %v1037 = vmax.f32 %v1005, 0.0
      %v1038 = vmax.f32 %v1006, 0.0
      %v1039 = vmax.f32 %v1007, 0.0
      %v1040 = vmax.f32 %v1008, 0.0
      %v1041 = vmax.f32 %v1009, 0.0
      %v1042 = vmax.f32 %v1010, 0.0
      %v1043 = vpack.c.bf16 %v1012, %v1011
      %v1044 = vpack.c.bf16 %v1014, %v1013
      %v1045 = vpack.c.bf16 %v1016, %v1015
      %v1046 = vpack.c.bf16 %v1018, %v1017
      %v1047 = vpack.c.bf16 %v1020, %v1019
      %v1048 = vpack.c.bf16 %v1022, %v1021
      %v1049 = vpack.c.bf16 %v1024, %v1023
      %v1050 = vpack.c.bf16 %v1026, %v1025
      %v1051 = vpack.c.bf16 %v1028, %v1027
      %v1052 = vpack.c.bf16 %v1030, %v1029
      %v1053 = vpack.c.bf16 %v1032, %v1031
      %v1054 = vpack.c.bf16 %v1034, %v1033
      %v1055 = vpack.c.bf16 %v1036, %v1035
      %v1056 = vpack.c.bf16 %v1038, %v1037
      %v1057 = vpack.c.bf16 %v1040, %v1039
      %v1058 = vpack.c.bf16 %v1042, %v1041
      %v1059 = vld [vmem:[%s3] sm:$0xf]
      %v1060 = vld [vmem:[%s3 + $0x4] sm:$0xf]
      %v1061 = vld [vmem:[%s3 + $0x8] sm:$0xf]
      %v1062 = vld [vmem:[%s3 + $0xc] sm:$0xf]
      %v1063 = vld [vmem:[%s3 + $0x10] sm:$0xf]
      %v1064 = vld [vmem:[%s3 + $0x14] sm:$0xf]
      %v1065 = vld [vmem:[%s3 + $0x18] sm:$0xf]
      %v1066 = vld [vmem:[%s3 + $0x1c] sm:$0xf]
      %v1067 = vld [vmem:[%s3 + $0x20] sm:$0xf]
      %v1068 = vld [vmem:[%s3 + $0x24] sm:$0xf]
      %v1069 = vld [vmem:[%s3 + $0x28] sm:$0xf]
      %v1070 = vld [vmem:[%s3 + $0x2c] sm:$0xf]
      %v1071 = vld [vmem:[%s3 + $0x30] sm:$0xf]
      %v1072 = vld [vmem:[%s3 + $0x34] sm:$0xf]
      %v1073 = vld [vmem:[%s3 + $0x38] sm:$0xf]
      %v1074 = vld [vmem:[%s3 + $0x3c] sm:$0xf]
      %v1075 = vld [vmem:[%s4] sm:$0x1]
      %v1077 = vlaneseq
      %v1078 = vshrl.u32 %v1077, 7
      %v1079 = vsub.s32 0, %v1078
      %v1080 = vrot.slane %v1075, %v1079
      %v1098 = vunpack.c.l.b16 %v1059
      %v1099 = vunpack.c.l.b16 %v1060
      %v1100 = vunpack.c.l.b16 %v1061
      %v1101 = vunpack.c.l.b16 %v1062
      %v1102 = vunpack.c.l.b16 %v1063
      %v1103 = vunpack.c.l.b16 %v1064
      %v1104 = vunpack.c.l.b16 %v1065
      %v1105 = vunpack.c.l.b16 %v1066
      %v1106 = vunpack.c.l.b16 %v1067
      %v1107 = vunpack.c.l.b16 %v1068
      %v1108 = vunpack.c.l.b16 %v1069
      %v1109 = vunpack.c.l.b16 %v1070
      %v1110 = vunpack.c.l.b16 %v1071
      %v1111 = vunpack.c.l.b16 %v1072
      %v1112 = vunpack.c.l.b16 %v1073
      %v1113 = vunpack.c.l.b16 %v1074
      %v1114 = vpack.c.b16 %v1099, %v1098
      %v1115 = vpack.c.b16 %v1101, %v1100
      %v1116 = vpack.c.b16 %v1103, %v1102
      %v1117 = vpack.c.b16 %v1105, %v1104
      %v1118 = vpack.c.b16 %v1107, %v1106
      %v1119 = vpack.c.b16 %v1109, %v1108
      %v1120 = vpack.c.b16 %v1111, %v1110
      %v1121 = vpack.c.b16 %v1113, %v1112
      %1130 = vmatprep.subr.bf16.mxu0 0
      %1131 = vmatpush1.bf16.msra.mxu0 %v1114
      %1132 = vmatprep.subr.bf16.mxu0 0
      %1133 = vmatpush1.bf16.msra.mxu0 %v1115
      %1134 = vmatprep.subr.bf16.mxu0 0
      %1135 = vmatpush1.bf16.msra.mxu0 %v1116
      %1136 = vmatprep.subr.bf16.mxu0 0
      %1137 = vmatpush1.bf16.msra.mxu0 %v1117
      %1138 = vmatprep.subr.bf16.mxu0 0
      %1139 = vmatpush1.bf16.msra.mxu0 %v1118
      %1140 = vmatprep.subr.bf16.mxu0 0
      %1141 = vmatpush1.bf16.msra.mxu0 %v1119
      %1142 = vmatprep.subr.bf16.mxu0 0
      %1143 = vmatpush1.bf16.msra.mxu0 %v1120
      %1144 = vmatprep.subr.bf16.mxu0 0
      %1145 = vmatpush1.bf16.msra.mxu0 %v1121
      %1146 = vmatprep.subr.bf16.mxu0 0
      %1147 = vmatpush1.bf16.msra.mxu0 0
      %1148 = vmatprep.subr.bf16.mxu0 0
      %1149 = vmatpush1.bf16.msra.mxu0 0
      %1150 = vmatprep.subr.bf16.mxu0 0
      %1151 = vmatpush1.bf16.msra.mxu0 0
      %1152 = vmatprep.subr.bf16.mxu0 0
      %1153 = vmatpush1.bf16.msra.mxu0 0
      %1154 = vmatprep.subr.bf16.mxu0 0
      %1155 = vmatpush1.bf16.msra.mxu0 0
      %1156 = vmatprep.subr.bf16.mxu0 0
      %1157 = vmatpush1.bf16.msra.mxu0 0
      %1158 = vmatprep.subr.bf16.mxu0 0
      %1159 = vmatpush1.bf16.msra.mxu0 0
      %1160 = vmatprep.subr.bf16.mxu0 0
      %1161 = vmatpush1.bf16.msra.mxu0 0
      %1162 = vmatprep.mubr.bf16.mxu0 0
      %1163 = vmatmul.mubr.bf16.gmra.mrb[0].mxu0 %v1043
      %v1164 = vpop.f32.mrb[0].mxu0
      %v1165 = vadd.f32 %v1080, %v1164
      %v1166 = vpop.f32.mrb[0].mxu0
      %v1167 = vpop.f32.mrb[0].mxu0
      %v1168 = vadd.f32 %v1080, %v1167
      %v1169 = vpop.f32.mrb[0].mxu0
      %1170 = vmatprep.mubr.bf16.mxu0 0
      %1171 = vmatmul.mubr.bf16.gmra.mrb[0].mxu0 %v1044
      %v1172 = vpop.f32.mrb[0].mxu0
      %v1173 = vadd.f32 %v1080, %v1172
      %v1174 = vpop.f32.mrb[0].mxu0
      %v1175 = vpop.f32.mrb[0].mxu0
      %v1176 = vadd.f32 %v1080, %v1175
      %v1177 = vpop.f32.mrb[0].mxu0
      %1178 = vmatprep.mubr.bf16.mxu0 0
      %1179 = vmatmul.mubr.bf16.gmra.mrb[0].mxu0 %v1045
      %v1180 = vpop.f32.mrb[0].mxu0
      %v1181 = vadd.f32 %v1080, %v1180
      %v1182 = vpop.f32.mrb[0].mxu0
      %v1183 = vpop.f32.mrb[0].mxu0
      %v1184 = vadd.f32 %v1080, %v1183
      %v1185 = vpop.f32.mrb[0].mxu0
      %1186 = vmatprep.mubr.bf16.mxu0 0
      %1187 = vmatmul.mubr.bf16.gmra.mrb[0].mxu0 %v1046
      %v1188 = vpop.f32.mrb[0].mxu0
      %v1189 = vadd.f32 %v1080, %v1188
      %v1190 = vpop.f32.mrb[0].mxu0
      %v1191 = vpop.f32.mrb[0].mxu0
      %v1192 = vadd.f32 %v1080, %v1191
      %v1193 = vpop.f32.mrb[0].mxu0
      %1194 = vmatprep.mubr.bf16.mxu0 0
      %1195 = vmatmul.mubr.bf16.gmra.mrb[0].mxu0 %v1047
      %v1196 = vpop.f32.mrb[0].mxu0
      %v1197 = vadd.f32 %v1080, %v1196
      %v1198 = vpop.f32.mrb[0].mxu0
      %v1199 = vpop.f32.mrb[0].mxu0
      %v1200 = vadd.f32 %v1080, %v1199
      %v1201 = vpop.f32.mrb[0].mxu0
      %1202 = vmatprep.mubr.bf16.mxu0 0
      %1203 = vmatmul.mubr.bf16.gmra.mrb[0].mxu0 %v1048
      %v1204 = vpop.f32.mrb[0].mxu0
      %v1205 = vadd.f32 %v1080, %v1204
      %v1206 = vpop.f32.mrb[0].mxu0
      %v1207 = vpop.f32.mrb[0].mxu0
      %v1208 = vadd.f32 %v1080, %v1207
      %v1209 = vpop.f32.mrb[0].mxu0
      %1210 = vmatprep.mubr.bf16.mxu0 0
      %1211 = vmatmul.mubr.bf16.gmra.mrb[0].mxu0 %v1049
      %v1212 = vpop.f32.mrb[0].mxu0
      %v1213 = vadd.f32 %v1080, %v1212
      %v1214 = vpop.f32.mrb[0].mxu0
      %v1215 = vpop.f32.mrb[0].mxu0
      %v1216 = vadd.f32 %v1080, %v1215
      %v1217 = vpop.f32.mrb[0].mxu0
      %1218 = vmatprep.mubr.bf16.mxu0 0
      %1219 = vmatmul.mubr.bf16.gmra.mrb[0].mxu0 %v1050
      %v1220 = vpop.f32.mrb[0].mxu0
      %v1221 = vadd.f32 %v1080, %v1220
      %v1222 = vpop.f32.mrb[0].mxu0
      %v1223 = vpop.f32.mrb[0].mxu0
      %v1224 = vadd.f32 %v1080, %v1223
      %v1225 = vpop.f32.mrb[0].mxu0
      %1226 = vmatprep.mubr.bf16.mxu0 0
      %1227 = vmatmul.mubr.bf16.gmra.mrb[0].mxu0 %v1051
      %v1228 = vpop.f32.mrb[0].mxu0
      %v1229 = vadd.f32 %v1080, %v1228
      %v1230 = vpop.f32.mrb[0].mxu0
      %v1231 = vpop.f32.mrb[0].mxu0
      %v1232 = vadd.f32 %v1080, %v1231
      %v1233 = vpop.f32.mrb[0].mxu0
      %1234 = vmatprep.mubr.bf16.mxu0 0
      %1235 = vmatmul.mubr.bf16.gmra.mrb[0].mxu0 %v1052
      %v1236 = vpop.f32.mrb[0].mxu0
      %v1237 = vadd.f32 %v1080, %v1236
      %v1238 = vpop.f32.mrb[0].mxu0
      %v1239 = vpop.f32.mrb[0].mxu0
      %v1240 = vadd.f32 %v1080, %v1239
      %v1241 = vpop.f32.mrb[0].mxu0
      %1242 = vmatprep.mubr.bf16.mxu0 0
      %1243 = vmatmul.mubr.bf16.gmra.mrb[0].mxu0 %v1053
      %v1244 = vpop.f32.mrb[0].mxu0
      %v1245 = vadd.f32 %v1080, %v1244
      %v1246 = vpop.f32.mrb[0].mxu0
      %v1247 = vpop.f32.mrb[0].mxu0
      %v1248 = vadd.f32 %v1080, %v1247
      %v1249 = vpop.f32.mrb[0].mxu0
      %1250 = vmatprep.mubr.bf16.mxu0 0
      %1251 = vmatmul.mubr.bf16.gmra.mrb[0].mxu0 %v1054
      %v1252 = vpop.f32.mrb[0].mxu0
      %v1253 = vadd.f32 %v1080, %v1252
      %v1254 = vpop.f32.mrb[0].mxu0
      %v1255 = vpop.f32.mrb[0].mxu0
      %v1256 = vadd.f32 %v1080, %v1255
      %v1257 = vpop.f32.mrb[0].mxu0
      %1258 = vmatprep.mubr.bf16.mxu0 0
      %1259 = vmatmul.mubr.bf16.gmra.mrb[0].mxu0 %v1055
      %v1260 = vpop.f32.mrb[0].mxu0
      %v1261 = vadd.f32 %v1080, %v1260
      %v1262 = vpop.f32.mrb[0].mxu0
      %v1263 = vpop.f32.mrb[0].mxu0
      %v1264 = vadd.f32 %v1080, %v1263
      %v1265 = vpop.f32.mrb[0].mxu0
      %1266 = vmatprep.mubr.bf16.mxu0 0
      %1267 = vmatmul.mubr.bf16.gmra.mrb[0].mxu0 %v1056
      %v1268 = vpop.f32.mrb[0].mxu0
      %v1269 = vadd.f32 %v1080, %v1268
      %v1270 = vpop.f32.mrb[0].mxu0
      %v1271 = vpop.f32.mrb[0].mxu0
      %v1272 = vadd.f32 %v1080, %v1271
      %v1273 = vpop.f32.mrb[0].mxu0
      %1274 = vmatprep.mubr.bf16.mxu0 0
      %1275 = vmatmul.mubr.bf16.gmra.mrb[0].mxu0 %v1057
      %v1276 = vpop.f32.mrb[0].mxu0
      %v1277 = vadd.f32 %v1080, %v1276
      %v1278 = vpop.f32.mrb[0].mxu0
      %v1279 = vpop.f32.mrb[0].mxu0
      %v1280 = vadd.f32 %v1080, %v1279
      %v1281 = vpop.f32.mrb[0].mxu0
      %1282 = vmatprep.mubr.bf16.mxu0 0
      %1283 = vmatmul.mubr.bf16.gmra.mrb[0].mxu0 %v1058
      %v1284 = vpop.f32.mrb[0].mxu0
      %v1285 = vadd.f32 %v1080, %v1284
      %v1286 = vpop.f32.mrb[0].mxu0
      %v1287 = vpop.f32.mrb[0].mxu0
      %v1288 = vadd.f32 %v1080, %v1287
      %v1289 = vpop.f32.mrb[0].mxu0
      %1290 = vdwg.mxu0
      %v1291 = vmax.f32 %v1165, 0.0
      %v1292 = vmax.f32 %v1168, 0.0
      %v1293 = vmax.f32 %v1173, 0.0
      %v1294 = vmax.f32 %v1176, 0.0
      %v1295 = vmax.f32 %v1181, 0.0
      %v1296 = vmax.f32 %v1184, 0.0
      %v1297 = vmax.f32 %v1189, 0.0
      %v1298 = vmax.f32 %v1192, 0.0
      %v1299 = vmax.f32 %v1197, 0.0
      %v1300 = vmax.f32 %v1200, 0.0
      %v1301 = vmax.f32 %v1205, 0.0
      %v1302 = vmax.f32 %v1208, 0.0
      %v1303 = vmax.f32 %v1213, 0.0
      %v1304 = vmax.f32 %v1216, 0.0
      %v1305 = vmax.f32 %v1221, 0.0
      %v1306 = vmax.f32 %v1224, 0.0
      %v1307 = vmax.f32 %v1229, 0.0
      %v1308 = vmax.f32 %v1232, 0.0
      %v1309 = vmax.f32 %v1237, 0.0
      %v1310 = vmax.f32 %v1240, 0.0
      %v1311 = vmax.f32 %v1245, 0.0
      %v1312 = vmax.f32 %v1248, 0.0
      %v1313 = vmax.f32 %v1253, 0.0
      %v1314 = vmax.f32 %v1256, 0.0
      %v1315 = vmax.f32 %v1261, 0.0
      %v1316 = vmax.f32 %v1264, 0.0
      %v1317 = vmax.f32 %v1269, 0.0
      %v1318 = vmax.f32 %v1272, 0.0
      %v1319 = vmax.f32 %v1277, 0.0
      %v1320 = vmax.f32 %v1280, 0.0
      %v1321 = vmax.f32 %v1285, 0.0
      %v1322 = vmax.f32 %v1288, 0.0
      %v1323 = vpack.c.bf16 %v1292, %v1291
      %v1324 = vpack.c.bf16 %v1294, %v1293
      %v1325 = vpack.c.bf16 %v1296, %v1295
      %v1326 = vpack.c.bf16 %v1298, %v1297
      %v1327 = vpack.c.bf16 %v1300, %v1299
      %v1328 = vpack.c.bf16 %v1302, %v1301
      %v1329 = vpack.c.bf16 %v1304, %v1303
      %v1330 = vpack.c.bf16 %v1306, %v1305
      %v1331 = vpack.c.bf16 %v1308, %v1307
      %v1332 = vpack.c.bf16 %v1310, %v1309
      %v1333 = vpack.c.bf16 %v1312, %v1311
      %v1334 = vpack.c.bf16 %v1314, %v1313
      %v1335 = vpack.c.bf16 %v1316, %v1315
      %v1336 = vpack.c.bf16 %v1318, %v1317
      %v1337 = vpack.c.bf16 %v1320, %v1319
      %v1338 = vpack.c.bf16 %v1322, %v1321
      %v1339 = vld [vmem:[%s5] sm:$0xf]
      %v1340 = vld [vmem:[%s5 + $0x4] sm:$0xf]
      %v1341 = vld [vmem:[%s5 + $0x8] sm:$0xf]
      %v1342 = vld [vmem:[%s5 + $0xc] sm:$0xf]
      %v1343 = vld [vmem:[%s5 + $0x10] sm:$0xf]
      %v1344 = vld [vmem:[%s5 + $0x14] sm:$0xf]
      %v1345 = vld [vmem:[%s5 + $0x18] sm:$0xf]
      %v1346 = vld [vmem:[%s5 + $0x1c] sm:$0xf]
      %v1347 = vld [vmem:[%s5 + $0x20] sm:$0xf]
      %v1348 = vld [vmem:[%s5 + $0x24] sm:$0xf]
      %v1349 = vld [vmem:[%s5 + $0x28] sm:$0xf]
      %v1350 = vld [vmem:[%s5 + $0x2c] sm:$0xf]
      %v1351 = vld [vmem:[%s5 + $0x30] sm:$0xf]
      %v1352 = vld [vmem:[%s5 + $0x34] sm:$0xf]
      %v1353 = vld [vmem:[%s5 + $0x38] sm:$0xf]
      %v1354 = vld [vmem:[%s5 + $0x3c] sm:$0xf]
      %v1371 = vunpack.c.l.b16 %v1339
      %v1372 = vunpack.c.l.b16 %v1340
      %v1373 = vunpack.c.l.b16 %v1341
      %v1374 = vunpack.c.l.b16 %v1342
      %v1375 = vunpack.c.l.b16 %v1343
      %v1376 = vunpack.c.l.b16 %v1344
      %v1377 = vunpack.c.l.b16 %v1345
      %v1378 = vunpack.c.l.b16 %v1346
      %v1379 = vunpack.c.l.b16 %v1347
      %v1380 = vunpack.c.l.b16 %v1348
      %v1381 = vunpack.c.l.b16 %v1349
      %v1382 = vunpack.c.l.b16 %v1350
      %v1383 = vunpack.c.l.b16 %v1351
      %v1384 = vunpack.c.l.b16 %v1352
      %v1385 = vunpack.c.l.b16 %v1353
      %v1386 = vunpack.c.l.b16 %v1354
      %v1387 = vpack.c.b16 %v1372, %v1371
      %v1388 = vpack.c.b16 %v1374, %v1373
      %v1389 = vpack.c.b16 %v1376, %v1375
      %v1390 = vpack.c.b16 %v1378, %v1377
      %v1391 = vpack.c.b16 %v1380, %v1379
      %v1392 = vpack.c.b16 %v1382, %v1381
      %v1393 = vpack.c.b16 %v1384, %v1383
      %v1394 = vpack.c.b16 %v1386, %v1385
      %1403 = vmatprep.subr.bf16.mxu0 0
      %1404 = vmatpush1.bf16.msra.mxu0 %v1387
      %1405 = vmatprep.subr.bf16.mxu0 0
      %1406 = vmatpush1.bf16.msra.mxu0 %v1388
      %1407 = vmatprep.subr.bf16.mxu0 0
      %1408 = vmatpush1.bf16.msra.mxu0 %v1389
      %1409 = vmatprep.subr.bf16.mxu0 0
      %1410 = vmatpush1.bf16.msra.mxu0 %v1390
      %1411 = vmatprep.subr.bf16.mxu0 0
      %1412 = vmatpush1.bf16.msra.mxu0 %v1391
      %1413 = vmatprep.subr.bf16.mxu0 0
      %1414 = vmatpush1.bf16.msra.mxu0 %v1392
      %1415 = vmatprep.subr.bf16.mxu0 0
      %1416 = vmatpush1.bf16.msra.mxu0 %v1393
      %1417 = vmatprep.subr.bf16.mxu0 0
      %1418 = vmatpush1.bf16.msra.mxu0 %v1394
      %1419 = vmatprep.subr.bf16.mxu0 0
      %1420 = vmatpush1.bf16.msra.mxu0 0
      %1421 = vmatprep.subr.bf16.mxu0 0
      %1422 = vmatpush1.bf16.msra.mxu0 0
      %1423 = vmatprep.subr.bf16.mxu0 0
      %1424 = vmatpush1.bf16.msra.mxu0 0
      %1425 = vmatprep.subr.bf16.mxu0 0
      %1426 = vmatpush1.bf16.msra.mxu0 0
      %1427 = vmatprep.subr.bf16.mxu0 0
      %1428 = vmatpush1.bf16.msra.mxu0 0
      %1429 = vmatprep.subr.bf16.mxu0 0
      %1430 = vmatpush1.bf16.msra.mxu0 0
      %1431 = vmatprep.subr.bf16.mxu0 0
      %1432 = vmatpush1.bf16.msra.mxu0 0
      %1433 = vmatprep.subr.bf16.mxu0 0
      %1434 = vmatpush1.bf16.msra.mxu0 0
      %1435 = vmatprep.mubr.bf16.mxu0 0
      %1436 = vmatmul.mubr.bf16.gmra.mrb[0].mxu0 %v1323
      %v1437 = vpop.f32.mrb[0].mxu0
      %v1438 = vadd.f32 0.0, %v1437
      %v1439 = vpop.f32.mrb[0].mxu0
      %v1440 = vpop.f32.mrb[0].mxu0
      %v1441 = vadd.f32 0.0, %v1440
      %v1442 = vpop.f32.mrb[0].mxu0
      %1443 = vmatprep.mubr.bf16.mxu0 0
      %1444 = vmatmul.mubr.bf16.gmra.mrb[0].mxu0 %v1324
      %v1445 = vpop.f32.mrb[0].mxu0
      %v1446 = vadd.f32 0.0, %v1445
      %v1447 = vpop.f32.mrb[0].mxu0
      %v1448 = vpop.f32.mrb[0].mxu0
      %v1449 = vadd.f32 0.0, %v1448
      %v1450 = vpop.f32.mrb[0].mxu0
      %1451 = vmatprep.mubr.bf16.mxu0 0
      %1452 = vmatmul.mubr.bf16.gmra.mrb[0].mxu0 %v1325
      %v1453 = vpop.f32.mrb[0].mxu0
      %v1454 = vadd.f32 0.0, %v1453
      %v1455 = vpop.f32.mrb[0].mxu0
      %v1456 = vpop.f32.mrb[0].mxu0
      %v1457 = vadd.f32 0.0, %v1456
      %v1458 = vpop.f32.mrb[0].mxu0
      %1459 = vmatprep.mubr.bf16.mxu0 0
      %1460 = vmatmul.mubr.bf16.gmra.mrb[0].mxu0 %v1326
      %v1461 = vpop.f32.mrb[0].mxu0
      %v1462 = vadd.f32 0.0, %v1461
      %v1463 = vpop.f32.mrb[0].mxu0
      %v1464 = vpop.f32.mrb[0].mxu0
      %v1465 = vadd.f32 0.0, %v1464
      %v1466 = vpop.f32.mrb[0].mxu0
      %1467 = vmatprep.mubr.bf16.mxu0 0
      %1468 = vmatmul.mubr.bf16.gmra.mrb[0].mxu0 %v1327
      %v1469 = vpop.f32.mrb[0].mxu0
      %v1470 = vadd.f32 0.0, %v1469
      %v1471 = vpop.f32.mrb[0].mxu0
      %v1472 = vpop.f32.mrb[0].mxu0
      %v1473 = vadd.f32 0.0, %v1472
      %v1474 = vpop.f32.mrb[0].mxu0
      %1475 = vmatprep.mubr.bf16.mxu0 0
      %1476 = vmatmul.mubr.bf16.gmra.mrb[0].mxu0 %v1328
      %v1477 = vpop.f32.mrb[0].mxu0
      %v1478 = vadd.f32 0.0, %v1477
      %v1479 = vpop.f32.mrb[0].mxu0
      %v1480 = vpop.f32.mrb[0].mxu0
      %v1481 = vadd.f32 0.0, %v1480
      %v1482 = vpop.f32.mrb[0].mxu0
      %1483 = vmatprep.mubr.bf16.mxu0 0
      %1484 = vmatmul.mubr.bf16.gmra.mrb[0].mxu0 %v1329
      %v1485 = vpop.f32.mrb[0].mxu0
      %v1486 = vadd.f32 0.0, %v1485
      %v1487 = vpop.f32.mrb[0].mxu0
      %v1488 = vpop.f32.mrb[0].mxu0
      %v1489 = vadd.f32 0.0, %v1488
      %v1490 = vpop.f32.mrb[0].mxu0
      %1491 = vmatprep.mubr.bf16.mxu0 0
      %1492 = vmatmul.mubr.bf16.gmra.mrb[0].mxu0 %v1330
      %v1493 = vpop.f32.mrb[0].mxu0
      %v1494 = vadd.f32 0.0, %v1493
      %v1495 = vpop.f32.mrb[0].mxu0
      %v1496 = vpop.f32.mrb[0].mxu0
      %v1497 = vadd.f32 0.0, %v1496
      %v1498 = vpop.f32.mrb[0].mxu0
      %1499 = vmatprep.mubr.bf16.mxu0 0
      %1500 = vmatmul.mubr.bf16.gmra.mrb[0].mxu0 %v1331
      %v1501 = vpop.f32.mrb[0].mxu0
      %v1502 = vadd.f32 0.0, %v1501
      %v1503 = vpop.f32.mrb[0].mxu0
      %v1504 = vpop.f32.mrb[0].mxu0
      %v1505 = vadd.f32 0.0, %v1504
      %v1506 = vpop.f32.mrb[0].mxu0
      %1507 = vmatprep.mubr.bf16.mxu0 0
      %1508 = vmatmul.mubr.bf16.gmra.mrb[0].mxu0 %v1332
      %v1509 = vpop.f32.mrb[0].mxu0
      %v1510 = vadd.f32 0.0, %v1509
      %v1511 = vpop.f32.mrb[0].mxu0
      %v1512 = vpop.f32.mrb[0].mxu0
      %v1513 = vadd.f32 0.0, %v1512
      %v1514 = vpop.f32.mrb[0].mxu0
      %1515 = vmatprep.mubr.bf16.mxu0 0
      %1516 = vmatmul.mubr.bf16.gmra.mrb[0].mxu0 %v1333
      %v1517 = vpop.f32.mrb[0].mxu0
      %v1518 = vadd.f32 0.0, %v1517
      %v1519 = vpop.f32.mrb[0].mxu0
      %v1520 = vpop.f32.mrb[0].mxu0
      %v1521 = vadd.f32 0.0, %v1520
      %v1522 = vpop.f32.mrb[0].mxu0
      %1523 = vmatprep.mubr.bf16.mxu0 0
      %1524 = vmatmul.mubr.bf16.gmra.mrb[0].mxu0 %v1334
      %v1525 = vpop.f32.mrb[0].mxu0
      %v1526 = vadd.f32 0.0, %v1525
      %v1527 = vpop.f32.mrb[0].mxu0
      %v1528 = vpop.f32.mrb[0].mxu0
      %v1529 = vadd.f32 0.0, %v1528
      %v1530 = vpop.f32.mrb[0].mxu0
      %1531 = vmatprep.mubr.bf16.mxu0 0
      %1532 = vmatmul.mubr.bf16.gmra.mrb[0].mxu0 %v1335
      %v1533 = vpop.f32.mrb[0].mxu0
      %v1534 = vadd.f32 0.0, %v1533
      %v1535 = vpop.f32.mrb[0].mxu0
      %v1536 = vpop.f32.mrb[0].mxu0
      %v1537 = vadd.f32 0.0, %v1536
      %v1538 = vpop.f32.mrb[0].mxu0
      %1539 = vmatprep.mubr.bf16.mxu0 0
      %1540 = vmatmul.mubr.bf16.gmra.mrb[0].mxu0 %v1336
      %v1541 = vpop.f32.mrb[0].mxu0
      %v1542 = vadd.f32 0.0, %v1541
      %v1543 = vpop.f32.mrb[0].mxu0
      %v1544 = vpop.f32.mrb[0].mxu0
      %v1545 = vadd.f32 0.0, %v1544
      %v1546 = vpop.f32.mrb[0].mxu0
      %1547 = vmatprep.mubr.bf16.mxu0 0
      %1548 = vmatmul.mubr.bf16.gmra.mrb[0].mxu0 %v1337
      %v1549 = vpop.f32.mrb[0].mxu0
      %v1550 = vadd.f32 0.0, %v1549
      %v1551 = vpop.f32.mrb[0].mxu0
      %v1552 = vpop.f32.mrb[0].mxu0
      %v1553 = vadd.f32 0.0, %v1552
      %v1554 = vpop.f32.mrb[0].mxu0
      %1555 = vmatprep.mubr.bf16.mxu0 0
      %1556 = vmatmul.mubr.bf16.gmra.mrb[0].mxu0 %v1338
      %v1557 = vpop.f32.mrb[0].mxu0
      %v1558 = vadd.f32 0.0, %v1557
      %v1559 = vpop.f32.mrb[0].mxu0
      %v1560 = vpop.f32.mrb[0].mxu0
      %v1561 = vadd.f32 0.0, %v1560
      %v1562 = vpop.f32.mrb[0].mxu0
      %1563 = vdwg.mxu0
      %v1564 = vmax.f32 %v1438, %v1454
      %v1565 = vmax.f32 %v1441, %v1457
      %v1566 = vmax.f32 %v1446, %v1462
      %v1567 = vmax.f32 %v1449, %v1465
      %v1568 = vmax.f32 %v1564, %v1470
      %v1569 = vmax.f32 %v1565, %v1473
      %v1570 = vmax.f32 %v1566, %v1478
      %v1571 = vmax.f32 %v1567, %v1481
      %v1572 = vmax.f32 %v1568, %v1486
      %v1573 = vmax.f32 %v1569, %v1489
      %v1574 = vmax.f32 %v1570, %v1494
      %v1575 = vmax.f32 %v1571, %v1497
      %v1576 = vmax.f32 %v1572, %v1502
      %v1577 = vmax.f32 %v1573, %v1505
      %v1578 = vmax.f32 %v1574, %v1510
      %v1579 = vmax.f32 %v1575, %v1513
      %v1580 = vmax.f32 %v1576, %v1518
      %v1581 = vmax.f32 %v1577, %v1521
      %v1582 = vmax.f32 %v1578, %v1526
      %v1583 = vmax.f32 %v1579, %v1529
      %v1584 = vmax.f32 %v1580, %v1534
      %v1585 = vmax.f32 %v1581, %v1537
      %v1586 = vmax.f32 %v1582, %v1542
      %v1587 = vmax.f32 %v1583, %v1545
      %v1588 = vmax.f32 %v1584, %v1550
      %v1589 = vmax.f32 %v1585, %v1553
      %v1590 = vmax.f32 %v1586, %v1558
      %v1591 = vmax.f32 %v1587, %v1561
      %v1592 = vld [vmem:[%s6] sm:$0x1]
      %v1594 = vlaneseq
      %v1595 = vshrl.u32 %v1594, 7
      %v1596 = vsub.s32 0, %v1595
      %v1597 = vrot.slane %v1592, %v1596
      %v1599 = vadd.f32 %v1588, %v1597
      %v1600 = vadd.f32 %v1589, %v1597
      %v1601 = vadd.f32 %v1590, %v1597
      %v1602 = vadd.f32 %v1591, %v1597
      %v1603 = vmax.f32 %v1599, 0.0
      %v1604 = vmax.f32 %v1600, 0.0
      %v1605 = vmax.f32 %v1601, 0.0
      %v1606 = vmax.f32 %v1602, 0.0
      %v1607 = vpack.c.bf16 %v1604, %v1603
      %v1608 = vpack.c.bf16 %v1606, %v1605
      %v1611 = vunpack.c.l.b16 %v1607
      %v1612 = vunpack.c.h.b16 %v1607
      %v1613 = vunpack.c.l.b16 %v1608
      %v1614 = vunpack.c.h.b16 %v1608
      %v1615 = vpack.c.b16 %v1611, %v1611
      %v1616 = vpack.c.b16 %v1612, %v1612
      %v1617 = vpack.c.b16 %v1613, %v1613
      %v1618 = vpack.c.b16 %v1614, %v1614
      %1623 = vst [vmem:[%s316] sm:$0xf] %v1615
      %1624 = vst [vmem:[%s316 + $0x4] sm:$0xf] %v1616
      %1625 = vst [vmem:[%s316 + $0x8] sm:$0xf] %v1617
      %1626 = vst [vmem:[%s316 + $0xc] sm:$0xf] %v1618
      %s1627 = smul.u32 4, %s23
      %p1628 = scmp.lt.s32.totalorder %s22, 1
      %s1629 = scalar_select %p1628, %s22, 1
      %p1630 = scmp.lt.s32.totalorder %s1627, 3
      %s1631 = scalar_select %p1630, %s1627, 3
      %s1632 = smul.addr %s1629, 4
      %s1633 = sadd.s32 %s1631, %s1632
      %s1634 = smul.addr %s1633, 4
      %s1635 = scalar_lea.vmem %s7, %s1634
      // Predicated region
      $region49: #{_lambda_.6} parent=47 // pred_check
        %p1636 = pneg %p204
      $region50: #{_lambda_.6} parent=47 // pred_check_branch
        %1638 = sbr.rel (%p1636) target = $region52
      $region51: #{_lambda_.6} parent=47 // pred_region
        %s1639 = smul.u32 4, %s23
      $region52: #{_lambda_.6} parent=47 // pred_fallthru
        _
    $region48: #{_lambda_.6} parent=5 // pred_fallthru
      _
    %p1640 = scmp.le.s32.totalorder 2, %s13
    // Predicated region
    $region53: #{_lambda_.6} parent=5 // pred_check
      %p1641 = pneg %p1640
    $region54: #{_lambda_.6} parent=5 // pred_check_branch
      %1643 = sbr.rel (%p1641) target = $region56
    $region55: #{_lambda_.6} parent=5 // pred_region
      %s1644 = ssub.s32 %s13, 2
      // Predicated region
      $region57: #{_lambda_.6} parent=55 // pred_check
        %p1645 = pneg %p210
      $region58: #{_lambda_.6} parent=55 // pred_check_branch
        %1647 = sbr.rel (%p1645) target = $region60
      $region59: #{_lambda_.6} parent=55 // pred_region
        %s1648 = smul.u32 4, %s25
        %p1649 = scmp.lt.s32.totalorder %s24, 1
        %s1650 = scalar_select %p1649, %s24, 1
        %p1651 = scmp.lt.s32.totalorder %s1648, 3
        %s1652 = scalar_select %p1651, %s1648, 3
        %s1653 = smul.addr %s1650, 4
        %s1654 = sadd.s32 %s1652, %s1653
        %s1655 = smul.addr %s1654, 4
        %s1656 = scalar_lea.vmem %s7, %s1655
      $region60: #{_lambda_.6} parent=55 // pred_fallthru
        _
    $region56: #{_lambda_.6} parent=5 // pred_fallthru
      _
  $region6: #{_lambda_.6} parent=0 // loop_footer
    %s17 = sadd.s32 1, %s13
  $region7: #{_lambda_.6} parent=0 // loop_footer_branch
    %12 = sbr.rel target = $region3
  $region8: #{_lambda_.6} parent=0 // loop_exit
    _

// kernel: _lambda_.7
$region0: #{_lambda_.7}
  #allocation0 [shape = 'u32[]', space=smem, size = 0x4, offset = 0x4, fixed_abs, tag = 'smem constant byte address 0x4 - core index']
  #allocation1 [shape = 'u32[144,128]{1,0:T(1,128)}', space=vmem, size = 0x12000, scoped, tag = 'internal scratch']
  %s0 = inlined_call_operand.vmem [shape: bf16[2,8,16,3], index: 0, kind: input, shape index: {}]
  %s1 = inlined_call_operand.vmem [shape: bf16[2,8,16,128], index: 1, kind: input, shape index: {}]
  %s2 = inlined_call_operand.vmem [shape: bf16[128,128], index: 2, kind: input, shape index: {}]
  %s3 = inlined_call_operand.vmem [shape: f32[3,128], index: 3, kind: input, shape index: {}]
  %s4 = inlined_call_operand.vmem [shape: f32[1,128], index: 4, kind: input, shape index: {}, may-alias: {4,6}]
  %s5 = inlined_call_operand.vmem [shape: bf16[128,128], index: 5, kind: input, shape index: {}]
  %s6 = inlined_call_operand.vmem [shape: f32[1,128], index: 6, kind: input, shape index: {}, may-alias: {4,6}]
  %s7 = inlined_call_operand.vmem [shape: bf16[128,256], index: 7, kind: input, shape index: {}]
  %s8 = inlined_call_operand.vmem [shape: f32[1,256], index: 8, kind: input, shape index: {}]
  %s9 = inlined_call_operand.vmem [shape: bf16[2,16,256], index: 9, kind: output, shape index: {}]
  %s10 = sld [smem:[#allocation0]]
  $region69: #{_lambda_.7} parent=0
    _
  %s12 = ssub.s32 1, %s10
  %s13 = scalar_select 0, %s12, %s10
  loop: start=0, step=1, limit=4
  $region2: #{_lambda_.7} parent=0 // loop_pre_header
    _
  $region3: #{_lambda_.7} parent=0 // loop_header
    %s15 = sphi 0, %s19
    %p16 = scmp.ge.s32.totalorder %s15, 4
    %s22 = sphi 0, %s34
    %s23 = sphi 0, %s30
    %s24 = sphi 0, %s22
    %s25 = sphi 0, %s23
    %s26 = sphi 0, %s24
    %s27 = sphi 0, %s25
    %s39 = sphi 0, %s41
    %s42 = sphi 0, %s39
    %s43 = sphi 0, %s42
    %s59 = sphi 0, %s43
    %s67 = sphi 0, %s69
    %s70 = sphi 0, %s67
    %s71 = sphi 0, %s70
    %s87 = sphi 0, %s71
    %s91 = sphi 0, %s91
    %s93 = sphi 0, %s91
    %s94 = sphi 0, %s93
    %s108 = sphi 0, %s94
    %s112 = sphi 0, %s112
    %s114 = sphi 0, %s112
    %s115 = sphi 0, %s114
    %s129 = sphi 0, %s115
    %s133 = sphi 0, %s133
    %s135 = sphi 0, %s133
    %s136 = sphi 0, %s135
    %s150 = sphi 0, %s136
    %s154 = sphi 0, %s154
    %s156 = sphi 0, %s154
    %s157 = sphi 0, %s156
    %s171 = sphi 0, %s157
    %s175 = sphi 0, %s175
    %s177 = sphi 0, %s175
    %s178 = sphi 0, %s177
    %s192 = sphi 0, %s178
    %s196 = sphi 0, %s196
    %s198 = sphi 0, %s196
    %s199 = sphi 0, %s198
    %s213 = sphi 0, %s199
    %s217 = sphi 0, %s217
    %s219 = sphi 0, %s217
    %s220 = sphi 0, %s219
    %s234 = sphi 0, %s220
    %s242 = sphi 0, %s244
    %s245 = sphi 0, %s242
    %s246 = sphi 0, %s245
    %s262 = sphi 0, %s246
  $region4: #{_lambda_.7} parent=0 // loop_header_branch
    %18 = sbr.rel (%p16) target = $region8
  $region5: #{_lambda_.7} parent=0 // loop_body
    %s20 = ssub.s32 %s15, 1
    %s21 = ssub.s32 %s15, 2
    %s28 = sadd.s32 1, %s23
    %p29 = scmp.ge.s32.totalorder %s28, 1
    %s30 = scalar_select %p29, 0, %s28
    %s31 = sadd.s32 1, %s22
    %s32 = scalar_select %p29, %s31, %s22
    %p33 = scmp.ge.s32.totalorder %s32, 2
    %s34 = scalar_select %p33, 0, %s32
    %s35 = ssub.s32 %s22, %s34
    %s36 = ssub.s32 %s23, %s30
    %s37 = sor.u32 %s35, %s36
    %p38 = scmp.eq.s32.totalorder %s37, 0
    %s40 = sadd.s32 %s39, 1
    %s41 = scalar_select %p38, %s39, %s40
    %p44 = pneg %p38
    %p45 = scmp.eq.s32.totalorder %s15, 1
    %p46 = por %p44, %p45
    %p47 = scmp.ne.s32.totalorder %s39, %s42
    %p48 = scmp.eq.s32.totalorder %s15, 0
    %p49 = por %p47, %p48
    %p50 = scmp.ne.s32.totalorder %s39, %s42
    %p51 = scmp.eq.s32.totalorder %s20, 1
    %p52 = por %p50, %p51
    %p53 = scmp.ne.s32.totalorder %s42, %s43
    %p54 = scmp.eq.s32.totalorder %s20, 0
    %p55 = por %p53, %p54
    %p56 = scmp.ne.s32.totalorder %s42, %s43
    %p57 = scmp.eq.s32.totalorder %s21, 1
    %p58 = por %p56, %p57
    %p60 = scmp.ne.s32.totalorder %s43, %s59
    %p61 = scmp.eq.s32.totalorder %s21, 0
    %p62 = por %p60, %p61
    %s63 = ssub.s32 %s22, %s34
    %s64 = ssub.s32 %s23, %s30
    %s65 = sor.u32 %s63, %s64
    %p66 = scmp.eq.s32.totalorder %s65, 0
    %s68 = sadd.s32 %s67, 1
    %s69 = scalar_select %p66, %s67, %s68
    %p72 = pneg %p66
    %p73 = scmp.eq.s32.totalorder %s15, 1
    %p74 = por %p72, %p73
    %p75 = scmp.ne.s32.totalorder %s67, %s70
    %p76 = scmp.eq.s32.totalorder %s15, 0
    %p77 = por %p75, %p76
    %p78 = scmp.ne.s32.totalorder %s67, %s70
    %p79 = scmp.eq.s32.totalorder %s20, 1
    %p80 = por %p78, %p79
    %p81 = scmp.ne.s32.totalorder %s70, %s71
    %p82 = scmp.eq.s32.totalorder %s20, 0
    %p83 = por %p81, %p82
    %p84 = scmp.ne.s32.totalorder %s70, %s71
    %p85 = scmp.eq.s32.totalorder %s21, 1
    %p86 = por %p84, %p85
    %p88 = scmp.ne.s32.totalorder %s71, %s87
    %p89 = scmp.eq.s32.totalorder %s21, 0
    %p90 = por %p88, %p89
    %s92 = sadd.s32 %s91, 1
    %p95 = scmp.eq.s32.totalorder %s15, 1
    %p96 = scmp.ne.s32.totalorder %s91, %s93
    %p97 = scmp.eq.s32.totalorder %s15, 0
    %p98 = por %p96, %p97
    %p99 = scmp.ne.s32.totalorder %s91, %s93
    %p100 = scmp.eq.s32.totalorder %s20, 1
    %p101 = por %p99, %p100
    %p102 = scmp.ne.s32.totalorder %s93, %s94
    %p103 = scmp.eq.s32.totalorder %s20, 0
    %p104 = por %p102, %p103
    %p105 = scmp.ne.s32.totalorder %s93, %s94
    %p106 = scmp.eq.s32.totalorder %s21, 1
    %p107 = por %p105, %p106
    %p109 = scmp.ne.s32.totalorder %s94, %s108
    %p110 = scmp.eq.s32.totalorder %s21, 0
    %p111 = por %p109, %p110
    %s113 = sadd.s32 %s112, 1
    %p116 = scmp.eq.s32.totalorder %s15, 1
    %p117 = scmp.ne.s32.totalorder %s112, %s114
    %p118 = scmp.eq.s32.totalorder %s15, 0
    %p119 = por %p117, %p118
    %p120 = scmp.ne.s32.totalorder %s112, %s114
    %p121 = scmp.eq.s32.totalorder %s20, 1
    %p122 = por %p120, %p121
    %p123 = scmp.ne.s32.totalorder %s114, %s115
    %p124 = scmp.eq.s32.totalorder %s20, 0
    %p125 = por %p123, %p124
    %p126 = scmp.ne.s32.totalorder %s114, %s115
    %p127 = scmp.eq.s32.totalorder %s21, 1
    %p128 = por %p126, %p127
    %p130 = scmp.ne.s32.totalorder %s115, %s129
    %p131 = scmp.eq.s32.totalorder %s21, 0
    %p132 = por %p130, %p131
    %s134 = sadd.s32 %s133, 1
    %p137 = scmp.eq.s32.totalorder %s15, 1
    %p138 = scmp.ne.s32.totalorder %s133, %s135
    %p139 = scmp.eq.s32.totalorder %s15, 0
    %p140 = por %p138, %p139
    %p141 = scmp.ne.s32.totalorder %s133, %s135
    %p142 = scmp.eq.s32.totalorder %s20, 1
    %p143 = por %p141, %p142
    %p144 = scmp.ne.s32.totalorder %s135, %s136
    %p145 = scmp.eq.s32.totalorder %s20, 0
    %p146 = por %p144, %p145
    %p147 = scmp.ne.s32.totalorder %s135, %s136
    %p148 = scmp.eq.s32.totalorder %s21, 1
    %p149 = por %p147, %p148
    %p151 = scmp.ne.s32.totalorder %s136, %s150
    %p152 = scmp.eq.s32.totalorder %s21, 0
    %p153 = por %p151, %p152
    %s155 = sadd.s32 %s154, 1
    %p158 = scmp.eq.s32.totalorder %s15, 1
    %p159 = scmp.ne.s32.totalorder %s154, %s156
    %p160 = scmp.eq.s32.totalorder %s15, 0
    %p161 = por %p159, %p160
    %p162 = scmp.ne.s32.totalorder %s154, %s156
    %p163 = scmp.eq.s32.totalorder %s20, 1
    %p164 = por %p162, %p163
    %p165 = scmp.ne.s32.totalorder %s156, %s157
    %p166 = scmp.eq.s32.totalorder %s20, 0
    %p167 = por %p165, %p166
    %p168 = scmp.ne.s32.totalorder %s156, %s157
    %p169 = scmp.eq.s32.totalorder %s21, 1
    %p170 = por %p168, %p169
    %p172 = scmp.ne.s32.totalorder %s157, %s171
    %p173 = scmp.eq.s32.totalorder %s21, 0
    %p174 = por %p172, %p173
    %s176 = sadd.s32 %s175, 1
    %p179 = scmp.eq.s32.totalorder %s15, 1
    %p180 = scmp.ne.s32.totalorder %s175, %s177
    %p181 = scmp.eq.s32.totalorder %s15, 0
    %p182 = por %p180, %p181
    %p183 = scmp.ne.s32.totalorder %s175, %s177
    %p184 = scmp.eq.s32.totalorder %s20, 1
    %p185 = por %p183, %p184
    %p186 = scmp.ne.s32.totalorder %s177, %s178
    %p187 = scmp.eq.s32.totalorder %s20, 0
    %p188 = por %p186, %p187
    %p189 = scmp.ne.s32.totalorder %s177, %s178
    %p190 = scmp.eq.s32.totalorder %s21, 1
    %p191 = por %p189, %p190
    %p193 = scmp.ne.s32.totalorder %s178, %s192
    %p194 = scmp.eq.s32.totalorder %s21, 0
    %p195 = por %p193, %p194
    %s197 = sadd.s32 %s196, 1
    %p200 = scmp.eq.s32.totalorder %s15, 1
    %p201 = scmp.ne.s32.totalorder %s196, %s198
    %p202 = scmp.eq.s32.totalorder %s15, 0
    %p203 = por %p201, %p202
    %p204 = scmp.ne.s32.totalorder %s196, %s198
    %p205 = scmp.eq.s32.totalorder %s20, 1
    %p206 = por %p204, %p205
    %p207 = scmp.ne.s32.totalorder %s198, %s199
    %p208 = scmp.eq.s32.totalorder %s20, 0
    %p209 = por %p207, %p208
    %p210 = scmp.ne.s32.totalorder %s198, %s199
    %p211 = scmp.eq.s32.totalorder %s21, 1
    %p212 = por %p210, %p211
    %p214 = scmp.ne.s32.totalorder %s199, %s213
    %p215 = scmp.eq.s32.totalorder %s21, 0
    %p216 = por %p214, %p215
    %s218 = sadd.s32 %s217, 1
    %p221 = scmp.eq.s32.totalorder %s15, 1
    %p222 = scmp.ne.s32.totalorder %s217, %s219
    %p223 = scmp.eq.s32.totalorder %s15, 0
    %p224 = por %p222, %p223
    %p225 = scmp.ne.s32.totalorder %s217, %s219
    %p226 = scmp.eq.s32.totalorder %s20, 1
    %p227 = por %p225, %p226
    %p228 = scmp.ne.s32.totalorder %s219, %s220
    %p229 = scmp.eq.s32.totalorder %s20, 0
    %p230 = por %p228, %p229
    %p231 = scmp.ne.s32.totalorder %s219, %s220
    %p232 = scmp.eq.s32.totalorder %s21, 1
    %p233 = por %p231, %p232
    %p235 = scmp.ne.s32.totalorder %s220, %s234
    %p236 = scmp.eq.s32.totalorder %s21, 0
    %p237 = por %p235, %p236
    %s238 = ssub.s32 %s22, %s34
    %s239 = ssub.s32 %s23, %s30
    %s240 = sor.u32 %s238, %s239
    %p241 = scmp.eq.s32.totalorder %s240, 0
    %s243 = sadd.s32 %s242, 1
    %s244 = scalar_select %p241, %s242, %s243
    %p247 = pneg %p241
    %p248 = scmp.eq.s32.totalorder %s15, 1
    %p249 = por %p247, %p248
    %p250 = scmp.ne.s32.totalorder %s242, %s245
    %p251 = scmp.eq.s32.totalorder %s15, 0
    %p252 = por %p250, %p251
    %p253 = scmp.ne.s32.totalorder %s242, %s245
    %p254 = scmp.eq.s32.totalorder %s20, 1
    %p255 = por %p253, %p254
    %p256 = scmp.ne.s32.totalorder %s245, %s246
    %p257 = scmp.eq.s32.totalorder %s20, 0
    %p258 = por %p256, %p257
    %p259 = scmp.ne.s32.totalorder %s245, %s246
    %p260 = scmp.eq.s32.totalorder %s21, 1
    %p261 = por %p259, %p260
    %p263 = scmp.ne.s32.totalorder %s246, %s262
    %p264 = scmp.eq.s32.totalorder %s21, 0
    %p265 = por %p263, %p264
    %p266 = scmp.le.s32.totalorder 1, %s15
    %p267 = scmp.lt.s32.totalorder %s15, 3
    %p268 = pnand %p266, %p267
    %p269 = pneg %p268
    // Predicated region
    $region9: #{_lambda_.7} parent=5 // pred_check
      _
    $region10: #{_lambda_.7} parent=5 // pred_check_branch
      %271 = sbr.rel (%p268) target = $region12
    $region11: #{_lambda_.7} parent=5 // pred_region
      %s272 = ssub.s32 %s15, 1
      // Predicated region
      $region13: #{_lambda_.7} parent=11 // pred_check
        %p273 = pneg %p104
      $region14: #{_lambda_.7} parent=11 // pred_check_branch
        %275 = sbr.rel (%p273) target = $region16
      $region15: #{_lambda_.7} parent=11 // pred_region
        _
      $region16: #{_lambda_.7} parent=11 // pred_fallthru
        _
      // Predicated region
      $region17: #{_lambda_.7} parent=11 // pred_check
        %p276 = pneg %p125
      $region18: #{_lambda_.7} parent=11 // pred_check_branch
        %278 = sbr.rel (%p276) target = $region20
      $region19: #{_lambda_.7} parent=11 // pred_region
        _
      $region20: #{_lambda_.7} parent=11 // pred_fallthru
        _
      // Predicated region
      $region21: #{_lambda_.7} parent=11 // pred_check
        %p279 = pneg %p146
      $region22: #{_lambda_.7} parent=11 // pred_check_branch
        %281 = sbr.rel (%p279) target = $region24
      $region23: #{_lambda_.7} parent=11 // pred_region
        _
      $region24: #{_lambda_.7} parent=11 // pred_fallthru
        _
      // Predicated region
      $region25: #{_lambda_.7} parent=11 // pred_check
        %p282 = pneg %p167
      $region26: #{_lambda_.7} parent=11 // pred_check_branch
        %284 = sbr.rel (%p282) target = $region28
      $region27: #{_lambda_.7} parent=11 // pred_region
        _
      $region28: #{_lambda_.7} parent=11 // pred_fallthru
        _
      // Predicated region
      $region29: #{_lambda_.7} parent=11 // pred_check
        %p285 = pneg %p188
      $region30: #{_lambda_.7} parent=11 // pred_check_branch
        %287 = sbr.rel (%p285) target = $region32
      $region31: #{_lambda_.7} parent=11 // pred_region
        _
      $region32: #{_lambda_.7} parent=11 // pred_fallthru
        _
      // Predicated region
      $region33: #{_lambda_.7} parent=11 // pred_check
        %p288 = pneg %p209
      $region34: #{_lambda_.7} parent=11 // pred_check_branch
        %290 = sbr.rel (%p288) target = $region36
      $region35: #{_lambda_.7} parent=11 // pred_region
        _
      $region36: #{_lambda_.7} parent=11 // pred_fallthru
        _
      // Predicated region
      $region37: #{_lambda_.7} parent=11 // pred_check
        %p291 = pneg %p230
      $region38: #{_lambda_.7} parent=11 // pred_check_branch
        %293 = sbr.rel (%p291) target = $region40
      $region39: #{_lambda_.7} parent=11 // pred_region
        _
      $region40: #{_lambda_.7} parent=11 // pred_fallthru
        _
    $region12: #{_lambda_.7} parent=5 // pred_fallthru
      _
    %p294 = scmp.lt.s32.totalorder %s15, 2
    // Predicated region
    $region41: #{_lambda_.7} parent=5 // pred_check
      %p295 = pneg %p294
    $region42: #{_lambda_.7} parent=5 // pred_check_branch
      %297 = sbr.rel (%p295) target = $region44
    $region43: #{_lambda_.7} parent=5 // pred_region
      // Predicated region
      $region45: #{_lambda_.7} parent=43 // pred_check
        %p298 = pneg %p49
      $region46: #{_lambda_.7} parent=43 // pred_check_branch
        %300 = sbr.rel (%p298) target = $region48
      $region47: #{_lambda_.7} parent=43 // pred_region
        %s301 = smul.u32 2, %s23
        %p302 = scmp.lt.s32.totalorder %s22, 1
        %s303 = scalar_select %p302, %s22, 1
        %p304 = scmp.lt.s32.totalorder %s301, 1
        %s305 = scalar_select %p304, %s301, 1
        %s306 = smul.addr %s303, 16
        %s307 = sadd.s32 %s305, %s306
        %s308 = smul.addr %s307, 4
        %s309 = scalar_lea.vmem %s0, %s308
        %s310 = smul.u32 2, %s23
      $region48: #{_lambda_.7} parent=43 // pred_fallthru
        _
      // Predicated region
      $region49: #{_lambda_.7} parent=43 // pred_check
        %p311 = pneg %p77
      $region50: #{_lambda_.7} parent=43 // pred_check_branch
        %313 = sbr.rel (%p311) target = $region52
      $region51: #{_lambda_.7} parent=43 // pred_region
        %s314 = smul.u32 2, %s23
        %p315 = scmp.lt.s32.totalorder %s22, 1
        %s316 = scalar_select %p315, %s22, 1
        %p317 = scmp.lt.s32.totalorder %s314, 1
        %s318 = scalar_select %p317, %s314, 1
        %s319 = smul.addr %s316, 16
        %s320 = sadd.s32 %s318, %s319
        %s321 = smul.addr %s320, 4
        %s322 = scalar_lea.vmem %s1, %s321
        %s323 = smul.u32 2, %s23
      $region52: #{_lambda_.7} parent=43 // pred_fallthru
        _
    $region44: #{_lambda_.7} parent=5 // pred_fallthru
      _
    %p324 = scmp.le.s32.totalorder 1, %s15
    %p325 = scmp.lt.s32.totalorder %s15, 3
    %p326 = pnand %p324, %p325
    %p327 = pneg %p326
    // Predicated region
    $region53: #{_lambda_.7} parent=5 // pred_check
      _
    $region54: #{_lambda_.7} parent=5 // pred_check_branch
      %329 = sbr.rel (%p326) target = $region56
    $region55: #{_lambda_.7} parent=5 // pred_region
      %s330 = ssub.s32 %s15, 1
      %s331 = smul.u32 2, %s25
      %p332 = scmp.lt.s32.totalorder %s24, 1
      %s333 = scalar_select %p332, %s24, 1
      %p334 = scmp.lt.s32.totalorder %s331, 1
      %s335 = scalar_select %p334, %s331, 1
      %s336 = smul.addr %s333, 16
      %s337 = sadd.s32 %s335, %s336
      %s338 = smul.addr %s337, 4
      %s339 = scalar_lea.vmem %s0, %s338
      %p340 = pneg %p55
      %p341 = pneg %p52
      %s342 = smul.u32 2, %s25
      %p343 = scmp.lt.s32.totalorder %s24, 1
      %s344 = scalar_select %p343, %s24, 1
      %p345 = scmp.lt.s32.totalorder %s342, 1
      %s346 = scalar_select %p345, %s342, 1
      %s347 = smul.addr %s344, 16
      %s348 = sadd.s32 %s346, %s347
      %s349 = smul.addr %s348, 4
      %s350 = scalar_lea.vmem %s1, %s349
      %p351 = pneg %p83
      %p352 = pneg %p80
      %p353 = pneg %p104
      %p354 = pneg %p101
      %p355 = pneg %p125
      %p356 = pneg %p122
      %p357 = pneg %p146
      %p358 = pneg %p143
      %p359 = pneg %p167
      %p360 = pneg %p164
      %p361 = pneg %p188
      %p362 = pneg %p185
      %p363 = pneg %p209
      %p364 = pneg %p206
      %p365 = pneg %p230
      %p366 = pneg %p227
      %p367 = pneg %p258
      %p368 = pneg %p255
      %s369 = smul.u32 2, %s25
      %p370 = scmp.lt.s32.totalorder %s24, 1
      %s371 = scalar_select %p370, %s24, 1
      %p372 = scmp.lt.s32.totalorder %s369, 1
      %s373 = scalar_select %p372, %s369, 1
      %s374 = smul.addr %s373, 2
      %s375 = smul.addr %s371, 4
      %s376 = sadd.s32 %s374, %s375
      %s377 = smul.addr %s376, 4
      %s378 = scalar_lea.vmem %s9, %s377
      %s379 = smul.u32 2, %s25
      %p380 = scmp.lt.s32.totalorder %s24, 1
      %s381 = scalar_select %p380, %s24, 1
      %p382 = scmp.lt.s32.totalorder %s379, 1
      %s383 = scalar_select %p382, %s379, 1
      %s384 = smul.addr %s381, 16
      %s385 = sadd.s32 %s383, %s384
      %s386 = smul.addr %s385, 4
      %s387 = scalar_lea.vmem %s0, %s386
      %s388 = smul.u32 2, %s25
      %s389 = smul.u32 2, %s25
      %p390 = scmp.lt.s32.totalorder %s24, 1
      %s391 = scalar_select %p390, %s24, 1
      %p392 = scmp.lt.s32.totalorder %s389, 1
      %s393 = scalar_select %p392, %s389, 1
      %s394 = smul.addr %s391, 16
      %s395 = sadd.s32 %s393, %s394
      %s396 = smul.addr %s395, 4
      %s397 = scalar_lea.vmem %s1, %s396
      %s398 = smul.u32 2, %s25
      %s399 = smul.u32 2, %s25
      %p400 = scmp.lt.s32.totalorder %s24, 1
      %s401 = scalar_select %p400, %s24, 1
      %p402 = scmp.lt.s32.totalorder %s399, 1
      %s403 = scalar_select %p402, %s399, 1
      %s404 = smul.addr %s403, 2
      %s405 = smul.addr %s401, 4
      %s406 = sadd.s32 %s404, %s405
      %s407 = smul.addr %s406, 4
      %s408 = scalar_lea.vmem %s9, %s407
      %s409 = smul.u32 2, %s25
      %v411 = vld [vmem:[%s397] sm:$0xf]
      %v412 = vld [vmem:[%s397 + $0x4] sm:$0xf]
      %v413 = vld [vmem:[%s397 + $0x8] sm:$0xf]
      %v414 = vld [vmem:[%s397 + $0xc] sm:$0xf]
      %v415 = vld [vmem:[%s397 + $0x10] sm:$0xf]
      %v416 = vld [vmem:[%s397 + $0x14] sm:$0xf]
      %v417 = vld [vmem:[%s397 + $0x18] sm:$0xf]
      %v418 = vld [vmem:[%s397 + $0x1c] sm:$0xf]
      %v419 = vld [vmem:[%s397 + $0x20] sm:$0xf]
      %v420 = vld [vmem:[%s397 + $0x24] sm:$0xf]
      %v421 = vld [vmem:[%s397 + $0x28] sm:$0xf]
      %v422 = vld [vmem:[%s397 + $0x2c] sm:$0xf]
      %v423 = vld [vmem:[%s397 + $0x30] sm:$0xf]
      %v424 = vld [vmem:[%s397 + $0x34] sm:$0xf]
      %v425 = vld [vmem:[%s397 + $0x38] sm:$0xf]
      %v426 = vld [vmem:[%s397 + $0x3c] sm:$0xf]
      %v427 = vld [vmem:[%s2] sm:$0xf]
      %v428 = vld [vmem:[%s2 + $0x4] sm:$0xf]
      %v429 = vld [vmem:[%s2 + $0x8] sm:$0xf]
      %v430 = vld [vmem:[%s2 + $0xc] sm:$0xf]
      %v431 = vld [vmem:[%s2 + $0x10] sm:$0xf]
      %v432 = vld [vmem:[%s2 + $0x14] sm:$0xf]
      %v433 = vld [vmem:[%s2 + $0x18] sm:$0xf]
      %v434 = vld [vmem:[%s2 + $0x1c] sm:$0xf]
      %v435 = vld [vmem:[%s2 + $0x20] sm:$0xf]
      %v436 = vld [vmem:[%s2 + $0x24] sm:$0xf]
      %v437 = vld [vmem:[%s2 + $0x28] sm:$0xf]
      %v438 = vld [vmem:[%s2 + $0x2c] sm:$0xf]
      %v439 = vld [vmem:[%s2 + $0x30] sm:$0xf]
      %v440 = vld [vmem:[%s2 + $0x34] sm:$0xf]
      %v441 = vld [vmem:[%s2 + $0x38] sm:$0xf]
      %v442 = vld [vmem:[%s2 + $0x3c] sm:$0xf]
      %v443 = vld [vmem:[%s387] sm:$0xf]
      %v444 = vld [vmem:[%s387 + $0x4] sm:$0xf]
      %v445 = vld [vmem:[%s387 + $0x8] sm:$0xf]
      %v446 = vld [vmem:[%s387 + $0xc] sm:$0xf]
      %v447 = vld [vmem:[%s387 + $0x10] sm:$0xf]
      %v448 = vld [vmem:[%s387 + $0x14] sm:$0xf]
      %v449 = vld [vmem:[%s387 + $0x18] sm:$0xf]
      %v450 = vld [vmem:[%s387 + $0x1c] sm:$0xf]
      %v451 = vld [vmem:[%s387 + $0x20] sm:$0xf]
      %v452 = vld [vmem:[%s387 + $0x24] sm:$0xf]
      %v453 = vld [vmem:[%s387 + $0x28] sm:$0xf]
      %v454 = vld [vmem:[%s387 + $0x2c] sm:$0xf]
      %v455 = vld [vmem:[%s387 + $0x30] sm:$0xf]
      %v456 = vld [vmem:[%s387 + $0x34] sm:$0xf]
      %v457 = vld [vmem:[%s387 + $0x38] sm:$0xf]
      %v458 = vld [vmem:[%s387 + $0x3c] sm:$0xf]
      %v459 = vunpack.c.l.bf16 %v443
      %v460 = vunpack.c.l.bf16 %v444
      %v461 = vunpack.c.l.bf16 %v445
      %v462 = vunpack.c.l.bf16 %v446
      %v463 = vunpack.c.l.bf16 %v447
      %v464 = vunpack.c.l.bf16 %v448
      %v465 = vunpack.c.l.bf16 %v449
      %v466 = vunpack.c.l.bf16 %v450
      %v467 = vunpack.c.l.bf16 %v451
      %v468 = vunpack.c.l.bf16 %v452
      %v469 = vunpack.c.l.bf16 %v453
      %v470 = vunpack.c.l.bf16 %v454
      %v471 = vunpack.c.l.bf16 %v455
      %v472 = vunpack.c.l.bf16 %v456
      %v473 = vunpack.c.l.bf16 %v457
      %v474 = vunpack.c.l.bf16 %v458
      %v475 = vld [vmem:[%s3] sm:$0x7]
      %477 = vset.pattern.permute.xlu0 0
      %478 = vperm.xlu0 %477, %v459
      %v479 = vpop.permute.xlu0 %478
      %482 = vset.pattern.permute.xlu0 0
      %483 = vperm.xlu0 %482, %v460
      %v484 = vpop.permute.xlu0 %483
      %487 = vset.pattern.permute.xlu0 0
      %488 = vperm.xlu0 %487, %v461
      %v489 = vpop.permute.xlu0 %488
      %492 = vset.pattern.permute.xlu0 0
      %493 = vperm.xlu0 %492, %v462
      %v494 = vpop.permute.xlu0 %493
      %497 = vset.pattern.permute.xlu0 0
      %498 = vperm.xlu0 %497, %v463
      %v499 = vpop.permute.xlu0 %498
      %502 = vset.pattern.permute.xlu0 0
      %503 = vperm.xlu0 %502, %v464
      %v504 = vpop.permute.xlu0 %503
      %507 = vset.pattern.permute.xlu0 0
      %508 = vperm.xlu0 %507, %v465
      %v509 = vpop.permute.xlu0 %508
      %512 = vset.pattern.permute.xlu0 0
      %513 = vperm.xlu0 %512, %v466
      %v514 = vpop.permute.xlu0 %513
      %517 = vset.pattern.permute.xlu0 0
      %518 = vperm.xlu0 %517, %v467
      %v519 = vpop.permute.xlu0 %518
      %522 = vset.pattern.permute.xlu0 0
      %523 = vperm.xlu0 %522, %v468
      %v524 = vpop.permute.xlu0 %523
      %527 = vset.pattern.permute.xlu0 0
      %528 = vperm.xlu0 %527, %v469
      %v529 = vpop.permute.xlu0 %528
      %532 = vset.pattern.permute.xlu0 0
      %533 = vperm.xlu0 %532, %v470
      %v534 = vpop.permute.xlu0 %533
      %537 = vset.pattern.permute.xlu0 0
      %538 = vperm.xlu0 %537, %v471
      %v539 = vpop.permute.xlu0 %538
      %542 = vset.pattern.permute.xlu0 0
      %543 = vperm.xlu0 %542, %v472
      %v544 = vpop.permute.xlu0 %543
      %547 = vset.pattern.permute.xlu0 0
      %548 = vperm.xlu0 %547, %v473
      %v549 = vpop.permute.xlu0 %548
      %552 = vset.pattern.permute.xlu0 0
      %553 = vperm.xlu0 %552, %v474
      %v554 = vpop.permute.xlu0 %553
      %v556 = vlaneseq
      %v557 = vshrl.u32 %v556, 7
      %v558 = vsub.s32 0, %v557
      %v559 = vrot.slane %v475, %v558
      %v560 = vmul.f32 %v479, %v559
      %v561 = vmul.f32 %v484, %v559
      %v562 = vmul.f32 %v489, %v559
      %v563 = vmul.f32 %v494, %v559
      %v564 = vmul.f32 %v499, %v559
      %v565 = vmul.f32 %v504, %v559
      %v566 = vmul.f32 %v509, %v559
      %v567 = vmul.f32 %v514, %v559
      %v568 = vmul.f32 %v519, %v559
      %v569 = vmul.f32 %v524, %v559
      %v570 = vmul.f32 %v529, %v559
      %v571 = vmul.f32 %v534, %v559
      %v572 = vmul.f32 %v539, %v559
      %v573 = vmul.f32 %v544, %v559
      %v574 = vmul.f32 %v549, %v559
      %v575 = vmul.f32 %v554, %v559
      %576 = vset.pattern.permute.xlu0 1
      %577 = vperm.xlu0 %576, %v459
      %v578 = vpop.permute.xlu0 %577
      %580 = vset.pattern.permute.xlu0 1
      %581 = vperm.xlu0 %580, %v460
      %v582 = vpop.permute.xlu0 %581
      %584 = vset.pattern.permute.xlu0 1
      %585 = vperm.xlu0 %584, %v461
      %v586 = vpop.permute.xlu0 %585
      %588 = vset.pattern.permute.xlu0 1
      %589 = vperm.xlu0 %588, %v462
      %v590 = vpop.permute.xlu0 %589
      %592 = vset.pattern.permute.xlu0 1
      %593 = vperm.xlu0 %592, %v463
      %v594 = vpop.permute.xlu0 %593
      %596 = vset.pattern.permute.xlu0 1
      %597 = vperm.xlu0 %596, %v464
      %v598 = vpop.permute.xlu0 %597
      %600 = vset.pattern.permute.xlu0 1
      %601 = vperm.xlu0 %600, %v465
      %v602 = vpop.permute.xlu0 %601
      %604 = vset.pattern.permute.xlu0 1
      %605 = vperm.xlu0 %604, %v466
      %v606 = vpop.permute.xlu0 %605
      %608 = vset.pattern.permute.xlu0 1
      %609 = vperm.xlu0 %608, %v467
      %v610 = vpop.permute.xlu0 %609
      %612 = vset.pattern.permute.xlu0 1
      %613 = vperm.xlu0 %612, %v468
      %v614 = vpop.permute.xlu0 %613
      %616 = vset.pattern.permute.xlu0 1
      %617 = vperm.xlu0 %616, %v469
      %v618 = vpop.permute.xlu0 %617
      %620 = vset.pattern.permute.xlu0 1
      %621 = vperm.xlu0 %620, %v470
      %v622 = vpop.permute.xlu0 %621
      %624 = vset.pattern.permute.xlu0 1
      %625 = vperm.xlu0 %624, %v471
      %v626 = vpop.permute.xlu0 %625
      %628 = vset.pattern.permute.xlu0 1
      %629 = vperm.xlu0 %628, %v472
      %v630 = vpop.permute.xlu0 %629
      %632 = vset.pattern.permute.xlu0 1
      %633 = vperm.xlu0 %632, %v473
      %v634 = vpop.permute.xlu0 %633
      %636 = vset.pattern.permute.xlu0 1
      %637 = vperm.xlu0 %636, %v474
      %v638 = vpop.permute.xlu0 %637
      %v640 = vlaneseq
      %v641 = vshrl.u32 %v640, 7
      %v642 = vsub.s32 1, %v641
      %v643 = vrot.slane %v475, %v642
      %v644 = vmul.f32 %v578, %v643
      %v645 = vmul.f32 %v582, %v643
      %v646 = vmul.f32 %v586, %v643
      %v647 = vmul.f32 %v590, %v643
      %v648 = vmul.f32 %v594, %v643
      %v649 = vmul.f32 %v598, %v643
      %v650 = vmul.f32 %v602, %v643
      %v651 = vmul.f32 %v606, %v643
      %v652 = vmul.f32 %v610, %v643
      %v653 = vmul.f32 %v614, %v643
      %v654 = vmul.f32 %v618, %v643
      %v655 = vmul.f32 %v622, %v643
      %v656 = vmul.f32 %v626, %v643
      %v657 = vmul.f32 %v630, %v643
      %v658 = vmul.f32 %v634, %v643
      %v659 = vmul.f32 %v638, %v643
      %v660 = vadd.f32 %v560, %v644
      %v661 = vadd.f32 %v561, %v645
      %v662 = vadd.f32 %v562, %v646
      %v663 = vadd.f32 %v563, %v647
      %v664 = vadd.f32 %v564, %v648
      %v665 = vadd.f32 %v565, %v649
      %v666 = vadd.f32 %v566, %v650
      %v667 = vadd.f32 %v567, %v651
      %v668 = vadd.f32 %v568, %v652
      %v669 = vadd.f32 %v569, %v653
      %v670 = vadd.f32 %v570, %v654
      %v671 = vadd.f32 %v571, %v655
      %v672 = vadd.f32 %v572, %v656
      %v673 = vadd.f32 %v573, %v657
      %v674 = vadd.f32 %v574, %v658
      %v675 = vadd.f32 %v575, %v659
      %676 = vset.pattern.permute.xlu0 2
      %677 = vperm.xlu0 %676, %v459
      %v678 = vpop.permute.xlu0 %677
      %680 = vset.pattern.permute.xlu0 2
      %681 = vperm.xlu0 %680, %v460
      %v682 = vpop.permute.xlu0 %681
      %684 = vset.pattern.permute.xlu0 2
      %685 = vperm.xlu0 %684, %v461
      %v686 = vpop.permute.xlu0 %685
      %688 = vset.pattern.permute.xlu0 2
      %689 = vperm.xlu0 %688, %v462
      %v690 = vpop.permute.xlu0 %689
      %692 = vset.pattern.permute.xlu0 2
      %693 = vperm.xlu0 %692, %v463
      %v694 = vpop.permute.xlu0 %693
      %696 = vset.pattern.permute.xlu0 2
      %697 = vperm.xlu0 %696, %v464
      %v698 = vpop.permute.xlu0 %697
      %700 = vset.pattern.permute.xlu0 2
      %701 = vperm.xlu0 %700, %v465
      %v702 = vpop.permute.xlu0 %701
      %704 = vset.pattern.permute.xlu0 2
      %705 = vperm.xlu0 %704, %v466
      %v706 = vpop.permute.xlu0 %705
      %708 = vset.pattern.permute.xlu0 2
      %709 = vperm.xlu0 %708, %v467
      %v710 = vpop.permute.xlu0 %709
      %712 = vset.pattern.permute.xlu0 2
      %713 = vperm.xlu0 %712, %v468
      %v714 = vpop.permute.xlu0 %713
      %716 = vset.pattern.permute.xlu0 2
      %717 = vperm.xlu0 %716, %v469
      %v718 = vpop.permute.xlu0 %717
      %720 = vset.pattern.permute.xlu0 2
      %721 = vperm.xlu0 %720, %v470
      %v722 = vpop.permute.xlu0 %721
      %724 = vset.pattern.permute.xlu0 2
      %725 = vperm.xlu0 %724, %v471
      %v726 = vpop.permute.xlu0 %725
      %728 = vset.pattern.permute.xlu0 2
      %729 = vperm.xlu0 %728, %v472
      %v730 = vpop.permute.xlu0 %729
      %732 = vset.pattern.permute.xlu0 2
      %733 = vperm.xlu0 %732, %v473
      %v734 = vpop.permute.xlu0 %733
      %736 = vset.pattern.permute.xlu0 2
      %737 = vperm.xlu0 %736, %v474
      %v738 = vpop.permute.xlu0 %737
      %v740 = vlaneseq
      %v741 = vshrl.u32 %v740, 7
      %v742 = vsub.s32 2, %v741
      %v743 = vrot.slane %v475, %v742
      %v744 = vmul.f32 %v678, %v743
      %v745 = vmul.f32 %v682, %v743
      %v746 = vmul.f32 %v686, %v743
      %v747 = vmul.f32 %v690, %v743
      %v748 = vmul.f32 %v694, %v743
      %v749 = vmul.f32 %v698, %v743
      %v750 = vmul.f32 %v702, %v743
      %v751 = vmul.f32 %v706, %v743
      %v752 = vmul.f32 %v710, %v743
      %v753 = vmul.f32 %v714, %v743
      %v754 = vmul.f32 %v718, %v743
      %v755 = vmul.f32 %v722, %v743
      %v756 = vmul.f32 %v726, %v743
      %v757 = vmul.f32 %v730, %v743
      %v758 = vmul.f32 %v734, %v743
      %v759 = vmul.f32 %v738, %v743
      %v760 = vadd.f32 %v660, %v744
      %v761 = vadd.f32 %v661, %v745
      %v762 = vadd.f32 %v662, %v746
      %v763 = vadd.f32 %v663, %v747
      %v764 = vadd.f32 %v664, %v748
      %v765 = vadd.f32 %v665, %v749
      %v766 = vadd.f32 %v666, %v750
      %v767 = vadd.f32 %v667, %v751
      %v768 = vadd.f32 %v668, %v752
      %v769 = vadd.f32 %v669, %v753
      %v770 = vadd.f32 %v670, %v754
      %v771 = vadd.f32 %v671, %v755
      %v772 = vadd.f32 %v672, %v756
      %v773 = vadd.f32 %v673, %v757
      %v774 = vadd.f32 %v674, %v758
      %v775 = vadd.f32 %v675, %v759
      %v792 = vunpack.c.l.b16 %v411
      %v793 = vunpack.c.l.b16 %v412
      %v794 = vunpack.c.l.b16 %v413
      %v795 = vunpack.c.l.b16 %v414
      %v796 = vunpack.c.l.b16 %v415
      %v797 = vunpack.c.l.b16 %v416
      %v798 = vunpack.c.l.b16 %v417
      %v799 = vunpack.c.l.b16 %v418
      %v800 = vunpack.c.l.b16 %v419
      %v801 = vunpack.c.l.b16 %v420
      %v802 = vunpack.c.l.b16 %v421
      %v803 = vunpack.c.l.b16 %v422
      %v804 = vunpack.c.l.b16 %v423
      %v805 = vunpack.c.l.b16 %v424
      %v806 = vunpack.c.l.b16 %v425
      %v807 = vunpack.c.l.b16 %v426
      %v808 = vpack.c.b16 %v793, %v792
      %v809 = vpack.c.b16 %v795, %v794
      %v810 = vpack.c.b16 %v797, %v796
      %v811 = vpack.c.b16 %v799, %v798
      %v812 = vpack.c.b16 %v801, %v800
      %v813 = vpack.c.b16 %v803, %v802
      %v814 = vpack.c.b16 %v805, %v804
      %v815 = vpack.c.b16 %v807, %v806
      %v840 = vunpack.c.l.b16 %v427
      %v841 = vunpack.c.l.b16 %v428
      %v842 = vunpack.c.l.b16 %v429
      %v843 = vunpack.c.l.b16 %v430
      %v844 = vunpack.c.l.b16 %v431
      %v845 = vunpack.c.l.b16 %v432
      %v846 = vunpack.c.l.b16 %v433
      %v847 = vunpack.c.l.b16 %v434
      %v848 = vunpack.c.l.b16 %v435
      %v849 = vunpack.c.l.b16 %v436
      %v850 = vunpack.c.l.b16 %v437
      %v851 = vunpack.c.l.b16 %v438
      %v852 = vunpack.c.l.b16 %v439
      %v853 = vunpack.c.l.b16 %v440
      %v854 = vunpack.c.l.b16 %v441
      %v855 = vunpack.c.l.b16 %v442
      %v856 = vpack.c.b16 %v841, %v840
      %v857 = vpack.c.b16 %v843, %v842
      %v858 = vpack.c.b16 %v845, %v844
      %v859 = vpack.c.b16 %v847, %v846
      %v860 = vpack.c.b16 %v849, %v848
      %v861 = vpack.c.b16 %v851, %v850
      %v862 = vpack.c.b16 %v853, %v852
      %v863 = vpack.c.b16 %v855, %v854
      %872 = vmatprep.subr.bf16.mxu0 0
      %873 = vmatpush1.bf16.msra.mxu0 %v856
      %874 = vmatprep.subr.bf16.mxu0 0
      %875 = vmatpush1.bf16.msra.mxu0 %v857
      %876 = vmatprep.subr.bf16.mxu0 0
      %877 = vmatpush1.bf16.msra.mxu0 %v858
      %878 = vmatprep.subr.bf16.mxu0 0
      %879 = vmatpush1.bf16.msra.mxu0 %v859
      %880 = vmatprep.subr.bf16.mxu0 0
      %881 = vmatpush1.bf16.msra.mxu0 %v860
      %882 = vmatprep.subr.bf16.mxu0 0
      %883 = vmatpush1.bf16.msra.mxu0 %v861
      %884 = vmatprep.subr.bf16.mxu0 0
      %885 = vmatpush1.bf16.msra.mxu0 %v862
      %886 = vmatprep.subr.bf16.mxu0 0
      %887 = vmatpush1.bf16.msra.mxu0 %v863
      %888 = vmatprep.subr.bf16.mxu0 0
      %889 = vmatpush1.bf16.msra.mxu0 0
      %890 = vmatprep.subr.bf16.mxu0 0
      %891 = vmatpush1.bf16.msra.mxu0 0
      %892 = vmatprep.subr.bf16.mxu0 0
      %893 = vmatpush1.bf16.msra.mxu0 0
      %894 = vmatprep.subr.bf16.mxu0 0
      %895 = vmatpush1.bf16.msra.mxu0 0
      %896 = vmatprep.subr.bf16.mxu0 0
      %897 = vmatpush1.bf16.msra.mxu0 0
      %898 = vmatprep.subr.bf16.mxu0 0
      %899 = vmatpush1.bf16.msra.mxu0 0
      %900 = vmatprep.subr.bf16.mxu0 0
      %901 = vmatpush1.bf16.msra.mxu0 0
      %902 = vmatprep.subr.bf16.mxu0 0
      %903 = vmatpush1.bf16.msra.mxu0 0
      %904 = vmatprep.mubr.bf16.mxu0 0
      %905 = vmatmul.mubr.bf16.gmra.mrb[0].mxu0 %v808
      %v906 = vpop.f32.mrb[0].mxu0
      %v907 = vadd.f32 %v760, %v906
      %v908 = vpop.f32.mrb[0].mxu0
      %v909 = vpop.f32.mrb[0].mxu0
      %v910 = vadd.f32 %v761, %v909
      %v911 = vpop.f32.mrb[0].mxu0
      %912 = vmatprep.mubr.bf16.mxu0 0
      %913 = vmatmul.mubr.bf16.gmra.mrb[0].mxu0 %v809
      %v914 = vpop.f32.mrb[0].mxu0
      %v915 = vadd.f32 %v762, %v914
      %v916 = vpop.f32.mrb[0].mxu0
      %v917 = vpop.f32.mrb[0].mxu0
      %v918 = vadd.f32 %v763, %v917
      %v919 = vpop.f32.mrb[0].mxu0
      %920 = vmatprep.mubr.bf16.mxu0 0
      %921 = vmatmul.mubr.bf16.gmra.mrb[0].mxu0 %v810
      %v922 = vpop.f32.mrb[0].mxu0
      %v923 = vadd.f32 %v764, %v922
      %v924 = vpop.f32.mrb[0].mxu0
      %v925 = vpop.f32.mrb[0].mxu0
      %v926 = vadd.f32 %v765, %v925
      %v927 = vpop.f32.mrb[0].mxu0
      %928 = vmatprep.mubr.bf16.mxu0 0
      %929 = vmatmul.mubr.bf16.gmra.mrb[0].mxu0 %v811
      %v930 = vpop.f32.mrb[0].mxu0
      %v931 = vadd.f32 %v766, %v930
      %v932 = vpop.f32.mrb[0].mxu0
      %v933 = vpop.f32.mrb[0].mxu0
      %v934 = vadd.f32 %v767, %v933
      %v935 = vpop.f32.mrb[0].mxu0
      %936 = vmatprep.mubr.bf16.mxu0 0
      %937 = vmatmul.mubr.bf16.gmra.mrb[0].mxu0 %v812
      %v938 = vpop.f32.mrb[0].mxu0
      %v939 = vadd.f32 %v768, %v938
      %v940 = vpop.f32.mrb[0].mxu0
      %v941 = vpop.f32.mrb[0].mxu0
      %v942 = vadd.f32 %v769, %v941
      %v943 = vpop.f32.mrb[0].mxu0
      %944 = vmatprep.mubr.bf16.mxu0 0
      %945 = vmatmul.mubr.bf16.gmra.mrb[0].mxu0 %v813
      %v946 = vpop.f32.mrb[0].mxu0
      %v947 = vadd.f32 %v770, %v946
      %v948 = vpop.f32.mrb[0].mxu0
      %v949 = vpop.f32.mrb[0].mxu0
      %v950 = vadd.f32 %v771, %v949
      %v951 = vpop.f32.mrb[0].mxu0
      %952 = vmatprep.mubr.bf16.mxu0 0
      %953 = vmatmul.mubr.bf16.gmra.mrb[0].mxu0 %v814
      %v954 = vpop.f32.mrb[0].mxu0
      %v955 = vadd.f32 %v772, %v954
      %v956 = vpop.f32.mrb[0].mxu0
      %v957 = vpop.f32.mrb[0].mxu0
      %v958 = vadd.f32 %v773, %v957
      %v959 = vpop.f32.mrb[0].mxu0
      %960 = vmatprep.mubr.bf16.mxu0 0
      %961 = vmatmul.mubr.bf16.gmra.mrb[0].mxu0 %v815
      %v962 = vpop.f32.mrb[0].mxu0
      %v963 = vadd.f32 %v774, %v962
      %v964 = vpop.f32.mrb[0].mxu0
      %v965 = vpop.f32.mrb[0].mxu0
      %v966 = vadd.f32 %v775, %v965
      %v967 = vpop.f32.mrb[0].mxu0
      %968 = vdwg.mxu0
      %v969 = vld [vmem:[%s4] sm:$0x1]
      %v971 = vlaneseq
      %v972 = vshrl.u32 %v971, 7
      %v973 = vsub.s32 0, %v972
      %v974 = vrot.slane %v969, %v973
      %v976 = vadd.f32 %v907, %v974
      %v977 = vadd.f32 %v910, %v974
      %v978 = vadd.f32 %v915, %v974
      %v979 = vadd.f32 %v918, %v974
      %v980 = vadd.f32 %v923, %v974
      %v981 = vadd.f32 %v926, %v974
      %v982 = vadd.f32 %v931, %v974
      %v983 = vadd.f32 %v934, %v974
      %v984 = vadd.f32 %v939, %v974
      %v985 = vadd.f32 %v942, %v974
      %v986 = vadd.f32 %v947, %v974
      %v987 = vadd.f32 %v950, %v974
      %v988 = vadd.f32 %v955, %v974
      %v989 = vadd.f32 %v958, %v974
      %v990 = vadd.f32 %v963, %v974
      %v991 = vadd.f32 %v966, %v974
      %v992 = vmax.f32 %v976, 0.0
      %v993 = vmax.f32 %v977, 0.0
      %v994 = vmax.f32 %v978, 0.0
      %v995 = vmax.f32 %v979, 0.0
      %v996 = vmax.f32 %v980, 0.0
      %v997 = vmax.f32 %v981, 0.0
      %v998 = vmax.f32 %v982, 0.0
      %v999 = vmax.f32 %v983, 0.0
      %v1000 = vmax.f32 %v984, 0.0
      %v1001 = vmax.f32 %v985, 0.0
      %v1002 = vmax.f32 %v986, 0.0
      %v1003 = vmax.f32 %v987, 0.0
      %v1004 = vmax.f32 %v988, 0.0
      %v1005 = vmax.f32 %v989, 0.0
      %v1006 = vmax.f32 %v990, 0.0
      %v1007 = vmax.f32 %v991, 0.0
      %v1008 = vpack.c.bf16 %v993, %v992
      %v1009 = vpack.c.bf16 %v995, %v994
      %v1010 = vpack.c.bf16 %v997, %v996
      %v1011 = vpack.c.bf16 %v999, %v998
      %v1012 = vpack.c.bf16 %v1001, %v1000
      %v1013 = vpack.c.bf16 %v1003, %v1002
      %v1014 = vpack.c.bf16 %v1005, %v1004
      %v1015 = vpack.c.bf16 %v1007, %v1006
      %v1016 = vld [vmem:[%s5] sm:$0xf]
      %v1017 = vld [vmem:[%s5 + $0x4] sm:$0xf]
      %v1018 = vld [vmem:[%s5 + $0x8] sm:$0xf]
      %v1019 = vld [vmem:[%s5 + $0xc] sm:$0xf]
      %v1020 = vld [vmem:[%s5 + $0x10] sm:$0xf]
      %v1021 = vld [vmem:[%s5 + $0x14] sm:$0xf]
      %v1022 = vld [vmem:[%s5 + $0x18] sm:$0xf]
      %v1023 = vld [vmem:[%s5 + $0x1c] sm:$0xf]
      %v1024 = vld [vmem:[%s5 + $0x20] sm:$0xf]
      %v1025 = vld [vmem:[%s5 + $0x24] sm:$0xf]
      %v1026 = vld [vmem:[%s5 + $0x28] sm:$0xf]
      %v1027 = vld [vmem:[%s5 + $0x2c] sm:$0xf]
      %v1028 = vld [vmem:[%s5 + $0x30] sm:$0xf]
      %v1029 = vld [vmem:[%s5 + $0x34] sm:$0xf]
      %v1030 = vld [vmem:[%s5 + $0x38] sm:$0xf]
      %v1031 = vld [vmem:[%s5 + $0x3c] sm:$0xf]
      %v1032 = vld [vmem:[%s6] sm:$0x1]
      %v1034 = vlaneseq
      %v1035 = vshrl.u32 %v1034, 7
      %v1036 = vsub.s32 0, %v1035
      %v1037 = vrot.slane %v1032, %v1036
      %v1055 = vunpack.c.l.b16 %v1016
      %v1056 = vunpack.c.l.b16 %v1017
      %v1057 = vunpack.c.l.b16 %v1018
      %v1058 = vunpack.c.l.b16 %v1019
      %v1059 = vunpack.c.l.b16 %v1020
      %v1060 = vunpack.c.l.b16 %v1021
      %v1061 = vunpack.c.l.b16 %v1022
      %v1062 = vunpack.c.l.b16 %v1023
      %v1063 = vunpack.c.l.b16 %v1024
      %v1064 = vunpack.c.l.b16 %v1025
      %v1065 = vunpack.c.l.b16 %v1026
      %v1066 = vunpack.c.l.b16 %v1027
      %v1067 = vunpack.c.l.b16 %v1028
      %v1068 = vunpack.c.l.b16 %v1029
      %v1069 = vunpack.c.l.b16 %v1030
      %v1070 = vunpack.c.l.b16 %v1031
      %v1071 = vpack.c.b16 %v1056, %v1055
      %v1072 = vpack.c.b16 %v1058, %v1057
      %v1073 = vpack.c.b16 %v1060, %v1059
      %v1074 = vpack.c.b16 %v1062, %v1061
      %v1075 = vpack.c.b16 %v1064, %v1063
      %v1076 = vpack.c.b16 %v1066, %v1065
      %v1077 = vpack.c.b16 %v1068, %v1067
      %v1078 = vpack.c.b16 %v1070, %v1069
      %1087 = vmatprep.subr.bf16.mxu0 0
      %1088 = vmatpush1.bf16.msra.mxu0 %v1071
      %1089 = vmatprep.subr.bf16.mxu0 0
      %1090 = vmatpush1.bf16.msra.mxu0 %v1072
      %1091 = vmatprep.subr.bf16.mxu0 0
      %1092 = vmatpush1.bf16.msra.mxu0 %v1073
      %1093 = vmatprep.subr.bf16.mxu0 0
      %1094 = vmatpush1.bf16.msra.mxu0 %v1074
      %1095 = vmatprep.subr.bf16.mxu0 0
      %1096 = vmatpush1.bf16.msra.mxu0 %v1075
      %1097 = vmatprep.subr.bf16.mxu0 0
      %1098 = vmatpush1.bf16.msra.mxu0 %v1076
      %1099 = vmatprep.subr.bf16.mxu0 0
      %1100 = vmatpush1.bf16.msra.mxu0 %v1077
      %1101 = vmatprep.subr.bf16.mxu0 0
      %1102 = vmatpush1.bf16.msra.mxu0 %v1078
      %1103 = vmatprep.subr.bf16.mxu0 0
      %1104 = vmatpush1.bf16.msra.mxu0 0
      %1105 = vmatprep.subr.bf16.mxu0 0
      %1106 = vmatpush1.bf16.msra.mxu0 0
      %1107 = vmatprep.subr.bf16.mxu0 0
      %1108 = vmatpush1.bf16.msra.mxu0 0
      %1109 = vmatprep.subr.bf16.mxu0 0
      %1110 = vmatpush1.bf16.msra.mxu0 0
      %1111 = vmatprep.subr.bf16.mxu0 0
      %1112 = vmatpush1.bf16.msra.mxu0 0
      %1113 = vmatprep.subr.bf16.mxu0 0
      %1114 = vmatpush1.bf16.msra.mxu0 0
      %1115 = vmatprep.subr.bf16.mxu0 0
      %1116 = vmatpush1.bf16.msra.mxu0 0
      %1117 = vmatprep.subr.bf16.mxu0 0
      %1118 = vmatpush1.bf16.msra.mxu0 0
      %1119 = vmatprep.mubr.bf16.mxu0 0
      %1120 = vmatmul.mubr.bf16.gmra.mrb[0].mxu0 %v1008
      %v1121 = vpop.f32.mrb[0].mxu0
      %v1122 = vadd.f32 %v1037, %v1121
      %v1123 = vpop.f32.mrb[0].mxu0
      %v1124 = vpop.f32.mrb[0].mxu0
      %v1125 = vadd.f32 %v1037, %v1124
      %v1126 = vpop.f32.mrb[0].mxu0
      %1127 = vmatprep.mubr.bf16.mxu0 0
      %1128 = vmatmul.mubr.bf16.gmra.mrb[0].mxu0 %v1009
      %v1129 = vpop.f32.mrb[0].mxu0
      %v1130 = vadd.f32 %v1037, %v1129
      %v1131 = vpop.f32.mrb[0].mxu0
      %v1132 = vpop.f32.mrb[0].mxu0
      %v1133 = vadd.f32 %v1037, %v1132
      %v1134 = vpop.f32.mrb[0].mxu0
      %1135 = vmatprep.mubr.bf16.mxu0 0
      %1136 = vmatmul.mubr.bf16.gmra.mrb[0].mxu0 %v1010
      %v1137 = vpop.f32.mrb[0].mxu0
      %v1138 = vadd.f32 %v1037, %v1137
      %v1139 = vpop.f32.mrb[0].mxu0
      %v1140 = vpop.f32.mrb[0].mxu0
      %v1141 = vadd.f32 %v1037, %v1140
      %v1142 = vpop.f32.mrb[0].mxu0
      %1143 = vmatprep.mubr.bf16.mxu0 0
      %1144 = vmatmul.mubr.bf16.gmra.mrb[0].mxu0 %v1011
      %v1145 = vpop.f32.mrb[0].mxu0
      %v1146 = vadd.f32 %v1037, %v1145
      %v1147 = vpop.f32.mrb[0].mxu0
      %v1148 = vpop.f32.mrb[0].mxu0
      %v1149 = vadd.f32 %v1037, %v1148
      %v1150 = vpop.f32.mrb[0].mxu0
      %1151 = vmatprep.mubr.bf16.mxu0 0
      %1152 = vmatmul.mubr.bf16.gmra.mrb[0].mxu0 %v1012
      %v1153 = vpop.f32.mrb[0].mxu0
      %v1154 = vadd.f32 %v1037, %v1153
      %v1155 = vpop.f32.mrb[0].mxu0
      %v1156 = vpop.f32.mrb[0].mxu0
      %v1157 = vadd.f32 %v1037, %v1156
      %v1158 = vpop.f32.mrb[0].mxu0
      %1159 = vmatprep.mubr.bf16.mxu0 0
      %1160 = vmatmul.mubr.bf16.gmra.mrb[0].mxu0 %v1013
      %v1161 = vpop.f32.mrb[0].mxu0
      %v1162 = vadd.f32 %v1037, %v1161
      %v1163 = vpop.f32.mrb[0].mxu0
      %v1164 = vpop.f32.mrb[0].mxu0
      %v1165 = vadd.f32 %v1037, %v1164
      %v1166 = vpop.f32.mrb[0].mxu0
      %1167 = vmatprep.mubr.bf16.mxu0 0
      %1168 = vmatmul.mubr.bf16.gmra.mrb[0].mxu0 %v1014
      %v1169 = vpop.f32.mrb[0].mxu0
      %v1170 = vadd.f32 %v1037, %v1169
      %v1171 = vpop.f32.mrb[0].mxu0
      %v1172 = vpop.f32.mrb[0].mxu0
      %v1173 = vadd.f32 %v1037, %v1172
      %v1174 = vpop.f32.mrb[0].mxu0
      %1175 = vmatprep.mubr.bf16.mxu0 0
      %1176 = vmatmul.mubr.bf16.gmra.mrb[0].mxu0 %v1015
      %v1177 = vpop.f32.mrb[0].mxu0
      %v1178 = vadd.f32 %v1037, %v1177
      %v1179 = vpop.f32.mrb[0].mxu0
      %v1180 = vpop.f32.mrb[0].mxu0
      %v1181 = vadd.f32 %v1037, %v1180
      %v1182 = vpop.f32.mrb[0].mxu0
      %1183 = vdwg.mxu0
      %v1184 = vmax.f32 %v1122, 0.0
      %v1185 = vmax.f32 %v1125, 0.0
      %v1186 = vmax.f32 %v1130, 0.0
      %v1187 = vmax.f32 %v1133, 0.0
      %v1188 = vmax.f32 %v1138, 0.0
      %v1189 = vmax.f32 %v1141, 0.0
      %v1190 = vmax.f32 %v1146, 0.0
      %v1191 = vmax.f32 %v1149, 0.0
      %v1192 = vmax.f32 %v1154, 0.0
      %v1193 = vmax.f32 %v1157, 0.0
      %v1194 = vmax.f32 %v1162, 0.0
      %v1195 = vmax.f32 %v1165, 0.0
      %v1196 = vmax.f32 %v1170, 0.0
      %v1197 = vmax.f32 %v1173, 0.0
      %v1198 = vmax.f32 %v1178, 0.0
      %v1199 = vmax.f32 %v1181, 0.0
      %v1200 = vpack.c.bf16 %v1185, %v1184
      %v1201 = vpack.c.bf16 %v1187, %v1186
      %v1202 = vpack.c.bf16 %v1189, %v1188
      %v1203 = vpack.c.bf16 %v1191, %v1190
      %v1204 = vpack.c.bf16 %v1193, %v1192
      %v1205 = vpack.c.bf16 %v1195, %v1194
      %v1206 = vpack.c.bf16 %v1197, %v1196
      %v1207 = vpack.c.bf16 %v1199, %v1198
      %v1208 = vld [vmem:[%s7] sm:$0xff]
      %v1209 = vld [vmem:[%s7 + $0x8] sm:$0xff]
      %v1210 = vld [vmem:[%s7 + $0x10] sm:$0xff]
      %v1211 = vld [vmem:[%s7 + $0x18] sm:$0xff]
      %v1212 = vld [vmem:[%s7 + $0x20] sm:$0xff]
      %v1213 = vld [vmem:[%s7 + $0x28] sm:$0xff]
      %v1214 = vld [vmem:[%s7 + $0x30] sm:$0xff]
      %v1215 = vld [vmem:[%s7 + $0x38] sm:$0xff]
      %v1216 = vld [vmem:[%s7 + $0x40] sm:$0xff]
      %v1217 = vld [vmem:[%s7 + $0x48] sm:$0xff]
      %v1218 = vld [vmem:[%s7 + $0x50] sm:$0xff]
      %v1219 = vld [vmem:[%s7 + $0x58] sm:$0xff]
      %v1220 = vld [vmem:[%s7 + $0x60] sm:$0xff]
      %v1221 = vld [vmem:[%s7 + $0x68] sm:$0xff]
      %v1222 = vld [vmem:[%s7 + $0x70] sm:$0xff]
      %v1223 = vld [vmem:[%s7 + $0x78] sm:$0xff]
      %v1240 = vunpack.c.l.b16 %v1208
      %v1241 = vunpack.c.h.b16 %v1208
      %v1242 = vunpack.c.l.b16 %v1209
      %v1243 = vunpack.c.h.b16 %v1209
      %v1244 = vunpack.c.l.b16 %v1210
      %v1245 = vunpack.c.h.b16 %v1210
      %v1246 = vunpack.c.l.b16 %v1211
      %v1247 = vunpack.c.h.b16 %v1211
      %v1248 = vunpack.c.l.b16 %v1212
      %v1249 = vunpack.c.h.b16 %v1212
      %v1250 = vunpack.c.l.b16 %v1213
      %v1251 = vunpack.c.h.b16 %v1213
      %v1252 = vunpack.c.l.b16 %v1214
      %v1253 = vunpack.c.h.b16 %v1214
      %v1254 = vunpack.c.l.b16 %v1215
      %v1255 = vunpack.c.h.b16 %v1215
      %v1256 = vunpack.c.l.b16 %v1216
      %v1257 = vunpack.c.h.b16 %v1216
      %v1258 = vunpack.c.l.b16 %v1217
      %v1259 = vunpack.c.h.b16 %v1217
      %v1260 = vunpack.c.l.b16 %v1218
      %v1261 = vunpack.c.h.b16 %v1218
      %v1262 = vunpack.c.l.b16 %v1219
      %v1263 = vunpack.c.h.b16 %v1219
      %v1264 = vunpack.c.l.b16 %v1220
      %v1265 = vunpack.c.h.b16 %v1220
      %v1266 = vunpack.c.l.b16 %v1221
      %v1267 = vunpack.c.h.b16 %v1221
      %v1268 = vunpack.c.l.b16 %v1222
      %v1269 = vunpack.c.h.b16 %v1222
      %v1270 = vunpack.c.l.b16 %v1223
      %v1271 = vunpack.c.h.b16 %v1223
      %v1272 = vpack.c.b16 %v1242, %v1240
      %v1273 = vpack.c.b16 %v1243, %v1241
      %v1274 = vpack.c.b16 %v1246, %v1244
      %v1275 = vpack.c.b16 %v1247, %v1245
      %v1276 = vpack.c.b16 %v1250, %v1248
      %v1277 = vpack.c.b16 %v1251, %v1249
      %v1278 = vpack.c.b16 %v1254, %v1252
      %v1279 = vpack.c.b16 %v1255, %v1253
      %v1280 = vpack.c.b16 %v1258, %v1256
      %v1281 = vpack.c.b16 %v1259, %v1257
      %v1282 = vpack.c.b16 %v1262, %v1260
      %v1283 = vpack.c.b16 %v1263, %v1261
      %v1284 = vpack.c.b16 %v1266, %v1264
      %v1285 = vpack.c.b16 %v1267, %v1265
      %v1286 = vpack.c.b16 %v1270, %v1268
      %v1287 = vpack.c.b16 %v1271, %v1269
      %1304 = vmatprep.subr.bf16.mxu0 %v1273
      %1305 = vmatpush1.bf16.msra.mxu0 %v1272
      %1306 = vmatprep.subr.bf16.mxu0 %v1275
      %1307 = vmatpush1.bf16.msra.mxu0 %v1274
      %1308 = vmatprep.subr.bf16.mxu0 %v1277
      %1309 = vmatpush1.bf16.msra.mxu0 %v1276
      %1310 = vmatprep.subr.bf16.mxu0 %v1279
      %1311 = vmatpush1.bf16.msra.mxu0 %v1278
      %1312 = vmatprep.subr.bf16.mxu0 %v1281
      %1313 = vmatpush1.bf16.msra.mxu0 %v1280
      %1314 = vmatprep.subr.bf16.mxu0 %v1283
      %1315 = vmatpush1.bf16.msra.mxu0 %v1282
      %1316 = vmatprep.subr.bf16.mxu0 %v1285
      %1317 = vmatpush1.bf16.msra.mxu0 %v1284
      %1318 = vmatprep.subr.bf16.mxu0 %v1287
      %1319 = vmatpush1.bf16.msra.mxu0 %v1286
      %1320 = vmatprep.subr.bf16.mxu0 0
      %1321 = vmatpush1.bf16.msra.mxu0 0
      %1322 = vmatprep.subr.bf16.mxu0 0
      %1323 = vmatpush1.bf16.msra.mxu0 0
      %1324 = vmatprep.subr.bf16.mxu0 0
      %1325 = vmatpush1.bf16.msra.mxu0 0
      %1326 = vmatprep.subr.bf16.mxu0 0
      %1327 = vmatpush1.bf16.msra.mxu0 0
      %1328 = vmatprep.subr.bf16.mxu0 0
      %1329 = vmatpush1.bf16.msra.mxu0 0
      %1330 = vmatprep.subr.bf16.mxu0 0
      %1331 = vmatpush1.bf16.msra.mxu0 0
      %1332 = vmatprep.subr.bf16.mxu0 0
      %1333 = vmatpush1.bf16.msra.mxu0 0
      %1334 = vmatprep.subr.bf16.mxu0 0
      %1335 = vmatpush1.bf16.msra.mxu0 0
      %1336 = vmatprep.mubr.bf16.mxu0 0
      %1337 = vmatmul.mubr.bf16.gmra.mrb[0].mxu0 %v1200
      %v1338 = vpop.f32.mrb[0].mxu0
      %v1339 = vadd.f32 0.0, %v1338
      %v1340 = vpop.f32.mrb[0].mxu0
      %v1341 = vadd.f32 0.0, %v1340
      %v1342 = vpop.f32.mrb[0].mxu0
      %v1343 = vadd.f32 0.0, %v1342
      %v1344 = vpop.f32.mrb[0].mxu0
      %v1345 = vadd.f32 0.0, %v1344
      %1346 = vmatprep.mubr.bf16.mxu0 0
      %1347 = vmatmul.mubr.bf16.gmra.mrb[0].mxu0 %v1201
      %v1348 = vpop.f32.mrb[0].mxu0
      %v1349 = vadd.f32 0.0, %v1348
      %v1350 = vpop.f32.mrb[0].mxu0
      %v1351 = vadd.f32 0.0, %v1350
      %v1352 = vpop.f32.mrb[0].mxu0
      %v1353 = vadd.f32 0.0, %v1352
      %v1354 = vpop.f32.mrb[0].mxu0
      %v1355 = vadd.f32 0.0, %v1354
      %1356 = vmatprep.mubr.bf16.mxu0 0
      %1357 = vmatmul.mubr.bf16.gmra.mrb[0].mxu0 %v1202
      %v1358 = vpop.f32.mrb[0].mxu0
      %v1359 = vadd.f32 0.0, %v1358
      %v1360 = vpop.f32.mrb[0].mxu0
      %v1361 = vadd.f32 0.0, %v1360
      %v1362 = vpop.f32.mrb[0].mxu0
      %v1363 = vadd.f32 0.0, %v1362
      %v1364 = vpop.f32.mrb[0].mxu0
      %v1365 = vadd.f32 0.0, %v1364
      %1366 = vmatprep.mubr.bf16.mxu0 0
      %1367 = vmatmul.mubr.bf16.gmra.mrb[0].mxu0 %v1203
      %v1368 = vpop.f32.mrb[0].mxu0
      %v1369 = vadd.f32 0.0, %v1368
      %v1370 = vpop.f32.mrb[0].mxu0
      %v1371 = vadd.f32 0.0, %v1370
      %v1372 = vpop.f32.mrb[0].mxu0
      %v1373 = vadd.f32 0.0, %v1372
      %v1374 = vpop.f32.mrb[0].mxu0
      %v1375 = vadd.f32 0.0, %v1374
      %1376 = vmatprep.mubr.bf16.mxu0 0
      %1377 = vmatmul.mubr.bf16.gmra.mrb[0].mxu0 %v1204
      %v1378 = vpop.f32.mrb[0].mxu0
      %v1379 = vadd.f32 0.0, %v1378
      %v1380 = vpop.f32.mrb[0].mxu0
      %v1381 = vadd.f32 0.0, %v1380
      %v1382 = vpop.f32.mrb[0].mxu0
      %v1383 = vadd.f32 0.0, %v1382
      %v1384 = vpop.f32.mrb[0].mxu0
      %v1385 = vadd.f32 0.0, %v1384
      %1386 = vmatprep.mubr.bf16.mxu0 0
      %1387 = vmatmul.mubr.bf16.gmra.mrb[0].mxu0 %v1205
      %v1388 = vpop.f32.mrb[0].mxu0
      %v1389 = vadd.f32 0.0, %v1388
      %v1390 = vpop.f32.mrb[0].mxu0
      %v1391 = vadd.f32 0.0, %v1390
      %v1392 = vpop.f32.mrb[0].mxu0
      %v1393 = vadd.f32 0.0, %v1392
      %v1394 = vpop.f32.mrb[0].mxu0
      %v1395 = vadd.f32 0.0, %v1394
      %1396 = vmatprep.mubr.bf16.mxu0 0
      %1397 = vmatmul.mubr.bf16.gmra.mrb[0].mxu0 %v1206
      %v1398 = vpop.f32.mrb[0].mxu0
      %v1399 = vadd.f32 0.0, %v1398
      %v1400 = vpop.f32.mrb[0].mxu0
      %v1401 = vadd.f32 0.0, %v1400
      %v1402 = vpop.f32.mrb[0].mxu0
      %v1403 = vadd.f32 0.0, %v1402
      %v1404 = vpop.f32.mrb[0].mxu0
      %v1405 = vadd.f32 0.0, %v1404
      %1406 = vmatprep.mubr.bf16.mxu0 0
      %1407 = vmatmul.mubr.bf16.gmra.mrb[0].mxu0 %v1207
      %v1408 = vpop.f32.mrb[0].mxu0
      %v1409 = vadd.f32 0.0, %v1408
      %v1410 = vpop.f32.mrb[0].mxu0
      %v1411 = vadd.f32 0.0, %v1410
      %v1412 = vpop.f32.mrb[0].mxu0
      %v1413 = vadd.f32 0.0, %v1412
      %v1414 = vpop.f32.mrb[0].mxu0
      %v1415 = vadd.f32 0.0, %v1414
      %1416 = vdwg.mxu0
      %v1417 = vmax.f32 %v1339, %v1349
      %v1418 = vmax.f32 %v1341, %v1351
      %v1419 = vmax.f32 %v1343, %v1353
      %v1420 = vmax.f32 %v1345, %v1355
      %v1421 = vmax.f32 %v1417, %v1359
      %v1422 = vmax.f32 %v1418, %v1361
      %v1423 = vmax.f32 %v1419, %v1363
      %v1424 = vmax.f32 %v1420, %v1365
      %v1425 = vmax.f32 %v1421, %v1369
      %v1426 = vmax.f32 %v1422, %v1371
      %v1427 = vmax.f32 %v1423, %v1373
      %v1428 = vmax.f32 %v1424, %v1375
      %v1429 = vmax.f32 %v1425, %v1379
      %v1430 = vmax.f32 %v1426, %v1381
      %v1431 = vmax.f32 %v1427, %v1383
      %v1432 = vmax.f32 %v1428, %v1385
      %v1433 = vmax.f32 %v1429, %v1389
      %v1434 = vmax.f32 %v1430, %v1391
      %v1435 = vmax.f32 %v1431, %v1393
      %v1436 = vmax.f32 %v1432, %v1395
      %v1437 = vmax.f32 %v1433, %v1399
      %v1438 = vmax.f32 %v1434, %v1401
      %v1439 = vmax.f32 %v1435, %v1403
      %v1440 = vmax.f32 %v1436, %v1405
      %v1441 = vmax.f32 %v1437, %v1409
      %v1442 = vmax.f32 %v1438, %v1411
      %v1443 = vmax.f32 %v1439, %v1413
      %v1444 = vmax.f32 %v1440, %v1415
      %v1445 = vld [vmem:[%s8] sm:$0x3]
      %v1447 = vlaneseq
      %v1448 = vshrl.u32 %v1447, 7
      %v1449 = vsub.s32 0, %v1448
      %v1450 = vrot.slane %v1445, %v1449
      %v1451 = vlaneseq
      %v1452 = vshrl.u32 %v1451, 7
      %v1453 = vsub.s32 1, %v1452
      %v1454 = vrot.slane %v1445, %v1453
      %v1457 = vadd.f32 %v1441, %v1450
      %v1458 = vadd.f32 %v1442, %v1454
      %v1459 = vadd.f32 %v1443, %v1450
      %v1460 = vadd.f32 %v1444, %v1454
      %v1461 = vmax.f32 %v1457, 0.0
      %v1462 = vmax.f32 %v1458, 0.0
      %v1463 = vmax.f32 %v1459, 0.0
      %v1464 = vmax.f32 %v1460, 0.0
      %v1465 = vpack.c.bf16 %v1463, %v1461
      %v1466 = vpack.c.bf16 %v1464, %v1462
      %v1469 = vunpack.c.l.b16 %v1465
      %v1470 = vunpack.c.l.b16 %v1466
      %v1471 = vunpack.c.h.b16 %v1465
      %v1472 = vunpack.c.h.b16 %v1466
      %v1473 = vpack.c.b16 %v1470, %v1469
      %v1474 = vpack.c.b16 %v1472, %v1471
      %1477 = vst [vmem:[%s408] sm:$0xff] %v1473
      %1478 = vst [vmem:[%s408 + $0x8] sm:$0xff] %v1474
      %s1479 = smul.u32 2, %s25
      %p1480 = scmp.lt.s32.totalorder %s24, 1
      %s1481 = scalar_select %p1480, %s24, 1
      %p1482 = scmp.lt.s32.totalorder %s1479, 1
      %s1483 = scalar_select %p1482, %s1479, 1
      %s1484 = smul.addr %s1483, 2
      %s1485 = smul.addr %s1481, 4
      %s1486 = sadd.s32 %s1484, %s1485
      %s1487 = smul.addr %s1486, 4
      %s1488 = scalar_lea.vmem %s9, %s1487
      // Predicated region
      $region57: #{_lambda_.7} parent=55 // pred_check
        %p1489 = pneg %p255
      $region58: #{_lambda_.7} parent=55 // pred_check_branch
        %1491 = sbr.rel (%p1489) target = $region60
      $region59: #{_lambda_.7} parent=55 // pred_region
        %s1492 = smul.u32 2, %s25
      $region60: #{_lambda_.7} parent=55 // pred_fallthru
        _
    $region56: #{_lambda_.7} parent=5 // pred_fallthru
      _
    %p1493 = scmp.le.s32.totalorder 2, %s15
    // Predicated region
    $region61: #{_lambda_.7} parent=5 // pred_check
      %p1494 = pneg %p1493
    $region62: #{_lambda_.7} parent=5 // pred_check_branch
      %1496 = sbr.rel (%p1494) target = $region64
    $region63: #{_lambda_.7} parent=5 // pred_region
      %s1497 = ssub.s32 %s15, 2
      // Predicated region
      $region65: #{_lambda_.7} parent=63 // pred_check
        %p1498 = pneg %p261
      $region66: #{_lambda_.7} parent=63 // pred_check_branch
        %1500 = sbr.rel (%p1498) target = $region68
      $region67: #{_lambda_.7} parent=63 // pred_region
        %s1501 = smul.u32 2, %s27
        %p1502 = scmp.lt.s32.totalorder %s26, 1
        %s1503 = scalar_select %p1502, %s26, 1
        %p1504 = scmp.lt.s32.totalorder %s1501, 1
        %s1505 = scalar_select %p1504, %s1501, 1
        %s1506 = smul.addr %s1505, 2
        %s1507 = smul.addr %s1503, 4
        %s1508 = sadd.s32 %s1506, %s1507
        %s1509 = smul.addr %s1508, 4
        %s1510 = scalar_lea.vmem %s9, %s1509
      $region68: #{_lambda_.7} parent=63 // pred_fallthru
        _
    $region64: #{_lambda_.7} parent=5 // pred_fallthru
      _
  $region6: #{_lambda_.7} parent=0 // loop_footer
    %s19 = sadd.s32 1, %s15
  $region7: #{_lambda_.7} parent=0 // loop_footer_branch
    %14 = sbr.rel target = $region3
  $region8: #{_lambda_.7} parent=0 // loop_exit
    _

// kernel: custom-call.37
$region0: #{custom-call.37}
  %s0 = inlined_call_operand.vmem [shape: f32[2,8], index: 0, kind: output, shape index: {}]

// kernel: _lambda_.8
$region0: #{_lambda_.8}
  #allocation0 [shape = 'u32[]', space=smem, size = 0x4, offset = 0x4, fixed_abs, tag = 'smem constant byte address 0x4 - core index']
  #allocation1 [shape = 'u32[144,128]{1,0:T(1,128)}', space=vmem, size = 0x12000, scoped, tag = 'internal scratch']
  %s0 = inlined_call_operand.vmem [shape: bf16[2,8,16,3], index: 0, kind: input, shape index: {}]
  %s1 = inlined_call_operand.vmem [shape: bf16[2,8,16,256], index: 1, kind: input, shape index: {}]
  %s2 = inlined_call_operand.vmem [shape: bf16[256,128], index: 2, kind: input, shape index: {}]
  %s3 = inlined_call_operand.vmem [shape: f32[3,128], index: 3, kind: input, shape index: {}]
  %s4 = inlined_call_operand.vmem [shape: f32[1,128], index: 4, kind: input, shape index: {}, may-alias: {4,6}]
  %s5 = inlined_call_operand.vmem [shape: bf16[128,128], index: 5, kind: input, shape index: {}]
  %s6 = inlined_call_operand.vmem [shape: f32[1,128], index: 6, kind: input, shape index: {}, may-alias: {4,6}]
  %s7 = inlined_call_operand.vmem [shape: bf16[128,256], index: 7, kind: input, shape index: {}]
  %s8 = inlined_call_operand.vmem [shape: f32[1,256], index: 8, kind: input, shape index: {}]
  %s9 = inlined_call_operand.vmem [shape: bf16[2,16,256], index: 9, kind: output, shape index: {}]
  %s10 = sld [smem:[#allocation0]]
  $region69: #{_lambda_.8} parent=0
    _
  %s12 = ssub.s32 1, %s10
  %s13 = scalar_select 0, %s12, %s10
  loop: start=0, step=1, limit=4
  $region2: #{_lambda_.8} parent=0 // loop_pre_header
    _
  $region3: #{_lambda_.8} parent=0 // loop_header
    %s15 = sphi 0, %s19
    %p16 = scmp.ge.s32.totalorder %s15, 4
    %s22 = sphi 0, %s34
    %s23 = sphi 0, %s30
    %s24 = sphi 0, %s22
    %s25 = sphi 0, %s23
    %s26 = sphi 0, %s24
    %s27 = sphi 0, %s25
    %s39 = sphi 0, %s41
    %s42 = sphi 0, %s39
    %s43 = sphi 0, %s42
    %s59 = sphi 0, %s43
    %s67 = sphi 0, %s69
    %s70 = sphi 0, %s67
    %s71 = sphi 0, %s70
    %s87 = sphi 0, %s71
    %s91 = sphi 0, %s91
    %s93 = sphi 0, %s91
    %s94 = sphi 0, %s93
    %s108 = sphi 0, %s94
    %s112 = sphi 0, %s112
    %s114 = sphi 0, %s112
    %s115 = sphi 0, %s114
    %s129 = sphi 0, %s115
    %s133 = sphi 0, %s133
    %s135 = sphi 0, %s133
    %s136 = sphi 0, %s135
    %s150 = sphi 0, %s136
    %s154 = sphi 0, %s154
    %s156 = sphi 0, %s154
    %s157 = sphi 0, %s156
    %s171 = sphi 0, %s157
    %s175 = sphi 0, %s175
    %s177 = sphi 0, %s175
    %s178 = sphi 0, %s177
    %s192 = sphi 0, %s178
    %s196 = sphi 0, %s196
    %s198 = sphi 0, %s196
    %s199 = sphi 0, %s198
    %s213 = sphi 0, %s199
    %s217 = sphi 0, %s217
    %s219 = sphi 0, %s217
    %s220 = sphi 0, %s219
    %s234 = sphi 0, %s220
    %s242 = sphi 0, %s244
    %s245 = sphi 0, %s242
    %s246 = sphi 0, %s245
    %s262 = sphi 0, %s246
  $region4: #{_lambda_.8} parent=0 // loop_header_branch
    %18 = sbr.rel (%p16) target = $region8
  $region5: #{_lambda_.8} parent=0 // loop_body
    %s20 = ssub.s32 %s15, 1
    %s21 = ssub.s32 %s15, 2
    %s28 = sadd.s32 1, %s23
    %p29 = scmp.ge.s32.totalorder %s28, 1
    %s30 = scalar_select %p29, 0, %s28
    %s31 = sadd.s32 1, %s22
    %s32 = scalar_select %p29, %s31, %s22
    %p33 = scmp.ge.s32.totalorder %s32, 2
    %s34 = scalar_select %p33, 0, %s32
    %s35 = ssub.s32 %s22, %s34
    %s36 = ssub.s32 %s23, %s30
    %s37 = sor.u32 %s35, %s36
    %p38 = scmp.eq.s32.totalorder %s37, 0
    %s40 = sadd.s32 %s39, 1
    %s41 = scalar_select %p38, %s39, %s40
    %p44 = pneg %p38
    %p45 = scmp.eq.s32.totalorder %s15, 1
    %p46 = por %p44, %p45
    %p47 = scmp.ne.s32.totalorder %s39, %s42
    %p48 = scmp.eq.s32.totalorder %s15, 0
    %p49 = por %p47, %p48
    %p50 = scmp.ne.s32.totalorder %s39, %s42
    %p51 = scmp.eq.s32.totalorder %s20, 1
    %p52 = por %p50, %p51
    %p53 = scmp.ne.s32.totalorder %s42, %s43
    %p54 = scmp.eq.s32.totalorder %s20, 0
    %p55 = por %p53, %p54
    %p56 = scmp.ne.s32.totalorder %s42, %s43
    %p57 = scmp.eq.s32.totalorder %s21, 1
    %p58 = por %p56, %p57
    %p60 = scmp.ne.s32.totalorder %s43, %s59
    %p61 = scmp.eq.s32.totalorder %s21, 0
    %p62 = por %p60, %p61
    %s63 = ssub.s32 %s22, %s34
    %s64 = ssub.s32 %s23, %s30
    %s65 = sor.u32 %s63, %s64
    %p66 = scmp.eq.s32.totalorder %s65, 0
    %s68 = sadd.s32 %s67, 1
    %s69 = scalar_select %p66, %s67, %s68
    %p72 = pneg %p66
    %p73 = scmp.eq.s32.totalorder %s15, 1
    %p74 = por %p72, %p73
    %p75 = scmp.ne.s32.totalorder %s67, %s70
    %p76 = scmp.eq.s32.totalorder %s15, 0
    %p77 = por %p75, %p76
    %p78 = scmp.ne.s32.totalorder %s67, %s70
    %p79 = scmp.eq.s32.totalorder %s20, 1
    %p80 = por %p78, %p79
    %p81 = scmp.ne.s32.totalorder %s70, %s71
    %p82 = scmp.eq.s32.totalorder %s20, 0
    %p83 = por %p81, %p82
    %p84 = scmp.ne.s32.totalorder %s70, %s71
    %p85 = scmp.eq.s32.totalorder %s21, 1
    %p86 = por %p84, %p85
    %p88 = scmp.ne.s32.totalorder %s71, %s87
    %p89 = scmp.eq.s32.totalorder %s21, 0
    %p90 = por %p88, %p89
    %s92 = sadd.s32 %s91, 1
    %p95 = scmp.eq.s32.totalorder %s15, 1
    %p96 = scmp.ne.s32.totalorder %s91, %s93
    %p97 = scmp.eq.s32.totalorder %s15, 0
    %p98 = por %p96, %p97
    %p99 = scmp.ne.s32.totalorder %s91, %s93
    %p100 = scmp.eq.s32.totalorder %s20, 1
    %p101 = por %p99, %p100
    %p102 = scmp.ne.s32.totalorder %s93, %s94
    %p103 = scmp.eq.s32.totalorder %s20, 0
    %p104 = por %p102, %p103
    %p105 = scmp.ne.s32.totalorder %s93, %s94
    %p106 = scmp.eq.s32.totalorder %s21, 1
    %p107 = por %p105, %p106
    %p109 = scmp.ne.s32.totalorder %s94, %s108
    %p110 = scmp.eq.s32.totalorder %s21, 0
    %p111 = por %p109, %p110
    %s113 = sadd.s32 %s112, 1
    %p116 = scmp.eq.s32.totalorder %s15, 1
    %p117 = scmp.ne.s32.totalorder %s112, %s114
    %p118 = scmp.eq.s32.totalorder %s15, 0
    %p119 = por %p117, %p118
    %p120 = scmp.ne.s32.totalorder %s112, %s114
    %p121 = scmp.eq.s32.totalorder %s20, 1
    %p122 = por %p120, %p121
    %p123 = scmp.ne.s32.totalorder %s114, %s115
    %p124 = scmp.eq.s32.totalorder %s20, 0
    %p125 = por %p123, %p124
    %p126 = scmp.ne.s32.totalorder %s114, %s115
    %p127 = scmp.eq.s32.totalorder %s21, 1
    %p128 = por %p126, %p127
    %p130 = scmp.ne.s32.totalorder %s115, %s129
    %p131 = scmp.eq.s32.totalorder %s21, 0
    %p132 = por %p130, %p131
    %s134 = sadd.s32 %s133, 1
    %p137 = scmp.eq.s32.totalorder %s15, 1
    %p138 = scmp.ne.s32.totalorder %s133, %s135
    %p139 = scmp.eq.s32.totalorder %s15, 0
    %p140 = por %p138, %p139
    %p141 = scmp.ne.s32.totalorder %s133, %s135
    %p142 = scmp.eq.s32.totalorder %s20, 1
    %p143 = por %p141, %p142
    %p144 = scmp.ne.s32.totalorder %s135, %s136
    %p145 = scmp.eq.s32.totalorder %s20, 0
    %p146 = por %p144, %p145
    %p147 = scmp.ne.s32.totalorder %s135, %s136
    %p148 = scmp.eq.s32.totalorder %s21, 1
    %p149 = por %p147, %p148
    %p151 = scmp.ne.s32.totalorder %s136, %s150
    %p152 = scmp.eq.s32.totalorder %s21, 0
    %p153 = por %p151, %p152
    %s155 = sadd.s32 %s154, 1
    %p158 = scmp.eq.s32.totalorder %s15, 1
    %p159 = scmp.ne.s32.totalorder %s154, %s156
    %p160 = scmp.eq.s32.totalorder %s15, 0
    %p161 = por %p159, %p160
    %p162 = scmp.ne.s32.totalorder %s154, %s156
    %p163 = scmp.eq.s32.totalorder %s20, 1
    %p164 = por %p162, %p163
    %p165 = scmp.ne.s32.totalorder %s156, %s157
    %p166 = scmp.eq.s32.totalorder %s20, 0
    %p167 = por %p165, %p166
    %p168 = scmp.ne.s32.totalorder %s156, %s157
    %p169 = scmp.eq.s32.totalorder %s21, 1
    %p170 = por %p168, %p169
    %p172 = scmp.ne.s32.totalorder %s157, %s171
    %p173 = scmp.eq.s32.totalorder %s21, 0
    %p174 = por %p172, %p173
    %s176 = sadd.s32 %s175, 1
    %p179 = scmp.eq.s32.totalorder %s15, 1
    %p180 = scmp.ne.s32.totalorder %s175, %s177
    %p181 = scmp.eq.s32.totalorder %s15, 0
    %p182 = por %p180, %p181
    %p183 = scmp.ne.s32.totalorder %s175, %s177
    %p184 = scmp.eq.s32.totalorder %s20, 1
    %p185 = por %p183, %p184
    %p186 = scmp.ne.s32.totalorder %s177, %s178
    %p187 = scmp.eq.s32.totalorder %s20, 0
    %p188 = por %p186, %p187
    %p189 = scmp.ne.s32.totalorder %s177, %s178
    %p190 = scmp.eq.s32.totalorder %s21, 1
    %p191 = por %p189, %p190
    %p193 = scmp.ne.s32.totalorder %s178, %s192
    %p194 = scmp.eq.s32.totalorder %s21, 0
    %p195 = por %p193, %p194
    %s197 = sadd.s32 %s196, 1
    %p200 = scmp.eq.s32.totalorder %s15, 1
    %p201 = scmp.ne.s32.totalorder %s196, %s198
    %p202 = scmp.eq.s32.totalorder %s15, 0
    %p203 = por %p201, %p202
    %p204 = scmp.ne.s32.totalorder %s196, %s198
    %p205 = scmp.eq.s32.totalorder %s20, 1
    %p206 = por %p204, %p205
    %p207 = scmp.ne.s32.totalorder %s198, %s199
    %p208 = scmp.eq.s32.totalorder %s20, 0
    %p209 = por %p207, %p208
    %p210 = scmp.ne.s32.totalorder %s198, %s199
    %p211 = scmp.eq.s32.totalorder %s21, 1
    %p212 = por %p210, %p211
    %p214 = scmp.ne.s32.totalorder %s199, %s213
    %p215 = scmp.eq.s32.totalorder %s21, 0
    %p216 = por %p214, %p215
    %s218 = sadd.s32 %s217, 1
    %p221 = scmp.eq.s32.totalorder %s15, 1
    %p222 = scmp.ne.s32.totalorder %s217, %s219
    %p223 = scmp.eq.s32.totalorder %s15, 0
    %p224 = por %p222, %p223
    %p225 = scmp.ne.s32.totalorder %s217, %s219
    %p226 = scmp.eq.s32.totalorder %s20, 1
    %p227 = por %p225, %p226
    %p228 = scmp.ne.s32.totalorder %s219, %s220
    %p229 = scmp.eq.s32.totalorder %s20, 0
    %p230 = por %p228, %p229
    %p231 = scmp.ne.s32.totalorder %s219, %s220
    %p232 = scmp.eq.s32.totalorder %s21, 1
    %p233 = por %p231, %p232
    %p235 = scmp.ne.s32.totalorder %s220, %s234
    %p236 = scmp.eq.s32.totalorder %s21, 0
    %p237 = por %p235, %p236
    %s238 = ssub.s32 %s22, %s34
    %s239 = ssub.s32 %s23, %s30
    %s240 = sor.u32 %s238, %s239
    %p241 = scmp.eq.s32.totalorder %s240, 0
    %s243 = sadd.s32 %s242, 1
    %s244 = scalar_select %p241, %s242, %s243
    %p247 = pneg %p241
    %p248 = scmp.eq.s32.totalorder %s15, 1
    %p249 = por %p247, %p248
    %p250 = scmp.ne.s32.totalorder %s242, %s245
    %p251 = scmp.eq.s32.totalorder %s15, 0
    %p252 = por %p250, %p251
    %p253 = scmp.ne.s32.totalorder %s242, %s245
    %p254 = scmp.eq.s32.totalorder %s20, 1
    %p255 = por %p253, %p254
    %p256 = scmp.ne.s32.totalorder %s245, %s246
    %p257 = scmp.eq.s32.totalorder %s20, 0
    %p258 = por %p256, %p257
    %p259 = scmp.ne.s32.totalorder %s245, %s246
    %p260 = scmp.eq.s32.totalorder %s21, 1
    %p261 = por %p259, %p260
    %p263 = scmp.ne.s32.totalorder %s246, %s262
    %p264 = scmp.eq.s32.totalorder %s21, 0
    %p265 = por %p263, %p264
    %p266 = scmp.le.s32.totalorder 1, %s15
    %p267 = scmp.lt.s32.totalorder %s15, 3
    %p268 = pnand %p266, %p267
    %p269 = pneg %p268
    // Predicated region
    $region9: #{_lambda_.8} parent=5 // pred_check
      _
    $region10: #{_lambda_.8} parent=5 // pred_check_branch
      %271 = sbr.rel (%p268) target = $region12
    $region11: #{_lambda_.8} parent=5 // pred_region
      %s272 = ssub.s32 %s15, 1
      // Predicated region
      $region13: #{_lambda_.8} parent=11 // pred_check
        %p273 = pneg %p104
      $region14: #{_lambda_.8} parent=11 // pred_check_branch
        %275 = sbr.rel (%p273) target = $region16
      $region15: #{_lambda_.8} parent=11 // pred_region
        _
      $region16: #{_lambda_.8} parent=11 // pred_fallthru
        _
      // Predicated region
      $region17: #{_lambda_.8} parent=11 // pred_check
        %p276 = pneg %p125
      $region18: #{_lambda_.8} parent=11 // pred_check_branch
        %278 = sbr.rel (%p276) target = $region20
      $region19: #{_lambda_.8} parent=11 // pred_region
        _
      $region20: #{_lambda_.8} parent=11 // pred_fallthru
        _
      // Predicated region
      $region21: #{_lambda_.8} parent=11 // pred_check
        %p279 = pneg %p146
      $region22: #{_lambda_.8} parent=11 // pred_check_branch
        %281 = sbr.rel (%p279) target = $region24
      $region23: #{_lambda_.8} parent=11 // pred_region
        _
      $region24: #{_lambda_.8} parent=11 // pred_fallthru
        _
      // Predicated region
      $region25: #{_lambda_.8} parent=11 // pred_check
        %p282 = pneg %p167
      $region26: #{_lambda_.8} parent=11 // pred_check_branch
        %284 = sbr.rel (%p282) target = $region28
      $region27: #{_lambda_.8} parent=11 // pred_region
        _
      $region28: #{_lambda_.8} parent=11 // pred_fallthru
        _
      // Predicated region
      $region29: #{_lambda_.8} parent=11 // pred_check
        %p285 = pneg %p188
      $region30: #{_lambda_.8} parent=11 // pred_check_branch
        %287 = sbr.rel (%p285) target = $region32
      $region31: #{_lambda_.8} parent=11 // pred_region
        _
      $region32: #{_lambda_.8} parent=11 // pred_fallthru
        _
      // Predicated region
      $region33: #{_lambda_.8} parent=11 // pred_check
        %p288 = pneg %p209
      $region34: #{_lambda_.8} parent=11 // pred_check_branch
        %290 = sbr.rel (%p288) target = $region36
      $region35: #{_lambda_.8} parent=11 // pred_region
        _
      $region36: #{_lambda_.8} parent=11 // pred_fallthru
        _
      // Predicated region
      $region37: #{_lambda_.8} parent=11 // pred_check
        %p291 = pneg %p230
      $region38: #{_lambda_.8} parent=11 // pred_check_branch
        %293 = sbr.rel (%p291) target = $region40
      $region39: #{_lambda_.8} parent=11 // pred_region
        _
      $region40: #{_lambda_.8} parent=11 // pred_fallthru
        _
    $region12: #{_lambda_.8} parent=5 // pred_fallthru
      _
    %p294 = scmp.lt.s32.totalorder %s15, 2
    // Predicated region
    $region41: #{_lambda_.8} parent=5 // pred_check
      %p295 = pneg %p294
    $region42: #{_lambda_.8} parent=5 // pred_check_branch
      %297 = sbr.rel (%p295) target = $region44
    $region43: #{_lambda_.8} parent=5 // pred_region
      // Predicated region
      $region45: #{_lambda_.8} parent=43 // pred_check
        %p298 = pneg %p49
      $region46: #{_lambda_.8} parent=43 // pred_check_branch
        %300 = sbr.rel (%p298) target = $region48
      $region47: #{_lambda_.8} parent=43 // pred_region
        %s301 = smul.u32 2, %s23
        %p302 = scmp.lt.s32.totalorder %s22, 1
        %s303 = scalar_select %p302, %s22, 1
        %p304 = scmp.lt.s32.totalorder %s301, 1
        %s305 = scalar_select %p304, %s301, 1
        %s306 = smul.addr %s303, 16
        %s307 = sadd.s32 %s305, %s306
        %s308 = smul.addr %s307, 4
        %s309 = scalar_lea.vmem %s0, %s308
        %s310 = smul.u32 2, %s23
      $region48: #{_lambda_.8} parent=43 // pred_fallthru
        _
      // Predicated region
      $region49: #{_lambda_.8} parent=43 // pred_check
        %p311 = pneg %p77
      $region50: #{_lambda_.8} parent=43 // pred_check_branch
        %313 = sbr.rel (%p311) target = $region52
      $region51: #{_lambda_.8} parent=43 // pred_region
        %s314 = smul.u32 2, %s23
        %p315 = scmp.lt.s32.totalorder %s22, 1
        %s316 = scalar_select %p315, %s22, 1
        %p317 = scmp.lt.s32.totalorder %s314, 1
        %s318 = scalar_select %p317, %s314, 1
        %s319 = smul.addr %s318, 2
        %s320 = smul.addr %s316, 32
        %s321 = sadd.s32 %s319, %s320
        %s322 = smul.addr %s321, 4
        %s323 = scalar_lea.vmem %s1, %s322
        %s324 = smul.u32 2, %s23
      $region52: #{_lambda_.8} parent=43 // pred_fallthru
        _
    $region44: #{_lambda_.8} parent=5 // pred_fallthru
      _
    %p325 = scmp.le.s32.totalorder 1, %s15
    %p326 = scmp.lt.s32.totalorder %s15, 3
    %p327 = pnand %p325, %p326
    %p328 = pneg %p327
    // Predicated region
    $region53: #{_lambda_.8} parent=5 // pred_check
      _
    $region54: #{_lambda_.8} parent=5 // pred_check_branch
      %330 = sbr.rel (%p327) target = $region56
    $region55: #{_lambda_.8} parent=5 // pred_region
      %s331 = ssub.s32 %s15, 1
      %s332 = smul.u32 2, %s25
      %p333 = scmp.lt.s32.totalorder %s24, 1
      %s334 = scalar_select %p333, %s24, 1
      %p335 = scmp.lt.s32.totalorder %s332, 1
      %s336 = scalar_select %p335, %s332, 1
      %s337 = smul.addr %s334, 16
      %s338 = sadd.s32 %s336, %s337
      %s339 = smul.addr %s338, 4
      %s340 = scalar_lea.vmem %s0, %s339
      %p341 = pneg %p55
      %p342 = pneg %p52
      %s343 = smul.u32 2, %s25
      %p344 = scmp.lt.s32.totalorder %s24, 1
      %s345 = scalar_select %p344, %s24, 1
      %p346 = scmp.lt.s32.totalorder %s343, 1
      %s347 = scalar_select %p346, %s343, 1
      %s348 = smul.addr %s347, 2
      %s349 = smul.addr %s345, 32
      %s350 = sadd.s32 %s348, %s349
      %s351 = smul.addr %s350, 4
      %s352 = scalar_lea.vmem %s1, %s351
      %p353 = pneg %p83
      %p354 = pneg %p80
      %p355 = pneg %p104
      %p356 = pneg %p101
      %p357 = pneg %p125
      %p358 = pneg %p122
      %p359 = pneg %p146
      %p360 = pneg %p143
      %p361 = pneg %p167
      %p362 = pneg %p164
      %p363 = pneg %p188
      %p364 = pneg %p185
      %p365 = pneg %p209
      %p366 = pneg %p206
      %p367 = pneg %p230
      %p368 = pneg %p227
      %p369 = pneg %p258
      %p370 = pneg %p255
      %s371 = smul.u32 2, %s25
      %p372 = scmp.lt.s32.totalorder %s24, 1
      %s373 = scalar_select %p372, %s24, 1
      %p374 = scmp.lt.s32.totalorder %s371, 1
      %s375 = scalar_select %p374, %s371, 1
      %s376 = smul.addr %s375, 2
      %s377 = smul.addr %s373, 4
      %s378 = sadd.s32 %s376, %s377
      %s379 = smul.addr %s378, 4
      %s380 = scalar_lea.vmem %s9, %s379
      %s381 = smul.u32 2, %s25
      %p382 = scmp.lt.s32.totalorder %s24, 1
      %s383 = scalar_select %p382, %s24, 1
      %p384 = scmp.lt.s32.totalorder %s381, 1
      %s385 = scalar_select %p384, %s381, 1
      %s386 = smul.addr %s383, 16
      %s387 = sadd.s32 %s385, %s386
      %s388 = smul.addr %s387, 4
      %s389 = scalar_lea.vmem %s0, %s388
      %s390 = smul.u32 2, %s25
      %s391 = smul.u32 2, %s25
      %p392 = scmp.lt.s32.totalorder %s24, 1
      %s393 = scalar_select %p392, %s24, 1
      %p394 = scmp.lt.s32.totalorder %s391, 1
      %s395 = scalar_select %p394, %s391, 1
      %s396 = smul.addr %s395, 2
      %s397 = smul.addr %s393, 32
      %s398 = sadd.s32 %s396, %s397
      %s399 = smul.addr %s398, 4
      %s400 = scalar_lea.vmem %s1, %s399
      %s401 = smul.u32 2, %s25
      %s402 = smul.u32 2, %s25
      %p403 = scmp.lt.s32.totalorder %s24, 1
      %s404 = scalar_select %p403, %s24, 1
      %p405 = scmp.lt.s32.totalorder %s402, 1
      %s406 = scalar_select %p405, %s402, 1
      %s407 = smul.addr %s406, 2
      %s408 = smul.addr %s404, 4
      %s409 = sadd.s32 %s407, %s408
      %s410 = smul.addr %s409, 4
      %s411 = scalar_lea.vmem %s9, %s410
      %s412 = smul.u32 2, %s25
      %v414 = vld [vmem:[%s400] sm:$0xff]
      %v415 = vld [vmem:[%s400 + $0x8] sm:$0xff]
      %v416 = vld [vmem:[%s400 + $0x10] sm:$0xff]
      %v417 = vld [vmem:[%s400 + $0x18] sm:$0xff]
      %v418 = vld [vmem:[%s400 + $0x20] sm:$0xff]
      %v419 = vld [vmem:[%s400 + $0x28] sm:$0xff]
      %v420 = vld [vmem:[%s400 + $0x30] sm:$0xff]
      %v421 = vld [vmem:[%s400 + $0x38] sm:$0xff]
      %v422 = vld [vmem:[%s400 + $0x40] sm:$0xff]
      %v423 = vld [vmem:[%s400 + $0x48] sm:$0xff]
      %v424 = vld [vmem:[%s400 + $0x50] sm:$0xff]
      %v425 = vld [vmem:[%s400 + $0x58] sm:$0xff]
      %v426 = vld [vmem:[%s400 + $0x60] sm:$0xff]
      %v427 = vld [vmem:[%s400 + $0x68] sm:$0xff]
      %v428 = vld [vmem:[%s400 + $0x70] sm:$0xff]
      %v429 = vld [vmem:[%s400 + $0x78] sm:$0xff]
      %v430 = vld [vmem:[%s2] sm:$0xf]
      %v431 = vld [vmem:[%s2 + $0x4] sm:$0xf]
      %v432 = vld [vmem:[%s2 + $0x8] sm:$0xf]
      %v433 = vld [vmem:[%s2 + $0xc] sm:$0xf]
      %v434 = vld [vmem:[%s2 + $0x10] sm:$0xf]
      %v435 = vld [vmem:[%s2 + $0x14] sm:$0xf]
      %v436 = vld [vmem:[%s2 + $0x18] sm:$0xf]
      %v437 = vld [vmem:[%s2 + $0x1c] sm:$0xf]
      %v438 = vld [vmem:[%s2 + $0x20] sm:$0xf]
      %v439 = vld [vmem:[%s2 + $0x24] sm:$0xf]
      %v440 = vld [vmem:[%s2 + $0x28] sm:$0xf]
      %v441 = vld [vmem:[%s2 + $0x2c] sm:$0xf]
      %v442 = vld [vmem:[%s2 + $0x30] sm:$0xf]
      %v443 = vld [vmem:[%s2 + $0x34] sm:$0xf]
      %v444 = vld [vmem:[%s2 + $0x38] sm:$0xf]
      %v445 = vld [vmem:[%s2 + $0x3c] sm:$0xf]
      %v446 = vld [vmem:[%s2 + $0x40] sm:$0xf]
      %v447 = vld [vmem:[%s2 + $0x44] sm:$0xf]
      %v448 = vld [vmem:[%s2 + $0x48] sm:$0xf]
      %v449 = vld [vmem:[%s2 + $0x4c] sm:$0xf]
      %v450 = vld [vmem:[%s2 + $0x50] sm:$0xf]
      %v451 = vld [vmem:[%s2 + $0x54] sm:$0xf]
      %v452 = vld [vmem:[%s2 + $0x58] sm:$0xf]
      %v453 = vld [vmem:[%s2 + $0x5c] sm:$0xf]
      %v454 = vld [vmem:[%s2 + $0x60] sm:$0xf]
      %v455 = vld [vmem:[%s2 + $0x64] sm:$0xf]
      %v456 = vld [vmem:[%s2 + $0x68] sm:$0xf]
      %v457 = vld [vmem:[%s2 + $0x6c] sm:$0xf]
      %v458 = vld [vmem:[%s2 + $0x70] sm:$0xf]
      %v459 = vld [vmem:[%s2 + $0x74] sm:$0xf]
      %v460 = vld [vmem:[%s2 + $0x78] sm:$0xf]
      %v461 = vld [vmem:[%s2 + $0x7c] sm:$0xf]
      %v462 = vld [vmem:[%s389] sm:$0xf]
      %v463 = vld [vmem:[%s389 + $0x4] sm:$0xf]
      %v464 = vld [vmem:[%s389 + $0x8] sm:$0xf]
      %v465 = vld [vmem:[%s389 + $0xc] sm:$0xf]
      %v466 = vld [vmem:[%s389 + $0x10] sm:$0xf]
      %v467 = vld [vmem:[%s389 + $0x14] sm:$0xf]
      %v468 = vld [vmem:[%s389 + $0x18] sm:$0xf]
      %v469 = vld [vmem:[%s389 + $0x1c] sm:$0xf]
      %v470 = vld [vmem:[%s389 + $0x20] sm:$0xf]
      %v471 = vld [vmem:[%s389 + $0x24] sm:$0xf]
      %v472 = vld [vmem:[%s389 + $0x28] sm:$0xf]
      %v473 = vld [vmem:[%s389 + $0x2c] sm:$0xf]
      %v474 = vld [vmem:[%s389 + $0x30] sm:$0xf]
      %v475 = vld [vmem:[%s389 + $0x34] sm:$0xf]
      %v476 = vld [vmem:[%s389 + $0x38] sm:$0xf]
      %v477 = vld [vmem:[%s389 + $0x3c] sm:$0xf]
      %v478 = vunpack.c.l.bf16 %v462
      %v479 = vunpack.c.l.bf16 %v463
      %v480 = vunpack.c.l.bf16 %v464
      %v481 = vunpack.c.l.bf16 %v465
      %v482 = vunpack.c.l.bf16 %v466
      %v483 = vunpack.c.l.bf16 %v467
      %v484 = vunpack.c.l.bf16 %v468
      %v485 = vunpack.c.l.bf16 %v469
      %v486 = vunpack.c.l.bf16 %v470
      %v487 = vunpack.c.l.bf16 %v471
      %v488 = vunpack.c.l.bf16 %v472
      %v489 = vunpack.c.l.bf16 %v473
      %v490 = vunpack.c.l.bf16 %v474
      %v491 = vunpack.c.l.bf16 %v475
      %v492 = vunpack.c.l.bf16 %v476
      %v493 = vunpack.c.l.bf16 %v477
      %v494 = vld [vmem:[%s3] sm:$0x7]
      %496 = vset.pattern.permute.xlu0 0
      %497 = vperm.xlu0 %496, %v478
      %v498 = vpop.permute.xlu0 %497
      %501 = vset.pattern.permute.xlu0 0
      %502 = vperm.xlu0 %501, %v479
      %v503 = vpop.permute.xlu0 %502
      %506 = vset.pattern.permute.xlu0 0
      %507 = vperm.xlu0 %506, %v480
      %v508 = vpop.permute.xlu0 %507
      %511 = vset.pattern.permute.xlu0 0
      %512 = vperm.xlu0 %511, %v481
      %v513 = vpop.permute.xlu0 %512
      %516 = vset.pattern.permute.xlu0 0
      %517 = vperm.xlu0 %516, %v482
      %v518 = vpop.permute.xlu0 %517
      %521 = vset.pattern.permute.xlu0 0
      %522 = vperm.xlu0 %521, %v483
      %v523 = vpop.permute.xlu0 %522
      %526 = vset.pattern.permute.xlu0 0
      %527 = vperm.xlu0 %526, %v484
      %v528 = vpop.permute.xlu0 %527
      %531 = vset.pattern.permute.xlu0 0
      %532 = vperm.xlu0 %531, %v485
      %v533 = vpop.permute.xlu0 %532
      %536 = vset.pattern.permute.xlu0 0
      %537 = vperm.xlu0 %536, %v486
      %v538 = vpop.permute.xlu0 %537
      %541 = vset.pattern.permute.xlu0 0
      %542 = vperm.xlu0 %541, %v487
      %v543 = vpop.permute.xlu0 %542
      %546 = vset.pattern.permute.xlu0 0
      %547 = vperm.xlu0 %546, %v488
      %v548 = vpop.permute.xlu0 %547
      %551 = vset.pattern.permute.xlu0 0
      %552 = vperm.xlu0 %551, %v489
      %v553 = vpop.permute.xlu0 %552
      %556 = vset.pattern.permute.xlu0 0
      %557 = vperm.xlu0 %556, %v490
      %v558 = vpop.permute.xlu0 %557
      %561 = vset.pattern.permute.xlu0 0
      %562 = vperm.xlu0 %561, %v491
      %v563 = vpop.permute.xlu0 %562
      %566 = vset.pattern.permute.xlu0 0
      %567 = vperm.xlu0 %566, %v492
      %v568 = vpop.permute.xlu0 %567
      %571 = vset.pattern.permute.xlu0 0
      %572 = vperm.xlu0 %571, %v493
      %v573 = vpop.permute.xlu0 %572
      %v575 = vlaneseq
      %v576 = vshrl.u32 %v575, 7
      %v577 = vsub.s32 0, %v576
      %v578 = vrot.slane %v494, %v577
      %v579 = vmul.f32 %v498, %v578
      %v580 = vmul.f32 %v503, %v578
      %v581 = vmul.f32 %v508, %v578
      %v582 = vmul.f32 %v513, %v578
      %v583 = vmul.f32 %v518, %v578
      %v584 = vmul.f32 %v523, %v578
      %v585 = vmul.f32 %v528, %v578
      %v586 = vmul.f32 %v533, %v578
      %v587 = vmul.f32 %v538, %v578
      %v588 = vmul.f32 %v543, %v578
      %v589 = vmul.f32 %v548, %v578
      %v590 = vmul.f32 %v553, %v578
      %v591 = vmul.f32 %v558, %v578
      %v592 = vmul.f32 %v563, %v578
      %v593 = vmul.f32 %v568, %v578
      %v594 = vmul.f32 %v573, %v578
      %595 = vset.pattern.permute.xlu0 1
      %596 = vperm.xlu0 %595, %v478
      %v597 = vpop.permute.xlu0 %596
      %599 = vset.pattern.permute.xlu0 1
      %600 = vperm.xlu0 %599, %v479
      %v601 = vpop.permute.xlu0 %600
      %603 = vset.pattern.permute.xlu0 1
      %604 = vperm.xlu0 %603, %v480
      %v605 = vpop.permute.xlu0 %604
      %607 = vset.pattern.permute.xlu0 1
      %608 = vperm.xlu0 %607, %v481
      %v609 = vpop.permute.xlu0 %608
      %611 = vset.pattern.permute.xlu0 1
      %612 = vperm.xlu0 %611, %v482
      %v613 = vpop.permute.xlu0 %612
      %615 = vset.pattern.permute.xlu0 1
      %616 = vperm.xlu0 %615, %v483
      %v617 = vpop.permute.xlu0 %616
      %619 = vset.pattern.permute.xlu0 1
      %620 = vperm.xlu0 %619, %v484
      %v621 = vpop.permute.xlu0 %620
      %623 = vset.pattern.permute.xlu0 1
      %624 = vperm.xlu0 %623, %v485
      %v625 = vpop.permute.xlu0 %624
      %627 = vset.pattern.permute.xlu0 1
      %628 = vperm.xlu0 %627, %v486
      %v629 = vpop.permute.xlu0 %628
      %631 = vset.pattern.permute.xlu0 1
      %632 = vperm.xlu0 %631, %v487
      %v633 = vpop.permute.xlu0 %632
      %635 = vset.pattern.permute.xlu0 1
      %636 = vperm.xlu0 %635, %v488
      %v637 = vpop.permute.xlu0 %636
      %639 = vset.pattern.permute.xlu0 1
      %640 = vperm.xlu0 %639, %v489
      %v641 = vpop.permute.xlu0 %640
      %643 = vset.pattern.permute.xlu0 1
      %644 = vperm.xlu0 %643, %v490
      %v645 = vpop.permute.xlu0 %644
      %647 = vset.pattern.permute.xlu0 1
      %648 = vperm.xlu0 %647, %v491
      %v649 = vpop.permute.xlu0 %648
      %651 = vset.pattern.permute.xlu0 1
      %652 = vperm.xlu0 %651, %v492
      %v653 = vpop.permute.xlu0 %652
      %655 = vset.pattern.permute.xlu0 1
      %656 = vperm.xlu0 %655, %v493
      %v657 = vpop.permute.xlu0 %656
      %v659 = vlaneseq
      %v660 = vshrl.u32 %v659, 7
      %v661 = vsub.s32 1, %v660
      %v662 = vrot.slane %v494, %v661
      %v663 = vmul.f32 %v597, %v662
      %v664 = vmul.f32 %v601, %v662
      %v665 = vmul.f32 %v605, %v662
      %v666 = vmul.f32 %v609, %v662
      %v667 = vmul.f32 %v613, %v662
      %v668 = vmul.f32 %v617, %v662
      %v669 = vmul.f32 %v621, %v662
      %v670 = vmul.f32 %v625, %v662
      %v671 = vmul.f32 %v629, %v662
      %v672 = vmul.f32 %v633, %v662
      %v673 = vmul.f32 %v637, %v662
      %v674 = vmul.f32 %v641, %v662
      %v675 = vmul.f32 %v645, %v662
      %v676 = vmul.f32 %v649, %v662
      %v677 = vmul.f32 %v653, %v662
      %v678 = vmul.f32 %v657, %v662
      %v679 = vadd.f32 %v579, %v663
      %v680 = vadd.f32 %v580, %v664
      %v681 = vadd.f32 %v581, %v665
      %v682 = vadd.f32 %v582, %v666
      %v683 = vadd.f32 %v583, %v667
      %v684 = vadd.f32 %v584, %v668
      %v685 = vadd.f32 %v585, %v669
      %v686 = vadd.f32 %v586, %v670
      %v687 = vadd.f32 %v587, %v671
      %v688 = vadd.f32 %v588, %v672
      %v689 = vadd.f32 %v589, %v673
      %v690 = vadd.f32 %v590, %v674
      %v691 = vadd.f32 %v591, %v675
      %v692 = vadd.f32 %v592, %v676
      %v693 = vadd.f32 %v593, %v677
      %v694 = vadd.f32 %v594, %v678
      %695 = vset.pattern.permute.xlu0 2
      %696 = vperm.xlu0 %695, %v478
      %v697 = vpop.permute.xlu0 %696
      %699 = vset.pattern.permute.xlu0 2
      %700 = vperm.xlu0 %699, %v479
      %v701 = vpop.permute.xlu0 %700
      %703 = vset.pattern.permute.xlu0 2
      %704 = vperm.xlu0 %703, %v480
      %v705 = vpop.permute.xlu0 %704
      %707 = vset.pattern.permute.xlu0 2
      %708 = vperm.xlu0 %707, %v481
      %v709 = vpop.permute.xlu0 %708
      %711 = vset.pattern.permute.xlu0 2
      %712 = vperm.xlu0 %711, %v482
      %v713 = vpop.permute.xlu0 %712
      %715 = vset.pattern.permute.xlu0 2
      %716 = vperm.xlu0 %715, %v483
      %v717 = vpop.permute.xlu0 %716
      %719 = vset.pattern.permute.xlu0 2
      %720 = vperm.xlu0 %719, %v484
      %v721 = vpop.permute.xlu0 %720
      %723 = vset.pattern.permute.xlu0 2
      %724 = vperm.xlu0 %723, %v485
      %v725 = vpop.permute.xlu0 %724
      %727 = vset.pattern.permute.xlu0 2
      %728 = vperm.xlu0 %727, %v486
      %v729 = vpop.permute.xlu0 %728
      %731 = vset.pattern.permute.xlu0 2
      %732 = vperm.xlu0 %731, %v487
      %v733 = vpop.permute.xlu0 %732
      %735 = vset.pattern.permute.xlu0 2
      %736 = vperm.xlu0 %735, %v488
      %v737 = vpop.permute.xlu0 %736
      %739 = vset.pattern.permute.xlu0 2
      %740 = vperm.xlu0 %739, %v489
      %v741 = vpop.permute.xlu0 %740
      %743 = vset.pattern.permute.xlu0 2
      %744 = vperm.xlu0 %743, %v490
      %v745 = vpop.permute.xlu0 %744
      %747 = vset.pattern.permute.xlu0 2
      %748 = vperm.xlu0 %747, %v491
      %v749 = vpop.permute.xlu0 %748
      %751 = vset.pattern.permute.xlu0 2
      %752 = vperm.xlu0 %751, %v492
      %v753 = vpop.permute.xlu0 %752
      %755 = vset.pattern.permute.xlu0 2
      %756 = vperm.xlu0 %755, %v493
      %v757 = vpop.permute.xlu0 %756
      %v759 = vlaneseq
      %v760 = vshrl.u32 %v759, 7
      %v761 = vsub.s32 2, %v760
      %v762 = vrot.slane %v494, %v761
      %v763 = vmul.f32 %v697, %v762
      %v764 = vmul.f32 %v701, %v762
      %v765 = vmul.f32 %v705, %v762
      %v766 = vmul.f32 %v709, %v762
      %v767 = vmul.f32 %v713, %v762
      %v768 = vmul.f32 %v717, %v762
      %v769 = vmul.f32 %v721, %v762
      %v770 = vmul.f32 %v725, %v762
      %v771 = vmul.f32 %v729, %v762
      %v772 = vmul.f32 %v733, %v762
      %v773 = vmul.f32 %v737, %v762
      %v774 = vmul.f32 %v741, %v762
      %v775 = vmul.f32 %v745, %v762
      %v776 = vmul.f32 %v749, %v762
      %v777 = vmul.f32 %v753, %v762
      %v778 = vmul.f32 %v757, %v762
      %v779 = vadd.f32 %v679, %v763
      %v780 = vadd.f32 %v680, %v764
      %v781 = vadd.f32 %v681, %v765
      %v782 = vadd.f32 %v682, %v766
      %v783 = vadd.f32 %v683, %v767
      %v784 = vadd.f32 %v684, %v768
      %v785 = vadd.f32 %v685, %v769
      %v786 = vadd.f32 %v686, %v770
      %v787 = vadd.f32 %v687, %v771
      %v788 = vadd.f32 %v688, %v772
      %v789 = vadd.f32 %v689, %v773
      %v790 = vadd.f32 %v690, %v774
      %v791 = vadd.f32 %v691, %v775
      %v792 = vadd.f32 %v692, %v776
      %v793 = vadd.f32 %v693, %v777
      %v794 = vadd.f32 %v694, %v778
      %v811 = vunpack.c.l.b16 %v414
      %v812 = vunpack.c.h.b16 %v414
      %v813 = vunpack.c.l.b16 %v415
      %v814 = vunpack.c.h.b16 %v415
      %v815 = vunpack.c.l.b16 %v416
      %v816 = vunpack.c.h.b16 %v416
      %v817 = vunpack.c.l.b16 %v417
      %v818 = vunpack.c.h.b16 %v417
      %v819 = vunpack.c.l.b16 %v418
      %v820 = vunpack.c.h.b16 %v418
      %v821 = vunpack.c.l.b16 %v419
      %v822 = vunpack.c.h.b16 %v419
      %v823 = vunpack.c.l.b16 %v420
      %v824 = vunpack.c.h.b16 %v420
      %v825 = vunpack.c.l.b16 %v421
      %v826 = vunpack.c.h.b16 %v421
      %v827 = vunpack.c.l.b16 %v422
      %v828 = vunpack.c.h.b16 %v422
      %v829 = vunpack.c.l.b16 %v423
      %v830 = vunpack.c.h.b16 %v423
      %v831 = vunpack.c.l.b16 %v424
      %v832 = vunpack.c.h.b16 %v424
      %v833 = vunpack.c.l.b16 %v425
      %v834 = vunpack.c.h.b16 %v425
      %v835 = vunpack.c.l.b16 %v426
      %v836 = vunpack.c.h.b16 %v426
      %v837 = vunpack.c.l.b16 %v427
      %v838 = vunpack.c.h.b16 %v427
      %v839 = vunpack.c.l.b16 %v428
      %v840 = vunpack.c.h.b16 %v428
      %v841 = vunpack.c.l.b16 %v429
      %v842 = vunpack.c.h.b16 %v429
      %v843 = vpack.c.b16 %v813, %v811
      %v844 = vpack.c.b16 %v814, %v812
      %v845 = vpack.c.b16 %v817, %v815
      %v846 = vpack.c.b16 %v818, %v816
      %v847 = vpack.c.b16 %v821, %v819
      %v848 = vpack.c.b16 %v822, %v820
      %v849 = vpack.c.b16 %v825, %v823
      %v850 = vpack.c.b16 %v826, %v824
      %v851 = vpack.c.b16 %v829, %v827
      %v852 = vpack.c.b16 %v830, %v828
      %v853 = vpack.c.b16 %v833, %v831
      %v854 = vpack.c.b16 %v834, %v832
      %v855 = vpack.c.b16 %v837, %v835
      %v856 = vpack.c.b16 %v838, %v836
      %v857 = vpack.c.b16 %v841, %v839
      %v858 = vpack.c.b16 %v842, %v840
      %v907 = vunpack.c.l.b16 %v430
      %v908 = vunpack.c.l.b16 %v431
      %v909 = vunpack.c.l.b16 %v432
      %v910 = vunpack.c.l.b16 %v433
      %v911 = vunpack.c.l.b16 %v434
      %v912 = vunpack.c.l.b16 %v435
      %v913 = vunpack.c.l.b16 %v436
      %v914 = vunpack.c.l.b16 %v437
      %v915 = vunpack.c.l.b16 %v438
      %v916 = vunpack.c.l.b16 %v439
      %v917 = vunpack.c.l.b16 %v440
      %v918 = vunpack.c.l.b16 %v441
      %v919 = vunpack.c.l.b16 %v442
      %v920 = vunpack.c.l.b16 %v443
      %v921 = vunpack.c.l.b16 %v444
      %v922 = vunpack.c.l.b16 %v445
      %v923 = vunpack.c.l.b16 %v446
      %v924 = vunpack.c.l.b16 %v447
      %v925 = vunpack.c.l.b16 %v448
      %v926 = vunpack.c.l.b16 %v449
      %v927 = vunpack.c.l.b16 %v450
      %v928 = vunpack.c.l.b16 %v451
      %v929 = vunpack.c.l.b16 %v452
      %v930 = vunpack.c.l.b16 %v453
      %v931 = vunpack.c.l.b16 %v454
      %v932 = vunpack.c.l.b16 %v455
      %v933 = vunpack.c.l.b16 %v456
      %v934 = vunpack.c.l.b16 %v457
      %v935 = vunpack.c.l.b16 %v458
      %v936 = vunpack.c.l.b16 %v459
      %v937 = vunpack.c.l.b16 %v460
      %v938 = vunpack.c.l.b16 %v461
      %v939 = vpack.c.b16 %v908, %v907
      %v940 = vpack.c.b16 %v910, %v909
      %v941 = vpack.c.b16 %v912, %v911
      %v942 = vpack.c.b16 %v914, %v913
      %v943 = vpack.c.b16 %v916, %v915
      %v944 = vpack.c.b16 %v918, %v917
      %v945 = vpack.c.b16 %v920, %v919
      %v946 = vpack.c.b16 %v922, %v921
      %v947 = vpack.c.b16 %v924, %v923
      %v948 = vpack.c.b16 %v926, %v925
      %v949 = vpack.c.b16 %v928, %v927
      %v950 = vpack.c.b16 %v930, %v929
      %v951 = vpack.c.b16 %v932, %v931
      %v952 = vpack.c.b16 %v934, %v933
      %v953 = vpack.c.b16 %v936, %v935
      %v954 = vpack.c.b16 %v938, %v937
      %971 = vmatprep.subr.bf16.mxu0 0
      %972 = vmatpush1.bf16.msra.mxu0 %v939
      %973 = vmatprep.subr.bf16.mxu0 0
      %974 = vmatpush1.bf16.msra.mxu0 %v940
      %975 = vmatprep.subr.bf16.mxu0 0
      %976 = vmatpush1.bf16.msra.mxu0 %v941
      %977 = vmatprep.subr.bf16.mxu0 0
      %978 = vmatpush1.bf16.msra.mxu0 %v942
      %979 = vmatprep.subr.bf16.mxu0 0
      %980 = vmatpush1.bf16.msra.mxu0 %v943
      %981 = vmatprep.subr.bf16.mxu0 0
      %982 = vmatpush1.bf16.msra.mxu0 %v944
      %983 = vmatprep.subr.bf16.mxu0 0
      %984 = vmatpush1.bf16.msra.mxu0 %v945
      %985 = vmatprep.subr.bf16.mxu0 0
      %986 = vmatpush1.bf16.msra.mxu0 %v946
      %987 = vmatprep.subr.bf16.mxu0 0
      %988 = vmatpush1.bf16.msra.mxu0 %v947
      %989 = vmatprep.subr.bf16.mxu0 0
      %990 = vmatpush1.bf16.msra.mxu0 %v948
      %991 = vmatprep.subr.bf16.mxu0 0
      %992 = vmatpush1.bf16.msra.mxu0 %v949
      %993 = vmatprep.subr.bf16.mxu0 0
      %994 = vmatpush1.bf16.msra.mxu0 %v950
      %995 = vmatprep.subr.bf16.mxu0 0
      %996 = vmatpush1.bf16.msra.mxu0 %v951
      %997 = vmatprep.subr.bf16.mxu0 0
      %998 = vmatpush1.bf16.msra.mxu0 %v952
      %999 = vmatprep.subr.bf16.mxu0 0
      %1000 = vmatpush1.bf16.msra.mxu0 %v953
      %1001 = vmatprep.subr.bf16.mxu0 0
      %1002 = vmatpush1.bf16.msra.mxu0 %v954
      %1003 = vmatprep.mubr.bf16.mxu0 %v844
      %1004 = vmatmul.mubr.bf16.gmra.mrb[0].mxu0 %v843
      %v1005 = vpop.f32.mrb[0].mxu0
      %v1006 = vadd.f32 %v779, %v1005
      %v1007 = vpop.f32.mrb[0].mxu0
      %v1008 = vpop.f32.mrb[0].mxu0
      %v1009 = vadd.f32 %v780, %v1008
      %v1010 = vpop.f32.mrb[0].mxu0
      %1011 = vmatprep.mubr.bf16.mxu0 %v846
      %1012 = vmatmul.mubr.bf16.gmra.mrb[0].mxu0 %v845
      %v1013 = vpop.f32.mrb[0].mxu0
      %v1014 = vadd.f32 %v781, %v1013
      %v1015 = vpop.f32.mrb[0].mxu0
      %v1016 = vpop.f32.mrb[0].mxu0
      %v1017 = vadd.f32 %v782, %v1016
      %v1018 = vpop.f32.mrb[0].mxu0
      %1019 = vmatprep.mubr.bf16.mxu0 %v848
      %1020 = vmatmul.mubr.bf16.gmra.mrb[0].mxu0 %v847
      %v1021 = vpop.f32.mrb[0].mxu0
      %v1022 = vadd.f32 %v783, %v1021
      %v1023 = vpop.f32.mrb[0].mxu0
      %v1024 = vpop.f32.mrb[0].mxu0
      %v1025 = vadd.f32 %v784, %v1024
      %v1026 = vpop.f32.mrb[0].mxu0
      %1027 = vmatprep.mubr.bf16.mxu0 %v850
      %1028 = vmatmul.mubr.bf16.gmra.mrb[0].mxu0 %v849
      %v1029 = vpop.f32.mrb[0].mxu0
      %v1030 = vadd.f32 %v785, %v1029
      %v1031 = vpop.f32.mrb[0].mxu0
      %v1032 = vpop.f32.mrb[0].mxu0
      %v1033 = vadd.f32 %v786, %v1032
      %v1034 = vpop.f32.mrb[0].mxu0
      %1035 = vmatprep.mubr.bf16.mxu0 %v852
      %1036 = vmatmul.mubr.bf16.gmra.mrb[0].mxu0 %v851
      %v1037 = vpop.f32.mrb[0].mxu0
      %v1038 = vadd.f32 %v787, %v1037
      %v1039 = vpop.f32.mrb[0].mxu0
      %v1040 = vpop.f32.mrb[0].mxu0
      %v1041 = vadd.f32 %v788, %v1040
      %v1042 = vpop.f32.mrb[0].mxu0
      %1043 = vmatprep.mubr.bf16.mxu0 %v854
      %1044 = vmatmul.mubr.bf16.gmra.mrb[0].mxu0 %v853
      %v1045 = vpop.f32.mrb[0].mxu0
      %v1046 = vadd.f32 %v789, %v1045
      %v1047 = vpop.f32.mrb[0].mxu0
      %v1048 = vpop.f32.mrb[0].mxu0
      %v1049 = vadd.f32 %v790, %v1048
      %v1050 = vpop.f32.mrb[0].mxu0
      %1051 = vmatprep.mubr.bf16.mxu0 %v856
      %1052 = vmatmul.mubr.bf16.gmra.mrb[0].mxu0 %v855
      %v1053 = vpop.f32.mrb[0].mxu0
      %v1054 = vadd.f32 %v791, %v1053
      %v1055 = vpop.f32.mrb[0].mxu0
      %v1056 = vpop.f32.mrb[0].mxu0
      %v1057 = vadd.f32 %v792, %v1056
      %v1058 = vpop.f32.mrb[0].mxu0
      %1059 = vmatprep.mubr.bf16.mxu0 %v858
      %1060 = vmatmul.mubr.bf16.gmra.mrb[0].mxu0 %v857
      %v1061 = vpop.f32.mrb[0].mxu0
      %v1062 = vadd.f32 %v793, %v1061
      %v1063 = vpop.f32.mrb[0].mxu0
      %v1064 = vpop.f32.mrb[0].mxu0
      %v1065 = vadd.f32 %v794, %v1064
      %v1066 = vpop.f32.mrb[0].mxu0
      %1067 = vdwg.mxu0
      %v1068 = vld [vmem:[%s4] sm:$0x1]
      %v1070 = vlaneseq
      %v1071 = vshrl.u32 %v1070, 7
      %v1072 = vsub.s32 0, %v1071
      %v1073 = vrot.slane %v1068, %v1072
      %v1075 = vadd.f32 %v1006, %v1073
      %v1076 = vadd.f32 %v1009, %v1073
      %v1077 = vadd.f32 %v1014, %v1073
      %v1078 = vadd.f32 %v1017, %v1073
      %v1079 = vadd.f32 %v1022, %v1073
      %v1080 = vadd.f32 %v1025, %v1073
      %v1081 = vadd.f32 %v1030, %v1073
      %v1082 = vadd.f32 %v1033, %v1073
      %v1083 = vadd.f32 %v1038, %v1073
      %v1084 = vadd.f32 %v1041, %v1073
      %v1085 = vadd.f32 %v1046, %v1073
      %v1086 = vadd.f32 %v1049, %v1073
      %v1087 = vadd.f32 %v1054, %v1073
      %v1088 = vadd.f32 %v1057, %v1073
      %v1089 = vadd.f32 %v1062, %v1073
      %v1090 = vadd.f32 %v1065, %v1073
      %v1091 = vmax.f32 %v1075, 0.0
      %v1092 = vmax.f32 %v1076, 0.0
      %v1093 = vmax.f32 %v1077, 0.0
      %v1094 = vmax.f32 %v1078, 0.0
      %v1095 = vmax.f32 %v1079, 0.0
      %v1096 = vmax.f32 %v1080, 0.0
      %v1097 = vmax.f32 %v1081, 0.0
      %v1098 = vmax.f32 %v1082, 0.0
      %v1099 = vmax.f32 %v1083, 0.0
      %v1100 = vmax.f32 %v1084, 0.0
      %v1101 = vmax.f32 %v1085, 0.0
      %v1102 = vmax.f32 %v1086, 0.0
      %v1103 = vmax.f32 %v1087, 0.0
      %v1104 = vmax.f32 %v1088, 0.0
      %v1105 = vmax.f32 %v1089, 0.0
      %v1106 = vmax.f32 %v1090, 0.0
      %v1107 = vpack.c.bf16 %v1092, %v1091
      %v1108 = vpack.c.bf16 %v1094, %v1093
      %v1109 = vpack.c.bf16 %v1096, %v1095
      %v1110 = vpack.c.bf16 %v1098, %v1097
      %v1111 = vpack.c.bf16 %v1100, %v1099
      %v1112 = vpack.c.bf16 %v1102, %v1101
      %v1113 = vpack.c.bf16 %v1104, %v1103
      %v1114 = vpack.c.bf16 %v1106, %v1105
      %v1115 = vld [vmem:[%s5] sm:$0xf]
      %v1116 = vld [vmem:[%s5 + $0x4] sm:$0xf]
      %v1117 = vld [vmem:[%s5 + $0x8] sm:$0xf]
      %v1118 = vld [vmem:[%s5 + $0xc] sm:$0xf]
      %v1119 = vld [vmem:[%s5 + $0x10] sm:$0xf]
      %v1120 = vld [vmem:[%s5 + $0x14] sm:$0xf]
      %v1121 = vld [vmem:[%s5 + $0x18] sm:$0xf]
      %v1122 = vld [vmem:[%s5 + $0x1c] sm:$0xf]
      %v1123 = vld [vmem:[%s5 + $0x20] sm:$0xf]
      %v1124 = vld [vmem:[%s5 + $0x24] sm:$0xf]
      %v1125 = vld [vmem:[%s5 + $0x28] sm:$0xf]
      %v1126 = vld [vmem:[%s5 + $0x2c] sm:$0xf]
      %v1127 = vld [vmem:[%s5 + $0x30] sm:$0xf]
      %v1128 = vld [vmem:[%s5 + $0x34] sm:$0xf]
      %v1129 = vld [vmem:[%s5 + $0x38] sm:$0xf]
      %v1130 = vld [vmem:[%s5 + $0x3c] sm:$0xf]
      %v1131 = vld [vmem:[%s6] sm:$0x1]
      %v1133 = vlaneseq
      %v1134 = vshrl.u32 %v1133, 7
      %v1135 = vsub.s32 0, %v1134
      %v1136 = vrot.slane %v1131, %v1135
      %v1154 = vunpack.c.l.b16 %v1115
      %v1155 = vunpack.c.l.b16 %v1116
      %v1156 = vunpack.c.l.b16 %v1117
      %v1157 = vunpack.c.l.b16 %v1118
      %v1158 = vunpack.c.l.b16 %v1119
      %v1159 = vunpack.c.l.b16 %v1120
      %v1160 = vunpack.c.l.b16 %v1121
      %v1161 = vunpack.c.l.b16 %v1122
      %v1162 = vunpack.c.l.b16 %v1123
      %v1163 = vunpack.c.l.b16 %v1124
      %v1164 = vunpack.c.l.b16 %v1125
      %v1165 = vunpack.c.l.b16 %v1126
      %v1166 = vunpack.c.l.b16 %v1127
      %v1167 = vunpack.c.l.b16 %v1128
      %v1168 = vunpack.c.l.b16 %v1129
      %v1169 = vunpack.c.l.b16 %v1130
      %v1170 = vpack.c.b16 %v1155, %v1154
      %v1171 = vpack.c.b16 %v1157, %v1156
      %v1172 = vpack.c.b16 %v1159, %v1158
      %v1173 = vpack.c.b16 %v1161, %v1160
      %v1174 = vpack.c.b16 %v1163, %v1162
      %v1175 = vpack.c.b16 %v1165, %v1164
      %v1176 = vpack.c.b16 %v1167, %v1166
      %v1177 = vpack.c.b16 %v1169, %v1168
      %1186 = vmatprep.subr.bf16.mxu0 0
      %1187 = vmatpush1.bf16.msra.mxu0 %v1170
      %1188 = vmatprep.subr.bf16.mxu0 0
      %1189 = vmatpush1.bf16.msra.mxu0 %v1171
      %1190 = vmatprep.subr.bf16.mxu0 0
      %1191 = vmatpush1.bf16.msra.mxu0 %v1172
      %1192 = vmatprep.subr.bf16.mxu0 0
      %1193 = vmatpush1.bf16.msra.mxu0 %v1173
      %1194 = vmatprep.subr.bf16.mxu0 0
      %1195 = vmatpush1.bf16.msra.mxu0 %v1174
      %1196 = vmatprep.subr.bf16.mxu0 0
      %1197 = vmatpush1.bf16.msra.mxu0 %v1175
      %1198 = vmatprep.subr.bf16.mxu0 0
      %1199 = vmatpush1.bf16.msra.mxu0 %v1176
      %1200 = vmatprep.subr.bf16.mxu0 0
      %1201 = vmatpush1.bf16.msra.mxu0 %v1177
      %1202 = vmatprep.subr.bf16.mxu0 0
      %1203 = vmatpush1.bf16.msra.mxu0 0
      %1204 = vmatprep.subr.bf16.mxu0 0
      %1205 = vmatpush1.bf16.msra.mxu0 0
      %1206 = vmatprep.subr.bf16.mxu0 0
      %1207 = vmatpush1.bf16.msra.mxu0 0
      %1208 = vmatprep.subr.bf16.mxu0 0
      %1209 = vmatpush1.bf16.msra.mxu0 0
      %1210 = vmatprep.subr.bf16.mxu0 0
      %1211 = vmatpush1.bf16.msra.mxu0 0
      %1212 = vmatprep.subr.bf16.mxu0 0
      %1213 = vmatpush1.bf16.msra.mxu0 0
      %1214 = vmatprep.subr.bf16.mxu0 0
      %1215 = vmatpush1.bf16.msra.mxu0 0
      %1216 = vmatprep.subr.bf16.mxu0 0
      %1217 = vmatpush1.bf16.msra.mxu0 0
      %1218 = vmatprep.mubr.bf16.mxu0 0
      %1219 = vmatmul.mubr.bf16.gmra.mrb[0].mxu0 %v1107
      %v1220 = vpop.f32.mrb[0].mxu0
      %v1221 = vadd.f32 %v1136, %v1220
      %v1222 = vpop.f32.mrb[0].mxu0
      %v1223 = vpop.f32.mrb[0].mxu0
      %v1224 = vadd.f32 %v1136, %v1223
      %v1225 = vpop.f32.mrb[0].mxu0
      %1226 = vmatprep.mubr.bf16.mxu0 0
      %1227 = vmatmul.mubr.bf16.gmra.mrb[0].mxu0 %v1108
      %v1228 = vpop.f32.mrb[0].mxu0
      %v1229 = vadd.f32 %v1136, %v1228
      %v1230 = vpop.f32.mrb[0].mxu0
      %v1231 = vpop.f32.mrb[0].mxu0
      %v1232 = vadd.f32 %v1136, %v1231
      %v1233 = vpop.f32.mrb[0].mxu0
      %1234 = vmatprep.mubr.bf16.mxu0 0
      %1235 = vmatmul.mubr.bf16.gmra.mrb[0].mxu0 %v1109
      %v1236 = vpop.f32.mrb[0].mxu0
      %v1237 = vadd.f32 %v1136, %v1236
      %v1238 = vpop.f32.mrb[0].mxu0
      %v1239 = vpop.f32.mrb[0].mxu0
      %v1240 = vadd.f32 %v1136, %v1239
      %v1241 = vpop.f32.mrb[0].mxu0
      %1242 = vmatprep.mubr.bf16.mxu0 0
      %1243 = vmatmul.mubr.bf16.gmra.mrb[0].mxu0 %v1110
      %v1244 = vpop.f32.mrb[0].mxu0
      %v1245 = vadd.f32 %v1136, %v1244
      %v1246 = vpop.f32.mrb[0].mxu0
      %v1247 = vpop.f32.mrb[0].mxu0
      %v1248 = vadd.f32 %v1136, %v1247
      %v1249 = vpop.f32.mrb[0].mxu0
      %1250 = vmatprep.mubr.bf16.mxu0 0
      %1251 = vmatmul.mubr.bf16.gmra.mrb[0].mxu0 %v1111
      %v1252 = vpop.f32.mrb[0].mxu0
      %v1253 = vadd.f32 %v1136, %v1252
      %v1254 = vpop.f32.mrb[0].mxu0
      %v1255 = vpop.f32.mrb[0].mxu0
      %v1256 = vadd.f32 %v1136, %v1255
      %v1257 = vpop.f32.mrb[0].mxu0
      %1258 = vmatprep.mubr.bf16.mxu0 0
      %1259 = vmatmul.mubr.bf16.gmra.mrb[0].mxu0 %v1112
      %v1260 = vpop.f32.mrb[0].mxu0
      %v1261 = vadd.f32 %v1136, %v1260
      %v1262 = vpop.f32.mrb[0].mxu0
      %v1263 = vpop.f32.mrb[0].mxu0
      %v1264 = vadd.f32 %v1136, %v1263
      %v1265 = vpop.f32.mrb[0].mxu0
      %1266 = vmatprep.mubr.bf16.mxu0 0
      %1267 = vmatmul.mubr.bf16.gmra.mrb[0].mxu0 %v1113
      %v1268 = vpop.f32.mrb[0].mxu0
      %v1269 = vadd.f32 %v1136, %v1268
      %v1270 = vpop.f32.mrb[0].mxu0
      %v1271 = vpop.f32.mrb[0].mxu0
      %v1272 = vadd.f32 %v1136, %v1271
      %v1273 = vpop.f32.mrb[0].mxu0
      %1274 = vmatprep.mubr.bf16.mxu0 0
      %1275 = vmatmul.mubr.bf16.gmra.mrb[0].mxu0 %v1114
      %v1276 = vpop.f32.mrb[0].mxu0
      %v1277 = vadd.f32 %v1136, %v1276
      %v1278 = vpop.f32.mrb[0].mxu0
      %v1279 = vpop.f32.mrb[0].mxu0
      %v1280 = vadd.f32 %v1136, %v1279
      %v1281 = vpop.f32.mrb[0].mxu0
      %1282 = vdwg.mxu0
      %v1283 = vmax.f32 %v1221, 0.0
      %v1284 = vmax.f32 %v1224, 0.0
      %v1285 = vmax.f32 %v1229, 0.0
      %v1286 = vmax.f32 %v1232, 0.0
      %v1287 = vmax.f32 %v1237, 0.0
      %v1288 = vmax.f32 %v1240, 0.0
      %v1289 = vmax.f32 %v1245, 0.0
      %v1290 = vmax.f32 %v1248, 0.0
      %v1291 = vmax.f32 %v1253, 0.0
      %v1292 = vmax.f32 %v1256, 0.0
      %v1293 = vmax.f32 %v1261, 0.0
      %v1294 = vmax.f32 %v1264, 0.0
      %v1295 = vmax.f32 %v1269, 0.0
      %v1296 = vmax.f32 %v1272, 0.0
      %v1297 = vmax.f32 %v1277, 0.0
      %v1298 = vmax.f32 %v1280, 0.0
      %v1299 = vpack.c.bf16 %v1284, %v1283
      %v1300 = vpack.c.bf16 %v1286, %v1285
      %v1301 = vpack.c.bf16 %v1288, %v1287
      %v1302 = vpack.c.bf16 %v1290, %v1289
      %v1303 = vpack.c.bf16 %v1292, %v1291
      %v1304 = vpack.c.bf16 %v1294, %v1293
      %v1305 = vpack.c.bf16 %v1296, %v1295
      %v1306 = vpack.c.bf16 %v1298, %v1297
      %v1307 = vld [vmem:[%s7] sm:$0xff]
      %v1308 = vld [vmem:[%s7 + $0x8] sm:$0xff]
      %v1309 = vld [vmem:[%s7 + $0x10] sm:$0xff]
      %v1310 = vld [vmem:[%s7 + $0x18] sm:$0xff]
      %v1311 = vld [vmem:[%s7 + $0x20] sm:$0xff]
      %v1312 = vld [vmem:[%s7 + $0x28] sm:$0xff]
      %v1313 = vld [vmem:[%s7 + $0x30] sm:$0xff]
      %v1314 = vld [vmem:[%s7 + $0x38] sm:$0xff]
      %v1315 = vld [vmem:[%s7 + $0x40] sm:$0xff]
      %v1316 = vld [vmem:[%s7 + $0x48] sm:$0xff]
      %v1317 = vld [vmem:[%s7 + $0x50] sm:$0xff]
      %v1318 = vld [vmem:[%s7 + $0x58] sm:$0xff]
      %v1319 = vld [vmem:[%s7 + $0x60] sm:$0xff]
      %v1320 = vld [vmem:[%s7 + $0x68] sm:$0xff]
      %v1321 = vld [vmem:[%s7 + $0x70] sm:$0xff]
      %v1322 = vld [vmem:[%s7 + $0x78] sm:$0xff]
      %v1339 = vunpack.c.l.b16 %v1307
      %v1340 = vunpack.c.h.b16 %v1307
      %v1341 = vunpack.c.l.b16 %v1308
      %v1342 = vunpack.c.h.b16 %v1308
      %v1343 = vunpack.c.l.b16 %v1309
      %v1344 = vunpack.c.h.b16 %v1309
      %v1345 = vunpack.c.l.b16 %v1310
      %v1346 = vunpack.c.h.b16 %v1310
      %v1347 = vunpack.c.l.b16 %v1311
      %v1348 = vunpack.c.h.b16 %v1311
      %v1349 = vunpack.c.l.b16 %v1312
      %v1350 = vunpack.c.h.b16 %v1312
      %v1351 = vunpack.c.l.b16 %v1313
      %v1352 = vunpack.c.h.b16 %v1313
      %v1353 = vunpack.c.l.b16 %v1314
      %v1354 = vunpack.c.h.b16 %v1314
      %v1355 = vunpack.c.l.b16 %v1315
      %v1356 = vunpack.c.h.b16 %v1315
      %v1357 = vunpack.c.l.b16 %v1316
      %v1358 = vunpack.c.h.b16 %v1316
      %v1359 = vunpack.c.l.b16 %v1317
      %v1360 = vunpack.c.h.b16 %v1317
      %v1361 = vunpack.c.l.b16 %v1318
      %v1362 = vunpack.c.h.b16 %v1318
      %v1363 = vunpack.c.l.b16 %v1319
      %v1364 = vunpack.c.h.b16 %v1319
      %v1365 = vunpack.c.l.b16 %v1320
      %v1366 = vunpack.c.h.b16 %v1320
      %v1367 = vunpack.c.l.b16 %v1321
      %v1368 = vunpack.c.h.b16 %v1321
      %v1369 = vunpack.c.l.b16 %v1322
      %v1370 = vunpack.c.h.b16 %v1322
      %v1371 = vpack.c.b16 %v1341, %v1339
      %v1372 = vpack.c.b16 %v1342, %v1340
      %v1373 = vpack.c.b16 %v1345, %v1343
      %v1374 = vpack.c.b16 %v1346, %v1344
      %v1375 = vpack.c.b16 %v1349, %v1347
      %v1376 = vpack.c.b16 %v1350, %v1348
      %v1377 = vpack.c.b16 %v1353, %v1351
      %v1378 = vpack.c.b16 %v1354, %v1352
      %v1379 = vpack.c.b16 %v1357, %v1355
      %v1380 = vpack.c.b16 %v1358, %v1356
      %v1381 = vpack.c.b16 %v1361, %v1359
      %v1382 = vpack.c.b16 %v1362, %v1360
      %v1383 = vpack.c.b16 %v1365, %v1363
      %v1384 = vpack.c.b16 %v1366, %v1364
      %v1385 = vpack.c.b16 %v1369, %v1367
      %v1386 = vpack.c.b16 %v1370, %v1368
      %1403 = vmatprep.subr.bf16.mxu0 %v1372
      %1404 = vmatpush1.bf16.msra.mxu0 %v1371
      %1405 = vmatprep.subr.bf16.mxu0 %v1374
      %1406 = vmatpush1.bf16.msra.mxu0 %v1373
      %1407 = vmatprep.subr.bf16.mxu0 %v1376
      %1408 = vmatpush1.bf16.msra.mxu0 %v1375
      %1409 = vmatprep.subr.bf16.mxu0 %v1378
      %1410 = vmatpush1.bf16.msra.mxu0 %v1377
      %1411 = vmatprep.subr.bf16.mxu0 %v1380
      %1412 = vmatpush1.bf16.msra.mxu0 %v1379
      %1413 = vmatprep.subr.bf16.mxu0 %v1382
      %1414 = vmatpush1.bf16.msra.mxu0 %v1381
      %1415 = vmatprep.subr.bf16.mxu0 %v1384
      %1416 = vmatpush1.bf16.msra.mxu0 %v1383
      %1417 = vmatprep.subr.bf16.mxu0 %v1386
      %1418 = vmatpush1.bf16.msra.mxu0 %v1385
      %1419 = vmatprep.subr.bf16.mxu0 0
      %1420 = vmatpush1.bf16.msra.mxu0 0
      %1421 = vmatprep.subr.bf16.mxu0 0
      %1422 = vmatpush1.bf16.msra.mxu0 0
      %1423 = vmatprep.subr.bf16.mxu0 0
      %1424 = vmatpush1.bf16.msra.mxu0 0
      %1425 = vmatprep.subr.bf16.mxu0 0
      %1426 = vmatpush1.bf16.msra.mxu0 0
      %1427 = vmatprep.subr.bf16.mxu0 0
      %1428 = vmatpush1.bf16.msra.mxu0 0
      %1429 = vmatprep.subr.bf16.mxu0 0
      %1430 = vmatpush1.bf16.msra.mxu0 0
      %1431 = vmatprep.subr.bf16.mxu0 0
      %1432 = vmatpush1.bf16.msra.mxu0 0
      %1433 = vmatprep.subr.bf16.mxu0 0
      %1434 = vmatpush1.bf16.msra.mxu0 0
      %1435 = vmatprep.mubr.bf16.mxu0 0
      %1436 = vmatmul.mubr.bf16.gmra.mrb[0].mxu0 %v1299
      %v1437 = vpop.f32.mrb[0].mxu0
      %v1438 = vadd.f32 0.0, %v1437
      %v1439 = vpop.f32.mrb[0].mxu0
      %v1440 = vadd.f32 0.0, %v1439
      %v1441 = vpop.f32.mrb[0].mxu0
      %v1442 = vadd.f32 0.0, %v1441
      %v1443 = vpop.f32.mrb[0].mxu0
      %v1444 = vadd.f32 0.0, %v1443
      %1445 = vmatprep.mubr.bf16.mxu0 0
      %1446 = vmatmul.mubr.bf16.gmra.mrb[0].mxu0 %v1300
      %v1447 = vpop.f32.mrb[0].mxu0
      %v1448 = vadd.f32 0.0, %v1447
      %v1449 = vpop.f32.mrb[0].mxu0
      %v1450 = vadd.f32 0.0, %v1449
      %v1451 = vpop.f32.mrb[0].mxu0
      %v1452 = vadd.f32 0.0, %v1451
      %v1453 = vpop.f32.mrb[0].mxu0
      %v1454 = vadd.f32 0.0, %v1453
      %1455 = vmatprep.mubr.bf16.mxu0 0
      %1456 = vmatmul.mubr.bf16.gmra.mrb[0].mxu0 %v1301
      %v1457 = vpop.f32.mrb[0].mxu0
      %v1458 = vadd.f32 0.0, %v1457
      %v1459 = vpop.f32.mrb[0].mxu0
      %v1460 = vadd.f32 0.0, %v1459
      %v1461 = vpop.f32.mrb[0].mxu0
      %v1462 = vadd.f32 0.0, %v1461
      %v1463 = vpop.f32.mrb[0].mxu0
      %v1464 = vadd.f32 0.0, %v1463
      %1465 = vmatprep.mubr.bf16.mxu0 0
      %1466 = vmatmul.mubr.bf16.gmra.mrb[0].mxu0 %v1302
      %v1467 = vpop.f32.mrb[0].mxu0
      %v1468 = vadd.f32 0.0, %v1467
      %v1469 = vpop.f32.mrb[0].mxu0
      %v1470 = vadd.f32 0.0, %v1469
      %v1471 = vpop.f32.mrb[0].mxu0
      %v1472 = vadd.f32 0.0, %v1471
      %v1473 = vpop.f32.mrb[0].mxu0
      %v1474 = vadd.f32 0.0, %v1473
      %1475 = vmatprep.mubr.bf16.mxu0 0
      %1476 = vmatmul.mubr.bf16.gmra.mrb[0].mxu0 %v1303
      %v1477 = vpop.f32.mrb[0].mxu0
      %v1478 = vadd.f32 0.0, %v1477
      %v1479 = vpop.f32.mrb[0].mxu0
      %v1480 = vadd.f32 0.0, %v1479
      %v1481 = vpop.f32.mrb[0].mxu0
      %v1482 = vadd.f32 0.0, %v1481
      %v1483 = vpop.f32.mrb[0].mxu0
      %v1484 = vadd.f32 0.0, %v1483
      %1485 = vmatprep.mubr.bf16.mxu0 0
      %1486 = vmatmul.mubr.bf16.gmra.mrb[0].mxu0 %v1304
      %v1487 = vpop.f32.mrb[0].mxu0
      %v1488 = vadd.f32 0.0, %v1487
      %v1489 = vpop.f32.mrb[0].mxu0
      %v1490 = vadd.f32 0.0, %v1489
      %v1491 = vpop.f32.mrb[0].mxu0
      %v1492 = vadd.f32 0.0, %v1491
      %v1493 = vpop.f32.mrb[0].mxu0
      %v1494 = vadd.f32 0.0, %v1493
      %1495 = vmatprep.mubr.bf16.mxu0 0
      %1496 = vmatmul.mubr.bf16.gmra.mrb[0].mxu0 %v1305
      %v1497 = vpop.f32.mrb[0].mxu0
      %v1498 = vadd.f32 0.0, %v1497
      %v1499 = vpop.f32.mrb[0].mxu0
      %v1500 = vadd.f32 0.0, %v1499
      %v1501 = vpop.f32.mrb[0].mxu0
      %v1502 = vadd.f32 0.0, %v1501
      %v1503 = vpop.f32.mrb[0].mxu0
      %v1504 = vadd.f32 0.0, %v1503
      %1505 = vmatprep.mubr.bf16.mxu0 0
      %1506 = vmatmul.mubr.bf16.gmra.mrb[0].mxu0 %v1306
      %v1507 = vpop.f32.mrb[0].mxu0
      %v1508 = vadd.f32 0.0, %v1507
      %v1509 = vpop.f32.mrb[0].mxu0
      %v1510 = vadd.f32 0.0, %v1509
      %v1511 = vpop.f32.mrb[0].mxu0
      %v1512 = vadd.f32 0.0, %v1511
      %v1513 = vpop.f32.mrb[0].mxu0
      %v1514 = vadd.f32 0.0, %v1513
      %1515 = vdwg.mxu0
      %v1516 = vmax.f32 %v1438, %v1448
      %v1517 = vmax.f32 %v1440, %v1450
      %v1518 = vmax.f32 %v1442, %v1452
      %v1519 = vmax.f32 %v1444, %v1454
      %v1520 = vmax.f32 %v1516, %v1458
      %v1521 = vmax.f32 %v1517, %v1460
      %v1522 = vmax.f32 %v1518, %v1462
      %v1523 = vmax.f32 %v1519, %v1464
      %v1524 = vmax.f32 %v1520, %v1468
      %v1525 = vmax.f32 %v1521, %v1470
      %v1526 = vmax.f32 %v1522, %v1472
      %v1527 = vmax.f32 %v1523, %v1474
      %v1528 = vmax.f32 %v1524, %v1478
      %v1529 = vmax.f32 %v1525, %v1480
      %v1530 = vmax.f32 %v1526, %v1482
      %v1531 = vmax.f32 %v1527, %v1484
      %v1532 = vmax.f32 %v1528, %v1488
      %v1533 = vmax.f32 %v1529, %v1490
      %v1534 = vmax.f32 %v1530, %v1492
      %v1535 = vmax.f32 %v1531, %v1494
      %v1536 = vmax.f32 %v1532, %v1498
      %v1537 = vmax.f32 %v1533, %v1500
      %v1538 = vmax.f32 %v1534, %v1502
      %v1539 = vmax.f32 %v1535, %v1504
      %v1540 = vmax.f32 %v1536, %v1508
      %v1541 = vmax.f32 %v1537, %v1510
      %v1542 = vmax.f32 %v1538, %v1512
      %v1543 = vmax.f32 %v1539, %v1514
      %v1544 = vld [vmem:[%s8] sm:$0x3]
      %v1546 = vlaneseq
      %v1547 = vshrl.u32 %v1546, 7
      %v1548 = vsub.s32 0, %v1547
      %v1549 = vrot.slane %v1544, %v1548
      %v1550 = vlaneseq
      %v1551 = vshrl.u32 %v1550, 7
      %v1552 = vsub.s32 1, %v1551
      %v1553 = vrot.slane %v1544, %v1552
      %v1556 = vadd.f32 %v1540, %v1549
      %v1557 = vadd.f32 %v1541, %v1553
      %v1558 = vadd.f32 %v1542, %v1549
      %v1559 = vadd.f32 %v1543, %v1553
      %v1560 = vmax.f32 %v1556, 0.0
      %v1561 = vmax.f32 %v1557, 0.0
      %v1562 = vmax.f32 %v1558, 0.0
      %v1563 = vmax.f32 %v1559, 0.0
      %v1564 = vpack.c.bf16 %v1562, %v1560
      %v1565 = vpack.c.bf16 %v1563, %v1561
      %v1568 = vunpack.c.l.b16 %v1564
      %v1569 = vunpack.c.l.b16 %v1565
      %v1570 = vunpack.c.h.b16 %v1564
      %v1571 = vunpack.c.h.b16 %v1565
      %v1572 = vpack.c.b16 %v1569, %v1568
      %v1573 = vpack.c.b16 %v1571, %v1570
      %1576 = vst [vmem:[%s411] sm:$0xff] %v1572
      %1577 = vst [vmem:[%s411 + $0x8] sm:$0xff] %v1573
      %s1578 = smul.u32 2, %s25
      %p1579 = scmp.lt.s32.totalorder %s24, 1
      %s1580 = scalar_select %p1579, %s24, 1
      %p1581 = scmp.lt.s32.totalorder %s1578, 1
      %s1582 = scalar_select %p1581, %s1578, 1
      %s1583 = smul.addr %s1582, 2
      %s1584 = smul.addr %s1580, 4
      %s1585 = sadd.s32 %s1583, %s1584
      %s1586 = smul.addr %s1585, 4
      %s1587 = scalar_lea.vmem %s9, %s1586
      // Predicated region
      $region57: #{_lambda_.8} parent=55 // pred_check
        %p1588 = pneg %p255
      $region58: #{_lambda_.8} parent=55 // pred_check_branch
        %1590 = sbr.rel (%p1588) target = $region60
      $region59: #{_lambda_.8} parent=55 // pred_region
        %s1591 = smul.u32 2, %s25
      $region60: #{_lambda_.8} parent=55 // pred_fallthru
        _
    $region56: #{_lambda_.8} parent=5 // pred_fallthru
      _
    %p1592 = scmp.le.s32.totalorder 2, %s15
    // Predicated region
    $region61: #{_lambda_.8} parent=5 // pred_check
      %p1593 = pneg %p1592
    $region62: #{_lambda_.8} parent=5 // pred_check_branch
      %1595 = sbr.rel (%p1593) target = $region64
    $region63: #{_lambda_.8} parent=5 // pred_region
      %s1596 = ssub.s32 %s15, 2
      // Predicated region
      $region65: #{_lambda_.8} parent=63 // pred_check
        %p1597 = pneg %p261
      $region66: #{_lambda_.8} parent=63 // pred_check_branch
        %1599 = sbr.rel (%p1597) target = $region68
      $region67: #{_lambda_.8} parent=63 // pred_region
        %s1600 = smul.u32 2, %s27
        %p1601 = scmp.lt.s32.totalorder %s26, 1
        %s1602 = scalar_select %p1601, %s26, 1
        %p1603 = scmp.lt.s32.totalorder %s1600, 1
        %s1604 = scalar_select %p1603, %s1600, 1
        %s1605 = smul.addr %s1604, 2
        %s1606 = smul.addr %s1602, 4
        %s1607 = sadd.s32 %s1605, %s1606
        %s1608 = smul.addr %s1607, 4
        %s1609 = scalar_lea.vmem %s9, %s1608
      $region68: #{_lambda_.8} parent=63 // pred_fallthru
        _
    $region64: #{_lambda_.8} parent=5 // pred_fallthru
      _
  $region6: #{_lambda_.8} parent=0 // loop_footer
    %s19 = sadd.s32 1, %s15
  $region7: #{_lambda_.8} parent=0 // loop_footer_branch
    %14 = sbr.rel target = $region3
  $region8: #{_lambda_.8} parent=0 // loop_exit
    _

// kernel: neg.4
$region0: #{neg.4}
  #allocation0 [shape = 's32[1]{0}', space=sflag, size = 0x4, scoped, tag = 'scoped memory for neg.4']
  %s0 = inlined_call_operand.vmem [shape: f32[2,8,4], index: 0, kind: input, shape index: {}]
  %s1 = inlined_call_operand.vmem [shape: f32[2,8,4], index: 1, kind: output, shape index: {}]
  %v2 = vld [vmem:[%s0] sm:$0xff]
  %3 = xla_tuple %v2
  %4 = xla_tuple %3
  %v5 = vxor.u32 %v2, 2147483648
  %6 = xla_tuple %v5
  %7 = vst [vmem:[%s1] sm:$0xff] %v5
  %s8 = scalar_lea.vmem %s0, 8
  %v9 = vld [vmem:[%s8] sm:$0xff]
  %10 = xla_tuple %v9
  %11 = xla_tuple %10
  %v12 = vxor.u32 %v9, 2147483648
  %13 = xla_tuple %v12
  %s14 = scalar_lea.vmem %s1, 8
  %15 = vst [vmem:[%s14] sm:$0xff] %v12

// kernel: neg.6
$region0: #{neg.6}
  #allocation0 [shape = 's32[1]{0}', space=sflag, size = 0x4, scoped, tag = 'scoped memory for neg.6']
  %s0 = inlined_call_operand.vmem [shape: f32[2,16,8], index: 0, kind: input, shape index: {}]
  %s1 = inlined_call_operand.vmem [shape: f32[2,16,8], index: 1, kind: output, shape index: {}]
  %v2 = vld [vmem:[%s0] sm:$0xff]
  %3 = xla_tuple %v2
  %4 = xla_tuple %3
  %v5 = vxor.u32 %v2, 2147483648
  %6 = xla_tuple %v5
  %7 = vst [vmem:[%s1] sm:$0xff] %v5
  %s8 = scalar_lea.vmem %s0, 8
  %v9 = vld [vmem:[%s8] sm:$0xff]
  %10 = xla_tuple %v9
  %11 = xla_tuple %10
  %v12 = vxor.u32 %v9, 2147483648
  %13 = xla_tuple %v12
  %s14 = scalar_lea.vmem %s1, 8
  %15 = vst [vmem:[%s14] sm:$0xff] %v12

// kernel: _lambda_.10
$region0: #{_lambda_.10}
  #allocation0 [shape = 'u32[]', space=smem, size = 0x4, offset = 0x4, fixed_abs, tag = 'smem constant byte address 0x4 - core index']
  #allocation1 [shape = 'u32[144,128]{1,0:T(1,128)}', space=vmem, size = 0x12000, scoped, tag = 'internal scratch']
  %s0 = inlined_call_operand.vmem [shape: bf16[16,256], index: 0, kind: input, shape index: {}]
  %s1 = inlined_call_operand.vmem [shape: bf16[16,256], index: 1, kind: input, shape index: {}]
  %s2 = inlined_call_operand.vmem [shape: bf16[256,256], index: 2, kind: input, shape index: {}]
  %s3 = inlined_call_operand.vmem [shape: bf16[256,256], index: 3, kind: input, shape index: {}]
  %s4 = inlined_call_operand.vmem [shape: f32[1,256], index: 4, kind: input, shape index: {}, may-alias: {4,6}]
  %s5 = inlined_call_operand.vmem [shape: bf16[256,256], index: 5, kind: input, shape index: {}]
  %s6 = inlined_call_operand.vmem [shape: f32[1,256], index: 6, kind: input, shape index: {}, may-alias: {4,6}]
  %s7 = inlined_call_operand.vmem [shape: bf16[16,256], index: 7, kind: output, shape index: {}]
  %s8 = sld [smem:[#allocation0]]
  $region38: #{_lambda_.10} parent=0
    _
  %s10 = ssub.s32 1, %s8
  %s11 = scalar_select 0, %s10, %s8
  // Predicated region
  $region2: #{_lambda_.10} parent=0 // pred_check
    _
  $region3: #{_lambda_.10} parent=0 // pred_check_branch
    %13 = sbr.rel (0) target = $region5
  $region4: #{_lambda_.10} parent=0 // pred_region
    _
  $region5: #{_lambda_.10} parent=0 // pred_fallthru
    _
  // Predicated region
  $region6: #{_lambda_.10} parent=0 // pred_check
    _
  $region7: #{_lambda_.10} parent=0 // pred_check_branch
    %15 = sbr.rel (0) target = $region9
  $region8: #{_lambda_.10} parent=0 // pred_region
    _
  $region9: #{_lambda_.10} parent=0 // pred_fallthru
    _
  // Predicated region
  $region10: #{_lambda_.10} parent=0 // pred_check
    _
  $region11: #{_lambda_.10} parent=0 // pred_check_branch
    %17 = sbr.rel (0) target = $region13
  $region12: #{_lambda_.10} parent=0 // pred_region
    _
  $region13: #{_lambda_.10} parent=0 // pred_fallthru
    _
  // Predicated region
  $region14: #{_lambda_.10} parent=0 // pred_check
    _
  $region15: #{_lambda_.10} parent=0 // pred_check_branch
    %19 = sbr.rel (0) target = $region17
  $region16: #{_lambda_.10} parent=0 // pred_region
    _
  $region17: #{_lambda_.10} parent=0 // pred_fallthru
    _
  // Predicated region
  $region18: #{_lambda_.10} parent=0 // pred_check
    _
  $region19: #{_lambda_.10} parent=0 // pred_check_branch
    %21 = sbr.rel (0) target = $region21
  $region20: #{_lambda_.10} parent=0 // pred_region
    _
  $region21: #{_lambda_.10} parent=0 // pred_fallthru
    _
  // Predicated region
  $region22: #{_lambda_.10} parent=0 // pred_check
    _
  $region23: #{_lambda_.10} parent=0 // pred_check_branch
    %23 = sbr.rel (0) target = $region25
  $region24: #{_lambda_.10} parent=0 // pred_region
    _
  $region25: #{_lambda_.10} parent=0 // pred_fallthru
    _
  // Predicated region
  $region26: #{_lambda_.10} parent=0 // pred_check
    _
  $region27: #{_lambda_.10} parent=0 // pred_check_branch
    %25 = sbr.rel (0) target = $region29
  $region28: #{_lambda_.10} parent=0 // pred_region
    _
  $region29: #{_lambda_.10} parent=0 // pred_fallthru
    _
  %v26 = vld [vmem:[%s0] sm:$0xff]
  %v27 = vld [vmem:[%s0 + $0x8] sm:$0xff]
  %v28 = vld [vmem:[%s2] sm:$0xff]
  %v29 = vld [vmem:[%s2 + $0x8] sm:$0xff]
  %v30 = vld [vmem:[%s2 + $0x10] sm:$0xff]
  %v31 = vld [vmem:[%s2 + $0x18] sm:$0xff]
  %v32 = vld [vmem:[%s2 + $0x20] sm:$0xff]
  %v33 = vld [vmem:[%s2 + $0x28] sm:$0xff]
  %v34 = vld [vmem:[%s2 + $0x30] sm:$0xff]
  %v35 = vld [vmem:[%s2 + $0x38] sm:$0xff]
  %v36 = vld [vmem:[%s2 + $0x40] sm:$0xff]
  %v37 = vld [vmem:[%s2 + $0x48] sm:$0xff]
  %v38 = vld [vmem:[%s2 + $0x50] sm:$0xff]
  %v39 = vld [vmem:[%s2 + $0x58] sm:$0xff]
  %v40 = vld [vmem:[%s2 + $0x60] sm:$0xff]
  %v41 = vld [vmem:[%s2 + $0x68] sm:$0xff]
  %v42 = vld [vmem:[%s2 + $0x70] sm:$0xff]
  %v43 = vld [vmem:[%s2 + $0x78] sm:$0xff]
  %v44 = vld [vmem:[%s2 + $0x80] sm:$0xff]
  %v45 = vld [vmem:[%s2 + $0x88] sm:$0xff]
  %v46 = vld [vmem:[%s2 + $0x90] sm:$0xff]
  %v47 = vld [vmem:[%s2 + $0x98] sm:$0xff]
  %v48 = vld [vmem:[%s2 + $0xa0] sm:$0xff]
  %v49 = vld [vmem:[%s2 + $0xa8] sm:$0xff]
  %v50 = vld [vmem:[%s2 + $0xb0] sm:$0xff]
  %v51 = vld [vmem:[%s2 + $0xb8] sm:$0xff]
  %v52 = vld [vmem:[%s2 + $0xc0] sm:$0xff]
  %v53 = vld [vmem:[%s2 + $0xc8] sm:$0xff]
  %v54 = vld [vmem:[%s2 + $0xd0] sm:$0xff]
  %v55 = vld [vmem:[%s2 + $0xd8] sm:$0xff]
  %v56 = vld [vmem:[%s2 + $0xe0] sm:$0xff]
  %v57 = vld [vmem:[%s2 + $0xe8] sm:$0xff]
  %v58 = vld [vmem:[%s2 + $0xf0] sm:$0xff]
  %v59 = vld [vmem:[%s2 + $0xf8] sm:$0xff]
  %v60 = vld [vmem:[%s1] sm:$0xff]
  %v61 = vld [vmem:[%s1 + $0x8] sm:$0xff]
  %v62 = vld [vmem:[%s3] sm:$0xff]
  %v63 = vld [vmem:[%s3 + $0x8] sm:$0xff]
  %v64 = vld [vmem:[%s3 + $0x10] sm:$0xff]
  %v65 = vld [vmem:[%s3 + $0x18] sm:$0xff]
  %v66 = vld [vmem:[%s3 + $0x20] sm:$0xff]
  %v67 = vld [vmem:[%s3 + $0x28] sm:$0xff]
  %v68 = vld [vmem:[%s3 + $0x30] sm:$0xff]
  %v69 = vld [vmem:[%s3 + $0x38] sm:$0xff]
  %v70 = vld [vmem:[%s3 + $0x40] sm:$0xff]
  %v71 = vld [vmem:[%s3 + $0x48] sm:$0xff]
  %v72 = vld [vmem:[%s3 + $0x50] sm:$0xff]
  %v73 = vld [vmem:[%s3 + $0x58] sm:$0xff]
  %v74 = vld [vmem:[%s3 + $0x60] sm:$0xff]
  %v75 = vld [vmem:[%s3 + $0x68] sm:$0xff]
  %v76 = vld [vmem:[%s3 + $0x70] sm:$0xff]
  %v77 = vld [vmem:[%s3 + $0x78] sm:$0xff]
  %v78 = vld [vmem:[%s3 + $0x80] sm:$0xff]
  %v79 = vld [vmem:[%s3 + $0x88] sm:$0xff]
  %v80 = vld [vmem:[%s3 + $0x90] sm:$0xff]
  %v81 = vld [vmem:[%s3 + $0x98] sm:$0xff]
  %v82 = vld [vmem:[%s3 + $0xa0] sm:$0xff]
  %v83 = vld [vmem:[%s3 + $0xa8] sm:$0xff]
  %v84 = vld [vmem:[%s3 + $0xb0] sm:$0xff]
  %v85 = vld [vmem:[%s3 + $0xb8] sm:$0xff]
  %v86 = vld [vmem:[%s3 + $0xc0] sm:$0xff]
  %v87 = vld [vmem:[%s3 + $0xc8] sm:$0xff]
  %v88 = vld [vmem:[%s3 + $0xd0] sm:$0xff]
  %v89 = vld [vmem:[%s3 + $0xd8] sm:$0xff]
  %v90 = vld [vmem:[%s3 + $0xe0] sm:$0xff]
  %v91 = vld [vmem:[%s3 + $0xe8] sm:$0xff]
  %v92 = vld [vmem:[%s3 + $0xf0] sm:$0xff]
  %v93 = vld [vmem:[%s3 + $0xf8] sm:$0xff]
  %v96 = vunpack.c.l.b16 %v60
  %v97 = vunpack.c.h.b16 %v60
  %v98 = vunpack.c.l.b16 %v61
  %v99 = vunpack.c.h.b16 %v61
  %v100 = vpack.c.b16 %v98, %v96
  %v101 = vpack.c.b16 %v99, %v97
  %v136 = vunpack.c.l.b16 %v62
  %v137 = vunpack.c.h.b16 %v62
  %v138 = vunpack.c.l.b16 %v63
  %v139 = vunpack.c.h.b16 %v63
  %v140 = vunpack.c.l.b16 %v64
  %v141 = vunpack.c.h.b16 %v64
  %v142 = vunpack.c.l.b16 %v65
  %v143 = vunpack.c.h.b16 %v65
  %v144 = vunpack.c.l.b16 %v66
  %v145 = vunpack.c.h.b16 %v66
  %v146 = vunpack.c.l.b16 %v67
  %v147 = vunpack.c.h.b16 %v67
  %v148 = vunpack.c.l.b16 %v68
  %v149 = vunpack.c.h.b16 %v68
  %v150 = vunpack.c.l.b16 %v69
  %v151 = vunpack.c.h.b16 %v69
  %v152 = vunpack.c.l.b16 %v70
  %v153 = vunpack.c.h.b16 %v70
  %v154 = vunpack.c.l.b16 %v71
  %v155 = vunpack.c.h.b16 %v71
  %v156 = vunpack.c.l.b16 %v72
  %v157 = vunpack.c.h.b16 %v72
  %v158 = vunpack.c.l.b16 %v73
  %v159 = vunpack.c.h.b16 %v73
  %v160 = vunpack.c.l.b16 %v74
  %v161 = vunpack.c.h.b16 %v74
  %v162 = vunpack.c.l.b16 %v75
  %v163 = vunpack.c.h.b16 %v75
  %v164 = vunpack.c.l.b16 %v76
  %v165 = vunpack.c.h.b16 %v76
  %v166 = vunpack.c.l.b16 %v77
  %v167 = vunpack.c.h.b16 %v77
  %v168 = vunpack.c.l.b16 %v78
  %v169 = vunpack.c.h.b16 %v78
  %v170 = vunpack.c.l.b16 %v79
  %v171 = vunpack.c.h.b16 %v79
  %v172 = vunpack.c.l.b16 %v80
  %v173 = vunpack.c.h.b16 %v80
  %v174 = vunpack.c.l.b16 %v81
  %v175 = vunpack.c.h.b16 %v81
  %v176 = vunpack.c.l.b16 %v82
  %v177 = vunpack.c.h.b16 %v82
  %v178 = vunpack.c.l.b16 %v83
  %v179 = vunpack.c.h.b16 %v83
  %v180 = vunpack.c.l.b16 %v84
  %v181 = vunpack.c.h.b16 %v84
  %v182 = vunpack.c.l.b16 %v85
  %v183 = vunpack.c.h.b16 %v85
  %v184 = vunpack.c.l.b16 %v86
  %v185 = vunpack.c.h.b16 %v86
  %v186 = vunpack.c.l.b16 %v87
  %v187 = vunpack.c.h.b16 %v87
  %v188 = vunpack.c.l.b16 %v88
  %v189 = vunpack.c.h.b16 %v88
  %v190 = vunpack.c.l.b16 %v89
  %v191 = vunpack.c.h.b16 %v89
  %v192 = vunpack.c.l.b16 %v90
  %v193 = vunpack.c.h.b16 %v90
  %v194 = vunpack.c.l.b16 %v91
  %v195 = vunpack.c.h.b16 %v91
  %v196 = vunpack.c.l.b16 %v92
  %v197 = vunpack.c.h.b16 %v92
  %v198 = vunpack.c.l.b16 %v93
  %v199 = vunpack.c.h.b16 %v93
  %v200 = vpack.c.b16 %v138, %v136
  %v201 = vpack.c.b16 %v139, %v137
  %v202 = vpack.c.b16 %v142, %v140
  %v203 = vpack.c.b16 %v143, %v141
  %v204 = vpack.c.b16 %v146, %v144
  %v205 = vpack.c.b16 %v147, %v145
  %v206 = vpack.c.b16 %v150, %v148
  %v207 = vpack.c.b16 %v151, %v149
  %v208 = vpack.c.b16 %v154, %v152
  %v209 = vpack.c.b16 %v155, %v153
  %v210 = vpack.c.b16 %v158, %v156
  %v211 = vpack.c.b16 %v159, %v157
  %v212 = vpack.c.b16 %v162, %v160
  %v213 = vpack.c.b16 %v163, %v161
  %v214 = vpack.c.b16 %v166, %v164
  %v215 = vpack.c.b16 %v167, %v165
  %v216 = vpack.c.b16 %v170, %v168
  %v217 = vpack.c.b16 %v171, %v169
  %v218 = vpack.c.b16 %v174, %v172
  %v219 = vpack.c.b16 %v175, %v173
  %v220 = vpack.c.b16 %v178, %v176
  %v221 = vpack.c.b16 %v179, %v177
  %v222 = vpack.c.b16 %v182, %v180
  %v223 = vpack.c.b16 %v183, %v181
  %v224 = vpack.c.b16 %v186, %v184
  %v225 = vpack.c.b16 %v187, %v185
  %v226 = vpack.c.b16 %v190, %v188
  %v227 = vpack.c.b16 %v191, %v189
  %v228 = vpack.c.b16 %v194, %v192
  %v229 = vpack.c.b16 %v195, %v193
  %v230 = vpack.c.b16 %v198, %v196
  %v231 = vpack.c.b16 %v199, %v197
  %264 = vmatprep.subr.bf16.mxu0 %v201
  %265 = vmatpush1.bf16.msra.mxu0 %v200
  %266 = vmatprep.subr.bf16.mxu0 %v203
  %267 = vmatpush1.bf16.msra.mxu0 %v202
  %268 = vmatprep.subr.bf16.mxu0 %v205
  %269 = vmatpush1.bf16.msra.mxu0 %v204
  %270 = vmatprep.subr.bf16.mxu0 %v207
  %271 = vmatpush1.bf16.msra.mxu0 %v206
  %272 = vmatprep.subr.bf16.mxu0 %v209
  %273 = vmatpush1.bf16.msra.mxu0 %v208
  %274 = vmatprep.subr.bf16.mxu0 %v211
  %275 = vmatpush1.bf16.msra.mxu0 %v210
  %276 = vmatprep.subr.bf16.mxu0 %v213
  %277 = vmatpush1.bf16.msra.mxu0 %v212
  %278 = vmatprep.subr.bf16.mxu0 %v215
  %279 = vmatpush1.bf16.msra.mxu0 %v214
  %280 = vmatprep.subr.bf16.mxu0 %v217
  %281 = vmatpush1.bf16.msra.mxu0 %v216
  %282 = vmatprep.subr.bf16.mxu0 %v219
  %283 = vmatpush1.bf16.msra.mxu0 %v218
  %284 = vmatprep.subr.bf16.mxu0 %v221
  %285 = vmatpush1.bf16.msra.mxu0 %v220
  %286 = vmatprep.subr.bf16.mxu0 %v223
  %287 = vmatpush1.bf16.msra.mxu0 %v222
  %288 = vmatprep.subr.bf16.mxu0 %v225
  %289 = vmatpush1.bf16.msra.mxu0 %v224
  %290 = vmatprep.subr.bf16.mxu0 %v227
  %291 = vmatpush1.bf16.msra.mxu0 %v226
  %292 = vmatprep.subr.bf16.mxu0 %v229
  %293 = vmatpush1.bf16.msra.mxu0 %v228
  %294 = vmatprep.subr.bf16.mxu0 %v231
  %295 = vmatpush1.bf16.msra.mxu0 %v230
  %296 = vmatprep.mubr.bf16.mxu0 %v101
  %297 = vmatmul.mubr.bf16.gmra.mrb[0].mxu0 %v100
  %v298 = vpop.f32.mrb[0].mxu0
  %v299 = vadd.f32 0.0, %v298
  %v300 = vpop.f32.mrb[0].mxu0
  %v301 = vadd.f32 0.0, %v300
  %v302 = vpop.f32.mrb[0].mxu0
  %v303 = vadd.f32 0.0, %v302
  %v304 = vpop.f32.mrb[0].mxu0
  %v305 = vadd.f32 0.0, %v304
  %306 = vdwg.mxu0
  %v309 = vunpack.c.l.b16 %v26
  %v310 = vunpack.c.h.b16 %v26
  %v311 = vunpack.c.l.b16 %v27
  %v312 = vunpack.c.h.b16 %v27
  %v313 = vpack.c.b16 %v311, %v309
  %v314 = vpack.c.b16 %v312, %v310
  %v349 = vunpack.c.l.b16 %v28
  %v350 = vunpack.c.h.b16 %v28
  %v351 = vunpack.c.l.b16 %v29
  %v352 = vunpack.c.h.b16 %v29
  %v353 = vunpack.c.l.b16 %v30
  %v354 = vunpack.c.h.b16 %v30
  %v355 = vunpack.c.l.b16 %v31
  %v356 = vunpack.c.h.b16 %v31
  %v357 = vunpack.c.l.b16 %v32
  %v358 = vunpack.c.h.b16 %v32
  %v359 = vunpack.c.l.b16 %v33
  %v360 = vunpack.c.h.b16 %v33
  %v361 = vunpack.c.l.b16 %v34
  %v362 = vunpack.c.h.b16 %v34
  %v363 = vunpack.c.l.b16 %v35
  %v364 = vunpack.c.h.b16 %v35
  %v365 = vunpack.c.l.b16 %v36
  %v366 = vunpack.c.h.b16 %v36
  %v367 = vunpack.c.l.b16 %v37
  %v368 = vunpack.c.h.b16 %v37
  %v369 = vunpack.c.l.b16 %v38
  %v370 = vunpack.c.h.b16 %v38
  %v371 = vunpack.c.l.b16 %v39
  %v372 = vunpack.c.h.b16 %v39
  %v373 = vunpack.c.l.b16 %v40
  %v374 = vunpack.c.h.b16 %v40
  %v375 = vunpack.c.l.b16 %v41
  %v376 = vunpack.c.h.b16 %v41
  %v377 = vunpack.c.l.b16 %v42
  %v378 = vunpack.c.h.b16 %v42
  %v379 = vunpack.c.l.b16 %v43
  %v380 = vunpack.c.h.b16 %v43
  %v381 = vunpack.c.l.b16 %v44
  %v382 = vunpack.c.h.b16 %v44
  %v383 = vunpack.c.l.b16 %v45
  %v384 = vunpack.c.h.b16 %v45
  %v385 = vunpack.c.l.b16 %v46
  %v386 = vunpack.c.h.b16 %v46
  %v387 = vunpack.c.l.b16 %v47
  %v388 = vunpack.c.h.b16 %v47
  %v389 = vunpack.c.l.b16 %v48
  %v390 = vunpack.c.h.b16 %v48
  %v391 = vunpack.c.l.b16 %v49
  %v392 = vunpack.c.h.b16 %v49
  %v393 = vunpack.c.l.b16 %v50
  %v394 = vunpack.c.h.b16 %v50
  %v395 = vunpack.c.l.b16 %v51
  %v396 = vunpack.c.h.b16 %v51
  %v397 = vunpack.c.l.b16 %v52
  %v398 = vunpack.c.h.b16 %v52
  %v399 = vunpack.c.l.b16 %v53
  %v400 = vunpack.c.h.b16 %v53
  %v401 = vunpack.c.l.b16 %v54
  %v402 = vunpack.c.h.b16 %v54
  %v403 = vunpack.c.l.b16 %v55
  %v404 = vunpack.c.h.b16 %v55
  %v405 = vunpack.c.l.b16 %v56
  %v406 = vunpack.c.h.b16 %v56
  %v407 = vunpack.c.l.b16 %v57
  %v408 = vunpack.c.h.b16 %v57
  %v409 = vunpack.c.l.b16 %v58
  %v410 = vunpack.c.h.b16 %v58
  %v411 = vunpack.c.l.b16 %v59
  %v412 = vunpack.c.h.b16 %v59
  %v413 = vpack.c.b16 %v351, %v349
  %v414 = vpack.c.b16 %v352, %v350
  %v415 = vpack.c.b16 %v355, %v353
  %v416 = vpack.c.b16 %v356, %v354
  %v417 = vpack.c.b16 %v359, %v357
  %v418 = vpack.c.b16 %v360, %v358
  %v419 = vpack.c.b16 %v363, %v361
  %v420 = vpack.c.b16 %v364, %v362
  %v421 = vpack.c.b16 %v367, %v365
  %v422 = vpack.c.b16 %v368, %v366
  %v423 = vpack.c.b16 %v371, %v369
  %v424 = vpack.c.b16 %v372, %v370
  %v425 = vpack.c.b16 %v375, %v373
  %v426 = vpack.c.b16 %v376, %v374
  %v427 = vpack.c.b16 %v379, %v377
  %v428 = vpack.c.b16 %v380, %v378
  %v429 = vpack.c.b16 %v383, %v381
  %v430 = vpack.c.b16 %v384, %v382
  %v431 = vpack.c.b16 %v387, %v385
  %v432 = vpack.c.b16 %v388, %v386
  %v433 = vpack.c.b16 %v391, %v389
  %v434 = vpack.c.b16 %v392, %v390
  %v435 = vpack.c.b16 %v395, %v393
  %v436 = vpack.c.b16 %v396, %v394
  %v437 = vpack.c.b16 %v399, %v397
  %v438 = vpack.c.b16 %v400, %v398
  %v439 = vpack.c.b16 %v403, %v401
  %v440 = vpack.c.b16 %v404, %v402
  %v441 = vpack.c.b16 %v407, %v405
  %v442 = vpack.c.b16 %v408, %v406
  %v443 = vpack.c.b16 %v411, %v409
  %v444 = vpack.c.b16 %v412, %v410
  %477 = vmatprep.subr.bf16.mxu0 %v414
  %478 = vmatpush1.bf16.msra.mxu0 %v413
  %479 = vmatprep.subr.bf16.mxu0 %v416
  %480 = vmatpush1.bf16.msra.mxu0 %v415
  %481 = vmatprep.subr.bf16.mxu0 %v418
  %482 = vmatpush1.bf16.msra.mxu0 %v417
  %483 = vmatprep.subr.bf16.mxu0 %v420
  %484 = vmatpush1.bf16.msra.mxu0 %v419
  %485 = vmatprep.subr.bf16.mxu0 %v422
  %486 = vmatpush1.bf16.msra.mxu0 %v421
  %487 = vmatprep.subr.bf16.mxu0 %v424
  %488 = vmatpush1.bf16.msra.mxu0 %v423
  %489 = vmatprep.subr.bf16.mxu0 %v426
  %490 = vmatpush1.bf16.msra.mxu0 %v425
  %491 = vmatprep.subr.bf16.mxu0 %v428
  %492 = vmatpush1.bf16.msra.mxu0 %v427
  %493 = vmatprep.subr.bf16.mxu0 %v430
  %494 = vmatpush1.bf16.msra.mxu0 %v429
  %495 = vmatprep.subr.bf16.mxu0 %v432
  %496 = vmatpush1.bf16.msra.mxu0 %v431
  %497 = vmatprep.subr.bf16.mxu0 %v434
  %498 = vmatpush1.bf16.msra.mxu0 %v433
  %499 = vmatprep.subr.bf16.mxu0 %v436
  %500 = vmatpush1.bf16.msra.mxu0 %v435
  %501 = vmatprep.subr.bf16.mxu0 %v438
  %502 = vmatpush1.bf16.msra.mxu0 %v437
  %503 = vmatprep.subr.bf16.mxu0 %v440
  %504 = vmatpush1.bf16.msra.mxu0 %v439
  %505 = vmatprep.subr.bf16.mxu0 %v442
  %506 = vmatpush1.bf16.msra.mxu0 %v441
  %507 = vmatprep.subr.bf16.mxu0 %v444
  %508 = vmatpush1.bf16.msra.mxu0 %v443
  %509 = vmatprep.mubr.bf16.mxu0 %v314
  %510 = vmatmul.mubr.bf16.gmra.mrb[0].mxu0 %v313
  %v511 = vpop.f32.mrb[0].mxu0
  %v512 = vadd.f32 %v299, %v511
  %v513 = vpop.f32.mrb[0].mxu0
  %v514 = vadd.f32 %v301, %v513
  %v515 = vpop.f32.mrb[0].mxu0
  %v516 = vadd.f32 %v303, %v515
  %v517 = vpop.f32.mrb[0].mxu0
  %v518 = vadd.f32 %v305, %v517
  %519 = vdwg.mxu0
  %v520 = vld [vmem:[%s4] sm:$0x3]
  %v522 = vlaneseq
  %v523 = vshrl.u32 %v522, 7
  %v524 = vsub.s32 0, %v523
  %v525 = vrot.slane %v520, %v524
  %v526 = vlaneseq
  %v527 = vshrl.u32 %v526, 7
  %v528 = vsub.s32 1, %v527
  %v529 = vrot.slane %v520, %v528
  %v532 = vadd.f32 %v512, %v525
  %v533 = vadd.f32 %v514, %v529
  %v534 = vadd.f32 %v516, %v525
  %v535 = vadd.f32 %v518, %v529
  %v536 = vmax.f32 %v532, 0.0
  %v537 = vmax.f32 %v533, 0.0
  %v538 = vmax.f32 %v534, 0.0
  %v539 = vmax.f32 %v535, 0.0
  %v540 = vpack.c.bf16 %v538, %v536
  %v541 = vpack.c.bf16 %v539, %v537
  %v542 = vld [vmem:[%s5] sm:$0xff]
  %v543 = vld [vmem:[%s5 + $0x8] sm:$0xff]
  %v544 = vld [vmem:[%s5 + $0x10] sm:$0xff]
  %v545 = vld [vmem:[%s5 + $0x18] sm:$0xff]
  %v546 = vld [vmem:[%s5 + $0x20] sm:$0xff]
  %v547 = vld [vmem:[%s5 + $0x28] sm:$0xff]
  %v548 = vld [vmem:[%s5 + $0x30] sm:$0xff]
  %v549 = vld [vmem:[%s5 + $0x38] sm:$0xff]
  %v550 = vld [vmem:[%s5 + $0x40] sm:$0xff]
  %v551 = vld [vmem:[%s5 + $0x48] sm:$0xff]
  %v552 = vld [vmem:[%s5 + $0x50] sm:$0xff]
  %v553 = vld [vmem:[%s5 + $0x58] sm:$0xff]
  %v554 = vld [vmem:[%s5 + $0x60] sm:$0xff]
  %v555 = vld [vmem:[%s5 + $0x68] sm:$0xff]
  %v556 = vld [vmem:[%s5 + $0x70] sm:$0xff]
  %v557 = vld [vmem:[%s5 + $0x78] sm:$0xff]
  %v558 = vld [vmem:[%s5 + $0x80] sm:$0xff]
  %v559 = vld [vmem:[%s5 + $0x88] sm:$0xff]
  %v560 = vld [vmem:[%s5 + $0x90] sm:$0xff]
  %v561 = vld [vmem:[%s5 + $0x98] sm:$0xff]
  %v562 = vld [vmem:[%s5 + $0xa0] sm:$0xff]
  %v563 = vld [vmem:[%s5 + $0xa8] sm:$0xff]
  %v564 = vld [vmem:[%s5 + $0xb0] sm:$0xff]
  %v565 = vld [vmem:[%s5 + $0xb8] sm:$0xff]
  %v566 = vld [vmem:[%s5 + $0xc0] sm:$0xff]
  %v567 = vld [vmem:[%s5 + $0xc8] sm:$0xff]
  %v568 = vld [vmem:[%s5 + $0xd0] sm:$0xff]
  %v569 = vld [vmem:[%s5 + $0xd8] sm:$0xff]
  %v570 = vld [vmem:[%s5 + $0xe0] sm:$0xff]
  %v571 = vld [vmem:[%s5 + $0xe8] sm:$0xff]
  %v572 = vld [vmem:[%s5 + $0xf0] sm:$0xff]
  %v573 = vld [vmem:[%s5 + $0xf8] sm:$0xff]
  %v574 = vld [vmem:[%s6] sm:$0x3]
  %v576 = vlaneseq
  %v577 = vshrl.u32 %v576, 7
  %v578 = vsub.s32 0, %v577
  %v579 = vrot.slane %v574, %v578
  %v580 = vlaneseq
  %v581 = vshrl.u32 %v580, 7
  %v582 = vsub.s32 1, %v581
  %v583 = vrot.slane %v574, %v582
  %v618 = vunpack.c.l.b16 %v542
  %v619 = vunpack.c.h.b16 %v542
  %v620 = vunpack.c.l.b16 %v543
  %v621 = vunpack.c.h.b16 %v543
  %v622 = vunpack.c.l.b16 %v544
  %v623 = vunpack.c.h.b16 %v544
  %v624 = vunpack.c.l.b16 %v545
  %v625 = vunpack.c.h.b16 %v545
  %v626 = vunpack.c.l.b16 %v546
  %v627 = vunpack.c.h.b16 %v546
  %v628 = vunpack.c.l.b16 %v547
  %v629 = vunpack.c.h.b16 %v547
  %v630 = vunpack.c.l.b16 %v548
  %v631 = vunpack.c.h.b16 %v548
  %v632 = vunpack.c.l.b16 %v549
  %v633 = vunpack.c.h.b16 %v549
  %v634 = vunpack.c.l.b16 %v550
  %v635 = vunpack.c.h.b16 %v550
  %v636 = vunpack.c.l.b16 %v551
  %v637 = vunpack.c.h.b16 %v551
  %v638 = vunpack.c.l.b16 %v552
  %v639 = vunpack.c.h.b16 %v552
  %v640 = vunpack.c.l.b16 %v553
  %v641 = vunpack.c.h.b16 %v553
  %v642 = vunpack.c.l.b16 %v554
  %v643 = vunpack.c.h.b16 %v554
  %v644 = vunpack.c.l.b16 %v555
  %v645 = vunpack.c.h.b16 %v555
  %v646 = vunpack.c.l.b16 %v556
  %v647 = vunpack.c.h.b16 %v556
  %v648 = vunpack.c.l.b16 %v557
  %v649 = vunpack.c.h.b16 %v557
  %v650 = vunpack.c.l.b16 %v558
  %v651 = vunpack.c.h.b16 %v558
  %v652 = vunpack.c.l.b16 %v559
  %v653 = vunpack.c.h.b16 %v559
  %v654 = vunpack.c.l.b16 %v560
  %v655 = vunpack.c.h.b16 %v560
  %v656 = vunpack.c.l.b16 %v561
  %v657 = vunpack.c.h.b16 %v561
  %v658 = vunpack.c.l.b16 %v562
  %v659 = vunpack.c.h.b16 %v562
  %v660 = vunpack.c.l.b16 %v563
  %v661 = vunpack.c.h.b16 %v563
  %v662 = vunpack.c.l.b16 %v564
  %v663 = vunpack.c.h.b16 %v564
  %v664 = vunpack.c.l.b16 %v565
  %v665 = vunpack.c.h.b16 %v565
  %v666 = vunpack.c.l.b16 %v566
  %v667 = vunpack.c.h.b16 %v566
  %v668 = vunpack.c.l.b16 %v567
  %v669 = vunpack.c.h.b16 %v567
  %v670 = vunpack.c.l.b16 %v568
  %v671 = vunpack.c.h.b16 %v568
  %v672 = vunpack.c.l.b16 %v569
  %v673 = vunpack.c.h.b16 %v569
  %v674 = vunpack.c.l.b16 %v570
  %v675 = vunpack.c.h.b16 %v570
  %v676 = vunpack.c.l.b16 %v571
  %v677 = vunpack.c.h.b16 %v571
  %v678 = vunpack.c.l.b16 %v572
  %v679 = vunpack.c.h.b16 %v572
  %v680 = vunpack.c.l.b16 %v573
  %v681 = vunpack.c.h.b16 %v573
  %v682 = vpack.c.b16 %v620, %v618
  %v683 = vpack.c.b16 %v621, %v619
  %v684 = vpack.c.b16 %v624, %v622
  %v685 = vpack.c.b16 %v625, %v623
  %v686 = vpack.c.b16 %v628, %v626
  %v687 = vpack.c.b16 %v629, %v627
  %v688 = vpack.c.b16 %v632, %v630
  %v689 = vpack.c.b16 %v633, %v631
  %v690 = vpack.c.b16 %v636, %v634
  %v691 = vpack.c.b16 %v637, %v635
  %v692 = vpack.c.b16 %v640, %v638
  %v693 = vpack.c.b16 %v641, %v639
  %v694 = vpack.c.b16 %v644, %v642
  %v695 = vpack.c.b16 %v645, %v643
  %v696 = vpack.c.b16 %v648, %v646
  %v697 = vpack.c.b16 %v649, %v647
  %v698 = vpack.c.b16 %v652, %v650
  %v699 = vpack.c.b16 %v653, %v651
  %v700 = vpack.c.b16 %v656, %v654
  %v701 = vpack.c.b16 %v657, %v655
  %v702 = vpack.c.b16 %v660, %v658
  %v703 = vpack.c.b16 %v661, %v659
  %v704 = vpack.c.b16 %v664, %v662
  %v705 = vpack.c.b16 %v665, %v663
  %v706 = vpack.c.b16 %v668, %v666
  %v707 = vpack.c.b16 %v669, %v667
  %v708 = vpack.c.b16 %v672, %v670
  %v709 = vpack.c.b16 %v673, %v671
  %v710 = vpack.c.b16 %v676, %v674
  %v711 = vpack.c.b16 %v677, %v675
  %v712 = vpack.c.b16 %v680, %v678
  %v713 = vpack.c.b16 %v681, %v679
  %746 = vmatprep.subr.bf16.mxu0 %v683
  %747 = vmatpush1.bf16.msra.mxu0 %v682
  %748 = vmatprep.subr.bf16.mxu0 %v685
  %749 = vmatpush1.bf16.msra.mxu0 %v684
  %750 = vmatprep.subr.bf16.mxu0 %v687
  %751 = vmatpush1.bf16.msra.mxu0 %v686
  %752 = vmatprep.subr.bf16.mxu0 %v689
  %753 = vmatpush1.bf16.msra.mxu0 %v688
  %754 = vmatprep.subr.bf16.mxu0 %v691
  %755 = vmatpush1.bf16.msra.mxu0 %v690
  %756 = vmatprep.subr.bf16.mxu0 %v693
  %757 = vmatpush1.bf16.msra.mxu0 %v692
  %758 = vmatprep.subr.bf16.mxu0 %v695
  %759 = vmatpush1.bf16.msra.mxu0 %v694
  %760 = vmatprep.subr.bf16.mxu0 %v697
  %761 = vmatpush1.bf16.msra.mxu0 %v696
  %762 = vmatprep.subr.bf16.mxu0 %v699
  %763 = vmatpush1.bf16.msra.mxu0 %v698
  %764 = vmatprep.subr.bf16.mxu0 %v701
  %765 = vmatpush1.bf16.msra.mxu0 %v700
  %766 = vmatprep.subr.bf16.mxu0 %v703
  %767 = vmatpush1.bf16.msra.mxu0 %v702
  %768 = vmatprep.subr.bf16.mxu0 %v705
  %769 = vmatpush1.bf16.msra.mxu0 %v704
  %770 = vmatprep.subr.bf16.mxu0 %v707
  %771 = vmatpush1.bf16.msra.mxu0 %v706
  %772 = vmatprep.subr.bf16.mxu0 %v709
  %773 = vmatpush1.bf16.msra.mxu0 %v708
  %774 = vmatprep.subr.bf16.mxu0 %v711
  %775 = vmatpush1.bf16.msra.mxu0 %v710
  %776 = vmatprep.subr.bf16.mxu0 %v713
  %777 = vmatpush1.bf16.msra.mxu0 %v712
  %778 = vmatprep.mubr.bf16.mxu0 %v541
  %779 = vmatmul.mubr.bf16.gmra.mrb[0].mxu0 %v540
  %v780 = vpop.f32.mrb[0].mxu0
  %v781 = vadd.f32 %v579, %v780
  %v782 = vpop.f32.mrb[0].mxu0
  %v783 = vadd.f32 %v583, %v782
  %v784 = vpop.f32.mrb[0].mxu0
  %v785 = vadd.f32 %v579, %v784
  %v786 = vpop.f32.mrb[0].mxu0
  %v787 = vadd.f32 %v583, %v786
  %788 = vdwg.mxu0
  %v789 = vmax.f32 %v781, 0.0
  %v790 = vmax.f32 %v783, 0.0
  %v791 = vmax.f32 %v785, 0.0
  %v792 = vmax.f32 %v787, 0.0
  %v793 = vpack.c.bf16 %v791, %v789
  %v794 = vpack.c.bf16 %v792, %v790
  %v797 = vunpack.c.l.b16 %v793
  %v798 = vunpack.c.l.b16 %v794
  %v799 = vunpack.c.h.b16 %v793
  %v800 = vunpack.c.h.b16 %v794
  %v801 = vpack.c.b16 %v798, %v797
  %v802 = vpack.c.b16 %v800, %v799
  %805 = vst [vmem:[%s7] sm:$0xff] %v801
  %806 = vst [vmem:[%s7 + $0x8] sm:$0xff] %v802
  // Predicated region
  $region30: #{_lambda_.10} parent=0 // pred_check
    _
  $region31: #{_lambda_.10} parent=0 // pred_check_branch
    %808 = sbr.rel (0) target = $region33
  $region32: #{_lambda_.10} parent=0 // pred_region
    _
  $region33: #{_lambda_.10} parent=0 // pred_fallthru
    _
  // Predicated region
  $region34: #{_lambda_.10} parent=0 // pred_check
    _
  $region35: #{_lambda_.10} parent=0 // pred_check_branch
    %810 = sbr.rel (0) target = $region37
  $region36: #{_lambda_.10} parent=0 // pred_region
    _
  $region37: #{_lambda_.10} parent=0 // pred_fallthru
    _

// kernel: _lambda_.11
$region0: #{_lambda_.11}
  #allocation0 [shape = 'u32[]', space=smem, size = 0x4, offset = 0x4, fixed_abs, tag = 'smem constant byte address 0x4 - core index']
  #allocation1 [shape = 'u32[144,128]{1,0:T(1,128)}', space=vmem, size = 0x12000, scoped, tag = 'internal scratch']
  %s0 = inlined_call_operand.vmem [shape: bf16[32,256], index: 0, kind: input, shape index: {}]
  %s1 = inlined_call_operand.vmem [shape: bf16[32,256], index: 1, kind: input, shape index: {}]
  %s2 = inlined_call_operand.vmem [shape: bf16[256,256], index: 2, kind: input, shape index: {}]
  %s3 = inlined_call_operand.vmem [shape: bf16[256,256], index: 3, kind: input, shape index: {}]
  %s4 = inlined_call_operand.vmem [shape: f32[1,256], index: 4, kind: input, shape index: {}, may-alias: {4,6}]
  %s5 = inlined_call_operand.vmem [shape: bf16[256,256], index: 5, kind: input, shape index: {}]
  %s6 = inlined_call_operand.vmem [shape: f32[1,256], index: 6, kind: input, shape index: {}, may-alias: {4,6}]
  %s7 = inlined_call_operand.hbm [shape: f32[32,256], index: 7, kind: output, shape index: {}]
  %s8 = sld [smem:[#allocation0]]
  $region61: #{_lambda_.11} parent=0
    _
  %s10 = ssub.s32 1, %s8
  %s11 = scalar_select 0, %s10, %s8
  $region1: #{_lambda_.11} parent=0
    #allocation2 [shape = 'u8[32768]{0}', space=vmem, size = 0x8000, scoped, tag = 'output window, operand 0']
    #allocation3 [shape = 's32[2]{0}', space=sflag, size = 0x8, scoped, tag = 'scoped memory for _lambda_.11']
    %12 = vsyncpa [#allocation3], 0
    %s13 = scalar_lea.sflag [#allocation3], 1
    %14 = vsyncpa %s13, 0
    loop: start=0, step=1, limit=4
    $region2: #{_lambda_.11} parent=1 // loop_pre_header
      _
    $region3: #{_lambda_.11} parent=1 // loop_header
      %s16 = sphi 0, %s20
      %p17 = scmp.ge.s32.totalorder %s16, 4
      %s26 = sphi 0, %s28
      %s29 = sphi 0, %s26
      %s30 = sphi 0, %s29
      %s46 = sphi 0, %s30
      %s52 = sphi 0, %s54
      %s55 = sphi 0, %s52
      %s56 = sphi 0, %s55
      %s72 = sphi 0, %s56
      %s76 = sphi 0, %s76
      %s78 = sphi 0, %s76
      %s79 = sphi 0, %s78
      %s93 = sphi 0, %s79
      %s97 = sphi 0, %s97
      %s99 = sphi 0, %s97
      %s100 = sphi 0, %s99
      %s114 = sphi 0, %s100
      %s118 = sphi 0, %s118
      %s120 = sphi 0, %s118
      %s121 = sphi 0, %s120
      %s135 = sphi 0, %s121
      %s139 = sphi 0, %s139
      %s141 = sphi 0, %s139
      %s142 = sphi 0, %s141
      %s156 = sphi 0, %s142
      %s160 = sphi 0, %s160
      %s162 = sphi 0, %s160
      %s163 = sphi 0, %s162
      %s177 = sphi 0, %s163
      %s183 = sphi 0, %s185
      %s186 = sphi 0, %s183
      %s187 = sphi 0, %s186
      %s203 = sphi 0, %s187
    $region4: #{_lambda_.11} parent=1 // loop_header_branch
      %19 = sbr.rel (%p17) target = $region8
    $region5: #{_lambda_.11} parent=1 // loop_body
      %s21 = ssub.s32 %s16, 1
      %s22 = ssub.s32 %s16, 2
      %s23 = sadd.s32 %s16, 1
      %s24 = ssub.s32 %s16, %s23
      %p25 = scmp.eq.s32.totalorder %s24, 0
      %s27 = sadd.s32 %s26, 1
      %s28 = scalar_select %p25, %s26, %s27
      %p31 = pneg %p25
      %p32 = scmp.eq.s32.totalorder %s16, 1
      %p33 = por %p31, %p32
      %p34 = scmp.ne.s32.totalorder %s26, %s29
      %p35 = scmp.eq.s32.totalorder %s16, 0
      %p36 = por %p34, %p35
      %p37 = scmp.ne.s32.totalorder %s26, %s29
      %p38 = scmp.eq.s32.totalorder %s21, 1
      %p39 = por %p37, %p38
      %p40 = scmp.ne.s32.totalorder %s29, %s30
      %p41 = scmp.eq.s32.totalorder %s21, 0
      %p42 = por %p40, %p41
      %p43 = scmp.ne.s32.totalorder %s29, %s30
      %p44 = scmp.eq.s32.totalorder %s22, 1
      %p45 = por %p43, %p44
      %p47 = scmp.ne.s32.totalorder %s30, %s46
      %p48 = scmp.eq.s32.totalorder %s22, 0
      %p49 = por %p47, %p48
      %s50 = ssub.s32 %s16, %s23
      %p51 = scmp.eq.s32.totalorder %s50, 0
      %s53 = sadd.s32 %s52, 1
      %s54 = scalar_select %p51, %s52, %s53
      %p57 = pneg %p51
      %p58 = scmp.eq.s32.totalorder %s16, 1
      %p59 = por %p57, %p58
      %p60 = scmp.ne.s32.totalorder %s52, %s55
      %p61 = scmp.eq.s32.totalorder %s16, 0
      %p62 = por %p60, %p61
      %p63 = scmp.ne.s32.totalorder %s52, %s55
      %p64 = scmp.eq.s32.totalorder %s21, 1
      %p65 = por %p63, %p64
      %p66 = scmp.ne.s32.totalorder %s55, %s56
      %p67 = scmp.eq.s32.totalorder %s21, 0
      %p68 = por %p66, %p67
      %p69 = scmp.ne.s32.totalorder %s55, %s56
      %p70 = scmp.eq.s32.totalorder %s22, 1
      %p71 = por %p69, %p70
      %p73 = scmp.ne.s32.totalorder %s56, %s72
      %p74 = scmp.eq.s32.totalorder %s22, 0
      %p75 = por %p73, %p74
      %s77 = sadd.s32 %s76, 1
      %p80 = scmp.eq.s32.totalorder %s16, 1
      %p81 = scmp.ne.s32.totalorder %s76, %s78
      %p82 = scmp.eq.s32.totalorder %s16, 0
      %p83 = por %p81, %p82
      %p84 = scmp.ne.s32.totalorder %s76, %s78
      %p85 = scmp.eq.s32.totalorder %s21, 1
      %p86 = por %p84, %p85
      %p87 = scmp.ne.s32.totalorder %s78, %s79
      %p88 = scmp.eq.s32.totalorder %s21, 0
      %p89 = por %p87, %p88
      %p90 = scmp.ne.s32.totalorder %s78, %s79
      %p91 = scmp.eq.s32.totalorder %s22, 1
      %p92 = por %p90, %p91
      %p94 = scmp.ne.s32.totalorder %s79, %s93
      %p95 = scmp.eq.s32.totalorder %s22, 0
      %p96 = por %p94, %p95
      %s98 = sadd.s32 %s97, 1
      %p101 = scmp.eq.s32.totalorder %s16, 1
      %p102 = scmp.ne.s32.totalorder %s97, %s99
      %p103 = scmp.eq.s32.totalorder %s16, 0
      %p104 = por %p102, %p103
      %p105 = scmp.ne.s32.totalorder %s97, %s99
      %p106 = scmp.eq.s32.totalorder %s21, 1
      %p107 = por %p105, %p106
      %p108 = scmp.ne.s32.totalorder %s99, %s100
      %p109 = scmp.eq.s32.totalorder %s21, 0
      %p110 = por %p108, %p109
      %p111 = scmp.ne.s32.totalorder %s99, %s100
      %p112 = scmp.eq.s32.totalorder %s22, 1
      %p113 = por %p111, %p112
      %p115 = scmp.ne.s32.totalorder %s100, %s114
      %p116 = scmp.eq.s32.totalorder %s22, 0
      %p117 = por %p115, %p116
      %s119 = sadd.s32 %s118, 1
      %p122 = scmp.eq.s32.totalorder %s16, 1
      %p123 = scmp.ne.s32.totalorder %s118, %s120
      %p124 = scmp.eq.s32.totalorder %s16, 0
      %p125 = por %p123, %p124
      %p126 = scmp.ne.s32.totalorder %s118, %s120
      %p127 = scmp.eq.s32.totalorder %s21, 1
      %p128 = por %p126, %p127
      %p129 = scmp.ne.s32.totalorder %s120, %s121
      %p130 = scmp.eq.s32.totalorder %s21, 0
      %p131 = por %p129, %p130
      %p132 = scmp.ne.s32.totalorder %s120, %s121
      %p133 = scmp.eq.s32.totalorder %s22, 1
      %p134 = por %p132, %p133
      %p136 = scmp.ne.s32.totalorder %s121, %s135
      %p137 = scmp.eq.s32.totalorder %s22, 0
      %p138 = por %p136, %p137
      %s140 = sadd.s32 %s139, 1
      %p143 = scmp.eq.s32.totalorder %s16, 1
      %p144 = scmp.ne.s32.totalorder %s139, %s141
      %p145 = scmp.eq.s32.totalorder %s16, 0
      %p146 = por %p144, %p145
      %p147 = scmp.ne.s32.totalorder %s139, %s141
      %p148 = scmp.eq.s32.totalorder %s21, 1
      %p149 = por %p147, %p148
      %p150 = scmp.ne.s32.totalorder %s141, %s142
      %p151 = scmp.eq.s32.totalorder %s21, 0
      %p152 = por %p150, %p151
      %p153 = scmp.ne.s32.totalorder %s141, %s142
      %p154 = scmp.eq.s32.totalorder %s22, 1
      %p155 = por %p153, %p154
      %p157 = scmp.ne.s32.totalorder %s142, %s156
      %p158 = scmp.eq.s32.totalorder %s22, 0
      %p159 = por %p157, %p158
      %s161 = sadd.s32 %s160, 1
      %p164 = scmp.eq.s32.totalorder %s16, 1
      %p165 = scmp.ne.s32.totalorder %s160, %s162
      %p166 = scmp.eq.s32.totalorder %s16, 0
      %p167 = por %p165, %p166
      %p168 = scmp.ne.s32.totalorder %s160, %s162
      %p169 = scmp.eq.s32.totalorder %s21, 1
      %p170 = por %p168, %p169
      %p171 = scmp.ne.s32.totalorder %s162, %s163
      %p172 = scmp.eq.s32.totalorder %s21, 0
      %p173 = por %p171, %p172
      %p174 = scmp.ne.s32.totalorder %s162, %s163
      %p175 = scmp.eq.s32.totalorder %s22, 1
      %p176 = por %p174, %p175
      %p178 = scmp.ne.s32.totalorder %s163, %s177
      %p179 = scmp.eq.s32.totalorder %s22, 0
      %p180 = por %p178, %p179
      %s181 = ssub.s32 %s16, %s23
      %p182 = scmp.eq.s32.totalorder %s181, 0
      %s184 = sadd.s32 %s183, 1
      %s185 = scalar_select %p182, %s183, %s184
      %p188 = pneg %p182
      %p189 = scmp.eq.s32.totalorder %s16, 1
      %p190 = por %p188, %p189
      %p191 = scmp.ne.s32.totalorder %s183, %s186
      %p192 = scmp.eq.s32.totalorder %s16, 0
      %p193 = por %p191, %p192
      %p194 = scmp.ne.s32.totalorder %s183, %s186
      %p195 = scmp.eq.s32.totalorder %s21, 1
      %p196 = por %p194, %p195
      %p197 = scmp.ne.s32.totalorder %s186, %s187
      %p198 = scmp.eq.s32.totalorder %s21, 0
      %p199 = por %p197, %p198
      %p200 = scmp.ne.s32.totalorder %s186, %s187
      %p201 = scmp.eq.s32.totalorder %s22, 1
      %p202 = por %p200, %p201
      %p204 = scmp.ne.s32.totalorder %s187, %s203
      %p205 = scmp.eq.s32.totalorder %s22, 0
      %p206 = por %p204, %p205
      %p207 = scmp.le.s32.totalorder 1, %s16
      %p208 = scmp.lt.s32.totalorder %s16, 3
      %p209 = pnand %p207, %p208
      %p210 = pneg %p209
      // Predicated region
      $region9: #{_lambda_.11} parent=5 // pred_check
        _
      $region10: #{_lambda_.11} parent=5 // pred_check_branch
        %212 = sbr.rel (%p209) target = $region12
      $region11: #{_lambda_.11} parent=5 // pred_region
        %s213 = ssub.s32 %s16, 1
        // Predicated region
        $region13: #{_lambda_.11} parent=11 // pred_check
          %p214 = pneg %p89
        $region14: #{_lambda_.11} parent=11 // pred_check_branch
          %216 = sbr.rel (%p214) target = $region16
        $region15: #{_lambda_.11} parent=11 // pred_region
          _
        $region16: #{_lambda_.11} parent=11 // pred_fallthru
          _
        // Predicated region
        $region17: #{_lambda_.11} parent=11 // pred_check
          %p217 = pneg %p110
        $region18: #{_lambda_.11} parent=11 // pred_check_branch
          %219 = sbr.rel (%p217) target = $region20
        $region19: #{_lambda_.11} parent=11 // pred_region
          _
        $region20: #{_lambda_.11} parent=11 // pred_fallthru
          _
        // Predicated region
        $region21: #{_lambda_.11} parent=11 // pred_check
          %p220 = pneg %p131
        $region22: #{_lambda_.11} parent=11 // pred_check_branch
          %222 = sbr.rel (%p220) target = $region24
        $region23: #{_lambda_.11} parent=11 // pred_region
          _
        $region24: #{_lambda_.11} parent=11 // pred_fallthru
          _
        // Predicated region
        $region25: #{_lambda_.11} parent=11 // pred_check
          %p223 = pneg %p152
        $region26: #{_lambda_.11} parent=11 // pred_check_branch
          %225 = sbr.rel (%p223) target = $region28
        $region27: #{_lambda_.11} parent=11 // pred_region
          _
        $region28: #{_lambda_.11} parent=11 // pred_fallthru
          _
        // Predicated region
        $region29: #{_lambda_.11} parent=11 // pred_check
          %p226 = pneg %p173
        $region30: #{_lambda_.11} parent=11 // pred_check_branch
          %228 = sbr.rel (%p226) target = $region32
        $region31: #{_lambda_.11} parent=11 // pred_region
          _
        $region32: #{_lambda_.11} parent=11 // pred_fallthru
          _
      $region12: #{_lambda_.11} parent=5 // pred_fallthru
        _
      %p229 = scmp.lt.s32.totalorder %s16, 2
      // Predicated region
      $region33: #{_lambda_.11} parent=5 // pred_check
        %p230 = pneg %p229
      $region34: #{_lambda_.11} parent=5 // pred_check_branch
        %232 = sbr.rel (%p230) target = $region36
      $region35: #{_lambda_.11} parent=5 // pred_region
        // Predicated region
        $region37: #{_lambda_.11} parent=35 // pred_check
          %p233 = pneg %p36
        $region38: #{_lambda_.11} parent=35 // pred_check_branch
          %235 = sbr.rel (%p233) target = $region40
        $region39: #{_lambda_.11} parent=35 // pred_region
          %s236 = smul.u32 2, %s16
          %p237 = scmp.lt.s32.totalorder %s236, 3
          %s238 = scalar_select %p237, %s236, 3
          %s239 = smul.addr %s238, 2
          %s240 = smul.addr %s239, 4
          %s241 = scalar_lea.vmem %s0, %s240
          %s242 = smul.u32 2, %s16
        $region40: #{_lambda_.11} parent=35 // pred_fallthru
          _
        // Predicated region
        $region41: #{_lambda_.11} parent=35 // pred_check
          %p243 = pneg %p62
        $region42: #{_lambda_.11} parent=35 // pred_check_branch
          %245 = sbr.rel (%p243) target = $region44
        $region43: #{_lambda_.11} parent=35 // pred_region
          %s246 = smul.u32 2, %s16
          %p247 = scmp.lt.s32.totalorder %s246, 3
          %s248 = scalar_select %p247, %s246, 3
          %s249 = smul.addr %s248, 2
          %s250 = smul.addr %s249, 4
          %s251 = scalar_lea.vmem %s1, %s250
          %s252 = smul.u32 2, %s16
        $region44: #{_lambda_.11} parent=35 // pred_fallthru
          _
      $region36: #{_lambda_.11} parent=5 // pred_fallthru
        _
      %p253 = scmp.le.s32.totalorder 1, %s16
      %p254 = scmp.lt.s32.totalorder %s16, 3
      %p255 = pnand %p253, %p254
      %p256 = pneg %p255
      // Predicated region
      $region45: #{_lambda_.11} parent=5 // pred_check
        _
      $region46: #{_lambda_.11} parent=5 // pred_check_branch
        %258 = sbr.rel (%p255) target = $region48
      $region47: #{_lambda_.11} parent=5 // pred_region
        %s259 = ssub.s32 %s16, 1
        %s260 = smul.u32 2, %s21
        %p261 = scmp.lt.s32.totalorder %s260, 3
        %s262 = scalar_select %p261, %s260, 3
        %s263 = smul.addr %s262, 2
        %s264 = smul.addr %s263, 4
        %s265 = scalar_lea.vmem %s0, %s264
        %p266 = pneg %p42
        %p267 = pneg %p39
        %s268 = smul.u32 2, %s21
        %p269 = scmp.lt.s32.totalorder %s268, 3
        %s270 = scalar_select %p269, %s268, 3
        %s271 = smul.addr %s270, 2
        %s272 = smul.addr %s271, 4
        %s273 = scalar_lea.vmem %s1, %s272
        %p274 = pneg %p68
        %p275 = pneg %p65
        %p276 = pneg %p89
        %p277 = pneg %p86
        %p278 = pneg %p110
        %p279 = pneg %p107
        %p280 = pneg %p131
        %p281 = pneg %p128
        %p282 = pneg %p152
        %p283 = pneg %p149
        %p284 = pneg %p173
        %p285 = pneg %p170
        %p286 = pneg %p199
        %p287 = pneg %p196
        %s288 = sand.u32 %s186, 1
        %s289 = scalar_lea.sflag [#allocation3], %s288
        %s290 = sand.u32 %s186, 1
        %s291 = smul.addr %s290, 32
        %s292 = scalar_lea.vmem [#allocation2], %s291
        %s293 = smul.u32 2, %s21
        %p294 = scmp.lt.s32.totalorder %s293, 3
        %s295 = scalar_select %p294, %s293, 3
        %s296 = smul.addr %s295, 2
        %s297 = smul.addr %s296, 4
        %s298 = scalar_lea.vmem %s0, %s297
        %s299 = smul.u32 2, %s21
        %s300 = smul.u32 2, %s21
        %p301 = scmp.lt.s32.totalorder %s300, 3
        %s302 = scalar_select %p301, %s300, 3
        %s303 = smul.addr %s302, 2
        %s304 = smul.addr %s303, 4
        %s305 = scalar_lea.vmem %s1, %s304
        %s306 = smul.u32 2, %s21
        %s307 = smul.u32 2, %s21
        %v308 = vld [vmem:[%s298] sm:$0xff]
        %v309 = vld [vmem:[%s298 + $0x8] sm:$0xff]
        %v310 = vld [vmem:[%s2] sm:$0xff]
        %v311 = vld [vmem:[%s2 + $0x8] sm:$0xff]
        %v312 = vld [vmem:[%s2 + $0x10] sm:$0xff]
        %v313 = vld [vmem:[%s2 + $0x18] sm:$0xff]
        %v314 = vld [vmem:[%s2 + $0x20] sm:$0xff]
        %v315 = vld [vmem:[%s2 + $0x28] sm:$0xff]
        %v316 = vld [vmem:[%s2 + $0x30] sm:$0xff]
        %v317 = vld [vmem:[%s2 + $0x38] sm:$0xff]
        %v318 = vld [vmem:[%s2 + $0x40] sm:$0xff]
        %v319 = vld [vmem:[%s2 + $0x48] sm:$0xff]
        %v320 = vld [vmem:[%s2 + $0x50] sm:$0xff]
        %v321 = vld [vmem:[%s2 + $0x58] sm:$0xff]
        %v322 = vld [vmem:[%s2 + $0x60] sm:$0xff]
        %v323 = vld [vmem:[%s2 + $0x68] sm:$0xff]
        %v324 = vld [vmem:[%s2 + $0x70] sm:$0xff]
        %v325 = vld [vmem:[%s2 + $0x78] sm:$0xff]
        %v326 = vld [vmem:[%s2 + $0x80] sm:$0xff]
        %v327 = vld [vmem:[%s2 + $0x88] sm:$0xff]
        %v328 = vld [vmem:[%s2 + $0x90] sm:$0xff]
        %v329 = vld [vmem:[%s2 + $0x98] sm:$0xff]
        %v330 = vld [vmem:[%s2 + $0xa0] sm:$0xff]
        %v331 = vld [vmem:[%s2 + $0xa8] sm:$0xff]
        %v332 = vld [vmem:[%s2 + $0xb0] sm:$0xff]
        %v333 = vld [vmem:[%s2 + $0xb8] sm:$0xff]
        %v334 = vld [vmem:[%s2 + $0xc0] sm:$0xff]
        %v335 = vld [vmem:[%s2 + $0xc8] sm:$0xff]
        %v336 = vld [vmem:[%s2 + $0xd0] sm:$0xff]
        %v337 = vld [vmem:[%s2 + $0xd8] sm:$0xff]
        %v338 = vld [vmem:[%s2 + $0xe0] sm:$0xff]
        %v339 = vld [vmem:[%s2 + $0xe8] sm:$0xff]
        %v340 = vld [vmem:[%s2 + $0xf0] sm:$0xff]
        %v341 = vld [vmem:[%s2 + $0xf8] sm:$0xff]
        %v342 = vld [vmem:[%s305] sm:$0xff]
        %v343 = vld [vmem:[%s305 + $0x8] sm:$0xff]
        %v344 = vld [vmem:[%s3] sm:$0xff]
        %v345 = vld [vmem:[%s3 + $0x8] sm:$0xff]
        %v346 = vld [vmem:[%s3 + $0x10] sm:$0xff]
        %v347 = vld [vmem:[%s3 + $0x18] sm:$0xff]
        %v348 = vld [vmem:[%s3 + $0x20] sm:$0xff]
        %v349 = vld [vmem:[%s3 + $0x28] sm:$0xff]
        %v350 = vld [vmem:[%s3 + $0x30] sm:$0xff]
        %v351 = vld [vmem:[%s3 + $0x38] sm:$0xff]
        %v352 = vld [vmem:[%s3 + $0x40] sm:$0xff]
        %v353 = vld [vmem:[%s3 + $0x48] sm:$0xff]
        %v354 = vld [vmem:[%s3 + $0x50] sm:$0xff]
        %v355 = vld [vmem:[%s3 + $0x58] sm:$0xff]
        %v356 = vld [vmem:[%s3 + $0x60] sm:$0xff]
        %v357 = vld [vmem:[%s3 + $0x68] sm:$0xff]
        %v358 = vld [vmem:[%s3 + $0x70] sm:$0xff]
        %v359 = vld [vmem:[%s3 + $0x78] sm:$0xff]
        %v360 = vld [vmem:[%s3 + $0x80] sm:$0xff]
        %v361 = vld [vmem:[%s3 + $0x88] sm:$0xff]
        %v362 = vld [vmem:[%s3 + $0x90] sm:$0xff]
        %v363 = vld [vmem:[%s3 + $0x98] sm:$0xff]
        %v364 = vld [vmem:[%s3 + $0xa0] sm:$0xff]
        %v365 = vld [vmem:[%s3 + $0xa8] sm:$0xff]
        %v366 = vld [vmem:[%s3 + $0xb0] sm:$0xff]
        %v367 = vld [vmem:[%s3 + $0xb8] sm:$0xff]
        %v368 = vld [vmem:[%s3 + $0xc0] sm:$0xff]
        %v369 = vld [vmem:[%s3 + $0xc8] sm:$0xff]
        %v370 = vld [vmem:[%s3 + $0xd0] sm:$0xff]
        %v371 = vld [vmem:[%s3 + $0xd8] sm:$0xff]
        %v372 = vld [vmem:[%s3 + $0xe0] sm:$0xff]
        %v373 = vld [vmem:[%s3 + $0xe8] sm:$0xff]
        %v374 = vld [vmem:[%s3 + $0xf0] sm:$0xff]
        %v375 = vld [vmem:[%s3 + $0xf8] sm:$0xff]
        %v378 = vunpack.c.l.b16 %v342
        %v379 = vunpack.c.h.b16 %v342
        %v380 = vunpack.c.l.b16 %v343
        %v381 = vunpack.c.h.b16 %v343
        %v382 = vpack.c.b16 %v380, %v378
        %v383 = vpack.c.b16 %v381, %v379
        %v418 = vunpack.c.l.b16 %v344
        %v419 = vunpack.c.h.b16 %v344
        %v420 = vunpack.c.l.b16 %v345
        %v421 = vunpack.c.h.b16 %v345
        %v422 = vunpack.c.l.b16 %v346
        %v423 = vunpack.c.h.b16 %v346
        %v424 = vunpack.c.l.b16 %v347
        %v425 = vunpack.c.h.b16 %v347
        %v426 = vunpack.c.l.b16 %v348
        %v427 = vunpack.c.h.b16 %v348
        %v428 = vunpack.c.l.b16 %v349
        %v429 = vunpack.c.h.b16 %v349
        %v430 = vunpack.c.l.b16 %v350
        %v431 = vunpack.c.h.b16 %v350
        %v432 = vunpack.c.l.b16 %v351
        %v433 = vunpack.c.h.b16 %v351
        %v434 = vunpack.c.l.b16 %v352
        %v435 = vunpack.c.h.b16 %v352
        %v436 = vunpack.c.l.b16 %v353
        %v437 = vunpack.c.h.b16 %v353
        %v438 = vunpack.c.l.b16 %v354
        %v439 = vunpack.c.h.b16 %v354
        %v440 = vunpack.c.l.b16 %v355
        %v441 = vunpack.c.h.b16 %v355
        %v442 = vunpack.c.l.b16 %v356
        %v443 = vunpack.c.h.b16 %v356
        %v444 = vunpack.c.l.b16 %v357
        %v445 = vunpack.c.h.b16 %v357
        %v446 = vunpack.c.l.b16 %v358
        %v447 = vunpack.c.h.b16 %v358
        %v448 = vunpack.c.l.b16 %v359
        %v449 = vunpack.c.h.b16 %v359
        %v450 = vunpack.c.l.b16 %v360
        %v451 = vunpack.c.h.b16 %v360
        %v452 = vunpack.c.l.b16 %v361
        %v453 = vunpack.c.h.b16 %v361
        %v454 = vunpack.c.l.b16 %v362
        %v455 = vunpack.c.h.b16 %v362
        %v456 = vunpack.c.l.b16 %v363
        %v457 = vunpack.c.h.b16 %v363
        %v458 = vunpack.c.l.b16 %v364
        %v459 = vunpack.c.h.b16 %v364
        %v460 = vunpack.c.l.b16 %v365
        %v461 = vunpack.c.h.b16 %v365
        %v462 = vunpack.c.l.b16 %v366
        %v463 = vunpack.c.h.b16 %v366
        %v464 = vunpack.c.l.b16 %v367
        %v465 = vunpack.c.h.b16 %v367
        %v466 = vunpack.c.l.b16 %v368
        %v467 = vunpack.c.h.b16 %v368
        %v468 = vunpack.c.l.b16 %v369
        %v469 = vunpack.c.h.b16 %v369
        %v470 = vunpack.c.l.b16 %v370
        %v471 = vunpack.c.h.b16 %v370
        %v472 = vunpack.c.l.b16 %v371
        %v473 = vunpack.c.h.b16 %v371
        %v474 = vunpack.c.l.b16 %v372
        %v475 = vunpack.c.h.b16 %v372
        %v476 = vunpack.c.l.b16 %v373
        %v477 = vunpack.c.h.b16 %v373
        %v478 = vunpack.c.l.b16 %v374
        %v479 = vunpack.c.h.b16 %v374
        %v480 = vunpack.c.l.b16 %v375
        %v481 = vunpack.c.h.b16 %v375
        %v482 = vpack.c.b16 %v420, %v418
        %v483 = vpack.c.b16 %v421, %v419
        %v484 = vpack.c.b16 %v424, %v422
        %v485 = vpack.c.b16 %v425, %v423
        %v486 = vpack.c.b16 %v428, %v426
        %v487 = vpack.c.b16 %v429, %v427
        %v488 = vpack.c.b16 %v432, %v430
        %v489 = vpack.c.b16 %v433, %v431
        %v490 = vpack.c.b16 %v436, %v434
        %v491 = vpack.c.b16 %v437, %v435
        %v492 = vpack.c.b16 %v440, %v438
        %v493 = vpack.c.b16 %v441, %v439
        %v494 = vpack.c.b16 %v444, %v442
        %v495 = vpack.c.b16 %v445, %v443
        %v496 = vpack.c.b16 %v448, %v446
        %v497 = vpack.c.b16 %v449, %v447
        %v498 = vpack.c.b16 %v452, %v450
        %v499 = vpack.c.b16 %v453, %v451
        %v500 = vpack.c.b16 %v456, %v454
        %v501 = vpack.c.b16 %v457, %v455
        %v502 = vpack.c.b16 %v460, %v458
        %v503 = vpack.c.b16 %v461, %v459
        %v504 = vpack.c.b16 %v464, %v462
        %v505 = vpack.c.b16 %v465, %v463
        %v506 = vpack.c.b16 %v468, %v466
        %v507 = vpack.c.b16 %v469, %v467
        %v508 = vpack.c.b16 %v472, %v470
        %v509 = vpack.c.b16 %v473, %v471
        %v510 = vpack.c.b16 %v476, %v474
        %v511 = vpack.c.b16 %v477, %v475
        %v512 = vpack.c.b16 %v480, %v478
        %v513 = vpack.c.b16 %v481, %v479
        %546 = vmatprep.subr.bf16.mxu0 %v483
        %547 = vmatpush1.bf16.msra.mxu0 %v482
        %548 = vmatprep.subr.bf16.mxu0 %v485
        %549 = vmatpush1.bf16.msra.mxu0 %v484
        %550 = vmatprep.subr.bf16.mxu0 %v487
        %551 = vmatpush1.bf16.msra.mxu0 %v486
        %552 = vmatprep.subr.bf16.mxu0 %v489
        %553 = vmatpush1.bf16.msra.mxu0 %v488
        %554 = vmatprep.subr.bf16.mxu0 %v491
        %555 = vmatpush1.bf16.msra.mxu0 %v490
        %556 = vmatprep.subr.bf16.mxu0 %v493
        %557 = vmatpush1.bf16.msra.mxu0 %v492
        %558 = vmatprep.subr.bf16.mxu0 %v495
        %559 = vmatpush1.bf16.msra.mxu0 %v494
        %560 = vmatprep.subr.bf16.mxu0 %v497
        %561 = vmatpush1.bf16.msra.mxu0 %v496
        %562 = vmatprep.subr.bf16.mxu0 %v499
        %563 = vmatpush1.bf16.msra.mxu0 %v498
        %564 = vmatprep.subr.bf16.mxu0 %v501
        %565 = vmatpush1.bf16.msra.mxu0 %v500
        %566 = vmatprep.subr.bf16.mxu0 %v503
        %567 = vmatpush1.bf16.msra.mxu0 %v502
        %568 = vmatprep.subr.bf16.mxu0 %v505
        %569 = vmatpush1.bf16.msra.mxu0 %v504
        %570 = vmatprep.subr.bf16.mxu0 %v507
        %571 = vmatpush1.bf16.msra.mxu0 %v506
        %572 = vmatprep.subr.bf16.mxu0 %v509
        %573 = vmatpush1.bf16.msra.mxu0 %v508
        %574 = vmatprep.subr.bf16.mxu0 %v511
        %575 = vmatpush1.bf16.msra.mxu0 %v510
        %576 = vmatprep.subr.bf16.mxu0 %v513
        %577 = vmatpush1.bf16.msra.mxu0 %v512
        %578 = vmatprep.mubr.bf16.mxu0 %v383
        %579 = vmatmul.mubr.bf16.gmra.mrb[0].mxu0 %v382
        %v580 = vpop.f32.mrb[0].mxu0
        %v581 = vadd.f32 0.0, %v580
        %v582 = vpop.f32.mrb[0].mxu0
        %v583 = vadd.f32 0.0, %v582
        %v584 = vpop.f32.mrb[0].mxu0
        %v585 = vadd.f32 0.0, %v584
        %v586 = vpop.f32.mrb[0].mxu0
        %v587 = vadd.f32 0.0, %v586
        %588 = vdwg.mxu0
        %v591 = vunpack.c.l.b16 %v308
        %v592 = vunpack.c.h.b16 %v308
        %v593 = vunpack.c.l.b16 %v309
        %v594 = vunpack.c.h.b16 %v309
        %v595 = vpack.c.b16 %v593, %v591
        %v596 = vpack.c.b16 %v594, %v592
        %v631 = vunpack.c.l.b16 %v310
        %v632 = vunpack.c.h.b16 %v310
        %v633 = vunpack.c.l.b16 %v311
        %v634 = vunpack.c.h.b16 %v311
        %v635 = vunpack.c.l.b16 %v312
        %v636 = vunpack.c.h.b16 %v312
        %v637 = vunpack.c.l.b16 %v313
        %v638 = vunpack.c.h.b16 %v313
        %v639 = vunpack.c.l.b16 %v314
        %v640 = vunpack.c.h.b16 %v314
        %v641 = vunpack.c.l.b16 %v315
        %v642 = vunpack.c.h.b16 %v315
        %v643 = vunpack.c.l.b16 %v316
        %v644 = vunpack.c.h.b16 %v316
        %v645 = vunpack.c.l.b16 %v317
        %v646 = vunpack.c.h.b16 %v317
        %v647 = vunpack.c.l.b16 %v318
        %v648 = vunpack.c.h.b16 %v318
        %v649 = vunpack.c.l.b16 %v319
        %v650 = vunpack.c.h.b16 %v319
        %v651 = vunpack.c.l.b16 %v320
        %v652 = vunpack.c.h.b16 %v320
        %v653 = vunpack.c.l.b16 %v321
        %v654 = vunpack.c.h.b16 %v321
        %v655 = vunpack.c.l.b16 %v322
        %v656 = vunpack.c.h.b16 %v322
        %v657 = vunpack.c.l.b16 %v323
        %v658 = vunpack.c.h.b16 %v323
        %v659 = vunpack.c.l.b16 %v324
        %v660 = vunpack.c.h.b16 %v324
        %v661 = vunpack.c.l.b16 %v325
        %v662 = vunpack.c.h.b16 %v325
        %v663 = vunpack.c.l.b16 %v326
        %v664 = vunpack.c.h.b16 %v326
        %v665 = vunpack.c.l.b16 %v327
        %v666 = vunpack.c.h.b16 %v327
        %v667 = vunpack.c.l.b16 %v328
        %v668 = vunpack.c.h.b16 %v328
        %v669 = vunpack.c.l.b16 %v329
        %v670 = vunpack.c.h.b16 %v329
        %v671 = vunpack.c.l.b16 %v330
        %v672 = vunpack.c.h.b16 %v330
        %v673 = vunpack.c.l.b16 %v331
        %v674 = vunpack.c.h.b16 %v331
        %v675 = vunpack.c.l.b16 %v332
        %v676 = vunpack.c.h.b16 %v332
        %v677 = vunpack.c.l.b16 %v333
        %v678 = vunpack.c.h.b16 %v333
        %v679 = vunpack.c.l.b16 %v334
        %v680 = vunpack.c.h.b16 %v334
        %v681 = vunpack.c.l.b16 %v335
        %v682 = vunpack.c.h.b16 %v335
        %v683 = vunpack.c.l.b16 %v336
        %v684 = vunpack.c.h.b16 %v336
        %v685 = vunpack.c.l.b16 %v337
        %v686 = vunpack.c.h.b16 %v337
        %v687 = vunpack.c.l.b16 %v338
        %v688 = vunpack.c.h.b16 %v338
        %v689 = vunpack.c.l.b16 %v339
        %v690 = vunpack.c.h.b16 %v339
        %v691 = vunpack.c.l.b16 %v340
        %v692 = vunpack.c.h.b16 %v340
        %v693 = vunpack.c.l.b16 %v341
        %v694 = vunpack.c.h.b16 %v341
        %v695 = vpack.c.b16 %v633, %v631
        %v696 = vpack.c.b16 %v634, %v632
        %v697 = vpack.c.b16 %v637, %v635
        %v698 = vpack.c.b16 %v638, %v636
        %v699 = vpack.c.b16 %v641, %v639
        %v700 = vpack.c.b16 %v642, %v640
        %v701 = vpack.c.b16 %v645, %v643
        %v702 = vpack.c.b16 %v646, %v644
        %v703 = vpack.c.b16 %v649, %v647
        %v704 = vpack.c.b16 %v650, %v648
        %v705 = vpack.c.b16 %v653, %v651
        %v706 = vpack.c.b16 %v654, %v652
        %v707 = vpack.c.b16 %v657, %v655
        %v708 = vpack.c.b16 %v658, %v656
        %v709 = vpack.c.b16 %v661, %v659
        %v710 = vpack.c.b16 %v662, %v660
        %v711 = vpack.c.b16 %v665, %v663
        %v712 = vpack.c.b16 %v666, %v664
        %v713 = vpack.c.b16 %v669, %v667
        %v714 = vpack.c.b16 %v670, %v668
        %v715 = vpack.c.b16 %v673, %v671
        %v716 = vpack.c.b16 %v674, %v672
        %v717 = vpack.c.b16 %v677, %v675
        %v718 = vpack.c.b16 %v678, %v676
        %v719 = vpack.c.b16 %v681, %v679
        %v720 = vpack.c.b16 %v682, %v680
        %v721 = vpack.c.b16 %v685, %v683
        %v722 = vpack.c.b16 %v686, %v684
        %v723 = vpack.c.b16 %v689, %v687
        %v724 = vpack.c.b16 %v690, %v688
        %v725 = vpack.c.b16 %v693, %v691
        %v726 = vpack.c.b16 %v694, %v692
        %759 = vmatprep.subr.bf16.mxu0 %v696
        %760 = vmatpush1.bf16.msra.mxu0 %v695
        %761 = vmatprep.subr.bf16.mxu0 %v698
        %762 = vmatpush1.bf16.msra.mxu0 %v697
        %763 = vmatprep.subr.bf16.mxu0 %v700
        %764 = vmatpush1.bf16.msra.mxu0 %v699
        %765 = vmatprep.subr.bf16.mxu0 %v702
        %766 = vmatpush1.bf16.msra.mxu0 %v701
        %767 = vmatprep.subr.bf16.mxu0 %v704
        %768 = vmatpush1.bf16.msra.mxu0 %v703
        %769 = vmatprep.subr.bf16.mxu0 %v706
        %770 = vmatpush1.bf16.msra.mxu0 %v705
        %771 = vmatprep.subr.bf16.mxu0 %v708
        %772 = vmatpush1.bf16.msra.mxu0 %v707
        %773 = vmatprep.subr.bf16.mxu0 %v710
        %774 = vmatpush1.bf16.msra.mxu0 %v709
        %775 = vmatprep.subr.bf16.mxu0 %v712
        %776 = vmatpush1.bf16.msra.mxu0 %v711
        %777 = vmatprep.subr.bf16.mxu0 %v714
        %778 = vmatpush1.bf16.msra.mxu0 %v713
        %779 = vmatprep.subr.bf16.mxu0 %v716
        %780 = vmatpush1.bf16.msra.mxu0 %v715
        %781 = vmatprep.subr.bf16.mxu0 %v718
        %782 = vmatpush1.bf16.msra.mxu0 %v717
        %783 = vmatprep.subr.bf16.mxu0 %v720
        %784 = vmatpush1.bf16.msra.mxu0 %v719
        %785 = vmatprep.subr.bf16.mxu0 %v722
        %786 = vmatpush1.bf16.msra.mxu0 %v721
        %787 = vmatprep.subr.bf16.mxu0 %v724
        %788 = vmatpush1.bf16.msra.mxu0 %v723
        %789 = vmatprep.subr.bf16.mxu0 %v726
        %790 = vmatpush1.bf16.msra.mxu0 %v725
        %791 = vmatprep.mubr.bf16.mxu0 %v596
        %792 = vmatmul.mubr.bf16.gmra.mrb[0].mxu0 %v595
        %v793 = vpop.f32.mrb[0].mxu0
        %v794 = vadd.f32 %v581, %v793
        %v795 = vpop.f32.mrb[0].mxu0
        %v796 = vadd.f32 %v583, %v795
        %v797 = vpop.f32.mrb[0].mxu0
        %v798 = vadd.f32 %v585, %v797
        %v799 = vpop.f32.mrb[0].mxu0
        %v800 = vadd.f32 %v587, %v799
        %801 = vdwg.mxu0
        %v802 = vld [vmem:[%s4] sm:$0x3]
        %v804 = vlaneseq
        %v805 = vshrl.u32 %v804, 7
        %v806 = vsub.s32 0, %v805
        %v807 = vrot.slane %v802, %v806
        %v808 = vlaneseq
        %v809 = vshrl.u32 %v808, 7
        %v810 = vsub.s32 1, %v809
        %v811 = vrot.slane %v802, %v810
        %v814 = vadd.f32 %v794, %v807
        %v815 = vadd.f32 %v796, %v811
        %v816 = vadd.f32 %v798, %v807
        %v817 = vadd.f32 %v800, %v811
        %v818 = vmax.f32 %v814, 0.0
        %v819 = vmax.f32 %v815, 0.0
        %v820 = vmax.f32 %v816, 0.0
        %v821 = vmax.f32 %v817, 0.0
        %v822 = vpack.c.bf16 %v820, %v818
        %v823 = vpack.c.bf16 %v821, %v819
        %v824 = vld [vmem:[%s5] sm:$0xff]
        %v825 = vld [vmem:[%s5 + $0x8] sm:$0xff]
        %v826 = vld [vmem:[%s5 + $0x10] sm:$0xff]
        %v827 = vld [vmem:[%s5 + $0x18] sm:$0xff]
        %v828 = vld [vmem:[%s5 + $0x20] sm:$0xff]
        %v829 = vld [vmem:[%s5 + $0x28] sm:$0xff]
        %v830 = vld [vmem:[%s5 + $0x30] sm:$0xff]
        %v831 = vld [vmem:[%s5 + $0x38] sm:$0xff]
        %v832 = vld [vmem:[%s5 + $0x40] sm:$0xff]
        %v833 = vld [vmem:[%s5 + $0x48] sm:$0xff]
        %v834 = vld [vmem:[%s5 + $0x50] sm:$0xff]
        %v835 = vld [vmem:[%s5 + $0x58] sm:$0xff]
        %v836 = vld [vmem:[%s5 + $0x60] sm:$0xff]
        %v837 = vld [vmem:[%s5 + $0x68] sm:$0xff]
        %v838 = vld [vmem:[%s5 + $0x70] sm:$0xff]
        %v839 = vld [vmem:[%s5 + $0x78] sm:$0xff]
        %v840 = vld [vmem:[%s5 + $0x80] sm:$0xff]
        %v841 = vld [vmem:[%s5 + $0x88] sm:$0xff]
        %v842 = vld [vmem:[%s5 + $0x90] sm:$0xff]
        %v843 = vld [vmem:[%s5 + $0x98] sm:$0xff]
        %v844 = vld [vmem:[%s5 + $0xa0] sm:$0xff]
        %v845 = vld [vmem:[%s5 + $0xa8] sm:$0xff]
        %v846 = vld [vmem:[%s5 + $0xb0] sm:$0xff]
        %v847 = vld [vmem:[%s5 + $0xb8] sm:$0xff]
        %v848 = vld [vmem:[%s5 + $0xc0] sm:$0xff]
        %v849 = vld [vmem:[%s5 + $0xc8] sm:$0xff]
        %v850 = vld [vmem:[%s5 + $0xd0] sm:$0xff]
        %v851 = vld [vmem:[%s5 + $0xd8] sm:$0xff]
        %v852 = vld [vmem:[%s5 + $0xe0] sm:$0xff]
        %v853 = vld [vmem:[%s5 + $0xe8] sm:$0xff]
        %v854 = vld [vmem:[%s5 + $0xf0] sm:$0xff]
        %v855 = vld [vmem:[%s5 + $0xf8] sm:$0xff]
        %v856 = vld [vmem:[%s6] sm:$0x3]
        %v858 = vlaneseq
        %v859 = vshrl.u32 %v858, 7
        %v860 = vsub.s32 0, %v859
        %v861 = vrot.slane %v856, %v860
        %v862 = vlaneseq
        %v863 = vshrl.u32 %v862, 7
        %v864 = vsub.s32 1, %v863
        %v865 = vrot.slane %v856, %v864
        %v900 = vunpack.c.l.b16 %v824
        %v901 = vunpack.c.h.b16 %v824
        %v902 = vunpack.c.l.b16 %v825
        %v903 = vunpack.c.h.b16 %v825
        %v904 = vunpack.c.l.b16 %v826
        %v905 = vunpack.c.h.b16 %v826
        %v906 = vunpack.c.l.b16 %v827
        %v907 = vunpack.c.h.b16 %v827
        %v908 = vunpack.c.l.b16 %v828
        %v909 = vunpack.c.h.b16 %v828
        %v910 = vunpack.c.l.b16 %v829
        %v911 = vunpack.c.h.b16 %v829
        %v912 = vunpack.c.l.b16 %v830
        %v913 = vunpack.c.h.b16 %v830
        %v914 = vunpack.c.l.b16 %v831
        %v915 = vunpack.c.h.b16 %v831
        %v916 = vunpack.c.l.b16 %v832
        %v917 = vunpack.c.h.b16 %v832
        %v918 = vunpack.c.l.b16 %v833
        %v919 = vunpack.c.h.b16 %v833
        %v920 = vunpack.c.l.b16 %v834
        %v921 = vunpack.c.h.b16 %v834
        %v922 = vunpack.c.l.b16 %v835
        %v923 = vunpack.c.h.b16 %v835
        %v924 = vunpack.c.l.b16 %v836
        %v925 = vunpack.c.h.b16 %v836
        %v926 = vunpack.c.l.b16 %v837
        %v927 = vunpack.c.h.b16 %v837
        %v928 = vunpack.c.l.b16 %v838
        %v929 = vunpack.c.h.b16 %v838
        %v930 = vunpack.c.l.b16 %v839
        %v931 = vunpack.c.h.b16 %v839
        %v932 = vunpack.c.l.b16 %v840
        %v933 = vunpack.c.h.b16 %v840
        %v934 = vunpack.c.l.b16 %v841
        %v935 = vunpack.c.h.b16 %v841
        %v936 = vunpack.c.l.b16 %v842
        %v937 = vunpack.c.h.b16 %v842
        %v938 = vunpack.c.l.b16 %v843
        %v939 = vunpack.c.h.b16 %v843
        %v940 = vunpack.c.l.b16 %v844
        %v941 = vunpack.c.h.b16 %v844
        %v942 = vunpack.c.l.b16 %v845
        %v943 = vunpack.c.h.b16 %v845
        %v944 = vunpack.c.l.b16 %v846
        %v945 = vunpack.c.h.b16 %v846
        %v946 = vunpack.c.l.b16 %v847
        %v947 = vunpack.c.h.b16 %v847
        %v948 = vunpack.c.l.b16 %v848
        %v949 = vunpack.c.h.b16 %v848
        %v950 = vunpack.c.l.b16 %v849
        %v951 = vunpack.c.h.b16 %v849
        %v952 = vunpack.c.l.b16 %v850
        %v953 = vunpack.c.h.b16 %v850
        %v954 = vunpack.c.l.b16 %v851
        %v955 = vunpack.c.h.b16 %v851
        %v956 = vunpack.c.l.b16 %v852
        %v957 = vunpack.c.h.b16 %v852
        %v958 = vunpack.c.l.b16 %v853
        %v959 = vunpack.c.h.b16 %v853
        %v960 = vunpack.c.l.b16 %v854
        %v961 = vunpack.c.h.b16 %v854
        %v962 = vunpack.c.l.b16 %v855
        %v963 = vunpack.c.h.b16 %v855
        %v964 = vpack.c.b16 %v902, %v900
        %v965 = vpack.c.b16 %v903, %v901
        %v966 = vpack.c.b16 %v906, %v904
        %v967 = vpack.c.b16 %v907, %v905
        %v968 = vpack.c.b16 %v910, %v908
        %v969 = vpack.c.b16 %v911, %v909
        %v970 = vpack.c.b16 %v914, %v912
        %v971 = vpack.c.b16 %v915, %v913
        %v972 = vpack.c.b16 %v918, %v916
        %v973 = vpack.c.b16 %v919, %v917
        %v974 = vpack.c.b16 %v922, %v920
        %v975 = vpack.c.b16 %v923, %v921
        %v976 = vpack.c.b16 %v926, %v924
        %v977 = vpack.c.b16 %v927, %v925
        %v978 = vpack.c.b16 %v930, %v928
        %v979 = vpack.c.b16 %v931, %v929
        %v980 = vpack.c.b16 %v934, %v932
        %v981 = vpack.c.b16 %v935, %v933
        %v982 = vpack.c.b16 %v938, %v936
        %v983 = vpack.c.b16 %v939, %v937
        %v984 = vpack.c.b16 %v942, %v940
        %v985 = vpack.c.b16 %v943, %v941
        %v986 = vpack.c.b16 %v946, %v944
        %v987 = vpack.c.b16 %v947, %v945
        %v988 = vpack.c.b16 %v950, %v948
        %v989 = vpack.c.b16 %v951, %v949
        %v990 = vpack.c.b16 %v954, %v952
        %v991 = vpack.c.b16 %v955, %v953
        %v992 = vpack.c.b16 %v958, %v956
        %v993 = vpack.c.b16 %v959, %v957
        %v994 = vpack.c.b16 %v962, %v960
        %v995 = vpack.c.b16 %v963, %v961
        %1028 = vmatprep.subr.bf16.mxu0 %v965
        %1029 = vmatpush1.bf16.msra.mxu0 %v964
        %1030 = vmatprep.subr.bf16.mxu0 %v967
        %1031 = vmatpush1.bf16.msra.mxu0 %v966
        %1032 = vmatprep.subr.bf16.mxu0 %v969
        %1033 = vmatpush1.bf16.msra.mxu0 %v968
        %1034 = vmatprep.subr.bf16.mxu0 %v971
        %1035 = vmatpush1.bf16.msra.mxu0 %v970
        %1036 = vmatprep.subr.bf16.mxu0 %v973
        %1037 = vmatpush1.bf16.msra.mxu0 %v972
        %1038 = vmatprep.subr.bf16.mxu0 %v975
        %1039 = vmatpush1.bf16.msra.mxu0 %v974
        %1040 = vmatprep.subr.bf16.mxu0 %v977
        %1041 = vmatpush1.bf16.msra.mxu0 %v976
        %1042 = vmatprep.subr.bf16.mxu0 %v979
        %1043 = vmatpush1.bf16.msra.mxu0 %v978
        %1044 = vmatprep.subr.bf16.mxu0 %v981
        %1045 = vmatpush1.bf16.msra.mxu0 %v980
        %1046 = vmatprep.subr.bf16.mxu0 %v983
        %1047 = vmatpush1.bf16.msra.mxu0 %v982
        %1048 = vmatprep.subr.bf16.mxu0 %v985
        %1049 = vmatpush1.bf16.msra.mxu0 %v984
        %1050 = vmatprep.subr.bf16.mxu0 %v987
        %1051 = vmatpush1.bf16.msra.mxu0 %v986
        %1052 = vmatprep.subr.bf16.mxu0 %v989
        %1053 = vmatpush1.bf16.msra.mxu0 %v988
        %1054 = vmatprep.subr.bf16.mxu0 %v991
        %1055 = vmatpush1.bf16.msra.mxu0 %v990
        %1056 = vmatprep.subr.bf16.mxu0 %v993
        %1057 = vmatpush1.bf16.msra.mxu0 %v992
        %1058 = vmatprep.subr.bf16.mxu0 %v995
        %1059 = vmatpush1.bf16.msra.mxu0 %v994
        %1060 = vmatprep.mubr.bf16.mxu0 %v823
        %1061 = vmatmul.mubr.bf16.gmra.mrb[0].mxu0 %v822
        %v1062 = vpop.f32.mrb[0].mxu0
        %v1063 = vadd.f32 %v861, %v1062
        %v1064 = vpop.f32.mrb[0].mxu0
        %v1065 = vadd.f32 %v865, %v1064
        %v1066 = vpop.f32.mrb[0].mxu0
        %v1067 = vadd.f32 %v861, %v1066
        %v1068 = vpop.f32.mrb[0].mxu0
        %v1069 = vadd.f32 %v865, %v1068
        %1070 = vdwg.mxu0
        %v1071 = vmax.f32 %v1063, 0.0
        %v1072 = vmax.f32 %v1065, 0.0
        %v1073 = vmax.f32 %v1067, 0.0
        %v1074 = vmax.f32 %v1069, 0.0
        %1075 = vst [vmem:[%s292] sm:$0xff] %v1071
        %1076 = vst [vmem:[%s292 + $0x8] sm:$0xff] %v1072
        %1077 = vst [vmem:[%s292 + $0x10] sm:$0xff] %v1073
        %1078 = vst [vmem:[%s292 + $0x18] sm:$0xff] %v1074
        %s1079 = sand.u32 %s186, 1
        %s1080 = scalar_lea.sflag [#allocation3], %s1079
        %s1081 = sand.u32 %s186, 1
        %s1082 = smul.addr %s1081, 32
        %s1083 = scalar_lea.vmem [#allocation2], %s1082
        // Predicated region
        $region49: #{_lambda_.11} parent=47 // pred_check
          %p1084 = pneg %p196
        $region50: #{_lambda_.11} parent=47 // pred_check_branch
          %1086 = sbr.rel (%p1084) target = $region52
        $region51: #{_lambda_.11} parent=47 // pred_region
          %s1087 = smul.u32 2, %s21
          %s1089 = ssub.s32 512, 512
          %1090 = vsyncadd %s1080, %s1089
          %s1091 = smul.addr %s1087, 2
          %s1092 = smul.addr %s1091, 128
          %s1093 = scalar_lea.hbm %s7, %s1092
          %s1094 = sshll.u32 %s1083, 4
          %s1095 = int_to_ptr.vmem [resolvable:$true] %s1094
          %1100 = dma.vmem_to_hbm [thread:$0]  %s1095, 512, %s1093, %s1080, 256, 256, 16
        $region52: #{_lambda_.11} parent=47 // pred_fallthru
          _
      $region48: #{_lambda_.11} parent=5 // pred_fallthru
        _
      %p1101 = scmp.le.s32.totalorder 2, %s16
      // Predicated region
      $region53: #{_lambda_.11} parent=5 // pred_check
        %p1102 = pneg %p1101
      $region54: #{_lambda_.11} parent=5 // pred_check_branch
        %1104 = sbr.rel (%p1102) target = $region56
      $region55: #{_lambda_.11} parent=5 // pred_region
        %s1105 = ssub.s32 %s16, 2
        // Predicated region
        $region57: #{_lambda_.11} parent=55 // pred_check
          %p1106 = pneg %p202
        $region58: #{_lambda_.11} parent=55 // pred_check_branch
          %1108 = sbr.rel (%p1106) target = $region60
        $region59: #{_lambda_.11} parent=55 // pred_region
          %s1109 = sand.u32 %s187, 1
          %s1110 = scalar_lea.sflag [#allocation3], %s1109
          %s1111 = sand.u32 %s187, 1
          %s1112 = smul.addr %s1111, 32
          %s1113 = scalar_lea.vmem [#allocation2], %s1112
          %1114 = dma.done %s1110, 512
        $region60: #{_lambda_.11} parent=55 // pred_fallthru
          _
      $region56: #{_lambda_.11} parent=5 // pred_fallthru
        _
    $region6: #{_lambda_.11} parent=1 // loop_footer
      %s20 = sadd.s32 1, %s16
    $region7: #{_lambda_.11} parent=1 // loop_footer_branch
      %15 = sbr.rel target = $region3
    $region8: #{_lambda_.11} parent=1 // loop_exit
      _
    %1115 = vsyncpa [#allocation3], 1
    %s1116 = scalar_lea.sflag [#allocation3], 1
    %1117 = vsyncpa %s1116, 1

</llo_original>
